<compile_context>
chip_gen: v7x
topology: tpu7x:2x2x1
jax: 0.10.0
libtpu: 0.0.40
codegen_flags: <defaults>
</compile_context>

<pallas_src>
import jax
import jax.numpy as jnp
from jax import lax
from jax.experimental import pallas as pl
from jax.experimental.pallas import tpu as pltpu


def _round_up(x, m):
    return (x + m - 1) // m * m


def _pad_to(a, axis, size):
    pad = size - a.shape[axis]
    if pad == 0:
        return a
    widths = [(0, 0)] * a.ndim
    widths[axis] = (0, pad)
    return jnp.pad(a, widths)


# ---------------------------------------------------------------------------
# Pallas kernels
# ---------------------------------------------------------------------------

def _gemm_bias_kernel(x_ref, w_ref, b_ref, o_ref):
    """o = x @ w + b for one (TM, N) row tile. bf16 operands, f32 accumulation."""
    o_ref[...] = (jnp.dot(x_ref[...], w_ref[...],
                          preferred_element_type=jnp.float32)
                  + b_ref[...]).astype(o_ref.dtype)


def _lstm_steps(gx_ref, whh_ref, h_sc, c_sc, emit):
    """Run the recurrence over one time chunk.

    gx_ref already holds x @ W_ih^T + (b_ih + b_hh), so the only work on the
    serial path is h @ W_hh^T (bf16 on the MXU) plus f32 gate math.
    """
    hp = h_sc.shape[-1]
    t_chunk = gx_ref.shape[0]

    def step(s, carry):
        gates = gx_ref[s] + jnp.dot(h_sc[...].astype(jnp.bfloat16), whh_ref[...],
                                    preferred_element_type=jnp.float32)
        # Gate order matches torch.nn.LSTM: i, f, g, o. Hp is a multiple of 128,
        # so every slice below is lane-aligned (no cross-lane relayout).
        i_g = jax.nn.sigmoid(gates[:, 0 * hp:1 * hp])
        f_g = jax.nn.sigmoid(gates[:, 1 * hp:2 * hp])
        g_g = jnp.tanh(gates[:, 2 * hp:3 * hp])
        o_g = jax.nn.sigmoid(gates[:, 3 * hp:4 * hp])
        c_new = f_g * c_sc[...] + i_g * g_g
        h_new = o_g * jnp.tanh(c_new)
        c_sc[...] = c_new
        h_sc[...] = h_new
        emit(s, h_new)
        return carry

    lax.fori_loop(0, t_chunk, step, 0, unroll=True)


def _lstm_rec_kernel(gx_ref, whh_ref, hseq_ref, h_sc, c_sc, hbuf_sc):
    """Intermediate LSTM layer: emits the hidden sequence (bf16 slab per chunk)."""
    @pl.when(pl.program_id(1) == 0)
    def _():
        h_sc[...] = jnp.zeros_like(h_sc)
        c_sc[...] = jnp.zeros_like(c_sc)

    def emit(s, h_new):
        hbuf_sc[s] = h_new            # dense f32 (Bc, Hp) store into VMEM scratch

    _lstm_steps(gx_ref, whh_ref, h_sc, c_sc, emit)
    # Single dense slab store of the whole chunk (halves HBM traffic via bf16).
    hseq_ref[...] = hbuf_sc[...].astype(hseq_ref.dtype)


def _lstm_rec_fc_kernel(gx_ref, whh_ref, wfc_ref, bfc_ref, out_ref,
                        h_sc, c_sc, hbuf_sc):
    """Last LSTM layer with the Linear head fused (one GEMM per time chunk)."""
    @pl.when(pl.program_id(1) == 0)
    def _():
        h_sc[...] = jnp.zeros_like(h_sc)
        c_sc[...] = jnp.zeros_like(c_sc)

    def emit(s, h_new):
        hbuf_sc[s] = h_new

    _lstm_steps(gx_ref, whh_ref, h_sc, c_sc, emit)

    tc, bc, hp = hbuf_sc.shape
    op = out_ref.shape[-1]
    # bc % 8 == 0 and hp % 128 == 0 -> these reshapes are layout-preserving.
    flat = hbuf_sc[...].reshape(tc * bc, hp).astype(jnp.bfloat16)
    y = (jnp.dot(flat, wfc_ref[...], preferred_element_type=jnp.float32)
         + bfc_ref[...])
    out_ref[...] = y.reshape(tc, bc, op).astype(out_ref.dtype)


# ---------------------------------------------------------------------------
# pallas_call wrappers
# ---------------------------------------------------------------------------

def gemm_bias_pallas(x2d, w_t, b_row, tm=256):
    """x2d: (M, K) bf16; w_t: (K, N) bf16; b_row: (1, N) f32 -> (M, N) f32."""
    M, K = x2d.shape
    N = w_t.shape[1]
    TM = M if M <= tm else tm                    # M is always a multiple of 8 here
    Mp = _round_up(M, TM)
    xp = _pad_to(x2d, 0, Mp)
    out = pl.pallas_call(
        _gemm_bias_kernel,
        out_shape=jax.ShapeDtypeStruct((Mp, N), jnp.float32),
        grid_spec=pltpu.PrefetchScalarGridSpec(
            num_scalar_prefetch=0,
            grid=(Mp // TM,),
            in_specs=[pl.BlockSpec((TM, K), lambda i: (i, 0)),
                      pl.BlockSpec((K, N), lambda i: (0, 0)),
                      pl.BlockSpec((1, N), lambda i: (0, 0))],
            out_specs=pl.BlockSpec((TM, N), lambda i: (i, 0)),
        ),
        compiler_params=pltpu.CompilerParams(
            dimension_semantics=("parallel",),
            vmem_limit_bytes=64 * 1024 * 1024),
    )(xp, w_t, b_row)
    return out[:M] if Mp != M else out


def lstm_rec_pallas(gx, w_hh_t, *, b_chunk, t_chunk):
    """gx: (Tp, Bp, 4Hp) f32 precomputed gates; w_hh_t: (Hp, 4Hp) bf16."""
    Tp, Bp, G = gx.shape
    Hp = G // 4
    return pl.pallas_call(
        _lstm_rec_kernel,
        out_shape=jax.ShapeDtypeStruct((Tp, Bp, Hp), jnp.bfloat16),
        grid_spec=pltpu.PrefetchScalarGridSpec(
            num_scalar_prefetch=0,
            grid=(Bp // b_chunk, Tp // t_chunk),
            in_specs=[
                pl.BlockSpec((t_chunk, b_chunk, G), lambda b, t: (t, b, 0)),
                pl.BlockSpec((Hp, G), lambda b, t: (0, 0)),
            ],
            out_specs=pl.BlockSpec((t_chunk, b_chunk, Hp), lambda b, t: (t, b, 0)),
            scratch_shapes=[pltpu.VMEM((b_chunk, Hp), jnp.float32),      # h state
                            pltpu.VMEM((b_chunk, Hp), jnp.float32),      # c state
                            pltpu.VMEM((t_chunk, b_chunk, Hp), jnp.float32)],
        ),
        compiler_params=pltpu.CompilerParams(
            dimension_semantics=("parallel", "arbitrary"),   # batch-par, time-serial
            vmem_limit_bytes=64 * 1024 * 1024),
    )(gx, w_hh_t)


def lstm_rec_fc_pallas(gx, w_hh_t, w_fc_t, b_fc_row, *, b_chunk, t_chunk):
    """Last layer + fused fc. w_fc_t: (Hp, Op) bf16; b_fc_row: (1, Op) f32."""
    Tp, Bp, G = gx.shape
    Hp = G // 4
    Op = w_fc_t.shape[1]
    return pl.pallas_call(
        _lstm_rec_fc_kernel,
        out_shape=jax.ShapeDtypeStruct((Tp, Bp, Op), jnp.float32),
        grid_spec=pltpu.PrefetchScalarGridSpec(
            num_scalar_prefetch=0,
            grid=(Bp // b_chunk, Tp // t_chunk),
            in_specs=[
                pl.BlockSpec((t_chunk, b_chunk, G), lambda b, t: (t, b, 0)),
                pl.BlockSpec((Hp, G), lambda b, t: (0, 0)),
                pl.BlockSpec((Hp, Op), lambda b, t: (0, 0)),
                pl.BlockSpec((1, Op), lambda b, t: (0, 0)),
            ],
            out_specs=pl.BlockSpec((t_chunk, b_chunk, Op), lambda b, t: (t, b, 0)),
            scratch_shapes=[pltpu.VMEM((b_chunk, Hp), jnp.float32),      # h state
                            pltpu.VMEM((b_chunk, Hp), jnp.float32),      # c state
                            pltpu.VMEM((t_chunk, b_chunk, Hp), jnp.float32)],
        ),
        compiler_params=pltpu.CompilerParams(
            dimension_semantics=("parallel", "arbitrary"),
            vmem_limit_bytes=64 * 1024 * 1024),
    )(gx, w_hh_t, w_fc_t, b_fc_row)


# ---------------------------------------------------------------------------
# Weight packing (torch layout -> padded, transposed, bf16 MXU operands)
# ---------------------------------------------------------------------------

def _pack_lstm_weight(w, H, Hp, d_in, d_in_p):
    """(4H, d_in) -> (d_in_p, 4*Hp) bf16; each gate block zero-padded to Hp."""
    w4 = jnp.pad(w.reshape(4, H, d_in), ((0, 0), (0, Hp - H), (0, d_in_p - d_in)))
    return jnp.transpose(w4.reshape(4 * Hp, d_in_p)).astype(jnp.bfloat16)


def _pack_lstm_bias(b, H, Hp):
    b4 = jnp.pad(b.reshape(4, H), ((0, 0), (0, Hp - H)))
    return b4.reshape(1, 4 * Hp).astype(jnp.float32)


def _pack_fc(w_fc, b_fc, H, Hp, O, Op):
    w = jnp.pad(w_fc, ((0, Op - O), (0, Hp - H)))                 # (Op, Hp)
    b = jnp.pad(b_fc, (0, Op - O)).reshape(1, Op).astype(jnp.float32)
    return jnp.transpose(w).astype(jnp.bfloat16), b               # (Hp, Op), (1, Op)


# ---------------------------------------------------------------------------
# Forward pass
# ---------------------------------------------------------------------------

@jax.jit
def eval_lstm_model2_forward(x, params):
    """x: (B, T, d) float32 -> (B, T, output_size) float32."""
    B, T, d = x.shape
    H = params["lstm"][0][1].shape[1]
    O = params["fc"][0].shape[0]
    n_layers = len(params["lstm"])

    Hp = _round_up(H, 128)          # lanes
    Op = _round_up(O, 128)
    Dp = _round_up(d, 128)
    Bp = _round_up(B, 8)            # sublanes
    t_chunk = min(T, 16)
    Tp = _round_up(T, t_chunk)
    # Split batch across megacore TCs only when chunks stay bf16-tile aligned.
    b_chunk = Bp // 2 if Bp % 32 == 0 else Bp

    # (B,T,d) -> time-major, zero-padded, bf16 matmul operand.  Padded hidden
    # lanes carry exact zeros through the recurrence (zero gates -> g=0 -> c=h=0),
    # padded batch rows / trailing timesteps are sliced off at the end.
    seq = jnp.transpose(x.astype(jnp.float32), (1, 0, 2))         # (T, B, d)
    seq = _pad_to(_pad_to(_pad_to(seq, 0, Tp), 1, Bp), 2, Dp)
    seq_bf16 = seq.astype(jnp.bfloat16)

    w_fc, b_fc = params["fc"]
    w_fc_p, b_fc_p = _pack_fc(w_fc, b_fc, H, Hp, O, Op)

    out = None
    for li, (w_ih, w_hh, b_ih, b_hh) in enumerate(params["lstm"]):
        d_in = w_ih.shape[1]
        d_in_p = Dp if li == 0 else Hp
        w_ih_p = _pack_lstm_weight(w_ih, H, Hp, d_in, d_in_p)     # (d_in_p, 4Hp)
        w_hh_p = _pack_lstm_weight(w_hh, H, Hp, H, Hp)            # (Hp, 4Hp)
        bias_p = _pack_lstm_bias(b_ih + b_hh, H, Hp)              # (1, 4Hp)

        # Input projection for ALL timesteps as one big, MXU-filling GEMM.
        gx = gemm_bias_pallas(seq_bf16.reshape(Tp * Bp, d_in_p), w_ih_p, bias_p)
        gx = gx.reshape(Tp, Bp, 4 * Hp)

        if li == n_layers - 1:
            out = lstm_rec_fc_pallas(gx, w_hh_p, w_fc_p, b_fc_p,
                                     b_chunk=b_chunk, t_chunk=t_chunk)
        else:
            seq_bf16 = lstm_rec_pallas(gx, w_hh_p,
                                       b_chunk=b_chunk, t_chunk=t_chunk)

    out = out[:T, :B, :O]                                         # drop padding
    return jnp.transpose(out, (1, 0, 2))                          # (B, T, O)


# ---------------------------------------------------------------------------
# Pure-JAX f32 reference (matches torch.nn.LSTM semantics, gate order i,f,g,o)
# ---------------------------------------------------------------------------

def reference_forward(x, params):
    B, T, _ = x.shape
    seq = x.astype(jnp.float32)
    for (w_ih, w_hh, b_ih, b_hh) in params["lstm"]:
        H = w_hh.shape[1]
        h = jnp.zeros((B, H), jnp.float32)
        c = jnp.zeros((B, H), jnp.float32)
        outs = []
        for t in range(T):
            gates = seq[:, t] @ w_ih.T + b_ih + h @ w_hh.T + b_hh
            i_g = jax.nn.sigmoid(gates[:, 0 * H:1 * H])
            f_g = jax.nn.sigmoid(gates[:, 1 * H:2 * H])
            g_g = jnp.tanh(gates[:, 2 * H:3 * H])
            o_g = jax.nn.sigmoid(gates[:, 3 * H:4 * H])
            c = f_g * c + i_g * g_g
            h = o_g * jnp.tanh(c)
            outs.append(h)
        seq = jnp.stack(outs, axis=1)
    w_fc, b_fc = params["fc"]
    out = seq.reshape(-1, seq.shape[-1]) @ w_fc.T + b_fc
    return out.reshape(B, T, -1)


# ---------------------------------------------------------------------------
# Deterministic parameter construction (shapes follow torch.nn.LSTM / Linear)
# ---------------------------------------------------------------------------

def make_params(key, input_size, hidden_size, num_layers, output_size):
    scale = 1.0 / jnp.sqrt(hidden_size)
    lstm_params = []
    for layer in range(num_layers):
        d_in = input_size if layer == 0 else hidden_size
        key, k1, k2, k3, k4 = jax.random.split(key, 5)
        w_ih = jax.random.uniform(k1, (4 * hidden_size, d_in), jnp.float32, -scale, scale)
        w_hh = jax.random.uniform(k2, (4 * hidden_size, hidden_size), jnp.float32, -scale, scale)
        b_ih = jax.random.uniform(k3, (4 * hidden_size,), jnp.float32, -scale, scale)
        b_hh = jax.random.uniform(k4, (4 * hidden_size,), jnp.float32, -scale, scale)
        lstm_params.append((w_ih, w_hh, b_ih, b_hh))
    key, k5, k6 = jax.random.split(key, 3)
    w_fc = jax.random.uniform(k5, (output_size, hidden_size), jnp.float32, -scale, scale)
    b_fc = jax.random.uniform(k6, (output_size,), jnp.float32, -scale, scale)
    return {"lstm": lstm_params, "fc": (w_fc, b_fc)}


if __name__ == "__main__":
    B, T = 2, 8
    input_size, hidden_size, num_layers, output_size = 4, 32, 2, 3

    key = jax.random.PRNGKey(0)
    key, kx, kp = jax.random.split(key, 3)
    x = jax.random.normal(kx, (B, T, input_size), jnp.float32)
    params = make_params(kp, input_size, hidden_size, num_layers, output_size)

    out = eval_lstm_model2_forward(x, params)
    out = jax.block_until_ready(out)

    ref = reference_forward(x, params)
    assert out.shape == (B, T, output_size), out.shape
    max_err = float(jnp.max(jnp.abs(out - ref)))
    # bf16 MXU operands (f32 accumulation) vs. pure-f32 reference.
    assert max_err < 2e-2, max_err

    print("KERNEL_OK")
</pallas_src>

<mosaic_0001>
module attributes {stable_mosaic.version = 11 : i64} {
  func.func @_gemm_bias_kernel(%arg0: i32, %arg1: memref<64x128xbf16, #tpu.memory_space<vmem>>, %arg2: memref<128x512xbf16, #tpu.memory_space<vmem>>, %arg3: memref<1x512xf32, #tpu.memory_space<vmem>>, %arg4: memref<64x512xf32, #tpu.memory_space<vmem>>) attributes {dimension_semantics = [#tpu.dimension_semantics<parallel>], iteration_bounds = array<i64: 1>, scalar_prefetch = 0 : i64, scratch_operands = 0 : i64, tpu.core_type = #tpu.core_type<tc>, window_params = [{transform_indices = @transform_0, window_bounds = array<i64: 64, 128>}, {pipeline_mode = #tpu.pipeline_mode<synchronous>, transform_indices = @transform_1, window_bounds = array<i64: 128, 512>}, {pipeline_mode = #tpu.pipeline_mode<synchronous>, transform_indices = @transform_2, window_bounds = array<i64: 1, 512>}, {transform_indices = @transform_3, window_bounds = array<i64: 64, 512>}]} {
    %c0 = arith.constant 0 : index
    %c0_0 = arith.constant 0 : index
    %0 = vector.load %arg1[%c0, %c0_0] : memref<64x128xbf16, #tpu.memory_space<vmem>>, vector<64x128xbf16>
    %c0_1 = arith.constant 0 : index
    %c0_2 = arith.constant 0 : index
    %1 = vector.load %arg2[%c0_1, %c0_2] : memref<128x512xbf16, #tpu.memory_space<vmem>>, vector<128x512xbf16>
    %cst = arith.constant dense<0.000000e+00> : vector<64x512xf32>
    %2 = tpu.matmul %0, %1, %cst {dimension_numbers = #tpu.dot_dimension_numbers<[1], [0], [0], [1], [0, 0, 1, 1], [], []>} : vector<64x128xbf16>, vector<128x512xbf16>, vector<64x512xf32> -> vector<64x512xf32>
    %c0_3 = arith.constant 0 : index
    %c0_4 = arith.constant 0 : index
    %3 = vector.load %arg3[%c0_3, %c0_4] : memref<1x512xf32, #tpu.memory_space<vmem>>, vector<1x512xf32>
    %4 = vector.broadcast %3 : vector<1x512xf32> to vector<64x512xf32>
    %5 = arith.addf %2, %4 : vector<64x512xf32>
    %c0_5 = arith.constant 0 : index
    %c0_6 = arith.constant 0 : index
    %6 = vector.load %arg4[%c0_5, %c0_6] : memref<64x512xf32, #tpu.memory_space<vmem>>, vector<64x512xf32>
    tpu.vector_store %arg4[%c0_5, %c0_6], %5 {strides = array<i32>} : memref<64x512xf32, #tpu.memory_space<vmem>>, vector<64x512xf32>,
    return
  }
  func.func @transform_0(%arg0: i32) -> (i32, i32) {
    %c0_i32 = arith.constant 0 : i32
    %c0_i32_0 = arith.constant 0 : i32
    return %arg0, %c0_i32 : i32, i32
  }
  func.func @transform_1(%arg0: i32) -> (i32, i32) {
    %c0_i32 = arith.constant 0 : i32
    %c0_i32_0 = arith.constant 0 : i32
    %c0_i32_1 = arith.constant 0 : i32
    return %c0_i32, %c0_i32_0 : i32, i32
  }
  func.func @transform_2(%arg0: i32) -> (i32, i32) {
    %c0_i32 = arith.constant 0 : i32
    %c0_i32_0 = arith.constant 0 : i32
    %c0_i32_1 = arith.constant 0 : i32
    return %c0_i32, %c0_i32_0 : i32, i32
  }
  func.func @transform_3(%arg0: i32) -> (i32, i32) {
    %c0_i32 = arith.constant 0 : i32
    %c0_i32_0 = arith.constant 0 : i32
    return %arg0, %c0_i32 : i32, i32
  }
}

module attributes {stable_mosaic.version = 11 : i64} {
  func.func @_lstm_rec_kernel(%arg0: i32, %arg1: i32, %arg2: memref<8x8x512xf32, #tpu.memory_space<vmem>>, %arg3: memref<128x512xbf16, #tpu.memory_space<vmem>>, %arg4: memref<8x8x128xbf16, #tpu.memory_space<vmem>>, %arg5: memref<8x128xf32, #tpu.memory_space<vmem>>, %arg6: memref<8x128xf32, #tpu.memory_space<vmem>>, %arg7: memref<8x8x128xf32, #tpu.memory_space<vmem>>) attributes {dimension_semantics = [#tpu.dimension_semantics<parallel>, #tpu.dimension_semantics<arbitrary>], iteration_bounds = array<i64: 1, 1>, scalar_prefetch = 0 : i64, scratch_operands = 3 : i64, tpu.core_type = #tpu.core_type<tc>, window_params = [{transform_indices = @transform_0, window_bounds = array<i64: 8, 8, 512>}, {pipeline_mode = #tpu.pipeline_mode<synchronous>, transform_indices = @transform_1, window_bounds = array<i64: 128, 512>}, {transform_indices = @transform_2, window_bounds = array<i64: 8, 8, 128>}]} {
    %c0_i32 = arith.constant 0 : i32
    %0 = arith.cmpi eq, %arg1, %c0_i32 : i32
    %1 = arith.extui %0 : i1 to i32
    %c0_i32_0 = arith.constant 0 : i32
    %2 = arith.cmpi ne, %1, %c0_i32_0 : i32
    scf.if %2 {
      %cst_150 = arith.constant 0.000000e+00 : f32
      %326 = vector.broadcast %cst_150 : f32 to vector<8x128xf32>
      %c0_151 = arith.constant 0 : index
      %c0_152 = arith.constant 0 : index
      %327 = vector.load %arg5[%c0_151, %c0_152] : memref<8x128xf32, #tpu.memory_space<vmem>>, vector<8x128xf32>
      tpu.vector_store %arg5[%c0_151, %c0_152], %326 {strides = array<i32>} : memref<8x128xf32, #tpu.memory_space<vmem>>, vector<8x128xf32>,
      %cst_153 = arith.constant 0.000000e+00 : f32
      %328 = vector.broadcast %cst_153 : f32 to vector<8x128xf32>
      %c0_154 = arith.constant 0 : index
      %c0_155 = arith.constant 0 : index
      %329 = vector.load %arg6[%c0_154, %c0_155] : memref<8x128xf32, #tpu.memory_space<vmem>>, vector<8x128xf32>
      tpu.vector_store %arg6[%c0_154, %c0_155], %328 {strides = array<i32>} : memref<8x128xf32, #tpu.memory_space<vmem>>, vector<8x128xf32>,
    } else {
    }
    %c0_i32_1 = arith.constant 0 : i32
    %3 = arith.index_cast %c0_i32_1 : i32 to index
    %c0 = arith.constant 0 : index
    %c0_2 = arith.constant 0 : index
    %4 = vector.load %arg2[%3, %c0, %c0_2] : memref<8x8x512xf32, #tpu.memory_space<vmem>>, vector<1x8x512xf32>
    %5 = vector.shape_cast %4 : vector<1x8x512xf32> to vector<8x512xf32>
    %c0_3 = arith.constant 0 : index
    %c0_4 = arith.constant 0 : index
    %6 = vector.load %arg5[%c0_3, %c0_4] : memref<8x128xf32, #tpu.memory_space<vmem>>, vector<8x128xf32>
    %7 = arith.truncf %6 : vector<8x128xf32> to vector<8x128xbf16>
    %c0_5 = arith.constant 0 : index
    %c0_6 = arith.constant 0 : index
    %8 = vector.load %arg3[%c0_5, %c0_6] : memref<128x512xbf16, #tpu.memory_space<vmem>>, vector<128x512xbf16>
    %cst = arith.constant dense<0.000000e+00> : vector<8x512xf32>
    %9 = tpu.matmul %7, %8, %cst {dimension_numbers = #tpu.dot_dimension_numbers<[1], [0], [0], [1], [0, 0, 1, 1], [], []>} : vector<8x128xbf16>, vector<128x512xbf16>, vector<8x512xf32> -> vector<8x512xf32>
    %10 = arith.addf %5, %9 : vector<8x512xf32>
    %11 = vector.extract_strided_slice %10 {offsets = [0, 0], sizes = [8, 128], strides = [1, 1]} : vector<8x512xf32> to vector<8x128xf32>
    %12 = arith.negf %11 : vector<8x128xf32>
    %13 = math.exp %12 : vector<8x128xf32>
    %cst_7 = arith.constant 1.000000e+00 : f32
    %14 = vector.broadcast %cst_7 : f32 to vector<8x128xf32>
    %15 = arith.addf %14, %13 : vector<8x128xf32>
    %16 = arith.divf %14, %15 : vector<8x128xf32>
    %17 = vector.extract_strided_slice %10 {offsets = [0, 128], sizes = [8, 128], strides = [1, 1]} : vector<8x512xf32> to vector<8x128xf32>
    %18 = arith.negf %17 : vector<8x128xf32>
    %19 = math.exp %18 : vector<8x128xf32>
    %cst_8 = arith.constant 1.000000e+00 : f32
    %20 = vector.broadcast %cst_8 : f32 to vector<8x128xf32>
    %21 = arith.addf %20, %19 : vector<8x128xf32>
    %22 = arith.divf %20, %21 : vector<8x128xf32>
    %23 = vector.extract_strided_slice %10 {offsets = [0, 256], sizes = [8, 128], strides = [1, 1]} : vector<8x512xf32> to vector<8x128xf32>
    %24 = math.tanh %23 : vector<8x128xf32>
    %25 = vector.extract_strided_slice %10 {offsets = [0, 384], sizes = [8, 128], strides = [1, 1]} : vector<8x512xf32> to vector<8x128xf32>
    %26 = arith.negf %25 : vector<8x128xf32>
    %27 = math.exp %26 : vector<8x128xf32>
    %cst_9 = arith.constant 1.000000e+00 : f32
    %28 = vector.broadcast %cst_9 : f32 to vector<8x128xf32>
    %29 = arith.addf %28, %27 : vector<8x128xf32>
    %30 = arith.divf %28, %29 : vector<8x128xf32>
    %c0_10 = arith.constant 0 : index
    %c0_11 = arith.constant 0 : index
    %31 = vector.load %arg6[%c0_10, %c0_11] : memref<8x128xf32, #tpu.memory_space<vmem>>, vector<8x128xf32>
    %32 = arith.mulf %22, %31 : vector<8x128xf32>
    %33 = arith.mulf %16, %24 : vector<8x128xf32>
    %34 = arith.addf %32, %33 : vector<8x128xf32>
    %35 = math.tanh %34 : vector<8x128xf32>
    %36 = arith.mulf %30, %35 : vector<8x128xf32>
    %c0_12 = arith.constant 0 : index
    %c0_13 = arith.constant 0 : index
    %37 = vector.load %arg6[%c0_12, %c0_13] : memref<8x128xf32, #tpu.memory_space<vmem>>, vector<8x128xf32>
    tpu.vector_store %arg6[%c0_12, %c0_13], %34 {strides = array<i32>} : memref<8x128xf32, #tpu.memory_space<vmem>>, vector<8x128xf32>,
    %c0_14 = arith.constant 0 : index
    %c0_15 = arith.constant 0 : index
    %38 = vector.load %arg5[%c0_14, %c0_15] : memref<8x128xf32, #tpu.memory_space<vmem>>, vector<8x128xf32>
    tpu.vector_store %arg5[%c0_14, %c0_15], %36 {strides = array<i32>} : memref<8x128xf32, #tpu.memory_space<vmem>>, vector<8x128xf32>,
    %39 = arith.index_cast %c0_i32_1 : i32 to index
    %c0_16 = arith.constant 0 : index
    %c0_17 = arith.constant 0 : index
    %40 = vector.load %arg7[%39, %c0_16, %c0_17] : memref<8x8x128xf32, #tpu.memory_space<vmem>>, vector<1x8x128xf32>
    %41 = vector.shape_cast %40 : vector<1x8x128xf32> to vector<8x128xf32>
    %42 = vector.shape_cast %36 : vector<8x128xf32> to vector<1x8x128xf32>
    tpu.vector_store %arg7[%39, %c0_16, %c0_17], %42 {strides = array<i32>} : memref<8x8x128xf32, #tpu.memory_space<vmem>>, vector<1x8x128xf32>,
    %c1_i32 = arith.constant 1 : i32
    %43 = arith.index_cast %c1_i32 : i32 to index
    %c0_18 = arith.constant 0 : index
    %c0_19 = arith.constant 0 : index
    %44 = vector.load %arg2[%43, %c0_18, %c0_19] : memref<8x8x512xf32, #tpu.memory_space<vmem>>, vector<1x8x512xf32>
    %45 = vector.shape_cast %44 : vector<1x8x512xf32> to vector<8x512xf32>
    %c0_20 = arith.constant 0 : index
    %c0_21 = arith.constant 0 : index
    %46 = vector.load %arg5[%c0_20, %c0_21] : memref<8x128xf32, #tpu.memory_space<vmem>>, vector<8x128xf32>
    %47 = arith.truncf %46 : vector<8x128xf32> to vector<8x128xbf16>
    %c0_22 = arith.constant 0 : index
    %c0_23 = arith.constant 0 : index
    %48 = vector.load %arg3[%c0_22, %c0_23] : memref<128x512xbf16, #tpu.memory_space<vmem>>, vector<128x512xbf16>
    %cst_24 = arith.constant dense<0.000000e+00> : vector<8x512xf32>
    %49 = tpu.matmul %47, %48, %cst_24 {dimension_numbers = #tpu.dot_dimension_numbers<[1], [0], [0], [1], [0, 0, 1, 1], [], []>} : vector<8x128xbf16>, vector<128x512xbf16>, vector<8x512xf32> -> vector<8x512xf32>
    %50 = arith.addf %45, %49 : vector<8x512xf32>
    %51 = vector.extract_strided_slice %50 {offsets = [0, 0], sizes = [8, 128], strides = [1, 1]} : vector<8x512xf32> to vector<8x128xf32>
    %52 = arith.negf %51 : vector<8x128xf32>
    %53 = math.exp %52 : vector<8x128xf32>
    %cst_25 = arith.constant 1.000000e+00 : f32
    %54 = vector.broadcast %cst_25 : f32 to vector<8x128xf32>
    %55 = arith.addf %54, %53 : vector<8x128xf32>
    %56 = arith.divf %54, %55 : vector<8x128xf32>
    %57 = vector.extract_strided_slice %50 {offsets = [0, 128], sizes = [8, 128], strides = [1, 1]} : vector<8x512xf32> to vector<8x128xf32>
    %58 = arith.negf %57 : vector<8x128xf32>
    %59 = math.exp %58 : vector<8x128xf32>
    %cst_26 = arith.constant 1.000000e+00 : f32
    %60 = vector.broadcast %cst_26 : f32 to vector<8x128xf32>
    %61 = arith.addf %60, %59 : vector<8x128xf32>
    %62 = arith.divf %60, %61 : vector<8x128xf32>
    %63 = vector.extract_strided_slice %50 {offsets = [0, 256], sizes = [8, 128], strides = [1, 1]} : vector<8x512xf32> to vector<8x128xf32>
    %64 = math.tanh %63 : vector<8x128xf32>
    %65 = vector.extract_strided_slice %50 {offsets = [0, 384], sizes = [8, 128], strides = [1, 1]} : vector<8x512xf32> to vector<8x128xf32>
    %66 = arith.negf %65 : vector<8x128xf32>
    %67 = math.exp %66 : vector<8x128xf32>
    %cst_27 = arith.constant 1.000000e+00 : f32
    %68 = vector.broadcast %cst_27 : f32 to vector<8x128xf32>
    %69 = arith.addf %68, %67 : vector<8x128xf32>
    %70 = arith.divf %68, %69 : vector<8x128xf32>
    %c0_28 = arith.constant 0 : index
    %c0_29 = arith.constant 0 : index
    %71 = vector.load %arg6[%c0_28, %c0_29] : memref<8x128xf32, #tpu.memory_space<vmem>>, vector<8x128xf32>
    %72 = arith.mulf %62, %71 : vector<8x128xf32>
    %73 = arith.mulf %56, %64 : vector<8x128xf32>
    %74 = arith.addf %72, %73 : vector<8x128xf32>
    %75 = math.tanh %74 : vector<8x128xf32>
    %76 = arith.mulf %70, %75 : vector<8x128xf32>
    %c0_30 = arith.constant 0 : index
    %c0_31 = arith.constant 0 : index
    %77 = vector.load %arg6[%c0_30, %c0_31] : memref<8x128xf32, #tpu.memory_space<vmem>>, vector<8x128xf32>
    tpu.vector_store %arg6[%c0_30, %c0_31], %74 {strides = array<i32>} : memref<8x128xf32, #tpu.memory_space<vmem>>, vector<8x128xf32>,
    %c0_32 = arith.constant 0 : index
    %c0_33 = arith.constant 0 : index
    %78 = vector.load %arg5[%c0_32, %c0_33] : memref<8x128xf32, #tpu.memory_space<vmem>>, vector<8x128xf32>
    tpu.vector_store %arg5[%c0_32, %c0_33], %76 {strides = array<i32>} : memref<8x128xf32, #tpu.memory_space<vmem>>, vector<8x128xf32>,
    %79 = arith.index_cast %c1_i32 : i32 to index
    %c0_34 = arith.constant 0 : index
    %c0_35 = arith.constant 0 : index
    %80 = vector.load %arg7[%79, %c0_34, %c0_35] : memref<8x8x128xf32, #tpu.memory_space<vmem>>, vector<1x8x128xf32>
    %81 = vector.shape_cast %80 : vector<1x8x128xf32> to vector<8x128xf32>
    %82 = vector.shape_cast %76 : vector<8x128xf32> to vector<1x8x128xf32>
    tpu.vector_store %arg7[%79, %c0_34, %c0_35], %82 {strides = array<i32>} : memref<8x8x128xf32, #tpu.memory_space<vmem>>, vector<1x8x128xf32>,
    %c2_i32 = arith.constant 2 : i32
    %83 = arith.index_cast %c2_i32 : i32 to index
    %c0_36 = arith.constant 0 : index
    %c0_37 = arith.constant 0 : index
    %84 = vector.load %arg2[%83, %c0_36, %c0_37] : memref<8x8x512xf32, #tpu.memory_space<vmem>>, vector<1x8x512xf32>
    %85 = vector.shape_cast %84 : vector<1x8x512xf32> to vector<8x512xf32>
    %c0_38 = arith.constant 0 : index
    %c0_39 = arith.constant 0 : index
    %86 = vector.load %arg5[%c0_38, %c0_39] : memref<8x128xf32, #tpu.memory_space<vmem>>, vector<8x128xf32>
    %87 = arith.truncf %86 : vector<8x128xf32> to vector<8x128xbf16>
    %c0_40 = arith.constant 0 : index
    %c0_41 = arith.constant 0 : index
    %88 = vector.load %arg3[%c0_40, %c0_41] : memref<128x512xbf16, #tpu.memory_space<vmem>>, vector<128x512xbf16>
    %cst_42 = arith.constant dense<0.000000e+00> : vector<8x512xf32>
    %89 = tpu.matmul %87, %88, %cst_42 {dimension_numbers = #tpu.dot_dimension_numbers<[1], [0], [0], [1], [0, 0, 1, 1], [], []>} : vector<8x128xbf16>, vector<128x512xbf16>, vector<8x512xf32> -> vector<8x512xf32>
    %90 = arith.addf %85, %89 : vector<8x512xf32>
    %91 = vector.extract_strided_slice %90 {offsets = [0, 0], sizes = [8, 128], strides = [1, 1]} : vector<8x512xf32> to vector<8x128xf32>
    %92 = arith.negf %91 : vector<8x128xf32>
    %93 = math.exp %92 : vector<8x128xf32>
    %cst_43 = arith.constant 1.000000e+00 : f32
    %94 = vector.broadcast %cst_43 : f32 to vector<8x128xf32>
    %95 = arith.addf %94, %93 : vector<8x128xf32>
    %96 = arith.divf %94, %95 : vector<8x128xf32>
    %97 = vector.extract_strided_slice %90 {offsets = [0, 128], sizes = [8, 128], strides = [1, 1]} : vector<8x512xf32> to vector<8x128xf32>
    %98 = arith.negf %97 : vector<8x128xf32>
    %99 = math.exp %98 : vector<8x128xf32>
    %cst_44 = arith.constant 1.000000e+00 : f32
    %100 = vector.broadcast %cst_44 : f32 to vector<8x128xf32>
    %101 = arith.addf %100, %99 : vector<8x128xf32>
    %102 = arith.divf %100, %101 : vector<8x128xf32>
    %103 = vector.extract_strided_slice %90 {offsets = [0, 256], sizes = [8, 128], strides = [1, 1]} : vector<8x512xf32> to vector<8x128xf32>
    %104 = math.tanh %103 : vector<8x128xf32>
    %105 = vector.extract_strided_slice %90 {offsets = [0, 384], sizes = [8, 128], strides = [1, 1]} : vector<8x512xf32> to vector<8x128xf32>
    %106 = arith.negf %105 : vector<8x128xf32>
    %107 = math.exp %106 : vector<8x128xf32>
    %cst_45 = arith.constant 1.000000e+00 : f32
    %108 = vector.broadcast %cst_45 : f32 to vector<8x128xf32>
    %109 = arith.addf %108, %107 : vector<8x128xf32>
    %110 = arith.divf %108, %109 : vector<8x128xf32>
    %c0_46 = arith.constant 0 : index
    %c0_47 = arith.constant 0 : index
    %111 = vector.load %arg6[%c0_46, %c0_47] : memref<8x128xf32, #tpu.memory_space<vmem>>, vector<8x128xf32>
    %112 = arith.mulf %102, %111 : vector<8x128xf32>
    %113 = arith.mulf %96, %104 : vector<8x128xf32>
    %114 = arith.addf %112, %113 : vector<8x128xf32>
    %115 = math.tanh %114 : vector<8x128xf32>
    %116 = arith.mulf %110, %115 : vector<8x128xf32>
    %c0_48 = arith.constant 0 : index
    %c0_49 = arith.constant 0 : index
    %117 = vector.load %arg6[%c0_48, %c0_49] : memref<8x128xf32, #tpu.memory_space<vmem>>, vector<8x128xf32>
    tpu.vector_store %arg6[%c0_48, %c0_49], %114 {strides = array<i32>} : memref<8x128xf32, #tpu.memory_space<vmem>>, vector<8x128xf32>,
    %c0_50 = arith.constant 0 : index
    %c0_51 = arith.constant 0 : index
    %118 = vector.load %arg5[%c0_50, %c0_51] : memref<8x128xf32, #tpu.memory_space<vmem>>, vector<8x128xf32>
    tpu.vector_store %arg5[%c0_50, %c0_51], %116 {strides = array<i32>} : memref<8x128xf32, #tpu.memory_space<vmem>>, vector<8x128xf32>,
    %119 = arith.index_cast %c2_i32 : i32 to index
    %c0_52 = arith.constant 0 : index
    %c0_53 = arith.constant 0 : index
    %120 = vector.load %arg7[%119, %c0_52, %c0_53] : memref<8x8x128xf32, #tpu.memory_space<vmem>>, vector<1x8x128xf32>
    %121 = vector.shape_cast %120 : vector<1x8x128xf32> to vector<8x128xf32>
    %122 = vector.shape_cast %116 : vector<8x128xf32> to vector<1x8x128xf32>
    tpu.vector_store %arg7[%119, %c0_52, %c0_53], %122 {strides = array<i32>} : memref<8x8x128xf32, #tpu.memory_space<vmem>>, vector<1x8x128xf32>,
    %c3_i32 = arith.constant 3 : i32
    %123 = arith.index_cast %c3_i32 : i32 to index
    %c0_54 = arith.constant 0 : index
    %c0_55 = arith.constant 0 : index
    %124 = vector.load %arg2[%123, %c0_54, %c0_55] : memref<8x8x512xf32, #tpu.memory_space<vmem>>, vector<1x8x512xf32>
    %125 = vector.shape_cast %124 : vector<1x8x512xf32> to vector<8x512xf32>
    %c0_56 = arith.constant 0 : index
    %c0_57 = arith.constant 0 : index
    %126 = vector.load %arg5[%c0_56, %c0_57] : memref<8x128xf32, #tpu.memory_space<vmem>>, vector<8x128xf32>
    %127 = arith.truncf %126 : vector<8x128xf32> to vector<8x128xbf16>
    %c0_58 = arith.constant 0 : index
    %c0_59 = arith.constant 0 : index
    %128 = vector.load %arg3[%c0_58, %c0_59] : memref<128x512xbf16, #tpu.memory_space<vmem>>, vector<128x512xbf16>
    %cst_60 = arith.constant dense<0.000000e+00> : vector<8x512xf32>
    %129 = tpu.matmul %127, %128, %cst_60 {dimension_numbers = #tpu.dot_dimension_numbers<[1], [0], [0], [1], [0, 0, 1, 1], [], []>} : vector<8x128xbf16>, vector<128x512xbf16>, vector<8x512xf32> -> vector<8x512xf32>
    %130 = arith.addf %125, %129 : vector<8x512xf32>
    %131 = vector.extract_strided_slice %130 {offsets = [0, 0], sizes = [8, 128], strides = [1, 1]} : vector<8x512xf32> to vector<8x128xf32>
    %132 = arith.negf %131 : vector<8x128xf32>
    %133 = math.exp %132 : vector<8x128xf32>
    %cst_61 = arith.constant 1.000000e+00 : f32
    %134 = vector.broadcast %cst_61 : f32 to vector<8x128xf32>
    %135 = arith.addf %134, %133 : vector<8x128xf32>
    %136 = arith.divf %134, %135 : vector<8x128xf32>
    %137 = vector.extract_strided_slice %130 {offsets = [0, 128], sizes = [8, 128], strides = [1, 1]} : vector<8x512xf32> to vector<8x128xf32>
    %138 = arith.negf %137 : vector<8x128xf32>
    %139 = math.exp %138 : vector<8x128xf32>
    %cst_62 = arith.constant 1.000000e+00 : f32
    %140 = vector.broadcast %cst_62 : f32 to vector<8x128xf32>
    %141 = arith.addf %140, %139 : vector<8x128xf32>
    %142 = arith.divf %140, %141 : vector<8x128xf32>
    %143 = vector.extract_strided_slice %130 {offsets = [0, 256], sizes = [8, 128], strides = [1, 1]} : vector<8x512xf32> to vector<8x128xf32>
    %144 = math.tanh %143 : vector<8x128xf32>
    %145 = vector.extract_strided_slice %130 {offsets = [0, 384], sizes = [8, 128], strides = [1, 1]} : vector<8x512xf32> to vector<8x128xf32>
    %146 = arith.negf %145 : vector<8x128xf32>
    %147 = math.exp %146 : vector<8x128xf32>
    %cst_63 = arith.constant 1.000000e+00 : f32
    %148 = vector.broadcast %cst_63 : f32 to vector<8x128xf32>
    %149 = arith.addf %148, %147 : vector<8x128xf32>
    %150 = arith.divf %148, %149 : vector<8x128xf32>
    %c0_64 = arith.constant 0 : index
    %c0_65 = arith.constant 0 : index
    %151 = vector.load %arg6[%c0_64, %c0_65] : memref<8x128xf32, #tpu.memory_space<vmem>>, vector<8x128xf32>
    %152 = arith.mulf %142, %151 : vector<8x128xf32>
    %153 = arith.mulf %136, %144 : vector<8x128xf32>
    %154 = arith.addf %152, %153 : vector<8x128xf32>
    %155 = math.tanh %154 : vector<8x128xf32>
    %156 = arith.mulf %150, %155 : vector<8x128xf32>
    %c0_66 = arith.constant 0 : index
    %c0_67 = arith.constant 0 : index
    %157 = vector.load %arg6[%c0_66, %c0_67] : memref<8x128xf32, #tpu.memory_space<vmem>>, vector<8x128xf32>
    tpu.vector_store %arg6[%c0_66, %c0_67], %154 {strides = array<i32>} : memref<8x128xf32, #tpu.memory_space<vmem>>, vector<8x128xf32>,
    %c0_68 = arith.constant 0 : index
    %c0_69 = arith.constant 0 : index
    %158 = vector.load %arg5[%c0_68, %c0_69] : memref<8x128xf32, #tpu.memory_space<vmem>>, vector<8x128xf32>
    tpu.vector_store %arg5[%c0_68, %c0_69], %156 {strides = array<i32>} : memref<8x128xf32, #tpu.memory_space<vmem>>, vector<8x128xf32>,
    %159 = arith.index_cast %c3_i32 : i32 to index
    %c0_70 = arith.constant 0 : index
    %c0_71 = arith.constant 0 : index
    %160 = vector.load %arg7[%159, %c0_70, %c0_71] : memref<8x8x128xf32, #tpu.memory_space<vmem>>, vector<1x8x128xf32>
    %161 = vector.shape_cast %160 : vector<1x8x128xf32> to vector<8x128xf32>
    %162 = vector.shape_cast %156 : vector<8x128xf32> to vector<1x8x128xf32>
    tpu.vector_store %arg7[%159, %c0_70, %c0_71], %162 {strides = array<i32>} : memref<8x8x128xf32, #tpu.memory_space<vmem>>, vector<1x8x128xf32>,
    %c4_i32 = arith.constant 4 : i32
    %163 = arith.index_cast %c4_i32 : i32 to index
    %c0_72 = arith.constant 0 : index
    %c0_73 = arith.constant 0 : index
    %164 = vector.load %arg2[%163, %c0_72, %c0_73] : memref<8x8x512xf32, #tpu.memory_space<vmem>>, vector<1x8x512xf32>
    %165 = vector.shape_cast %164 : vector<1x8x512xf32> to vector<8x512xf32>
    %c0_74 = arith.constant 0 : index
    %c0_75 = arith.constant 0 : index
    %166 = vector.load %arg5[%c0_74, %c0_75] : memref<8x128xf32, #tpu.memory_space<vmem>>, vector<8x128xf32>
    %167 = arith.truncf %166 : vector<8x128xf32> to vector<8x128xbf16>
    %c0_76 = arith.constant 0 : index
    %c0_77 = arith.constant 0 : index
    %168 = vector.load %arg3[%c0_76, %c0_77] : memref<128x512xbf16, #tpu.memory_space<vmem>>, vector<128x512xbf16>
    %cst_78 = arith.constant dense<0.000000e+00> : vector<8x512xf32>
    %169 = tpu.matmul %167, %168, %cst_78 {dimension_numbers = #tpu.dot_dimension_numbers<[1], [0], [0], [1], [0, 0, 1, 1], [], []>} : vector<8x128xbf16>, vector<128x512xbf16>, vector<8x512xf32> -> vector<8x512xf32>
    %170 = arith.addf %165, %169 : vector<8x512xf32>
    %171 = vector.extract_strided_slice %170 {offsets = [0, 0], sizes = [8, 128], strides = [1, 1]} : vector<8x512xf32> to vector<8x128xf32>
    %172 = arith.negf %171 : vector<8x128xf32>
    %173 = math.exp %172 : vector<8x128xf32>
    %cst_79 = arith.constant 1.000000e+00 : f32
    %174 = vector.broadcast %cst_79 : f32 to vector<8x128xf32>
    %175 = arith.addf %174, %173 : vector<8x128xf32>
    %176 = arith.divf %174, %175 : vector<8x128xf32>
    %177 = vector.extract_strided_slice %170 {offsets = [0, 128], sizes = [8, 128], strides = [1, 1]} : vector<8x512xf32> to vector<8x128xf32>
    %178 = arith.negf %177 : vector<8x128xf32>
    %179 = math.exp %178 : vector<8x128xf32>
    %cst_80 = arith.constant 1.000000e+00 : f32
    %180 = vector.broadcast %cst_80 : f32 to vector<8x128xf32>
    %181 = arith.addf %180, %179 : vector<8x128xf32>
    %182 = arith.divf %180, %181 : vector<8x128xf32>
    %183 = vector.extract_strided_slice %170 {offsets = [0, 256], sizes = [8, 128], strides = [1, 1]} : vector<8x512xf32> to vector<8x128xf32>
    %184 = math.tanh %183 : vector<8x128xf32>
    %185 = vector.extract_strided_slice %170 {offsets = [0, 384], sizes = [8, 128], strides = [1, 1]} : vector<8x512xf32> to vector<8x128xf32>
    %186 = arith.negf %185 : vector<8x128xf32>
    %187 = math.exp %186 : vector<8x128xf32>
    %cst_81 = arith.constant 1.000000e+00 : f32
    %188 = vector.broadcast %cst_81 : f32 to vector<8x128xf32>
    %189 = arith.addf %188, %187 : vector<8x128xf32>
    %190 = arith.divf %188, %189 : vector<8x128xf32>
    %c0_82 = arith.constant 0 : index
    %c0_83 = arith.constant 0 : index
    %191 = vector.load %arg6[%c0_82, %c0_83] : memref<8x128xf32, #tpu.memory_space<vmem>>, vector<8x128xf32>
    %192 = arith.mulf %182, %191 : vector<8x128xf32>
    %193 = arith.mulf %176, %184 : vector<8x128xf32>
    %194 = arith.addf %192, %193 : vector<8x128xf32>
    %195 = math.tanh %194 : vector<8x128xf32>
    %196 = arith.mulf %190, %195 : vector<8x128xf32>
    %c0_84 = arith.constant 0 : index
    %c0_85 = arith.constant 0 : index
    %197 = vector.load %arg6[%c0_84, %c0_85] : memref<8x128xf32, #tpu.memory_space<vmem>>, vector<8x128xf32>
    tpu.vector_store %arg6[%c0_84, %c0_85], %194 {strides = array<i32>} : memref<8x128xf32, #tpu.memory_space<vmem>>, vector<8x128xf32>,
    %c0_86 = arith.constant 0 : index
    %c0_87 = arith.constant 0 : index
    %198 = vector.load %arg5[%c0_86, %c0_87] : memref<8x128xf32, #tpu.memory_space<vmem>>, vector<8x128xf32>
    tpu.vector_store %arg5[%c0_86, %c0_87], %196 {strides = array<i32>} : memref<8x128xf32, #tpu.memory_space<vmem>>, vector<8x128xf32>,
    %199 = arith.index_cast %c4_i32 : i32 to index
    %c0_88 = arith.constant 0 : index
    %c0_89 = arith.constant 0 : index
    %200 = vector.load %arg7[%199, %c0_88, %c0_89] : memref<8x8x128xf32, #tpu.memory_space<vmem>>, vector<1x8x128xf32>
    %201 = vector.shape_cast %200 : vector<1x8x128xf32> to vector<8x128xf32>
    %202 = vector.shape_cast %196 : vector<8x128xf32> to vector<1x8x128xf32>
    tpu.vector_store %arg7[%199, %c0_88, %c0_89], %202 {strides = array<i32>} : memref<8x8x128xf32, #tpu.memory_space<vmem>>, vector<1x8x128xf32>,
    %c5_i32 = arith.constant 5 : i32
    %203 = arith.index_cast %c5_i32 : i32 to index
    %c0_90 = arith.constant 0 : index
    %c0_91 = arith.constant 0 : index
    %204 = vector.load %arg2[%203, %c0_90, %c0_91] : memref<8x8x512xf32, #tpu.memory_space<vmem>>, vector<1x8x512xf32>
    %205 = vector.shape_cast %204 : vector<1x8x512xf32> to vector<8x512xf32>
    %c0_92 = arith.constant 0 : index
    %c0_93 = arith.constant 0 : index
    %206 = vector.load %arg5[%c0_92, %c0_93] : memref<8x128xf32, #tpu.memory_space<vmem>>, vector<8x128xf32>
    %207 = arith.truncf %206 : vector<8x128xf32> to vector<8x128xbf16>
    %c0_94 = arith.constant 0 : index
    %c0_95 = arith.constant 0 : index
    %208 = vector.load %arg3[%c0_94, %c0_95] : memref<128x512xbf16, #tpu.memory_space<vmem>>, vector<128x512xbf16>
    %cst_96 = arith.constant dense<0.000000e+00> : vector<8x512xf32>
    %209 = tpu.matmul %207, %208, %cst_96 {dimension_numbers = #tpu.dot_dimension_numbers<[1], [0], [0], [1], [0, 0, 1, 1], [], []>} : vector<8x128xbf16>, vector<128x512xbf16>, vector<8x512xf32> -> vector<8x512xf32>
    %210 = arith.addf %205, %209 : vector<8x512xf32>
    %211 = vector.extract_strided_slice %210 {offsets = [0, 0], sizes = [8, 128], strides = [1, 1]} : vector<8x512xf32> to vector<8x128xf32>
    %212 = arith.negf %211 : vector<8x128xf32>
    %213 = math.exp %212 : vector<8x128xf32>
    %cst_97 = arith.constant 1.000000e+00 : f32
    %214 = vector.broadcast %cst_97 : f32 to vector<8x128xf32>
    %215 = arith.addf %214, %213 : vector<8x128xf32>
    %216 = arith.divf %214, %215 : vector<8x128xf32>
    %217 = vector.extract_strided_slice %210 {offsets = [0, 128], sizes = [8, 128], strides = [1, 1]} : vector<8x512xf32> to vector<8x128xf32>
    %218 = arith.negf %217 : vector<8x128xf32>
    %219 = math.exp %218 : vector<8x128xf32>
    %cst_98 = arith.constant 1.000000e+00 : f32
    %220 = vector.broadcast %cst_98 : f32 to vector<8x128xf32>
    %221 = arith.addf %220, %219 : vector<8x128xf32>
    %222 = arith.divf %220, %221 : vector<8x128xf32>
    %223 = vector.extract_strided_slice %210 {offsets = [0, 256], sizes = [8, 128], strides = [1, 1]} : vector<8x512xf32> to vector<8x128xf32>
    %224 = math.tanh %223 : vector<8x128xf32>
    %225 = vector.extract_strided_slice %210 {offsets = [0, 384], sizes = [8, 128], strides = [1, 1]} : vector<8x512xf32> to vector<8x128xf32>
    %226 = arith.negf %225 : vector<8x128xf32>
    %227 = math.exp %226 : vector<8x128xf32>
    %cst_99 = arith.constant 1.000000e+00 : f32
    %228 = vector.broadcast %cst_99 : f32 to vector<8x128xf32>
    %229 = arith.addf %228, %227 : vector<8x128xf32>
    %230 = arith.divf %228, %229 : vector<8x128xf32>
    %c0_100 = arith.constant 0 : index
    %c0_101 = arith.constant 0 : index
    %231 = vector.load %arg6[%c0_100, %c0_101] : memref<8x128xf32, #tpu.memory_space<vmem>>, vector<8x128xf32>
    %232 = arith.mulf %222, %231 : vector<8x128xf32>
    %233 = arith.mulf %216, %224 : vector<8x128xf32>
    %234 = arith.addf %232, %233 : vector<8x128xf32>
    %235 = math.tanh %234 : vector<8x128xf32>
    %236 = arith.mulf %230, %235 : vector<8x128xf32>
    %c0_102 = arith.constant 0 : index
    %c0_103 = arith.constant 0 : index
    %237 = vector.load %arg6[%c0_102, %c0_103] : memref<8x128xf32, #tpu.memory_space<vmem>>, vector<8x128xf32>
    tpu.vector_store %arg6[%c0_102, %c0_103], %234 {strides = array<i32>} : memref<8x128xf32, #tpu.memory_space<vmem>>, vector<8x128xf32>,
    %c0_104 = arith.constant 0 : index
    %c0_105 = arith.constant 0 : index
    %238 = vector.load %arg5[%c0_104, %c0_105] : memref<8x128xf32, #tpu.memory_space<vmem>>, vector<8x128xf32>
    tpu.vector_store %arg5[%c0_104, %c0_105], %236 {strides = array<i32>} : memref<8x128xf32, #tpu.memory_space<vmem>>, vector<8x128xf32>,
    %239 = arith.index_cast %c5_i32 : i32 to index
    %c0_106 = arith.constant 0 : index
    %c0_107 = arith.constant 0 : index
    %240 = vector.load %arg7[%239, %c0_106, %c0_107] : memref<8x8x128xf32, #tpu.memory_space<vmem>>, vector<1x8x128xf32>
    %241 = vector.shape_cast %240 : vector<1x8x128xf32> to vector<8x128xf32>
    %242 = vector.shape_cast %236 : vector<8x128xf32> to vector<1x8x128xf32>
    tpu.vector_store %arg7[%239, %c0_106, %c0_107], %242 {strides = array<i32>} : memref<8x8x128xf32, #tpu.memory_space<vmem>>, vector<1x8x128xf32>,
    %c6_i32 = arith.constant 6 : i32
    %243 = arith.index_cast %c6_i32 : i32 to index
    %c0_108 = arith.constant 0 : index
    %c0_109 = arith.constant 0 : index
    %244 = vector.load %arg2[%243, %c0_108, %c0_109] : memref<8x8x512xf32, #tpu.memory_space<vmem>>, vector<1x8x512xf32>
    %245 = vector.shape_cast %244 : vector<1x8x512xf32> to vector<8x512xf32>
    %c0_110 = arith.constant 0 : index
    %c0_111 = arith.constant 0 : index
    %246 = vector.load %arg5[%c0_110, %c0_111] : memref<8x128xf32, #tpu.memory_space<vmem>>, vector<8x128xf32>
    %247 = arith.truncf %246 : vector<8x128xf32> to vector<8x128xbf16>
    %c0_112 = arith.constant 0 : index
    %c0_113 = arith.constant 0 : index
    %248 = vector.load %arg3[%c0_112, %c0_113] : memref<128x512xbf16, #tpu.memory_space<vmem>>, vector<128x512xbf16>
    %cst_114 = arith.constant dense<0.000000e+00> : vector<8x512xf32>
    %249 = tpu.matmul %247, %248, %cst_114 {dimension_numbers = #tpu.dot_dimension_numbers<[1], [0], [0], [1], [0, 0, 1, 1], [], []>} : vector<8x128xbf16>, vector<128x512xbf16>, vector<8x512xf32> -> vector<8x512xf32>
    %250 = arith.addf %245, %249 : vector<8x512xf32>
    %251 = vector.extract_strided_slice %250 {offsets = [0, 0], sizes = [8, 128], strides = [1, 1]} : vector<8x512xf32> to vector<8x128xf32>
    %252 = arith.negf %251 : vector<8x128xf32>
    %253 = math.exp %252 : vector<8x128xf32>
    %cst_115 = arith.constant 1.000000e+00 : f32
    %254 = vector.broadcast %cst_115 : f32 to vector<8x128xf32>
    %255 = arith.addf %254, %253 : vector<8x128xf32>
    %256 = arith.divf %254, %255 : vector<8x128xf32>
    %257 = vector.extract_strided_slice %250 {offsets = [0, 128], sizes = [8, 128], strides = [1, 1]} : vector<8x512xf32> to vector<8x128xf32>
    %258 = arith.negf %257 : vector<8x128xf32>
    %259 = math.exp %258 : vector<8x128xf32>
    %cst_116 = arith.constant 1.000000e+00 : f32
    %260 = vector.broadcast %cst_116 : f32 to vector<8x128xf32>
    %261 = arith.addf %260, %259 : vector<8x128xf32>
    %262 = arith.divf %260, %261 : vector<8x128xf32>
    %263 = vector.extract_strided_slice %250 {offsets = [0, 256], sizes = [8, 128], strides = [1, 1]} : vector<8x512xf32> to vector<8x128xf32>
    %264 = math.tanh %263 : vector<8x128xf32>
    %265 = vector.extract_strided_slice %250 {offsets = [0, 384], sizes = [8, 128], strides = [1, 1]} : vector<8x512xf32> to vector<8x128xf32>
    %266 = arith.negf %265 : vector<8x128xf32>
    %267 = math.exp %266 : vector<8x128xf32>
    %cst_117 = arith.constant 1.000000e+00 : f32
    %268 = vector.broadcast %cst_117 : f32 to vector<8x128xf32>
    %269 = arith.addf %268, %267 : vector<8x128xf32>
    %270 = arith.divf %268, %269 : vector<8x128xf32>
    %c0_118 = arith.constant 0 : index
    %c0_119 = arith.constant 0 : index
    %271 = vector.load %arg6[%c0_118, %c0_119] : memref<8x128xf32, #tpu.memory_space<vmem>>, vector<8x128xf32>
    %272 = arith.mulf %262, %271 : vector<8x128xf32>
    %273 = arith.mulf %256, %264 : vector<8x128xf32>
    %274 = arith.addf %272, %273 : vector<8x128xf32>
    %275 = math.tanh %274 : vector<8x128xf32>
    %276 = arith.mulf %270, %275 : vector<8x128xf32>
    %c0_120 = arith.constant 0 : index
    %c0_121 = arith.constant 0 : index
    %277 = vector.load %arg6[%c0_120, %c0_121] : memref<8x128xf32, #tpu.memory_space<vmem>>, vector<8x128xf32>
    tpu.vector_store %arg6[%c0_120, %c0_121], %274 {strides = array<i32>} : memref<8x128xf32, #tpu.memory_space<vmem>>, vector<8x128xf32>,
    %c0_122 = arith.constant 0 : index
    %c0_123 = arith.constant 0 : index
    %278 = vector.load %arg5[%c0_122, %c0_123] : memref<8x128xf32, #tpu.memory_space<vmem>>, vector<8x128xf32>
    tpu.vector_store %arg5[%c0_122, %c0_123], %276 {strides = array<i32>} : memref<8x128xf32, #tpu.memory_space<vmem>>, vector<8x128xf32>,
    %279 = arith.index_cast %c6_i32 : i32 to index
    %c0_124 = arith.constant 0 : index
    %c0_125 = arith.constant 0 : index
    %280 = vector.load %arg7[%279, %c0_124, %c0_125] : memref<8x8x128xf32, #tpu.memory_space<vmem>>, vector<1x8x128xf32>
    %281 = vector.shape_cast %280 : vector<1x8x128xf32> to vector<8x128xf32>
    %282 = vector.shape_cast %276 : vector<8x128xf32> to vector<1x8x128xf32>
    tpu.vector_store %arg7[%279, %c0_124, %c0_125], %282 {strides = array<i32>} : memref<8x8x128xf32, #tpu.memory_space<vmem>>, vector<1x8x128xf32>,
    %c7_i32 = arith.constant 7 : i32
    %283 = arith.index_cast %c7_i32 : i32 to index
    %c0_126 = arith.constant 0 : index
    %c0_127 = arith.constant 0 : index
    %284 = vector.load %arg2[%283, %c0_126, %c0_127] : memref<8x8x512xf32, #tpu.memory_space<vmem>>, vector<1x8x512xf32>
    %285 = vector.shape_cast %284 : vector<1x8x512xf32> to vector<8x512xf32>
    %c0_128 = arith.constant 0 : index
    %c0_129 = arith.constant 0 : index
    %286 = vector.load %arg5[%c0_128, %c0_129] : memref<8x128xf32, #tpu.memory_space<vmem>>, vector<8x128xf32>
    %287 = arith.truncf %286 : vector<8x128xf32> to vector<8x128xbf16>
    %c0_130 = arith.constant 0 : index
    %c0_131 = arith.constant 0 : index
    %288 = vector.load %arg3[%c0_130, %c0_131] : memref<128x512xbf16, #tpu.memory_space<vmem>>, vector<128x512xbf16>
    %cst_132 = arith.constant dense<0.000000e+00> : vector<8x512xf32>
    %289 = tpu.matmul %287, %288, %cst_132 {dimension_numbers = #tpu.dot_dimension_numbers<[1], [0], [0], [1], [0, 0, 1, 1], [], []>} : vector<8x128xbf16>, vector<128x512xbf16>, vector<8x512xf32> -> vector<8x512xf32>
    %290 = arith.addf %285, %289 : vector<8x512xf32>
    %291 = vector.extract_strided_slice %290 {offsets = [0, 0], sizes = [8, 128], strides = [1, 1]} : vector<8x512xf32> to vector<8x128xf32>
    %292 = arith.negf %291 : vector<8x128xf32>
    %293 = math.exp %292 : vector<8x128xf32>
    %cst_133 = arith.constant 1.000000e+00 : f32
    %294 = vector.broadcast %cst_133 : f32 to vector<8x128xf32>
    %295 = arith.addf %294, %293 : vector<8x128xf32>
    %296 = arith.divf %294, %295 : vector<8x128xf32>
    %297 = vector.extract_strided_slice %290 {offsets = [0, 128], sizes = [8, 128], strides = [1, 1]} : vector<8x512xf32> to vector<8x128xf32>
    %298 = arith.negf %297 : vector<8x128xf32>
    %299 = math.exp %298 : vector<8x128xf32>
    %cst_134 = arith.constant 1.000000e+00 : f32
    %300 = vector.broadcast %cst_134 : f32 to vector<8x128xf32>
    %301 = arith.addf %300, %299 : vector<8x128xf32>
    %302 = arith.divf %300, %301 : vector<8x128xf32>
    %303 = vector.extract_strided_slice %290 {offsets = [0, 256], sizes = [8, 128], strides = [1, 1]} : vector<8x512xf32> to vector<8x128xf32>
    %304 = math.tanh %303 : vector<8x128xf32>
    %305 = vector.extract_strided_slice %290 {offsets = [0, 384], sizes = [8, 128], strides = [1, 1]} : vector<8x512xf32> to vector<8x128xf32>
    %306 = arith.negf %305 : vector<8x128xf32>
    %307 = math.exp %306 : vector<8x128xf32>
    %cst_135 = arith.constant 1.000000e+00 : f32
    %308 = vector.broadcast %cst_135 : f32 to vector<8x128xf32>
    %309 = arith.addf %308, %307 : vector<8x128xf32>
    %310 = arith.divf %308, %309 : vector<8x128xf32>
    %c0_136 = arith.constant 0 : index
    %c0_137 = arith.constant 0 : index
    %311 = vector.load %arg6[%c0_136, %c0_137] : memref<8x128xf32, #tpu.memory_space<vmem>>, vector<8x128xf32>
    %312 = arith.mulf %302, %311 : vector<8x128xf32>
    %313 = arith.mulf %296, %304 : vector<8x128xf32>
    %314 = arith.addf %312, %313 : vector<8x128xf32>
    %315 = math.tanh %314 : vector<8x128xf32>
    %316 = arith.mulf %310, %315 : vector<8x128xf32>
    %c0_138 = arith.constant 0 : index
    %c0_139 = arith.constant 0 : index
    %317 = vector.load %arg6[%c0_138, %c0_139] : memref<8x128xf32, #tpu.memory_space<vmem>>, vector<8x128xf32>
    tpu.vector_store %arg6[%c0_138, %c0_139], %314 {strides = array<i32>} : memref<8x128xf32, #tpu.memory_space<vmem>>, vector<8x128xf32>,
    %c0_140 = arith.constant 0 : index
    %c0_141 = arith.constant 0 : index
    %318 = vector.load %arg5[%c0_140, %c0_141] : memref<8x128xf32, #tpu.memory_space<vmem>>, vector<8x128xf32>
    tpu.vector_store %arg5[%c0_140, %c0_141], %316 {strides = array<i32>} : memref<8x128xf32, #tpu.memory_space<vmem>>, vector<8x128xf32>,
    %319 = arith.index_cast %c7_i32 : i32 to index
    %c0_142 = arith.constant 0 : index
    %c0_143 = arith.constant 0 : index
    %320 = vector.load %arg7[%319, %c0_142, %c0_143] : memref<8x8x128xf32, #tpu.memory_space<vmem>>, vector<1x8x128xf32>
    %321 = vector.shape_cast %320 : vector<1x8x128xf32> to vector<8x128xf32>
    %322 = vector.shape_cast %316 : vector<8x128xf32> to vector<1x8x128xf32>
    tpu.vector_store %arg7[%319, %c0_142, %c0_143], %322 {strides = array<i32>} : memref<8x8x128xf32, #tpu.memory_space<vmem>>, vector<1x8x128xf32>,
    %c8_i32 = arith.constant 8 : i32
    %c0_144 = arith.constant 0 : index
    %c0_145 = arith.constant 0 : index
    %c0_146 = arith.constant 0 : index
    %323 = vector.load %arg7[%c0_144, %c0_145, %c0_146] : memref<8x8x128xf32, #tpu.memory_space<vmem>>, vector<8x8x128xf32>
    %324 = arith.truncf %323 : vector<8x8x128xf32> to vector<8x8x128xbf16>
    %c0_147 = arith.constant 0 : index
    %c0_148 = arith.constant 0 : index
    %c0_149 = arith.constant 0 : index
    %325 = vector.load %arg4[%c0_147, %c0_148, %c0_149] : memref<8x8x128xbf16, #tpu.memory_space<vmem>>, vector<8x8x128xbf16>
    tpu.vector_store %arg4[%c0_147, %c0_148, %c0_149], %324 {strides = array<i32>} : memref<8x8x128xbf16, #tpu.memory_space<vmem>>, vector<8x8x128xbf16>,
    return
  }
  func.func @transform_0(%arg0: i32, %arg1: i32) -> (i32, i32, i32) {
    %c0_i32 = arith.constant 0 : i32
    %c0_i32_0 = arith.constant 0 : i32
    return %arg1, %arg0, %c0_i32 : i32, i32, i32
  }
  func.func @transform_1(%arg0: i32, %arg1: i32) -> (i32, i32) {
    %c0_i32 = arith.constant 0 : i32
    %c0_i32_0 = arith.constant 0 : i32
    %c0_i32_1 = arith.constant 0 : i32
    return %c0_i32, %c0_i32_0 : i32, i32
  }
  func.func @transform_2(%arg0: i32, %arg1: i32) -> (i32, i32, i32) {
    %c0_i32 = arith.constant 0 : i32
    %c0_i32_0 = arith.constant 0 : i32
    return %arg1, %arg0, %c0_i32 : i32, i32, i32
  }
}

module attributes {stable_mosaic.version = 11 : i64} {
  func.func @_lstm_rec_fc_kernel(%arg0: i32, %arg1: i32, %arg2: memref<8x8x512xf32, #tpu.memory_space<vmem>>, %arg3: memref<128x512xbf16, #tpu.memory_space<vmem>>, %arg4: memref<128x128xbf16, #tpu.memory_space<vmem>>, %arg5: memref<1x128xf32, #tpu.memory_space<vmem>>, %arg6: memref<8x8x128xf32, #tpu.memory_space<vmem>>, %arg7: memref<8x128xf32, #tpu.memory_space<vmem>>, %arg8: memref<8x128xf32, #tpu.memory_space<vmem>>, %arg9: memref<8x8x128xf32, #tpu.memory_space<vmem>>) attributes {dimension_semantics = [#tpu.dimension_semantics<parallel>, #tpu.dimension_semantics<arbitrary>], iteration_bounds = array<i64: 1, 1>, scalar_prefetch = 0 : i64, scratch_operands = 3 : i64, tpu.core_type = #tpu.core_type<tc>, window_params = [{transform_indices = @transform_0, window_bounds = array<i64: 8, 8, 512>}, {pipeline_mode = #tpu.pipeline_mode<synchronous>, transform_indices = @transform_1, window_bounds = array<i64: 128, 512>}, {pipeline_mode = #tpu.pipeline_mode<synchronous>, transform_indices = @transform_2, window_bounds = array<i64: 128, 128>}, {pipeline_mode = #tpu.pipeline_mode<synchronous>, transform_indices = @transform_3, window_bounds = array<i64: 1, 128>}, {transform_indices = @transform_4, window_bounds = array<i64: 8, 8, 128>}]} {
    %c0_i32 = arith.constant 0 : i32
    %0 = arith.cmpi eq, %arg1, %c0_i32 : i32
    %1 = arith.extui %0 : i1 to i32
    %c0_i32_0 = arith.constant 0 : i32
    %2 = arith.cmpi ne, %1, %c0_i32_0 : i32
    scf.if %2 {
      %cst_155 = arith.constant 0.000000e+00 : f32
      %333 = vector.broadcast %cst_155 : f32 to vector<8x128xf32>
      %c0_156 = arith.constant 0 : index
      %c0_157 = arith.constant 0 : index
      %334 = vector.load %arg7[%c0_156, %c0_157] : memref<8x128xf32, #tpu.memory_space<vmem>>, vector<8x128xf32>
      tpu.vector_store %arg7[%c0_156, %c0_157], %333 {strides = array<i32>} : memref<8x128xf32, #tpu.memory_space<vmem>>, vector<8x128xf32>,
      %cst_158 = arith.constant 0.000000e+00 : f32
      %335 = vector.broadcast %cst_158 : f32 to vector<8x128xf32>
      %c0_159 = arith.constant 0 : index
      %c0_160 = arith.constant 0 : index
      %336 = vector.load %arg8[%c0_159, %c0_160] : memref<8x128xf32, #tpu.memory_space<vmem>>, vector<8x128xf32>
      tpu.vector_store %arg8[%c0_159, %c0_160], %335 {strides = array<i32>} : memref<8x128xf32, #tpu.memory_space<vmem>>, vector<8x128xf32>,
    } else {
    }
    %c0_i32_1 = arith.constant 0 : i32
    %3 = arith.index_cast %c0_i32_1 : i32 to index
    %c0 = arith.constant 0 : index
    %c0_2 = arith.constant 0 : index
    %4 = vector.load %arg2[%3, %c0, %c0_2] : memref<8x8x512xf32, #tpu.memory_space<vmem>>, vector<1x8x512xf32>
    %5 = vector.shape_cast %4 : vector<1x8x512xf32> to vector<8x512xf32>
    %c0_3 = arith.constant 0 : index
    %c0_4 = arith.constant 0 : index
    %6 = vector.load %arg7[%c0_3, %c0_4] : memref<8x128xf32, #tpu.memory_space<vmem>>, vector<8x128xf32>
    %7 = arith.truncf %6 : vector<8x128xf32> to vector<8x128xbf16>
    %c0_5 = arith.constant 0 : index
    %c0_6 = arith.constant 0 : index
    %8 = vector.load %arg3[%c0_5, %c0_6] : memref<128x512xbf16, #tpu.memory_space<vmem>>, vector<128x512xbf16>
    %cst = arith.constant dense<0.000000e+00> : vector<8x512xf32>
    %9 = tpu.matmul %7, %8, %cst {dimension_numbers = #tpu.dot_dimension_numbers<[1], [0], [0], [1], [0, 0, 1, 1], [], []>} : vector<8x128xbf16>, vector<128x512xbf16>, vector<8x512xf32> -> vector<8x512xf32>
    %10 = arith.addf %5, %9 : vector<8x512xf32>
    %11 = vector.extract_strided_slice %10 {offsets = [0, 0], sizes = [8, 128], strides = [1, 1]} : vector<8x512xf32> to vector<8x128xf32>
    %12 = arith.negf %11 : vector<8x128xf32>
    %13 = math.exp %12 : vector<8x128xf32>
    %cst_7 = arith.constant 1.000000e+00 : f32
    %14 = vector.broadcast %cst_7 : f32 to vector<8x128xf32>
    %15 = arith.addf %14, %13 : vector<8x128xf32>
    %16 = arith.divf %14, %15 : vector<8x128xf32>
    %17 = vector.extract_strided_slice %10 {offsets = [0, 128], sizes = [8, 128], strides = [1, 1]} : vector<8x512xf32> to vector<8x128xf32>
    %18 = arith.negf %17 : vector<8x128xf32>
    %19 = math.exp %18 : vector<8x128xf32>
    %cst_8 = arith.constant 1.000000e+00 : f32
    %20 = vector.broadcast %cst_8 : f32 to vector<8x128xf32>
    %21 = arith.addf %20, %19 : vector<8x128xf32>
    %22 = arith.divf %20, %21 : vector<8x128xf32>
    %23 = vector.extract_strided_slice %10 {offsets = [0, 256], sizes = [8, 128], strides = [1, 1]} : vector<8x512xf32> to vector<8x128xf32>
    %24 = math.tanh %23 : vector<8x128xf32>
    %25 = vector.extract_strided_slice %10 {offsets = [0, 384], sizes = [8, 128], strides = [1, 1]} : vector<8x512xf32> to vector<8x128xf32>
    %26 = arith.negf %25 : vector<8x128xf32>
    %27 = math.exp %26 : vector<8x128xf32>
    %cst_9 = arith.constant 1.000000e+00 : f32
    %28 = vector.broadcast %cst_9 : f32 to vector<8x128xf32>
    %29 = arith.addf %28, %27 : vector<8x128xf32>
    %30 = arith.divf %28, %29 : vector<8x128xf32>
    %c0_10 = arith.constant 0 : index
    %c0_11 = arith.constant 0 : index
    %31 = vector.load %arg8[%c0_10, %c0_11] : memref<8x128xf32, #tpu.memory_space<vmem>>, vector<8x128xf32>
    %32 = arith.mulf %22, %31 : vector<8x128xf32>
    %33 = arith.mulf %16, %24 : vector<8x128xf32>
    %34 = arith.addf %32, %33 : vector<8x128xf32>
    %35 = math.tanh %34 : vector<8x128xf32>
    %36 = arith.mulf %30, %35 : vector<8x128xf32>
    %c0_12 = arith.constant 0 : index
    %c0_13 = arith.constant 0 : index
    %37 = vector.load %arg8[%c0_12, %c0_13] : memref<8x128xf32, #tpu.memory_space<vmem>>, vector<8x128xf32>
    tpu.vector_store %arg8[%c0_12, %c0_13], %34 {strides = array<i32>} : memref<8x128xf32, #tpu.memory_space<vmem>>, vector<8x128xf32>,
    %c0_14 = arith.constant 0 : index
    %c0_15 = arith.constant 0 : index
    %38 = vector.load %arg7[%c0_14, %c0_15] : memref<8x128xf32, #tpu.memory_space<vmem>>, vector<8x128xf32>
    tpu.vector_store %arg7[%c0_14, %c0_15], %36 {strides = array<i32>} : memref<8x128xf32, #tpu.memory_space<vmem>>, vector<8x128xf32>,
    %39 = arith.index_cast %c0_i32_1 : i32 to index
    %c0_16 = arith.constant 0 : index
    %c0_17 = arith.constant 0 : index
    %40 = vector.load %arg9[%39, %c0_16, %c0_17] : memref<8x8x128xf32, #tpu.memory_space<vmem>>, vector<1x8x128xf32>
    %41 = vector.shape_cast %40 : vector<1x8x128xf32> to vector<8x128xf32>
    %42 = vector.shape_cast %36 : vector<8x128xf32> to vector<1x8x128xf32>
    tpu.vector_store %arg9[%39, %c0_16, %c0_17], %42 {strides = array<i32>} : memref<8x8x128xf32, #tpu.memory_space<vmem>>, vector<1x8x128xf32>,
    %c1_i32 = arith.constant 1 : i32
    %43 = arith.index_cast %c1_i32 : i32 to index
    %c0_18 = arith.constant 0 : index
    %c0_19 = arith.constant 0 : index
    %44 = vector.load %arg2[%43, %c0_18, %c0_19] : memref<8x8x512xf32, #tpu.memory_space<vmem>>, vector<1x8x512xf32>
    %45 = vector.shape_cast %44 : vector<1x8x512xf32> to vector<8x512xf32>
    %c0_20 = arith.constant 0 : index
    %c0_21 = arith.constant 0 : index
    %46 = vector.load %arg7[%c0_20, %c0_21] : memref<8x128xf32, #tpu.memory_space<vmem>>, vector<8x128xf32>
    %47 = arith.truncf %46 : vector<8x128xf32> to vector<8x128xbf16>
    %c0_22 = arith.constant 0 : index
    %c0_23 = arith.constant 0 : index
    %48 = vector.load %arg3[%c0_22, %c0_23] : memref<128x512xbf16, #tpu.memory_space<vmem>>, vector<128x512xbf16>
    %cst_24 = arith.constant dense<0.000000e+00> : vector<8x512xf32>
    %49 = tpu.matmul %47, %48, %cst_24 {dimension_numbers = #tpu.dot_dimension_numbers<[1], [0], [0], [1], [0, 0, 1, 1], [], []>} : vector<8x128xbf16>, vector<128x512xbf16>, vector<8x512xf32> -> vector<8x512xf32>
    %50 = arith.addf %45, %49 : vector<8x512xf32>
    %51 = vector.extract_strided_slice %50 {offsets = [0, 0], sizes = [8, 128], strides = [1, 1]} : vector<8x512xf32> to vector<8x128xf32>
    %52 = arith.negf %51 : vector<8x128xf32>
    %53 = math.exp %52 : vector<8x128xf32>
    %cst_25 = arith.constant 1.000000e+00 : f32
    %54 = vector.broadcast %cst_25 : f32 to vector<8x128xf32>
    %55 = arith.addf %54, %53 : vector<8x128xf32>
    %56 = arith.divf %54, %55 : vector<8x128xf32>
    %57 = vector.extract_strided_slice %50 {offsets = [0, 128], sizes = [8, 128], strides = [1, 1]} : vector<8x512xf32> to vector<8x128xf32>
    %58 = arith.negf %57 : vector<8x128xf32>
    %59 = math.exp %58 : vector<8x128xf32>
    %cst_26 = arith.constant 1.000000e+00 : f32
    %60 = vector.broadcast %cst_26 : f32 to vector<8x128xf32>
    %61 = arith.addf %60, %59 : vector<8x128xf32>
    %62 = arith.divf %60, %61 : vector<8x128xf32>
    %63 = vector.extract_strided_slice %50 {offsets = [0, 256], sizes = [8, 128], strides = [1, 1]} : vector<8x512xf32> to vector<8x128xf32>
    %64 = math.tanh %63 : vector<8x128xf32>
    %65 = vector.extract_strided_slice %50 {offsets = [0, 384], sizes = [8, 128], strides = [1, 1]} : vector<8x512xf32> to vector<8x128xf32>
    %66 = arith.negf %65 : vector<8x128xf32>
    %67 = math.exp %66 : vector<8x128xf32>
    %cst_27 = arith.constant 1.000000e+00 : f32
    %68 = vector.broadcast %cst_27 : f32 to vector<8x128xf32>
    %69 = arith.addf %68, %67 : vector<8x128xf32>
    %70 = arith.divf %68, %69 : vector<8x128xf32>
    %c0_28 = arith.constant 0 : index
    %c0_29 = arith.constant 0 : index
    %71 = vector.load %arg8[%c0_28, %c0_29] : memref<8x128xf32, #tpu.memory_space<vmem>>, vector<8x128xf32>
    %72 = arith.mulf %62, %71 : vector<8x128xf32>
    %73 = arith.mulf %56, %64 : vector<8x128xf32>
    %74 = arith.addf %72, %73 : vector<8x128xf32>
    %75 = math.tanh %74 : vector<8x128xf32>
    %76 = arith.mulf %70, %75 : vector<8x128xf32>
    %c0_30 = arith.constant 0 : index
    %c0_31 = arith.constant 0 : index
    %77 = vector.load %arg8[%c0_30, %c0_31] : memref<8x128xf32, #tpu.memory_space<vmem>>, vector<8x128xf32>
    tpu.vector_store %arg8[%c0_30, %c0_31], %74 {strides = array<i32>} : memref<8x128xf32, #tpu.memory_space<vmem>>, vector<8x128xf32>,
    %c0_32 = arith.constant 0 : index
    %c0_33 = arith.constant 0 : index
    %78 = vector.load %arg7[%c0_32, %c0_33] : memref<8x128xf32, #tpu.memory_space<vmem>>, vector<8x128xf32>
    tpu.vector_store %arg7[%c0_32, %c0_33], %76 {strides = array<i32>} : memref<8x128xf32, #tpu.memory_space<vmem>>, vector<8x128xf32>,
    %79 = arith.index_cast %c1_i32 : i32 to index
    %c0_34 = arith.constant 0 : index
    %c0_35 = arith.constant 0 : index
    %80 = vector.load %arg9[%79, %c0_34, %c0_35] : memref<8x8x128xf32, #tpu.memory_space<vmem>>, vector<1x8x128xf32>
    %81 = vector.shape_cast %80 : vector<1x8x128xf32> to vector<8x128xf32>
    %82 = vector.shape_cast %76 : vector<8x128xf32> to vector<1x8x128xf32>
    tpu.vector_store %arg9[%79, %c0_34, %c0_35], %82 {strides = array<i32>} : memref<8x8x128xf32, #tpu.memory_space<vmem>>, vector<1x8x128xf32>,
    %c2_i32 = arith.constant 2 : i32
    %83 = arith.index_cast %c2_i32 : i32 to index
    %c0_36 = arith.constant 0 : index
    %c0_37 = arith.constant 0 : index
    %84 = vector.load %arg2[%83, %c0_36, %c0_37] : memref<8x8x512xf32, #tpu.memory_space<vmem>>, vector<1x8x512xf32>
    %85 = vector.shape_cast %84 : vector<1x8x512xf32> to vector<8x512xf32>
    %c0_38 = arith.constant 0 : index
    %c0_39 = arith.constant 0 : index
    %86 = vector.load %arg7[%c0_38, %c0_39] : memref<8x128xf32, #tpu.memory_space<vmem>>, vector<8x128xf32>
    %87 = arith.truncf %86 : vector<8x128xf32> to vector<8x128xbf16>
    %c0_40 = arith.constant 0 : index
    %c0_41 = arith.constant 0 : index
    %88 = vector.load %arg3[%c0_40, %c0_41] : memref<128x512xbf16, #tpu.memory_space<vmem>>, vector<128x512xbf16>
    %cst_42 = arith.constant dense<0.000000e+00> : vector<8x512xf32>
    %89 = tpu.matmul %87, %88, %cst_42 {dimension_numbers = #tpu.dot_dimension_numbers<[1], [0], [0], [1], [0, 0, 1, 1], [], []>} : vector<8x128xbf16>, vector<128x512xbf16>, vector<8x512xf32> -> vector<8x512xf32>
    %90 = arith.addf %85, %89 : vector<8x512xf32>
    %91 = vector.extract_strided_slice %90 {offsets = [0, 0], sizes = [8, 128], strides = [1, 1]} : vector<8x512xf32> to vector<8x128xf32>
    %92 = arith.negf %91 : vector<8x128xf32>
    %93 = math.exp %92 : vector<8x128xf32>
    %cst_43 = arith.constant 1.000000e+00 : f32
    %94 = vector.broadcast %cst_43 : f32 to vector<8x128xf32>
    %95 = arith.addf %94, %93 : vector<8x128xf32>
    %96 = arith.divf %94, %95 : vector<8x128xf32>
    %97 = vector.extract_strided_slice %90 {offsets = [0, 128], sizes = [8, 128], strides = [1, 1]} : vector<8x512xf32> to vector<8x128xf32>
    %98 = arith.negf %97 : vector<8x128xf32>
    %99 = math.exp %98 : vector<8x128xf32>
    %cst_44 = arith.constant 1.000000e+00 : f32
    %100 = vector.broadcast %cst_44 : f32 to vector<8x128xf32>
    %101 = arith.addf %100, %99 : vector<8x128xf32>
    %102 = arith.divf %100, %101 : vector<8x128xf32>
    %103 = vector.extract_strided_slice %90 {offsets = [0, 256], sizes = [8, 128], strides = [1, 1]} : vector<8x512xf32> to vector<8x128xf32>
    %104 = math.tanh %103 : vector<8x128xf32>
    %105 = vector.extract_strided_slice %90 {offsets = [0, 384], sizes = [8, 128], strides = [1, 1]} : vector<8x512xf32> to vector<8x128xf32>
    %106 = arith.negf %105 : vector<8x128xf32>
    %107 = math.exp %106 : vector<8x128xf32>
    %cst_45 = arith.constant 1.000000e+00 : f32
    %108 = vector.broadcast %cst_45 : f32 to vector<8x128xf32>
    %109 = arith.addf %108, %107 : vector<8x128xf32>
    %110 = arith.divf %108, %109 : vector<8x128xf32>
    %c0_46 = arith.constant 0 : index
    %c0_47 = arith.constant 0 : index
    %111 = vector.load %arg8[%c0_46, %c0_47] : memref<8x128xf32, #tpu.memory_space<vmem>>, vector<8x128xf32>
    %112 = arith.mulf %102, %111 : vector<8x128xf32>
    %113 = arith.mulf %96, %104 : vector<8x128xf32>
    %114 = arith.addf %112, %113 : vector<8x128xf32>
    %115 = math.tanh %114 : vector<8x128xf32>
    %116 = arith.mulf %110, %115 : vector<8x128xf32>
    %c0_48 = arith.constant 0 : index
    %c0_49 = arith.constant 0 : index
    %117 = vector.load %arg8[%c0_48, %c0_49] : memref<8x128xf32, #tpu.memory_space<vmem>>, vector<8x128xf32>
    tpu.vector_store %arg8[%c0_48, %c0_49], %114 {strides = array<i32>} : memref<8x128xf32, #tpu.memory_space<vmem>>, vector<8x128xf32>,
    %c0_50 = arith.constant 0 : index
    %c0_51 = arith.constant 0 : index
    %118 = vector.load %arg7[%c0_50, %c0_51] : memref<8x128xf32, #tpu.memory_space<vmem>>, vector<8x128xf32>
    tpu.vector_store %arg7[%c0_50, %c0_51], %116 {strides = array<i32>} : memref<8x128xf32, #tpu.memory_space<vmem>>, vector<8x128xf32>,
    %119 = arith.index_cast %c2_i32 : i32 to index
    %c0_52 = arith.constant 0 : index
    %c0_53 = arith.constant 0 : index
    %120 = vector.load %arg9[%119, %c0_52, %c0_53] : memref<8x8x128xf32, #tpu.memory_space<vmem>>, vector<1x8x128xf32>
    %121 = vector.shape_cast %120 : vector<1x8x128xf32> to vector<8x128xf32>
    %122 = vector.shape_cast %116 : vector<8x128xf32> to vector<1x8x128xf32>
    tpu.vector_store %arg9[%119, %c0_52, %c0_53], %122 {strides = array<i32>} : memref<8x8x128xf32, #tpu.memory_space<vmem>>, vector<1x8x128xf32>,
    %c3_i32 = arith.constant 3 : i32
    %123 = arith.index_cast %c3_i32 : i32 to index
    %c0_54 = arith.constant 0 : index
    %c0_55 = arith.constant 0 : index
    %124 = vector.load %arg2[%123, %c0_54, %c0_55] : memref<8x8x512xf32, #tpu.memory_space<vmem>>, vector<1x8x512xf32>
    %125 = vector.shape_cast %124 : vector<1x8x512xf32> to vector<8x512xf32>
    %c0_56 = arith.constant 0 : index
    %c0_57 = arith.constant 0 : index
    %126 = vector.load %arg7[%c0_56, %c0_57] : memref<8x128xf32, #tpu.memory_space<vmem>>, vector<8x128xf32>
    %127 = arith.truncf %126 : vector<8x128xf32> to vector<8x128xbf16>
    %c0_58 = arith.constant 0 : index
    %c0_59 = arith.constant 0 : index
    %128 = vector.load %arg3[%c0_58, %c0_59] : memref<128x512xbf16, #tpu.memory_space<vmem>>, vector<128x512xbf16>
    %cst_60 = arith.constant dense<0.000000e+00> : vector<8x512xf32>
    %129 = tpu.matmul %127, %128, %cst_60 {dimension_numbers = #tpu.dot_dimension_numbers<[1], [0], [0], [1], [0, 0, 1, 1], [], []>} : vector<8x128xbf16>, vector<128x512xbf16>, vector<8x512xf32> -> vector<8x512xf32>
    %130 = arith.addf %125, %129 : vector<8x512xf32>
    %131 = vector.extract_strided_slice %130 {offsets = [0, 0], sizes = [8, 128], strides = [1, 1]} : vector<8x512xf32> to vector<8x128xf32>
    %132 = arith.negf %131 : vector<8x128xf32>
    %133 = math.exp %132 : vector<8x128xf32>
    %cst_61 = arith.constant 1.000000e+00 : f32
    %134 = vector.broadcast %cst_61 : f32 to vector<8x128xf32>
    %135 = arith.addf %134, %133 : vector<8x128xf32>
    %136 = arith.divf %134, %135 : vector<8x128xf32>
    %137 = vector.extract_strided_slice %130 {offsets = [0, 128], sizes = [8, 128], strides = [1, 1]} : vector<8x512xf32> to vector<8x128xf32>
    %138 = arith.negf %137 : vector<8x128xf32>
    %139 = math.exp %138 : vector<8x128xf32>
    %cst_62 = arith.constant 1.000000e+00 : f32
    %140 = vector.broadcast %cst_62 : f32 to vector<8x128xf32>
    %141 = arith.addf %140, %139 : vector<8x128xf32>
    %142 = arith.divf %140, %141 : vector<8x128xf32>
    %143 = vector.extract_strided_slice %130 {offsets = [0, 256], sizes = [8, 128], strides = [1, 1]} : vector<8x512xf32> to vector<8x128xf32>
    %144 = math.tanh %143 : vector<8x128xf32>
    %145 = vector.extract_strided_slice %130 {offsets = [0, 384], sizes = [8, 128], strides = [1, 1]} : vector<8x512xf32> to vector<8x128xf32>
    %146 = arith.negf %145 : vector<8x128xf32>
    %147 = math.exp %146 : vector<8x128xf32>
    %cst_63 = arith.constant 1.000000e+00 : f32
    %148 = vector.broadcast %cst_63 : f32 to vector<8x128xf32>
    %149 = arith.addf %148, %147 : vector<8x128xf32>
    %150 = arith.divf %148, %149 : vector<8x128xf32>
    %c0_64 = arith.constant 0 : index
    %c0_65 = arith.constant 0 : index
    %151 = vector.load %arg8[%c0_64, %c0_65] : memref<8x128xf32, #tpu.memory_space<vmem>>, vector<8x128xf32>
    %152 = arith.mulf %142, %151 : vector<8x128xf32>
    %153 = arith.mulf %136, %144 : vector<8x128xf32>
    %154 = arith.addf %152, %153 : vector<8x128xf32>
    %155 = math.tanh %154 : vector<8x128xf32>
    %156 = arith.mulf %150, %155 : vector<8x128xf32>
    %c0_66 = arith.constant 0 : index
    %c0_67 = arith.constant 0 : index
    %157 = vector.load %arg8[%c0_66, %c0_67] : memref<8x128xf32, #tpu.memory_space<vmem>>, vector<8x128xf32>
    tpu.vector_store %arg8[%c0_66, %c0_67], %154 {strides = array<i32>} : memref<8x128xf32, #tpu.memory_space<vmem>>, vector<8x128xf32>,
    %c0_68 = arith.constant 0 : index
    %c0_69 = arith.constant 0 : index
    %158 = vector.load %arg7[%c0_68, %c0_69] : memref<8x128xf32, #tpu.memory_space<vmem>>, vector<8x128xf32>
    tpu.vector_store %arg7[%c0_68, %c0_69], %156 {strides = array<i32>} : memref<8x128xf32, #tpu.memory_space<vmem>>, vector<8x128xf32>,
    %159 = arith.index_cast %c3_i32 : i32 to index
    %c0_70 = arith.constant 0 : index
    %c0_71 = arith.constant 0 : index
    %160 = vector.load %arg9[%159, %c0_70, %c0_71] : memref<8x8x128xf32, #tpu.memory_space<vmem>>, vector<1x8x128xf32>
    %161 = vector.shape_cast %160 : vector<1x8x128xf32> to vector<8x128xf32>
    %162 = vector.shape_cast %156 : vector<8x128xf32> to vector<1x8x128xf32>
    tpu.vector_store %arg9[%159, %c0_70, %c0_71], %162 {strides = array<i32>} : memref<8x8x128xf32, #tpu.memory_space<vmem>>, vector<1x8x128xf32>,
    %c4_i32 = arith.constant 4 : i32
    %163 = arith.index_cast %c4_i32 : i32 to index
    %c0_72 = arith.constant 0 : index
    %c0_73 = arith.constant 0 : index
    %164 = vector.load %arg2[%163, %c0_72, %c0_73] : memref<8x8x512xf32, #tpu.memory_space<vmem>>, vector<1x8x512xf32>
    %165 = vector.shape_cast %164 : vector<1x8x512xf32> to vector<8x512xf32>
    %c0_74 = arith.constant 0 : index
    %c0_75 = arith.constant 0 : index
    %166 = vector.load %arg7[%c0_74, %c0_75] : memref<8x128xf32, #tpu.memory_space<vmem>>, vector<8x128xf32>
    %167 = arith.truncf %166 : vector<8x128xf32> to vector<8x128xbf16>
    %c0_76 = arith.constant 0 : index
    %c0_77 = arith.constant 0 : index
    %168 = vector.load %arg3[%c0_76, %c0_77] : memref<128x512xbf16, #tpu.memory_space<vmem>>, vector<128x512xbf16>
    %cst_78 = arith.constant dense<0.000000e+00> : vector<8x512xf32>
    %169 = tpu.matmul %167, %168, %cst_78 {dimension_numbers = #tpu.dot_dimension_numbers<[1], [0], [0], [1], [0, 0, 1, 1], [], []>} : vector<8x128xbf16>, vector<128x512xbf16>, vector<8x512xf32> -> vector<8x512xf32>
    %170 = arith.addf %165, %169 : vector<8x512xf32>
    %171 = vector.extract_strided_slice %170 {offsets = [0, 0], sizes = [8, 128], strides = [1, 1]} : vector<8x512xf32> to vector<8x128xf32>
    %172 = arith.negf %171 : vector<8x128xf32>
    %173 = math.exp %172 : vector<8x128xf32>
    %cst_79 = arith.constant 1.000000e+00 : f32
    %174 = vector.broadcast %cst_79 : f32 to vector<8x128xf32>
    %175 = arith.addf %174, %173 : vector<8x128xf32>
    %176 = arith.divf %174, %175 : vector<8x128xf32>
    %177 = vector.extract_strided_slice %170 {offsets = [0, 128], sizes = [8, 128], strides = [1, 1]} : vector<8x512xf32> to vector<8x128xf32>
    %178 = arith.negf %177 : vector<8x128xf32>
    %179 = math.exp %178 : vector<8x128xf32>
    %cst_80 = arith.constant 1.000000e+00 : f32
    %180 = vector.broadcast %cst_80 : f32 to vector<8x128xf32>
    %181 = arith.addf %180, %179 : vector<8x128xf32>
    %182 = arith.divf %180, %181 : vector<8x128xf32>
    %183 = vector.extract_strided_slice %170 {offsets = [0, 256], sizes = [8, 128], strides = [1, 1]} : vector<8x512xf32> to vector<8x128xf32>
    %184 = math.tanh %183 : vector<8x128xf32>
    %185 = vector.extract_strided_slice %170 {offsets = [0, 384], sizes = [8, 128], strides = [1, 1]} : vector<8x512xf32> to vector<8x128xf32>
    %186 = arith.negf %185 : vector<8x128xf32>
    %187 = math.exp %186 : vector<8x128xf32>
    %cst_81 = arith.constant 1.000000e+00 : f32
    %188 = vector.broadcast %cst_81 : f32 to vector<8x128xf32>
    %189 = arith.addf %188, %187 : vector<8x128xf32>
    %190 = arith.divf %188, %189 : vector<8x128xf32>
    %c0_82 = arith.constant 0 : index
    %c0_83 = arith.constant 0 : index
    %191 = vector.load %arg8[%c0_82, %c0_83] : memref<8x128xf32, #tpu.memory_space<vmem>>, vector<8x128xf32>
    %192 = arith.mulf %182, %191 : vector<8x128xf32>
    %193 = arith.mulf %176, %184 : vector<8x128xf32>
    %194 = arith.addf %192, %193 : vector<8x128xf32>
    %195 = math.tanh %194 : vector<8x128xf32>
    %196 = arith.mulf %190, %195 : vector<8x128xf32>
    %c0_84 = arith.constant 0 : index
    %c0_85 = arith.constant 0 : index
    %197 = vector.load %arg8[%c0_84, %c0_85] : memref<8x128xf32, #tpu.memory_space<vmem>>, vector<8x128xf32>
    tpu.vector_store %arg8[%c0_84, %c0_85], %194 {strides = array<i32>} : memref<8x128xf32, #tpu.memory_space<vmem>>, vector<8x128xf32>,
    %c0_86 = arith.constant 0 : index
    %c0_87 = arith.constant 0 : index
    %198 = vector.load %arg7[%c0_86, %c0_87] : memref<8x128xf32, #tpu.memory_space<vmem>>, vector<8x128xf32>
    tpu.vector_store %arg7[%c0_86, %c0_87], %196 {strides = array<i32>} : memref<8x128xf32, #tpu.memory_space<vmem>>, vector<8x128xf32>,
    %199 = arith.index_cast %c4_i32 : i32 to index
    %c0_88 = arith.constant 0 : index
    %c0_89 = arith.constant 0 : index
    %200 = vector.load %arg9[%199, %c0_88, %c0_89] : memref<8x8x128xf32, #tpu.memory_space<vmem>>, vector<1x8x128xf32>
    %201 = vector.shape_cast %200 : vector<1x8x128xf32> to vector<8x128xf32>
    %202 = vector.shape_cast %196 : vector<8x128xf32> to vector<1x8x128xf32>
    tpu.vector_store %arg9[%199, %c0_88, %c0_89], %202 {strides = array<i32>} : memref<8x8x128xf32, #tpu.memory_space<vmem>>, vector<1x8x128xf32>,
    %c5_i32 = arith.constant 5 : i32
    %203 = arith.index_cast %c5_i32 : i32 to index
    %c0_90 = arith.constant 0 : index
    %c0_91 = arith.constant 0 : index
    %204 = vector.load %arg2[%203, %c0_90, %c0_91] : memref<8x8x512xf32, #tpu.memory_space<vmem>>, vector<1x8x512xf32>
    %205 = vector.shape_cast %204 : vector<1x8x512xf32> to vector<8x512xf32>
    %c0_92 = arith.constant 0 : index
    %c0_93 = arith.constant 0 : index
    %206 = vector.load %arg7[%c0_92, %c0_93] : memref<8x128xf32, #tpu.memory_space<vmem>>, vector<8x128xf32>
    %207 = arith.truncf %206 : vector<8x128xf32> to vector<8x128xbf16>
    %c0_94 = arith.constant 0 : index
    %c0_95 = arith.constant 0 : index
    %208 = vector.load %arg3[%c0_94, %c0_95] : memref<128x512xbf16, #tpu.memory_space<vmem>>, vector<128x512xbf16>
    %cst_96 = arith.constant dense<0.000000e+00> : vector<8x512xf32>
    %209 = tpu.matmul %207, %208, %cst_96 {dimension_numbers = #tpu.dot_dimension_numbers<[1], [0], [0], [1], [0, 0, 1, 1], [], []>} : vector<8x128xbf16>, vector<128x512xbf16>, vector<8x512xf32> -> vector<8x512xf32>
    %210 = arith.addf %205, %209 : vector<8x512xf32>
    %211 = vector.extract_strided_slice %210 {offsets = [0, 0], sizes = [8, 128], strides = [1, 1]} : vector<8x512xf32> to vector<8x128xf32>
    %212 = arith.negf %211 : vector<8x128xf32>
    %213 = math.exp %212 : vector<8x128xf32>
    %cst_97 = arith.constant 1.000000e+00 : f32
    %214 = vector.broadcast %cst_97 : f32 to vector<8x128xf32>
    %215 = arith.addf %214, %213 : vector<8x128xf32>
    %216 = arith.divf %214, %215 : vector<8x128xf32>
    %217 = vector.extract_strided_slice %210 {offsets = [0, 128], sizes = [8, 128], strides = [1, 1]} : vector<8x512xf32> to vector<8x128xf32>
    %218 = arith.negf %217 : vector<8x128xf32>
    %219 = math.exp %218 : vector<8x128xf32>
    %cst_98 = arith.constant 1.000000e+00 : f32
    %220 = vector.broadcast %cst_98 : f32 to vector<8x128xf32>
    %221 = arith.addf %220, %219 : vector<8x128xf32>
    %222 = arith.divf %220, %221 : vector<8x128xf32>
    %223 = vector.extract_strided_slice %210 {offsets = [0, 256], sizes = [8, 128], strides = [1, 1]} : vector<8x512xf32> to vector<8x128xf32>
    %224 = math.tanh %223 : vector<8x128xf32>
    %225 = vector.extract_strided_slice %210 {offsets = [0, 384], sizes = [8, 128], strides = [1, 1]} : vector<8x512xf32> to vector<8x128xf32>
    %226 = arith.negf %225 : vector<8x128xf32>
    %227 = math.exp %226 : vector<8x128xf32>
    %cst_99 = arith.constant 1.000000e+00 : f32
    %228 = vector.broadcast %cst_99 : f32 to vector<8x128xf32>
    %229 = arith.addf %228, %227 : vector<8x128xf32>
    %230 = arith.divf %228, %229 : vector<8x128xf32>
    %c0_100 = arith.constant 0 : index
    %c0_101 = arith.constant 0 : index
    %231 = vector.load %arg8[%c0_100, %c0_101] : memref<8x128xf32, #tpu.memory_space<vmem>>, vector<8x128xf32>
    %232 = arith.mulf %222, %231 : vector<8x128xf32>
    %233 = arith.mulf %216, %224 : vector<8x128xf32>
    %234 = arith.addf %232, %233 : vector<8x128xf32>
    %235 = math.tanh %234 : vector<8x128xf32>
    %236 = arith.mulf %230, %235 : vector<8x128xf32>
    %c0_102 = arith.constant 0 : index
    %c0_103 = arith.constant 0 : index
    %237 = vector.load %arg8[%c0_102, %c0_103] : memref<8x128xf32, #tpu.memory_space<vmem>>, vector<8x128xf32>
    tpu.vector_store %arg8[%c0_102, %c0_103], %234 {strides = array<i32>} : memref<8x128xf32, #tpu.memory_space<vmem>>, vector<8x128xf32>,
    %c0_104 = arith.constant 0 : index
    %c0_105 = arith.constant 0 : index
    %238 = vector.load %arg7[%c0_104, %c0_105] : memref<8x128xf32, #tpu.memory_space<vmem>>, vector<8x128xf32>
    tpu.vector_store %arg7[%c0_104, %c0_105], %236 {strides = array<i32>} : memref<8x128xf32, #tpu.memory_space<vmem>>, vector<8x128xf32>,
    %239 = arith.index_cast %c5_i32 : i32 to index
    %c0_106 = arith.constant 0 : index
    %c0_107 = arith.constant 0 : index
    %240 = vector.load %arg9[%239, %c0_106, %c0_107] : memref<8x8x128xf32, #tpu.memory_space<vmem>>, vector<1x8x128xf32>
    %241 = vector.shape_cast %240 : vector<1x8x128xf32> to vector<8x128xf32>
    %242 = vector.shape_cast %236 : vector<8x128xf32> to vector<1x8x128xf32>
    tpu.vector_store %arg9[%239, %c0_106, %c0_107], %242 {strides = array<i32>} : memref<8x8x128xf32, #tpu.memory_space<vmem>>, vector<1x8x128xf32>,
    %c6_i32 = arith.constant 6 : i32
    %243 = arith.index_cast %c6_i32 : i32 to index
    %c0_108 = arith.constant 0 : index
    %c0_109 = arith.constant 0 : index
    %244 = vector.load %arg2[%243, %c0_108, %c0_109] : memref<8x8x512xf32, #tpu.memory_space<vmem>>, vector<1x8x512xf32>
    %245 = vector.shape_cast %244 : vector<1x8x512xf32> to vector<8x512xf32>
    %c0_110 = arith.constant 0 : index
    %c0_111 = arith.constant 0 : index
    %246 = vector.load %arg7[%c0_110, %c0_111] : memref<8x128xf32, #tpu.memory_space<vmem>>, vector<8x128xf32>
    %247 = arith.truncf %246 : vector<8x128xf32> to vector<8x128xbf16>
    %c0_112 = arith.constant 0 : index
    %c0_113 = arith.constant 0 : index
    %248 = vector.load %arg3[%c0_112, %c0_113] : memref<128x512xbf16, #tpu.memory_space<vmem>>, vector<128x512xbf16>
    %cst_114 = arith.constant dense<0.000000e+00> : vector<8x512xf32>
    %249 = tpu.matmul %247, %248, %cst_114 {dimension_numbers = #tpu.dot_dimension_numbers<[1], [0], [0], [1], [0, 0, 1, 1], [], []>} : vector<8x128xbf16>, vector<128x512xbf16>, vector<8x512xf32> -> vector<8x512xf32>
    %250 = arith.addf %245, %249 : vector<8x512xf32>
    %251 = vector.extract_strided_slice %250 {offsets = [0, 0], sizes = [8, 128], strides = [1, 1]} : vector<8x512xf32> to vector<8x128xf32>
    %252 = arith.negf %251 : vector<8x128xf32>
    %253 = math.exp %252 : vector<8x128xf32>
    %cst_115 = arith.constant 1.000000e+00 : f32
    %254 = vector.broadcast %cst_115 : f32 to vector<8x128xf32>
    %255 = arith.addf %254, %253 : vector<8x128xf32>
    %256 = arith.divf %254, %255 : vector<8x128xf32>
    %257 = vector.extract_strided_slice %250 {offsets = [0, 128], sizes = [8, 128], strides = [1, 1]} : vector<8x512xf32> to vector<8x128xf32>
    %258 = arith.negf %257 : vector<8x128xf32>
    %259 = math.exp %258 : vector<8x128xf32>
    %cst_116 = arith.constant 1.000000e+00 : f32
    %260 = vector.broadcast %cst_116 : f32 to vector<8x128xf32>
    %261 = arith.addf %260, %259 : vector<8x128xf32>
    %262 = arith.divf %260, %261 : vector<8x128xf32>
    %263 = vector.extract_strided_slice %250 {offsets = [0, 256], sizes = [8, 128], strides = [1, 1]} : vector<8x512xf32> to vector<8x128xf32>
    %264 = math.tanh %263 : vector<8x128xf32>
    %265 = vector.extract_strided_slice %250 {offsets = [0, 384], sizes = [8, 128], strides = [1, 1]} : vector<8x512xf32> to vector<8x128xf32>
    %266 = arith.negf %265 : vector<8x128xf32>
    %267 = math.exp %266 : vector<8x128xf32>
    %cst_117 = arith.constant 1.000000e+00 : f32
    %268 = vector.broadcast %cst_117 : f32 to vector<8x128xf32>
    %269 = arith.addf %268, %267 : vector<8x128xf32>
    %270 = arith.divf %268, %269 : vector<8x128xf32>
    %c0_118 = arith.constant 0 : index
    %c0_119 = arith.constant 0 : index
    %271 = vector.load %arg8[%c0_118, %c0_119] : memref<8x128xf32, #tpu.memory_space<vmem>>, vector<8x128xf32>
    %272 = arith.mulf %262, %271 : vector<8x128xf32>
    %273 = arith.mulf %256, %264 : vector<8x128xf32>
    %274 = arith.addf %272, %273 : vector<8x128xf32>
    %275 = math.tanh %274 : vector<8x128xf32>
    %276 = arith.mulf %270, %275 : vector<8x128xf32>
    %c0_120 = arith.constant 0 : index
    %c0_121 = arith.constant 0 : index
    %277 = vector.load %arg8[%c0_120, %c0_121] : memref<8x128xf32, #tpu.memory_space<vmem>>, vector<8x128xf32>
    tpu.vector_store %arg8[%c0_120, %c0_121], %274 {strides = array<i32>} : memref<8x128xf32, #tpu.memory_space<vmem>>, vector<8x128xf32>,
    %c0_122 = arith.constant 0 : index
    %c0_123 = arith.constant 0 : index
    %278 = vector.load %arg7[%c0_122, %c0_123] : memref<8x128xf32, #tpu.memory_space<vmem>>, vector<8x128xf32>
    tpu.vector_store %arg7[%c0_122, %c0_123], %276 {strides = array<i32>} : memref<8x128xf32, #tpu.memory_space<vmem>>, vector<8x128xf32>,
    %279 = arith.index_cast %c6_i32 : i32 to index
    %c0_124 = arith.constant 0 : index
    %c0_125 = arith.constant 0 : index
    %280 = vector.load %arg9[%279, %c0_124, %c0_125] : memref<8x8x128xf32, #tpu.memory_space<vmem>>, vector<1x8x128xf32>
    %281 = vector.shape_cast %280 : vector<1x8x128xf32> to vector<8x128xf32>
    %282 = vector.shape_cast %276 : vector<8x128xf32> to vector<1x8x128xf32>
    tpu.vector_store %arg9[%279, %c0_124, %c0_125], %282 {strides = array<i32>} : memref<8x8x128xf32, #tpu.memory_space<vmem>>, vector<1x8x128xf32>,
    %c7_i32 = arith.constant 7 : i32
    %283 = arith.index_cast %c7_i32 : i32 to index
    %c0_126 = arith.constant 0 : index
    %c0_127 = arith.constant 0 : index
    %284 = vector.load %arg2[%283, %c0_126, %c0_127] : memref<8x8x512xf32, #tpu.memory_space<vmem>>, vector<1x8x512xf32>
    %285 = vector.shape_cast %284 : vector<1x8x512xf32> to vector<8x512xf32>
    %c0_128 = arith.constant 0 : index
    %c0_129 = arith.constant 0 : index
    %286 = vector.load %arg7[%c0_128, %c0_129] : memref<8x128xf32, #tpu.memory_space<vmem>>, vector<8x128xf32>
    %287 = arith.truncf %286 : vector<8x128xf32> to vector<8x128xbf16>
    %c0_130 = arith.constant 0 : index
    %c0_131 = arith.constant 0 : index
    %288 = vector.load %arg3[%c0_130, %c0_131] : memref<128x512xbf16, #tpu.memory_space<vmem>>, vector<128x512xbf16>
    %cst_132 = arith.constant dense<0.000000e+00> : vector<8x512xf32>
    %289 = tpu.matmul %287, %288, %cst_132 {dimension_numbers = #tpu.dot_dimension_numbers<[1], [0], [0], [1], [0, 0, 1, 1], [], []>} : vector<8x128xbf16>, vector<128x512xbf16>, vector<8x512xf32> -> vector<8x512xf32>
    %290 = arith.addf %285, %289 : vector<8x512xf32>
    %291 = vector.extract_strided_slice %290 {offsets = [0, 0], sizes = [8, 128], strides = [1, 1]} : vector<8x512xf32> to vector<8x128xf32>
    %292 = arith.negf %291 : vector<8x128xf32>
    %293 = math.exp %292 : vector<8x128xf32>
    %cst_133 = arith.constant 1.000000e+00 : f32
    %294 = vector.broadcast %cst_133 : f32 to vector<8x128xf32>
    %295 = arith.addf %294, %293 : vector<8x128xf32>
    %296 = arith.divf %294, %295 : vector<8x128xf32>
    %297 = vector.extract_strided_slice %290 {offsets = [0, 128], sizes = [8, 128], strides = [1, 1]} : vector<8x512xf32> to vector<8x128xf32>
    %298 = arith.negf %297 : vector<8x128xf32>
    %299 = math.exp %298 : vector<8x128xf32>
    %cst_134 = arith.constant 1.000000e+00 : f32
    %300 = vector.broadcast %cst_134 : f32 to vector<8x128xf32>
    %301 = arith.addf %300, %299 : vector<8x128xf32>
    %302 = arith.divf %300, %301 : vector<8x128xf32>
    %303 = vector.extract_strided_slice %290 {offsets = [0, 256], sizes = [8, 128], strides = [1, 1]} : vector<8x512xf32> to vector<8x128xf32>
    %304 = math.tanh %303 : vector<8x128xf32>
    %305 = vector.extract_strided_slice %290 {offsets = [0, 384], sizes = [8, 128], strides = [1, 1]} : vector<8x512xf32> to vector<8x128xf32>
    %306 = arith.negf %305 : vector<8x128xf32>
    %307 = math.exp %306 : vector<8x128xf32>
    %cst_135 = arith.constant 1.000000e+00 : f32
    %308 = vector.broadcast %cst_135 : f32 to vector<8x128xf32>
    %309 = arith.addf %308, %307 : vector<8x128xf32>
    %310 = arith.divf %308, %309 : vector<8x128xf32>
    %c0_136 = arith.constant 0 : index
    %c0_137 = arith.constant 0 : index
    %311 = vector.load %arg8[%c0_136, %c0_137] : memref<8x128xf32, #tpu.memory_space<vmem>>, vector<8x128xf32>
    %312 = arith.mulf %302, %311 : vector<8x128xf32>
    %313 = arith.mulf %296, %304 : vector<8x128xf32>
    %314 = arith.addf %312, %313 : vector<8x128xf32>
    %315 = math.tanh %314 : vector<8x128xf32>
    %316 = arith.mulf %310, %315 : vector<8x128xf32>
    %c0_138 = arith.constant 0 : index
    %c0_139 = arith.constant 0 : index
    %317 = vector.load %arg8[%c0_138, %c0_139] : memref<8x128xf32, #tpu.memory_space<vmem>>, vector<8x128xf32>
    tpu.vector_store %arg8[%c0_138, %c0_139], %314 {strides = array<i32>} : memref<8x128xf32, #tpu.memory_space<vmem>>, vector<8x128xf32>,
    %c0_140 = arith.constant 0 : index
    %c0_141 = arith.constant 0 : index
    %318 = vector.load %arg7[%c0_140, %c0_141] : memref<8x128xf32, #tpu.memory_space<vmem>>, vector<8x128xf32>
    tpu.vector_store %arg7[%c0_140, %c0_141], %316 {strides = array<i32>} : memref<8x128xf32, #tpu.memory_space<vmem>>, vector<8x128xf32>,
    %319 = arith.index_cast %c7_i32 : i32 to index
    %c0_142 = arith.constant 0 : index
    %c0_143 = arith.constant 0 : index
    %320 = vector.load %arg9[%319, %c0_142, %c0_143] : memref<8x8x128xf32, #tpu.memory_space<vmem>>, vector<1x8x128xf32>
    %321 = vector.shape_cast %320 : vector<1x8x128xf32> to vector<8x128xf32>
    %322 = vector.shape_cast %316 : vector<8x128xf32> to vector<1x8x128xf32>
    tpu.vector_store %arg9[%319, %c0_142, %c0_143], %322 {strides = array<i32>} : memref<8x8x128xf32, #tpu.memory_space<vmem>>, vector<1x8x128xf32>,
    %c8_i32 = arith.constant 8 : i32
    %c0_144 = arith.constant 0 : index
    %c0_145 = arith.constant 0 : index
    %c0_146 = arith.constant 0 : index
    %323 = vector.load %arg9[%c0_144, %c0_145, %c0_146] : memref<8x8x128xf32, #tpu.memory_space<vmem>>, vector<8x8x128xf32>
    %324 = vector.shape_cast %323 : vector<8x8x128xf32> to vector<64x128xf32>
    %325 = arith.truncf %324 : vector<64x128xf32> to vector<64x128xbf16>
    %c0_147 = arith.constant 0 : index
    %c0_148 = arith.constant 0 : index
    %326 = vector.load %arg4[%c0_147, %c0_148] : memref<128x128xbf16, #tpu.memory_space<vmem>>, vector<128x128xbf16>
    %cst_149 = arith.constant dense<0.000000e+00> : vector<64x128xf32>
    %327 = tpu.matmul %325, %326, %cst_149 {dimension_numbers = #tpu.dot_dimension_numbers<[1], [0], [0], [1], [0, 0, 1, 1], [], []>} : vector<64x128xbf16>, vector<128x128xbf16>, vector<64x128xf32> -> vector<64x128xf32>
    %c0_150 = arith.constant 0 : index
    %c0_151 = arith.constant 0 : index
    %328 = vector.load %arg5[%c0_150, %c0_151] : memref<1x128xf32, #tpu.memory_space<vmem>>, vector<1x128xf32>
    %329 = vector.broadcast %328 : vector<1x128xf32> to vector<64x128xf32>
    %330 = arith.addf %327, %329 : vector<64x128xf32>
    %331 = vector.shape_cast %330 : vector<64x128xf32> to vector<8x8x128xf32>
    %c0_152 = arith.constant 0 : index
    %c0_153 = arith.constant 0 : index
    %c0_154 = arith.constant 0 : index
    %332 = vector.load %arg6[%c0_152, %c0_153, %c0_154] : memref<8x8x128xf32, #tpu.memory_space<vmem>>, vector<8x8x128xf32>
    tpu.vector_store %arg6[%c0_152, %c0_153, %c0_154], %331 {strides = array<i32>} : memref<8x8x128xf32, #tpu.memory_space<vmem>>, vector<8x8x128xf32>,
    return
  }
  func.func @transform_0(%arg0: i32, %arg1: i32) -> (i32, i32, i32) {
    %c0_i32 = arith.constant 0 : i32
    %c0_i32_0 = arith.constant 0 : i32
    return %arg1, %arg0, %c0_i32 : i32, i32, i32
  }
  func.func @transform_1(%arg0: i32, %arg1: i32) -> (i32, i32) {
    %c0_i32 = arith.constant 0 : i32
    %c0_i32_0 = arith.constant 0 : i32
    %c0_i32_1 = arith.constant 0 : i32
    return %c0_i32, %c0_i32_0 : i32, i32
  }
  func.func @transform_2(%arg0: i32, %arg1: i32) -> (i32, i32) {
    %c0_i32 = arith.constant 0 : i32
    %c0_i32_0 = arith.constant 0 : i32
    %c0_i32_1 = arith.constant 0 : i32
    return %c0_i32, %c0_i32_0 : i32, i32
  }
  func.func @transform_3(%arg0: i32, %arg1: i32) -> (i32, i32) {
    %c0_i32 = arith.constant 0 : i32
    %c0_i32_0 = arith.constant 0 : i32
    %c0_i32_1 = arith.constant 0 : i32
    return %c0_i32, %c0_i32_0 : i32, i32
  }
  func.func @transform_4(%arg0: i32, %arg1: i32) -> (i32, i32, i32) {
    %c0_i32 = arith.constant 0 : i32
    %c0_i32_0 = arith.constant 0 : i32
    return %arg1, %arg0, %c0_i32 : i32, i32, i32
  }
}

</mosaic_0001>

<llo_original>
// kernel: eval_lstm_model2_forward.4
$region0: #{eval_lstm_model2_forward.4}
  #allocation0 [shape = 'u32[]', space=smem, size = 0x4, offset = 0x4, fixed_abs, tag = 'smem constant byte address 0x4 - core index']
  #allocation1 [shape = 'u32[144,128]{1,0:T(1,128)}', space=vmem, size = 0x12000, scoped, tag = 'internal scratch']
  %s0 = inlined_call_operand.hbm [shape: bf16[64,128], index: 0, kind: input, shape index: {}]
  %s1 = inlined_call_operand.hbm [shape: bf16[128,512], index: 1, kind: input, shape index: {}]
  %s2 = inlined_call_operand.hbm [shape: f32[1,512], index: 2, kind: input, shape index: {}]
  %s3 = inlined_call_operand.hbm [shape: f32[64,512], index: 3, kind: output, shape index: {}]
  %s4 = sld [smem:[#allocation0]]
  $region34: #{eval_lstm_model2_forward.4} parent=0
    _
  %s6 = ssub.s32 1, %s4
  %s7 = scalar_select 0, %s6, %s4
  $region1: #{eval_lstm_model2_forward.4} parent=0
    #allocation2 [shape = 'u8[16384]{0}', space=vmem, size = 0x4000, scoped, tag = 'input window, operand 0, single buffered']
    #allocation3 [shape = 's32[1]{0}', space=sflag, size = 0x4, scoped, tag = 'scoped memory for eval_lstm_model2_forward.4']
    #allocation4 [shape = 's32[1]{0}', space=sflag, size = 0x4, scoped, tag = 'scoped memory for eval_lstm_model2_forward.4']
    #allocation5 [shape = 'u8[131072]{0}', space=vmem, size = 0x20000, scoped, tag = 'input window, operand 1, single buffered']
    #allocation6 [shape = 's32[1]{0}', space=sflag, size = 0x4, scoped, tag = 'scoped memory for eval_lstm_model2_forward.4']
    #allocation7 [shape = 'u8[2048]{0}', space=vmem, size = 0x800, scoped, tag = 'input window, operand 2, single buffered']
    #allocation8 [shape = 'u8[131072]{0}', space=vmem, size = 0x20000, scoped, tag = 'output window, operand 0, single buffered']
    %8 = vsyncpa [#allocation3], 0
    %9 = vsyncpa [#allocation6], 0
    %10 = vsyncpa [#allocation4], 0
    // Predicated region
    $region2: #{eval_lstm_model2_forward.4} parent=1 // pred_check
      _
    $region3: #{eval_lstm_model2_forward.4} parent=1 // pred_check_branch
      %12 = sbr.rel (0) target = $region5
    $region4: #{eval_lstm_model2_forward.4} parent=1 // pred_region
      %s14 = ssub.s32 512, 512
      %15 = vsyncadd [#allocation3], %s14
      %s16 = sshll.u32 [#allocation2], 4
      %s17 = int_to_ptr.vmem [resolvable:$true] %s16
      %22 = dma.hbm_to_vmem [thread:$0]  %s0, 512, %s17, [#allocation3], 64, 64, 4
    $region5: #{eval_lstm_model2_forward.4} parent=1 // pred_fallthru
      _
    // Predicated region
    $region6: #{eval_lstm_model2_forward.4} parent=1 // pred_check
      _
    $region7: #{eval_lstm_model2_forward.4} parent=1 // pred_check_branch
      %24 = sbr.rel (0) target = $region9
    $region8: #{eval_lstm_model2_forward.4} parent=1 // pred_region
      %s26 = ssub.s32 4096, 4096
      %27 = vsyncadd [#allocation6], %s26
      %s28 = sshll.u32 [#allocation5], 4
      %s29 = int_to_ptr.vmem [resolvable:$true] %s28
      %34 = dma.hbm_to_vmem [thread:$0]  %s1, 4096, %s29, [#allocation6], 256, 256, 16
    $region9: #{eval_lstm_model2_forward.4} parent=1 // pred_fallthru
      _
    // Predicated region
    $region10: #{eval_lstm_model2_forward.4} parent=1 // pred_check
      _
    $region11: #{eval_lstm_model2_forward.4} parent=1 // pred_check_branch
      %36 = sbr.rel (0) target = $region13
    $region12: #{eval_lstm_model2_forward.4} parent=1 // pred_region
      %s38 = ssub.s32 64, 64
      %39 = vsyncadd [#allocation6], %s38
      %s41 = sshll.u32 [#allocation7], 4
      %s42 = int_to_ptr.vmem [resolvable:$true] %s41
      %44 = dma.hbm_to_vmem [thread:$0]  %s2, 64, %s42, [#allocation6]
    $region13: #{eval_lstm_model2_forward.4} parent=1 // pred_fallthru
      _
    // Predicated region
    $region14: #{eval_lstm_model2_forward.4} parent=1 // pred_check
      _
    $region15: #{eval_lstm_model2_forward.4} parent=1 // pred_check_branch
      %46 = sbr.rel (0) target = $region17
    $region16: #{eval_lstm_model2_forward.4} parent=1 // pred_region
      %47 = dma.done [#allocation3], 512
    $region17: #{eval_lstm_model2_forward.4} parent=1 // pred_fallthru
      _
    // Predicated region
    $region18: #{eval_lstm_model2_forward.4} parent=1 // pred_check
      _
    $region19: #{eval_lstm_model2_forward.4} parent=1 // pred_check_branch
      %49 = sbr.rel (0) target = $region21
    $region20: #{eval_lstm_model2_forward.4} parent=1 // pred_region
      %50 = dma.done [#allocation6], 4096
    $region21: #{eval_lstm_model2_forward.4} parent=1 // pred_fallthru
      _
    // Predicated region
    $region22: #{eval_lstm_model2_forward.4} parent=1 // pred_check
      _
    $region23: #{eval_lstm_model2_forward.4} parent=1 // pred_check_branch
      %52 = sbr.rel (0) target = $region25
    $region24: #{eval_lstm_model2_forward.4} parent=1 // pred_region
      %53 = dma.done [#allocation6], 64
    $region25: #{eval_lstm_model2_forward.4} parent=1 // pred_fallthru
      _
    %v55 = vld [vmem:[#allocation2] sm:$0xf]
    %v56 = vld [vmem:[#allocation2 + $0x4] sm:$0xf]
    %v57 = vld [vmem:[#allocation2 + $0x8] sm:$0xf]
    %v58 = vld [vmem:[#allocation2 + $0xc] sm:$0xf]
    %v59 = vld [vmem:[#allocation2 + $0x10] sm:$0xf]
    %v60 = vld [vmem:[#allocation2 + $0x14] sm:$0xf]
    %v61 = vld [vmem:[#allocation2 + $0x18] sm:$0xf]
    %v62 = vld [vmem:[#allocation2 + $0x1c] sm:$0xf]
    %v63 = vld [vmem:[#allocation5] sm:$0xff]
    %v64 = vld [vmem:[#allocation5 + $0x8] sm:$0xff]
    %v65 = vld [vmem:[#allocation5 + $0x10] sm:$0xff]
    %v66 = vld [vmem:[#allocation5 + $0x18] sm:$0xff]
    %v67 = vld [vmem:[#allocation5 + $0x20] sm:$0xff]
    %v68 = vld [vmem:[#allocation5 + $0x28] sm:$0xff]
    %v69 = vld [vmem:[#allocation5 + $0x30] sm:$0xff]
    %v70 = vld [vmem:[#allocation5 + $0x38] sm:$0xff]
    %v71 = vld [vmem:[#allocation5 + $0x40] sm:$0xff]
    %v72 = vld [vmem:[#allocation5 + $0x48] sm:$0xff]
    %v73 = vld [vmem:[#allocation5 + $0x50] sm:$0xff]
    %v74 = vld [vmem:[#allocation5 + $0x58] sm:$0xff]
    %v75 = vld [vmem:[#allocation5 + $0x60] sm:$0xff]
    %v76 = vld [vmem:[#allocation5 + $0x68] sm:$0xff]
    %v77 = vld [vmem:[#allocation5 + $0x70] sm:$0xff]
    %v78 = vld [vmem:[#allocation5 + $0x78] sm:$0xff]
    %v79 = vld [vmem:[#allocation5 + $0x80] sm:$0xff]
    %v80 = vld [vmem:[#allocation5 + $0x88] sm:$0xff]
    %v81 = vld [vmem:[#allocation5 + $0x90] sm:$0xff]
    %v82 = vld [vmem:[#allocation5 + $0x98] sm:$0xff]
    %v83 = vld [vmem:[#allocation5 + $0xa0] sm:$0xff]
    %v84 = vld [vmem:[#allocation5 + $0xa8] sm:$0xff]
    %v85 = vld [vmem:[#allocation5 + $0xb0] sm:$0xff]
    %v86 = vld [vmem:[#allocation5 + $0xb8] sm:$0xff]
    %v87 = vld [vmem:[#allocation5 + $0xc0] sm:$0xff]
    %v88 = vld [vmem:[#allocation5 + $0xc8] sm:$0xff]
    %v89 = vld [vmem:[#allocation5 + $0xd0] sm:$0xff]
    %v90 = vld [vmem:[#allocation5 + $0xd8] sm:$0xff]
    %v91 = vld [vmem:[#allocation5 + $0xe0] sm:$0xff]
    %v92 = vld [vmem:[#allocation5 + $0xe8] sm:$0xff]
    %v93 = vld [vmem:[#allocation5 + $0xf0] sm:$0xff]
    %v94 = vld [vmem:[#allocation5 + $0xf8] sm:$0xff]
    %v95 = vld [vmem:[#allocation7] sm:$0xf]
    %v97 = vlaneseq
    %v98 = vshrl.u32 %v97, 7
    %v99 = vsub.s32 0, %v98
    %v100 = vrot.slane %v95, %v99
    %v101 = vlaneseq
    %v102 = vshrl.u32 %v101, 7
    %v103 = vsub.s32 1, %v102
    %v104 = vrot.slane %v95, %v103
    %v105 = vlaneseq
    %v106 = vshrl.u32 %v105, 7
    %v107 = vsub.s32 2, %v106
    %v108 = vrot.slane %v95, %v107
    %v109 = vlaneseq
    %v110 = vshrl.u32 %v109, 7
    %v111 = vsub.s32 3, %v110
    %v112 = vrot.slane %v95, %v111
    %v125 = vunpack.c.l.b16 %v55
    %v126 = vunpack.c.l.b16 %v56
    %v127 = vunpack.c.l.b16 %v57
    %v128 = vunpack.c.l.b16 %v58
    %v129 = vunpack.c.l.b16 %v59
    %v130 = vunpack.c.l.b16 %v60
    %v131 = vunpack.c.l.b16 %v61
    %v132 = vunpack.c.l.b16 %v62
    %v133 = vpack.c.b16 %v126, %v125
    %v134 = vpack.c.b16 %v128, %v127
    %v135 = vpack.c.b16 %v130, %v129
    %v136 = vpack.c.b16 %v132, %v131
    %v173 = vunpack.c.l.b16 %v63
    %v174 = vunpack.c.h.b16 %v63
    %v175 = vunpack.c.l.b16 %v64
    %v176 = vunpack.c.h.b16 %v64
    %v177 = vunpack.c.l.b16 %v65
    %v178 = vunpack.c.h.b16 %v65
    %v179 = vunpack.c.l.b16 %v66
    %v180 = vunpack.c.h.b16 %v66
    %v181 = vunpack.c.l.b16 %v67
    %v182 = vunpack.c.h.b16 %v67
    %v183 = vunpack.c.l.b16 %v68
    %v184 = vunpack.c.h.b16 %v68
    %v185 = vunpack.c.l.b16 %v69
    %v186 = vunpack.c.h.b16 %v69
    %v187 = vunpack.c.l.b16 %v70
    %v188 = vunpack.c.h.b16 %v70
    %v189 = vunpack.c.l.b16 %v71
    %v190 = vunpack.c.h.b16 %v71
    %v191 = vunpack.c.l.b16 %v72
    %v192 = vunpack.c.h.b16 %v72
    %v193 = vunpack.c.l.b16 %v73
    %v194 = vunpack.c.h.b16 %v73
    %v195 = vunpack.c.l.b16 %v74
    %v196 = vunpack.c.h.b16 %v74
    %v197 = vunpack.c.l.b16 %v75
    %v198 = vunpack.c.h.b16 %v75
    %v199 = vunpack.c.l.b16 %v76
    %v200 = vunpack.c.h.b16 %v76
    %v201 = vunpack.c.l.b16 %v77
    %v202 = vunpack.c.h.b16 %v77
    %v203 = vunpack.c.l.b16 %v78
    %v204 = vunpack.c.h.b16 %v78
    %v205 = vunpack.c.l.b16 %v79
    %v206 = vunpack.c.h.b16 %v79
    %v207 = vunpack.c.l.b16 %v80
    %v208 = vunpack.c.h.b16 %v80
    %v209 = vunpack.c.l.b16 %v81
    %v210 = vunpack.c.h.b16 %v81
    %v211 = vunpack.c.l.b16 %v82
    %v212 = vunpack.c.h.b16 %v82
    %v213 = vunpack.c.l.b16 %v83
    %v214 = vunpack.c.h.b16 %v83
    %v215 = vunpack.c.l.b16 %v84
    %v216 = vunpack.c.h.b16 %v84
    %v217 = vunpack.c.l.b16 %v85
    %v218 = vunpack.c.h.b16 %v85
    %v219 = vunpack.c.l.b16 %v86
    %v220 = vunpack.c.h.b16 %v86
    %v221 = vunpack.c.l.b16 %v87
    %v222 = vunpack.c.h.b16 %v87
    %v223 = vunpack.c.l.b16 %v88
    %v224 = vunpack.c.h.b16 %v88
    %v225 = vunpack.c.l.b16 %v89
    %v226 = vunpack.c.h.b16 %v89
    %v227 = vunpack.c.l.b16 %v90
    %v228 = vunpack.c.h.b16 %v90
    %v229 = vunpack.c.l.b16 %v91
    %v230 = vunpack.c.h.b16 %v91
    %v231 = vunpack.c.l.b16 %v92
    %v232 = vunpack.c.h.b16 %v92
    %v233 = vunpack.c.l.b16 %v93
    %v234 = vunpack.c.h.b16 %v93
    %v235 = vunpack.c.l.b16 %v94
    %v236 = vunpack.c.h.b16 %v94
    %v237 = vpack.c.b16 %v177, %v173
    %v238 = vpack.c.b16 %v178, %v174
    %v239 = vpack.c.b16 %v179, %v175
    %v240 = vpack.c.b16 %v180, %v176
    %v241 = vpack.c.b16 %v185, %v181
    %v242 = vpack.c.b16 %v186, %v182
    %v243 = vpack.c.b16 %v187, %v183
    %v244 = vpack.c.b16 %v188, %v184
    %v245 = vpack.c.b16 %v193, %v189
    %v246 = vpack.c.b16 %v194, %v190
    %v247 = vpack.c.b16 %v195, %v191
    %v248 = vpack.c.b16 %v196, %v192
    %v249 = vpack.c.b16 %v201, %v197
    %v250 = vpack.c.b16 %v202, %v198
    %v251 = vpack.c.b16 %v203, %v199
    %v252 = vpack.c.b16 %v204, %v200
    %v253 = vpack.c.b16 %v209, %v205
    %v254 = vpack.c.b16 %v210, %v206
    %v255 = vpack.c.b16 %v211, %v207
    %v256 = vpack.c.b16 %v212, %v208
    %v257 = vpack.c.b16 %v217, %v213
    %v258 = vpack.c.b16 %v218, %v214
    %v259 = vpack.c.b16 %v219, %v215
    %v260 = vpack.c.b16 %v220, %v216
    %v261 = vpack.c.b16 %v225, %v221
    %v262 = vpack.c.b16 %v226, %v222
    %v263 = vpack.c.b16 %v227, %v223
    %v264 = vpack.c.b16 %v228, %v224
    %v265 = vpack.c.b16 %v233, %v229
    %v266 = vpack.c.b16 %v234, %v230
    %v267 = vpack.c.b16 %v235, %v231
    %v268 = vpack.c.b16 %v236, %v232
    %301 = vmatprep.subr.bf16.mxu0 %v238
    %302 = vmatpush1.bf16.msra.mxu0 %v237
    %303 = vmatprep.subr.bf16.mxu0 %v242
    %304 = vmatpush1.bf16.msra.mxu0 %v241
    %305 = vmatprep.subr.bf16.mxu0 %v246
    %306 = vmatpush1.bf16.msra.mxu0 %v245
    %307 = vmatprep.subr.bf16.mxu0 %v250
    %308 = vmatpush1.bf16.msra.mxu0 %v249
    %309 = vmatprep.subr.bf16.mxu0 %v254
    %310 = vmatpush1.bf16.msra.mxu0 %v253
    %311 = vmatprep.subr.bf16.mxu0 %v258
    %312 = vmatpush1.bf16.msra.mxu0 %v257
    %313 = vmatprep.subr.bf16.mxu0 %v262
    %314 = vmatpush1.bf16.msra.mxu0 %v261
    %315 = vmatprep.subr.bf16.mxu0 %v266
    %316 = vmatpush1.bf16.msra.mxu0 %v265
    %317 = vmatprep.subr.bf16.mxu0 0
    %318 = vmatpush1.bf16.msra.mxu0 0
    %319 = vmatprep.subr.bf16.mxu0 0
    %320 = vmatpush1.bf16.msra.mxu0 0
    %321 = vmatprep.subr.bf16.mxu0 0
    %322 = vmatpush1.bf16.msra.mxu0 0
    %323 = vmatprep.subr.bf16.mxu0 0
    %324 = vmatpush1.bf16.msra.mxu0 0
    %325 = vmatprep.subr.bf16.mxu0 0
    %326 = vmatpush1.bf16.msra.mxu0 0
    %327 = vmatprep.subr.bf16.mxu0 0
    %328 = vmatpush1.bf16.msra.mxu0 0
    %329 = vmatprep.subr.bf16.mxu0 0
    %330 = vmatpush1.bf16.msra.mxu0 0
    %331 = vmatprep.subr.bf16.mxu0 0
    %332 = vmatpush1.bf16.msra.mxu0 0
    %333 = vmatprep.mubr.bf16.mxu0 0
    %334 = vmatmul.mubr.bf16.gmra.mrb[0].mxu0 %v133
    %v335 = vpop.f32.mrb[0].mxu0
    %v336 = vadd.f32 %v100, %v335
    %v337 = vpop.f32.mrb[0].mxu0
    %v338 = vadd.f32 %v104, %v337
    %v339 = vpop.f32.mrb[0].mxu0
    %v340 = vadd.f32 %v100, %v339
    %v341 = vpop.f32.mrb[0].mxu0
    %v342 = vadd.f32 %v104, %v341
    %343 = vmatprep.mubr.bf16.mxu0 0
    %344 = vmatmul.mubr.bf16.gmra.mrb[0].mxu0 %v134
    %v345 = vpop.f32.mrb[0].mxu0
    %v346 = vadd.f32 %v100, %v345
    %v347 = vpop.f32.mrb[0].mxu0
    %v348 = vadd.f32 %v104, %v347
    %v349 = vpop.f32.mrb[0].mxu0
    %v350 = vadd.f32 %v100, %v349
    %v351 = vpop.f32.mrb[0].mxu0
    %v352 = vadd.f32 %v104, %v351
    %353 = vmatprep.mubr.bf16.mxu0 0
    %354 = vmatmul.mubr.bf16.gmra.mrb[0].mxu0 %v135
    %v355 = vpop.f32.mrb[0].mxu0
    %v356 = vadd.f32 %v100, %v355
    %v357 = vpop.f32.mrb[0].mxu0
    %v358 = vadd.f32 %v104, %v357
    %v359 = vpop.f32.mrb[0].mxu0
    %v360 = vadd.f32 %v100, %v359
    %v361 = vpop.f32.mrb[0].mxu0
    %v362 = vadd.f32 %v104, %v361
    %363 = vmatprep.mubr.bf16.mxu0 0
    %364 = vmatmul.mubr.bf16.gmra.mrb[0].mxu0 %v136
    %v365 = vpop.f32.mrb[0].mxu0
    %v366 = vadd.f32 %v100, %v365
    %v367 = vpop.f32.mrb[0].mxu0
    %v368 = vadd.f32 %v104, %v367
    %v369 = vpop.f32.mrb[0].mxu0
    %v370 = vadd.f32 %v100, %v369
    %v371 = vpop.f32.mrb[0].mxu0
    %v372 = vadd.f32 %v104, %v371
    %373 = vdwg.mxu0
    %374 = vmatprep.subr.bf16.mxu0 %v240
    %375 = vmatpush1.bf16.msra.mxu0 %v239
    %376 = vmatprep.subr.bf16.mxu0 %v244
    %377 = vmatpush1.bf16.msra.mxu0 %v243
    %378 = vmatprep.subr.bf16.mxu0 %v248
    %379 = vmatpush1.bf16.msra.mxu0 %v247
    %380 = vmatprep.subr.bf16.mxu0 %v252
    %381 = vmatpush1.bf16.msra.mxu0 %v251
    %382 = vmatprep.subr.bf16.mxu0 %v256
    %383 = vmatpush1.bf16.msra.mxu0 %v255
    %384 = vmatprep.subr.bf16.mxu0 %v260
    %385 = vmatpush1.bf16.msra.mxu0 %v259
    %386 = vmatprep.subr.bf16.mxu0 %v264
    %387 = vmatpush1.bf16.msra.mxu0 %v263
    %388 = vmatprep.subr.bf16.mxu0 %v268
    %389 = vmatpush1.bf16.msra.mxu0 %v267
    %390 = vmatprep.subr.bf16.mxu0 0
    %391 = vmatpush1.bf16.msra.mxu0 0
    %392 = vmatprep.subr.bf16.mxu0 0
    %393 = vmatpush1.bf16.msra.mxu0 0
    %394 = vmatprep.subr.bf16.mxu0 0
    %395 = vmatpush1.bf16.msra.mxu0 0
    %396 = vmatprep.subr.bf16.mxu0 0
    %397 = vmatpush1.bf16.msra.mxu0 0
    %398 = vmatprep.subr.bf16.mxu0 0
    %399 = vmatpush1.bf16.msra.mxu0 0
    %400 = vmatprep.subr.bf16.mxu0 0
    %401 = vmatpush1.bf16.msra.mxu0 0
    %402 = vmatprep.subr.bf16.mxu0 0
    %403 = vmatpush1.bf16.msra.mxu0 0
    %404 = vmatprep.subr.bf16.mxu0 0
    %405 = vmatpush1.bf16.msra.mxu0 0
    %406 = vmatprep.mubr.bf16.mxu0 0
    %407 = vmatmul.mubr.bf16.gmra.mrb[0].mxu0 %v133
    %v408 = vpop.f32.mrb[0].mxu0
    %v409 = vadd.f32 %v108, %v408
    %v410 = vpop.f32.mrb[0].mxu0
    %v411 = vadd.f32 %v112, %v410
    %v412 = vpop.f32.mrb[0].mxu0
    %v413 = vadd.f32 %v108, %v412
    %v414 = vpop.f32.mrb[0].mxu0
    %v415 = vadd.f32 %v112, %v414
    %416 = vmatprep.mubr.bf16.mxu0 0
    %417 = vmatmul.mubr.bf16.gmra.mrb[0].mxu0 %v134
    %v418 = vpop.f32.mrb[0].mxu0
    %v419 = vadd.f32 %v108, %v418
    %v420 = vpop.f32.mrb[0].mxu0
    %v421 = vadd.f32 %v112, %v420
    %v422 = vpop.f32.mrb[0].mxu0
    %v423 = vadd.f32 %v108, %v422
    %v424 = vpop.f32.mrb[0].mxu0
    %v425 = vadd.f32 %v112, %v424
    %426 = vmatprep.mubr.bf16.mxu0 0
    %427 = vmatmul.mubr.bf16.gmra.mrb[0].mxu0 %v135
    %v428 = vpop.f32.mrb[0].mxu0
    %v429 = vadd.f32 %v108, %v428
    %v430 = vpop.f32.mrb[0].mxu0
    %v431 = vadd.f32 %v112, %v430
    %v432 = vpop.f32.mrb[0].mxu0
    %v433 = vadd.f32 %v108, %v432
    %v434 = vpop.f32.mrb[0].mxu0
    %v435 = vadd.f32 %v112, %v434
    %436 = vmatprep.mubr.bf16.mxu0 0
    %437 = vmatmul.mubr.bf16.gmra.mrb[0].mxu0 %v136
    %v438 = vpop.f32.mrb[0].mxu0
    %v439 = vadd.f32 %v108, %v438
    %v440 = vpop.f32.mrb[0].mxu0
    %v441 = vadd.f32 %v112, %v440
    %v442 = vpop.f32.mrb[0].mxu0
    %v443 = vadd.f32 %v108, %v442
    %v444 = vpop.f32.mrb[0].mxu0
    %v445 = vadd.f32 %v112, %v444
    %446 = vdwg.mxu0
    %447 = vst [vmem:[#allocation8] sm:$0xff] %v336
    %448 = vst [vmem:[#allocation8 + $0x8] sm:$0xff] %v338
    %449 = vst [vmem:[#allocation8 + $0x10] sm:$0xff] %v409
    %450 = vst [vmem:[#allocation8 + $0x18] sm:$0xff] %v411
    %451 = vst [vmem:[#allocation8 + $0x20] sm:$0xff] %v340
    %452 = vst [vmem:[#allocation8 + $0x28] sm:$0xff] %v342
    %453 = vst [vmem:[#allocation8 + $0x30] sm:$0xff] %v413
    %454 = vst [vmem:[#allocation8 + $0x38] sm:$0xff] %v415
    %455 = vst [vmem:[#allocation8 + $0x40] sm:$0xff] %v346
    %456 = vst [vmem:[#allocation8 + $0x48] sm:$0xff] %v348
    %457 = vst [vmem:[#allocation8 + $0x50] sm:$0xff] %v419
    %458 = vst [vmem:[#allocation8 + $0x58] sm:$0xff] %v421
    %459 = vst [vmem:[#allocation8 + $0x60] sm:$0xff] %v350
    %460 = vst [vmem:[#allocation8 + $0x68] sm:$0xff] %v352
    %461 = vst [vmem:[#allocation8 + $0x70] sm:$0xff] %v423
    %462 = vst [vmem:[#allocation8 + $0x78] sm:$0xff] %v425
    %463 = vst [vmem:[#allocation8 + $0x80] sm:$0xff] %v356
    %464 = vst [vmem:[#allocation8 + $0x88] sm:$0xff] %v358
    %465 = vst [vmem:[#allocation8 + $0x90] sm:$0xff] %v429
    %466 = vst [vmem:[#allocation8 + $0x98] sm:$0xff] %v431
    %467 = vst [vmem:[#allocation8 + $0xa0] sm:$0xff] %v360
    %468 = vst [vmem:[#allocation8 + $0xa8] sm:$0xff] %v362
    %469 = vst [vmem:[#allocation8 + $0xb0] sm:$0xff] %v433
    %470 = vst [vmem:[#allocation8 + $0xb8] sm:$0xff] %v435
    %471 = vst [vmem:[#allocation8 + $0xc0] sm:$0xff] %v366
    %472 = vst [vmem:[#allocation8 + $0xc8] sm:$0xff] %v368
    %473 = vst [vmem:[#allocation8 + $0xd0] sm:$0xff] %v439
    %474 = vst [vmem:[#allocation8 + $0xd8] sm:$0xff] %v441
    %475 = vst [vmem:[#allocation8 + $0xe0] sm:$0xff] %v370
    %476 = vst [vmem:[#allocation8 + $0xe8] sm:$0xff] %v372
    %477 = vst [vmem:[#allocation8 + $0xf0] sm:$0xff] %v443
    %478 = vst [vmem:[#allocation8 + $0xf8] sm:$0xff] %v445
    // Predicated region
    $region26: #{eval_lstm_model2_forward.4} parent=1 // pred_check
      _
    $region27: #{eval_lstm_model2_forward.4} parent=1 // pred_check_branch
      %480 = sbr.rel (0) target = $region29
    $region28: #{eval_lstm_model2_forward.4} parent=1 // pred_region
      %s482 = ssub.s32 4096, 4096
      %483 = vsyncadd [#allocation4], %s482
      %s484 = sshll.u32 [#allocation8], 4
      %s485 = int_to_ptr.vmem [resolvable:$true] %s484
      %490 = dma.vmem_to_hbm [thread:$0]  %s485, 4096, %s3, [#allocation4], 512, 512, 32
    $region29: #{eval_lstm_model2_forward.4} parent=1 // pred_fallthru
      _
    // Predicated region
    $region30: #{eval_lstm_model2_forward.4} parent=1 // pred_check
      _
    $region31: #{eval_lstm_model2_forward.4} parent=1 // pred_check_branch
      %492 = sbr.rel (0) target = $region33
    $region32: #{eval_lstm_model2_forward.4} parent=1 // pred_region
      %493 = dma.done [#allocation4], 4096
    $region33: #{eval_lstm_model2_forward.4} parent=1 // pred_fallthru
      _
    %494 = vsyncpa [#allocation3], 1
    %495 = vsyncpa [#allocation6], 1
    %496 = vsyncpa [#allocation4], 1

// kernel: eval_lstm_model2_forward.5
$region0: #{eval_lstm_model2_forward.5}
  #allocation0 [shape = 'u32[]', space=smem, size = 0x4, offset = 0x4, fixed_abs, tag = 'smem constant byte address 0x4 - core index']
  #allocation1 [shape = 'u32[144,128]{1,0:T(1,128)}', space=vmem, size = 0x12000, scoped, tag = 'internal scratch']
  #allocation2 [shape = 'f32[8,128]{1,0:T(8,128)}', space=vmem, size = 0x1000, scoped, tag = 'scratch operand']
  #allocation3 [shape = 'f32[8,128]{1,0:T(8,128)}', space=vmem, size = 0x1000, scoped, tag = 'scratch operand']
  #allocation4 [shape = 'f32[8,8,128]{2,1,0:T(8,128)}', space=vmem, size = 0x8000, scoped, tag = 'scratch operand']
  %s0 = inlined_call_operand.hbm [shape: f32[8,8,512], index: 0, kind: input, shape index: {}]
  %s1 = inlined_call_operand.hbm [shape: bf16[128,512], index: 1, kind: input, shape index: {}]
  %s2 = inlined_call_operand.hbm [shape: bf16[8,8,128], index: 2, kind: output, shape index: {}]
  %s3 = sld [smem:[#allocation0]]
  $region30: #{eval_lstm_model2_forward.5} parent=0
    _
  %s5 = ssub.s32 1, %s3
  %s6 = scalar_select 0, %s5, %s3
  $region1: #{eval_lstm_model2_forward.5} parent=0
    #allocation5 [shape = 'u8[131072]{0}', space=vmem, size = 0x20000, scoped, tag = 'input window, operand 0, single buffered']
    #allocation6 [shape = 's32[1]{0}', space=sflag, size = 0x4, scoped, tag = 'scoped memory for eval_lstm_model2_forward.5']
    #allocation7 [shape = 's32[1]{0}', space=sflag, size = 0x4, scoped, tag = 'scoped memory for eval_lstm_model2_forward.5']
    #allocation8 [shape = 'u8[131072]{0}', space=vmem, size = 0x20000, scoped, tag = 'input window, operand 1, single buffered']
    #allocation9 [shape = 's32[1]{0}', space=sflag, size = 0x4, scoped, tag = 'scoped memory for eval_lstm_model2_forward.5']
    #allocation10 [shape = 'u8[16384]{0}', space=vmem, size = 0x4000, scoped, tag = 'output window, operand 0, single buffered']
    %7 = vsyncpa [#allocation6], 0
    %8 = vsyncpa [#allocation9], 0
    %9 = vsyncpa [#allocation7], 0
    // Predicated region
    $region2: #{eval_lstm_model2_forward.5} parent=1 // pred_check
      _
    $region3: #{eval_lstm_model2_forward.5} parent=1 // pred_check_branch
      %11 = sbr.rel (0) target = $region5
    $region4: #{eval_lstm_model2_forward.5} parent=1 // pred_region
      %s13 = ssub.s32 4096, 4096
      %14 = vsyncadd [#allocation6], %s13
      %s15 = sshll.u32 [#allocation5], 4
      %s16 = int_to_ptr.vmem [resolvable:$true] %s15
      %21 = dma.hbm_to_vmem [thread:$0]  %s0, 4096, %s16, [#allocation6], 512, 512, 32
    $region5: #{eval_lstm_model2_forward.5} parent=1 // pred_fallthru
      _
    // Predicated region
    $region6: #{eval_lstm_model2_forward.5} parent=1 // pred_check
      _
    $region7: #{eval_lstm_model2_forward.5} parent=1 // pred_check_branch
      %23 = sbr.rel (0) target = $region9
    $region8: #{eval_lstm_model2_forward.5} parent=1 // pred_region
      %s25 = ssub.s32 4096, 4096
      %26 = vsyncadd [#allocation9], %s25
      %s27 = sshll.u32 [#allocation8], 4
      %s28 = int_to_ptr.vmem [resolvable:$true] %s27
      %33 = dma.hbm_to_vmem [thread:$0]  %s1, 4096, %s28, [#allocation9], 256, 256, 16
    $region9: #{eval_lstm_model2_forward.5} parent=1 // pred_fallthru
      _
    // Predicated region
    $region10: #{eval_lstm_model2_forward.5} parent=1 // pred_check
      _
    $region11: #{eval_lstm_model2_forward.5} parent=1 // pred_check_branch
      %35 = sbr.rel (0) target = $region13
    $region12: #{eval_lstm_model2_forward.5} parent=1 // pred_region
      %36 = dma.done [#allocation6], 4096
    $region13: #{eval_lstm_model2_forward.5} parent=1 // pred_fallthru
      _
    // Predicated region
    $region14: #{eval_lstm_model2_forward.5} parent=1 // pred_check
      _
    $region15: #{eval_lstm_model2_forward.5} parent=1 // pred_check_branch
      %38 = sbr.rel (0) target = $region17
    $region16: #{eval_lstm_model2_forward.5} parent=1 // pred_region
      %39 = dma.done [#allocation9], 4096
    $region17: #{eval_lstm_model2_forward.5} parent=1 // pred_fallthru
      _
    %p41 = scmp.eq.s32.totalorder 0, 0
    // Predicated region
    $region18: #{eval_lstm_model2_forward.5} parent=1 // pred_check
      %p42 = pneg %p41
    $region19: #{eval_lstm_model2_forward.5} parent=1 // pred_check_branch
      %44 = sbr.rel (%p42) target = $region21
    $region20: #{eval_lstm_model2_forward.5} parent=1 // pred_region
      %45 = vst [vmem:[#allocation2] sm:$0xff] 0.0
      %46 = vst [vmem:[#allocation3] sm:$0xff] 0.0
    $region21: #{eval_lstm_model2_forward.5} parent=1 // pred_fallthru
      _
    %v47 = vld [vmem:[#allocation5] sm:$0xff]
    %v48 = vld [vmem:[#allocation5 + $0x8] sm:$0xff]
    %v49 = vld [vmem:[#allocation5 + $0x10] sm:$0xff]
    %v50 = vld [vmem:[#allocation5 + $0x18] sm:$0xff]
    %v51 = vld [vmem:[#allocation2] sm:$0xff]
    %v52 = vpack.c.bf16 %v51, %v51
    %v53 = vld [vmem:[#allocation8] sm:$0xff]
    %v54 = vld [vmem:[#allocation8 + $0x8] sm:$0xff]
    %v55 = vld [vmem:[#allocation8 + $0x10] sm:$0xff]
    %v56 = vld [vmem:[#allocation8 + $0x18] sm:$0xff]
    %v57 = vld [vmem:[#allocation8 + $0x20] sm:$0xff]
    %v58 = vld [vmem:[#allocation8 + $0x28] sm:$0xff]
    %v59 = vld [vmem:[#allocation8 + $0x30] sm:$0xff]
    %v60 = vld [vmem:[#allocation8 + $0x38] sm:$0xff]
    %v61 = vld [vmem:[#allocation8 + $0x40] sm:$0xff]
    %v62 = vld [vmem:[#allocation8 + $0x48] sm:$0xff]
    %v63 = vld [vmem:[#allocation8 + $0x50] sm:$0xff]
    %v64 = vld [vmem:[#allocation8 + $0x58] sm:$0xff]
    %v65 = vld [vmem:[#allocation8 + $0x60] sm:$0xff]
    %v66 = vld [vmem:[#allocation8 + $0x68] sm:$0xff]
    %v67 = vld [vmem:[#allocation8 + $0x70] sm:$0xff]
    %v68 = vld [vmem:[#allocation8 + $0x78] sm:$0xff]
    %v69 = vld [vmem:[#allocation8 + $0x80] sm:$0xff]
    %v70 = vld [vmem:[#allocation8 + $0x88] sm:$0xff]
    %v71 = vld [vmem:[#allocation8 + $0x90] sm:$0xff]
    %v72 = vld [vmem:[#allocation8 + $0x98] sm:$0xff]
    %v73 = vld [vmem:[#allocation8 + $0xa0] sm:$0xff]
    %v74 = vld [vmem:[#allocation8 + $0xa8] sm:$0xff]
    %v75 = vld [vmem:[#allocation8 + $0xb0] sm:$0xff]
    %v76 = vld [vmem:[#allocation8 + $0xb8] sm:$0xff]
    %v77 = vld [vmem:[#allocation8 + $0xc0] sm:$0xff]
    %v78 = vld [vmem:[#allocation8 + $0xc8] sm:$0xff]
    %v79 = vld [vmem:[#allocation8 + $0xd0] sm:$0xff]
    %v80 = vld [vmem:[#allocation8 + $0xd8] sm:$0xff]
    %v81 = vld [vmem:[#allocation8 + $0xe0] sm:$0xff]
    %v82 = vld [vmem:[#allocation8 + $0xe8] sm:$0xff]
    %v83 = vld [vmem:[#allocation8 + $0xf0] sm:$0xff]
    %v84 = vld [vmem:[#allocation8 + $0xf8] sm:$0xff]
    %v117 = vunpack.c.l.b16 %v53
    %v118 = vunpack.c.h.b16 %v53
    %v119 = vunpack.c.l.b16 %v54
    %v120 = vunpack.c.h.b16 %v54
    %v121 = vunpack.c.l.b16 %v55
    %v122 = vunpack.c.h.b16 %v55
    %v123 = vunpack.c.l.b16 %v56
    %v124 = vunpack.c.h.b16 %v56
    %v125 = vunpack.c.l.b16 %v57
    %v126 = vunpack.c.h.b16 %v57
    %v127 = vunpack.c.l.b16 %v58
    %v128 = vunpack.c.h.b16 %v58
    %v129 = vunpack.c.l.b16 %v59
    %v130 = vunpack.c.h.b16 %v59
    %v131 = vunpack.c.l.b16 %v60
    %v132 = vunpack.c.h.b16 %v60
    %v133 = vunpack.c.l.b16 %v61
    %v134 = vunpack.c.h.b16 %v61
    %v135 = vunpack.c.l.b16 %v62
    %v136 = vunpack.c.h.b16 %v62
    %v137 = vunpack.c.l.b16 %v63
    %v138 = vunpack.c.h.b16 %v63
    %v139 = vunpack.c.l.b16 %v64
    %v140 = vunpack.c.h.b16 %v64
    %v141 = vunpack.c.l.b16 %v65
    %v142 = vunpack.c.h.b16 %v65
    %v143 = vunpack.c.l.b16 %v66
    %v144 = vunpack.c.h.b16 %v66
    %v145 = vunpack.c.l.b16 %v67
    %v146 = vunpack.c.h.b16 %v67
    %v147 = vunpack.c.l.b16 %v68
    %v148 = vunpack.c.h.b16 %v68
    %v149 = vunpack.c.l.b16 %v69
    %v150 = vunpack.c.h.b16 %v69
    %v151 = vunpack.c.l.b16 %v70
    %v152 = vunpack.c.h.b16 %v70
    %v153 = vunpack.c.l.b16 %v71
    %v154 = vunpack.c.h.b16 %v71
    %v155 = vunpack.c.l.b16 %v72
    %v156 = vunpack.c.h.b16 %v72
    %v157 = vunpack.c.l.b16 %v73
    %v158 = vunpack.c.h.b16 %v73
    %v159 = vunpack.c.l.b16 %v74
    %v160 = vunpack.c.h.b16 %v74
    %v161 = vunpack.c.l.b16 %v75
    %v162 = vunpack.c.h.b16 %v75
    %v163 = vunpack.c.l.b16 %v76
    %v164 = vunpack.c.h.b16 %v76
    %v165 = vunpack.c.l.b16 %v77
    %v166 = vunpack.c.h.b16 %v77
    %v167 = vunpack.c.l.b16 %v78
    %v168 = vunpack.c.h.b16 %v78
    %v169 = vunpack.c.l.b16 %v79
    %v170 = vunpack.c.h.b16 %v79
    %v171 = vunpack.c.l.b16 %v80
    %v172 = vunpack.c.h.b16 %v80
    %v173 = vunpack.c.l.b16 %v81
    %v174 = vunpack.c.h.b16 %v81
    %v175 = vunpack.c.l.b16 %v82
    %v176 = vunpack.c.h.b16 %v82
    %v177 = vunpack.c.l.b16 %v83
    %v178 = vunpack.c.h.b16 %v83
    %v179 = vunpack.c.l.b16 %v84
    %v180 = vunpack.c.h.b16 %v84
    %v181 = vpack.c.b16 %v121, %v117
    %v182 = vpack.c.b16 %v122, %v118
    %v183 = vpack.c.b16 %v123, %v119
    %v184 = vpack.c.b16 %v124, %v120
    %v185 = vpack.c.b16 %v129, %v125
    %v186 = vpack.c.b16 %v130, %v126
    %v187 = vpack.c.b16 %v131, %v127
    %v188 = vpack.c.b16 %v132, %v128
    %v189 = vpack.c.b16 %v137, %v133
    %v190 = vpack.c.b16 %v138, %v134
    %v191 = vpack.c.b16 %v139, %v135
    %v192 = vpack.c.b16 %v140, %v136
    %v193 = vpack.c.b16 %v145, %v141
    %v194 = vpack.c.b16 %v146, %v142
    %v195 = vpack.c.b16 %v147, %v143
    %v196 = vpack.c.b16 %v148, %v144
    %v197 = vpack.c.b16 %v153, %v149
    %v198 = vpack.c.b16 %v154, %v150
    %v199 = vpack.c.b16 %v155, %v151
    %v200 = vpack.c.b16 %v156, %v152
    %v201 = vpack.c.b16 %v161, %v157
    %v202 = vpack.c.b16 %v162, %v158
    %v203 = vpack.c.b16 %v163, %v159
    %v204 = vpack.c.b16 %v164, %v160
    %v205 = vpack.c.b16 %v169, %v165
    %v206 = vpack.c.b16 %v170, %v166
    %v207 = vpack.c.b16 %v171, %v167
    %v208 = vpack.c.b16 %v172, %v168
    %v209 = vpack.c.b16 %v177, %v173
    %v210 = vpack.c.b16 %v178, %v174
    %v211 = vpack.c.b16 %v179, %v175
    %v212 = vpack.c.b16 %v180, %v176
    %245 = vmatprep.subr.bf16.mxu0 %v182
    %246 = vmatpush1.bf16.msra.mxu0 %v181
    %247 = vmatprep.subr.bf16.mxu0 %v186
    %248 = vmatpush1.bf16.msra.mxu0 %v185
    %249 = vmatprep.subr.bf16.mxu0 %v190
    %250 = vmatpush1.bf16.msra.mxu0 %v189
    %251 = vmatprep.subr.bf16.mxu0 %v194
    %252 = vmatpush1.bf16.msra.mxu0 %v193
    %253 = vmatprep.subr.bf16.mxu0 %v198
    %254 = vmatpush1.bf16.msra.mxu0 %v197
    %255 = vmatprep.subr.bf16.mxu0 %v202
    %256 = vmatpush1.bf16.msra.mxu0 %v201
    %257 = vmatprep.subr.bf16.mxu0 %v206
    %258 = vmatpush1.bf16.msra.mxu0 %v205
    %259 = vmatprep.subr.bf16.mxu0 %v210
    %260 = vmatpush1.bf16.msra.mxu0 %v209
    %261 = vmatprep.subr.bf16.mxu0 0
    %262 = vmatpush1.bf16.msra.mxu0 0
    %263 = vmatprep.subr.bf16.mxu0 0
    %264 = vmatpush1.bf16.msra.mxu0 0
    %265 = vmatprep.subr.bf16.mxu0 0
    %266 = vmatpush1.bf16.msra.mxu0 0
    %267 = vmatprep.subr.bf16.mxu0 0
    %268 = vmatpush1.bf16.msra.mxu0 0
    %269 = vmatprep.subr.bf16.mxu0 0
    %270 = vmatpush1.bf16.msra.mxu0 0
    %271 = vmatprep.subr.bf16.mxu0 0
    %272 = vmatpush1.bf16.msra.mxu0 0
    %273 = vmatprep.subr.bf16.mxu0 0
    %274 = vmatpush1.bf16.msra.mxu0 0
    %275 = vmatprep.subr.bf16.mxu0 0
    %276 = vmatpush1.bf16.msra.mxu0 0
    %277 = vmatprep.mubr.bf16.mxu0 0
    %278 = vmatmul.mubr.bf16.gmra.mrb[0].mxu0 %v52
    %v279 = vpop.f32.mrb[0].mxu0
    %v280 = vadd.f32 0.0, %v279
    %v281 = vpop.f32.mrb[0].mxu0
    %v282 = vadd.f32 0.0, %v281
    %v283 = vpop.f32.mrb[0].mxu0
    %v284 = vpop.f32.mrb[0].mxu0
    %285 = vdwg.mxu0
    %286 = vmatprep.subr.bf16.mxu0 %v184
    %287 = vmatpush1.bf16.msra.mxu0 %v183
    %288 = vmatprep.subr.bf16.mxu0 %v188
    %289 = vmatpush1.bf16.msra.mxu0 %v187
    %290 = vmatprep.subr.bf16.mxu0 %v192
    %291 = vmatpush1.bf16.msra.mxu0 %v191
    %292 = vmatprep.subr.bf16.mxu0 %v196
    %293 = vmatpush1.bf16.msra.mxu0 %v195
    %294 = vmatprep.subr.bf16.mxu0 %v200
    %295 = vmatpush1.bf16.msra.mxu0 %v199
    %296 = vmatprep.subr.bf16.mxu0 %v204
    %297 = vmatpush1.bf16.msra.mxu0 %v203
    %298 = vmatprep.subr.bf16.mxu0 %v208
    %299 = vmatpush1.bf16.msra.mxu0 %v207
    %300 = vmatprep.subr.bf16.mxu0 %v212
    %301 = vmatpush1.bf16.msra.mxu0 %v211
    %302 = vmatprep.subr.bf16.mxu0 0
    %303 = vmatpush1.bf16.msra.mxu0 0
    %304 = vmatprep.subr.bf16.mxu0 0
    %305 = vmatpush1.bf16.msra.mxu0 0
    %306 = vmatprep.subr.bf16.mxu0 0
    %307 = vmatpush1.bf16.msra.mxu0 0
    %308 = vmatprep.subr.bf16.mxu0 0
    %309 = vmatpush1.bf16.msra.mxu0 0
    %310 = vmatprep.subr.bf16.mxu0 0
    %311 = vmatpush1.bf16.msra.mxu0 0
    %312 = vmatprep.subr.bf16.mxu0 0
    %313 = vmatpush1.bf16.msra.mxu0 0
    %314 = vmatprep.subr.bf16.mxu0 0
    %315 = vmatpush1.bf16.msra.mxu0 0
    %316 = vmatprep.subr.bf16.mxu0 0
    %317 = vmatpush1.bf16.msra.mxu0 0
    %318 = vmatprep.mubr.bf16.mxu0 0
    %319 = vmatmul.mubr.bf16.gmra.mrb[0].mxu0 %v52
    %v320 = vpop.f32.mrb[0].mxu0
    %v321 = vadd.f32 0.0, %v320
    %v322 = vpop.f32.mrb[0].mxu0
    %v323 = vadd.f32 0.0, %v322
    %v324 = vpop.f32.mrb[0].mxu0
    %v325 = vpop.f32.mrb[0].mxu0
    %326 = vdwg.mxu0
    %v327 = vadd.f32 %v47, %v280
    %v328 = vadd.f32 %v48, %v282
    %v329 = vadd.f32 %v49, %v321
    %v330 = vadd.f32 %v50, %v323
    %v331 = vxor.u32 %v327, 2147483648
    %v332 = vmul.f32 %v331, 1.442695
    %v333 = vpow.pop %v332
    %v334 = vadd.f32 %v333, 1.0
    %v335 = vrcp.pop %v334
    %v336 = vmul.f32 1.0, %v335
    %v337 = vxor.u32 %v328, 2147483648
    %v338 = vmul.f32 %v337, 1.442695
    %v339 = vpow.pop %v338
    %v340 = vadd.f32 %v339, 1.0
    %v341 = vrcp.pop %v340
    %v342 = vmul.f32 1.0, %v341
    %v343 = vtanh.pop %v329
    %v344 = vxor.u32 %v330, 2147483648
    %v345 = vmul.f32 %v344, 1.442695
    %v346 = vpow.pop %v345
    %v347 = vadd.f32 %v346, 1.0
    %v348 = vrcp.pop %v347
    %v349 = vmul.f32 1.0, %v348
    %v350 = vld [vmem:[#allocation3] sm:$0xff]
    %v351 = vmul.f32 %v342, %v350
    %v352 = vmul.f32 %v336, %v343
    %v353 = vadd.f32 %v351, %v352
    %v354 = vtanh.pop %v353
    %v355 = vmul.f32 %v349, %v354
    %356 = vst [vmem:[#allocation3] sm:$0xff] %v353
    %357 = vst [vmem:[#allocation2] sm:$0xff] %v355
    %358 = vst [vmem:[#allocation4] sm:$0xff] %v355
    %s359 = scalar_lea.vmem [#allocation5], 32
    %v360 = vld [vmem:[%s359] sm:$0xff]
    %v361 = vld [vmem:[%s359 + $0x8] sm:$0xff]
    %v362 = vld [vmem:[%s359 + $0x10] sm:$0xff]
    %v363 = vld [vmem:[%s359 + $0x18] sm:$0xff]
    %v364 = vld [vmem:[#allocation2] sm:$0xff]
    %v365 = vpack.c.bf16 %v364, %v364
    %v366 = vld [vmem:[#allocation8] sm:$0xff]
    %v367 = vld [vmem:[#allocation8 + $0x8] sm:$0xff]
    %v368 = vld [vmem:[#allocation8 + $0x10] sm:$0xff]
    %v369 = vld [vmem:[#allocation8 + $0x18] sm:$0xff]
    %v370 = vld [vmem:[#allocation8 + $0x20] sm:$0xff]
    %v371 = vld [vmem:[#allocation8 + $0x28] sm:$0xff]
    %v372 = vld [vmem:[#allocation8 + $0x30] sm:$0xff]
    %v373 = vld [vmem:[#allocation8 + $0x38] sm:$0xff]
    %v374 = vld [vmem:[#allocation8 + $0x40] sm:$0xff]
    %v375 = vld [vmem:[#allocation8 + $0x48] sm:$0xff]
    %v376 = vld [vmem:[#allocation8 + $0x50] sm:$0xff]
    %v377 = vld [vmem:[#allocation8 + $0x58] sm:$0xff]
    %v378 = vld [vmem:[#allocation8 + $0x60] sm:$0xff]
    %v379 = vld [vmem:[#allocation8 + $0x68] sm:$0xff]
    %v380 = vld [vmem:[#allocation8 + $0x70] sm:$0xff]
    %v381 = vld [vmem:[#allocation8 + $0x78] sm:$0xff]
    %v382 = vld [vmem:[#allocation8 + $0x80] sm:$0xff]
    %v383 = vld [vmem:[#allocation8 + $0x88] sm:$0xff]
    %v384 = vld [vmem:[#allocation8 + $0x90] sm:$0xff]
    %v385 = vld [vmem:[#allocation8 + $0x98] sm:$0xff]
    %v386 = vld [vmem:[#allocation8 + $0xa0] sm:$0xff]
    %v387 = vld [vmem:[#allocation8 + $0xa8] sm:$0xff]
    %v388 = vld [vmem:[#allocation8 + $0xb0] sm:$0xff]
    %v389 = vld [vmem:[#allocation8 + $0xb8] sm:$0xff]
    %v390 = vld [vmem:[#allocation8 + $0xc0] sm:$0xff]
    %v391 = vld [vmem:[#allocation8 + $0xc8] sm:$0xff]
    %v392 = vld [vmem:[#allocation8 + $0xd0] sm:$0xff]
    %v393 = vld [vmem:[#allocation8 + $0xd8] sm:$0xff]
    %v394 = vld [vmem:[#allocation8 + $0xe0] sm:$0xff]
    %v395 = vld [vmem:[#allocation8 + $0xe8] sm:$0xff]
    %v396 = vld [vmem:[#allocation8 + $0xf0] sm:$0xff]
    %v397 = vld [vmem:[#allocation8 + $0xf8] sm:$0xff]
    %v430 = vunpack.c.l.b16 %v366
    %v431 = vunpack.c.h.b16 %v366
    %v432 = vunpack.c.l.b16 %v367
    %v433 = vunpack.c.h.b16 %v367
    %v434 = vunpack.c.l.b16 %v368
    %v435 = vunpack.c.h.b16 %v368
    %v436 = vunpack.c.l.b16 %v369
    %v437 = vunpack.c.h.b16 %v369
    %v438 = vunpack.c.l.b16 %v370
    %v439 = vunpack.c.h.b16 %v370
    %v440 = vunpack.c.l.b16 %v371
    %v441 = vunpack.c.h.b16 %v371
    %v442 = vunpack.c.l.b16 %v372
    %v443 = vunpack.c.h.b16 %v372
    %v444 = vunpack.c.l.b16 %v373
    %v445 = vunpack.c.h.b16 %v373
    %v446 = vunpack.c.l.b16 %v374
    %v447 = vunpack.c.h.b16 %v374
    %v448 = vunpack.c.l.b16 %v375
    %v449 = vunpack.c.h.b16 %v375
    %v450 = vunpack.c.l.b16 %v376
    %v451 = vunpack.c.h.b16 %v376
    %v452 = vunpack.c.l.b16 %v377
    %v453 = vunpack.c.h.b16 %v377
    %v454 = vunpack.c.l.b16 %v378
    %v455 = vunpack.c.h.b16 %v378
    %v456 = vunpack.c.l.b16 %v379
    %v457 = vunpack.c.h.b16 %v379
    %v458 = vunpack.c.l.b16 %v380
    %v459 = vunpack.c.h.b16 %v380
    %v460 = vunpack.c.l.b16 %v381
    %v461 = vunpack.c.h.b16 %v381
    %v462 = vunpack.c.l.b16 %v382
    %v463 = vunpack.c.h.b16 %v382
    %v464 = vunpack.c.l.b16 %v383
    %v465 = vunpack.c.h.b16 %v383
    %v466 = vunpack.c.l.b16 %v384
    %v467 = vunpack.c.h.b16 %v384
    %v468 = vunpack.c.l.b16 %v385
    %v469 = vunpack.c.h.b16 %v385
    %v470 = vunpack.c.l.b16 %v386
    %v471 = vunpack.c.h.b16 %v386
    %v472 = vunpack.c.l.b16 %v387
    %v473 = vunpack.c.h.b16 %v387
    %v474 = vunpack.c.l.b16 %v388
    %v475 = vunpack.c.h.b16 %v388
    %v476 = vunpack.c.l.b16 %v389
    %v477 = vunpack.c.h.b16 %v389
    %v478 = vunpack.c.l.b16 %v390
    %v479 = vunpack.c.h.b16 %v390
    %v480 = vunpack.c.l.b16 %v391
    %v481 = vunpack.c.h.b16 %v391
    %v482 = vunpack.c.l.b16 %v392
    %v483 = vunpack.c.h.b16 %v392
    %v484 = vunpack.c.l.b16 %v393
    %v485 = vunpack.c.h.b16 %v393
    %v486 = vunpack.c.l.b16 %v394
    %v487 = vunpack.c.h.b16 %v394
    %v488 = vunpack.c.l.b16 %v395
    %v489 = vunpack.c.h.b16 %v395
    %v490 = vunpack.c.l.b16 %v396
    %v491 = vunpack.c.h.b16 %v396
    %v492 = vunpack.c.l.b16 %v397
    %v493 = vunpack.c.h.b16 %v397
    %v494 = vpack.c.b16 %v434, %v430
    %v495 = vpack.c.b16 %v435, %v431
    %v496 = vpack.c.b16 %v436, %v432
    %v497 = vpack.c.b16 %v437, %v433
    %v498 = vpack.c.b16 %v442, %v438
    %v499 = vpack.c.b16 %v443, %v439
    %v500 = vpack.c.b16 %v444, %v440
    %v501 = vpack.c.b16 %v445, %v441
    %v502 = vpack.c.b16 %v450, %v446
    %v503 = vpack.c.b16 %v451, %v447
    %v504 = vpack.c.b16 %v452, %v448
    %v505 = vpack.c.b16 %v453, %v449
    %v506 = vpack.c.b16 %v458, %v454
    %v507 = vpack.c.b16 %v459, %v455
    %v508 = vpack.c.b16 %v460, %v456
    %v509 = vpack.c.b16 %v461, %v457
    %v510 = vpack.c.b16 %v466, %v462
    %v511 = vpack.c.b16 %v467, %v463
    %v512 = vpack.c.b16 %v468, %v464
    %v513 = vpack.c.b16 %v469, %v465
    %v514 = vpack.c.b16 %v474, %v470
    %v515 = vpack.c.b16 %v475, %v471
    %v516 = vpack.c.b16 %v476, %v472
    %v517 = vpack.c.b16 %v477, %v473
    %v518 = vpack.c.b16 %v482, %v478
    %v519 = vpack.c.b16 %v483, %v479
    %v520 = vpack.c.b16 %v484, %v480
    %v521 = vpack.c.b16 %v485, %v481
    %v522 = vpack.c.b16 %v490, %v486
    %v523 = vpack.c.b16 %v491, %v487
    %v524 = vpack.c.b16 %v492, %v488
    %v525 = vpack.c.b16 %v493, %v489
    %558 = vmatprep.subr.bf16.mxu0 %v495
    %559 = vmatpush1.bf16.msra.mxu0 %v494
    %560 = vmatprep.subr.bf16.mxu0 %v499
    %561 = vmatpush1.bf16.msra.mxu0 %v498
    %562 = vmatprep.subr.bf16.mxu0 %v503
    %563 = vmatpush1.bf16.msra.mxu0 %v502
    %564 = vmatprep.subr.bf16.mxu0 %v507
    %565 = vmatpush1.bf16.msra.mxu0 %v506
    %566 = vmatprep.subr.bf16.mxu0 %v511
    %567 = vmatpush1.bf16.msra.mxu0 %v510
    %568 = vmatprep.subr.bf16.mxu0 %v515
    %569 = vmatpush1.bf16.msra.mxu0 %v514
    %570 = vmatprep.subr.bf16.mxu0 %v519
    %571 = vmatpush1.bf16.msra.mxu0 %v518
    %572 = vmatprep.subr.bf16.mxu0 %v523
    %573 = vmatpush1.bf16.msra.mxu0 %v522
    %574 = vmatprep.subr.bf16.mxu0 0
    %575 = vmatpush1.bf16.msra.mxu0 0
    %576 = vmatprep.subr.bf16.mxu0 0
    %577 = vmatpush1.bf16.msra.mxu0 0
    %578 = vmatprep.subr.bf16.mxu0 0
    %579 = vmatpush1.bf16.msra.mxu0 0
    %580 = vmatprep.subr.bf16.mxu0 0
    %581 = vmatpush1.bf16.msra.mxu0 0
    %582 = vmatprep.subr.bf16.mxu0 0
    %583 = vmatpush1.bf16.msra.mxu0 0
    %584 = vmatprep.subr.bf16.mxu0 0
    %585 = vmatpush1.bf16.msra.mxu0 0
    %586 = vmatprep.subr.bf16.mxu0 0
    %587 = vmatpush1.bf16.msra.mxu0 0
    %588 = vmatprep.subr.bf16.mxu0 0
    %589 = vmatpush1.bf16.msra.mxu0 0
    %590 = vmatprep.mubr.bf16.mxu0 0
    %591 = vmatmul.mubr.bf16.gmra.mrb[0].mxu0 %v365
    %v592 = vpop.f32.mrb[0].mxu0
    %v593 = vadd.f32 0.0, %v592
    %v594 = vpop.f32.mrb[0].mxu0
    %v595 = vadd.f32 0.0, %v594
    %v596 = vpop.f32.mrb[0].mxu0
    %v597 = vpop.f32.mrb[0].mxu0
    %598 = vdwg.mxu0
    %599 = vmatprep.subr.bf16.mxu0 %v497
    %600 = vmatpush1.bf16.msra.mxu0 %v496
    %601 = vmatprep.subr.bf16.mxu0 %v501
    %602 = vmatpush1.bf16.msra.mxu0 %v500
    %603 = vmatprep.subr.bf16.mxu0 %v505
    %604 = vmatpush1.bf16.msra.mxu0 %v504
    %605 = vmatprep.subr.bf16.mxu0 %v509
    %606 = vmatpush1.bf16.msra.mxu0 %v508
    %607 = vmatprep.subr.bf16.mxu0 %v513
    %608 = vmatpush1.bf16.msra.mxu0 %v512
    %609 = vmatprep.subr.bf16.mxu0 %v517
    %610 = vmatpush1.bf16.msra.mxu0 %v516
    %611 = vmatprep.subr.bf16.mxu0 %v521
    %612 = vmatpush1.bf16.msra.mxu0 %v520
    %613 = vmatprep.subr.bf16.mxu0 %v525
    %614 = vmatpush1.bf16.msra.mxu0 %v524
    %615 = vmatprep.subr.bf16.mxu0 0
    %616 = vmatpush1.bf16.msra.mxu0 0
    %617 = vmatprep.subr.bf16.mxu0 0
    %618 = vmatpush1.bf16.msra.mxu0 0
    %619 = vmatprep.subr.bf16.mxu0 0
    %620 = vmatpush1.bf16.msra.mxu0 0
    %621 = vmatprep.subr.bf16.mxu0 0
    %622 = vmatpush1.bf16.msra.mxu0 0
    %623 = vmatprep.subr.bf16.mxu0 0
    %624 = vmatpush1.bf16.msra.mxu0 0
    %625 = vmatprep.subr.bf16.mxu0 0
    %626 = vmatpush1.bf16.msra.mxu0 0
    %627 = vmatprep.subr.bf16.mxu0 0
    %628 = vmatpush1.bf16.msra.mxu0 0
    %629 = vmatprep.subr.bf16.mxu0 0
    %630 = vmatpush1.bf16.msra.mxu0 0
    %631 = vmatprep.mubr.bf16.mxu0 0
    %632 = vmatmul.mubr.bf16.gmra.mrb[0].mxu0 %v365
    %v633 = vpop.f32.mrb[0].mxu0
    %v634 = vadd.f32 0.0, %v633
    %v635 = vpop.f32.mrb[0].mxu0
    %v636 = vadd.f32 0.0, %v635
    %v637 = vpop.f32.mrb[0].mxu0
    %v638 = vpop.f32.mrb[0].mxu0
    %639 = vdwg.mxu0
    %v640 = vadd.f32 %v360, %v593
    %v641 = vadd.f32 %v361, %v595
    %v642 = vadd.f32 %v362, %v634
    %v643 = vadd.f32 %v363, %v636
    %v644 = vxor.u32 %v640, 2147483648
    %v645 = vmul.f32 %v644, 1.442695
    %v646 = vpow.pop %v645
    %v647 = vadd.f32 %v646, 1.0
    %v648 = vrcp.pop %v647
    %v649 = vmul.f32 1.0, %v648
    %v650 = vxor.u32 %v641, 2147483648
    %v651 = vmul.f32 %v650, 1.442695
    %v652 = vpow.pop %v651
    %v653 = vadd.f32 %v652, 1.0
    %v654 = vrcp.pop %v653
    %v655 = vmul.f32 1.0, %v654
    %v656 = vtanh.pop %v642
    %v657 = vxor.u32 %v643, 2147483648
    %v658 = vmul.f32 %v657, 1.442695
    %v659 = vpow.pop %v658
    %v660 = vadd.f32 %v659, 1.0
    %v661 = vrcp.pop %v660
    %v662 = vmul.f32 1.0, %v661
    %v663 = vld [vmem:[#allocation3] sm:$0xff]
    %v664 = vmul.f32 %v655, %v663
    %v665 = vmul.f32 %v649, %v656
    %v666 = vadd.f32 %v664, %v665
    %v667 = vtanh.pop %v666
    %v668 = vmul.f32 %v662, %v667
    %669 = vst [vmem:[#allocation3] sm:$0xff] %v666
    %670 = vst [vmem:[#allocation2] sm:$0xff] %v668
    %s671 = scalar_lea.vmem [#allocation4], 8
    %672 = vst [vmem:[%s671] sm:$0xff] %v668
    %s673 = scalar_lea.vmem [#allocation5], 64
    %v674 = vld [vmem:[%s673] sm:$0xff]
    %v675 = vld [vmem:[%s673 + $0x8] sm:$0xff]
    %v676 = vld [vmem:[%s673 + $0x10] sm:$0xff]
    %v677 = vld [vmem:[%s673 + $0x18] sm:$0xff]
    %v678 = vld [vmem:[#allocation2] sm:$0xff]
    %v679 = vpack.c.bf16 %v678, %v678
    %v680 = vld [vmem:[#allocation8] sm:$0xff]
    %v681 = vld [vmem:[#allocation8 + $0x8] sm:$0xff]
    %v682 = vld [vmem:[#allocation8 + $0x10] sm:$0xff]
    %v683 = vld [vmem:[#allocation8 + $0x18] sm:$0xff]
    %v684 = vld [vmem:[#allocation8 + $0x20] sm:$0xff]
    %v685 = vld [vmem:[#allocation8 + $0x28] sm:$0xff]
    %v686 = vld [vmem:[#allocation8 + $0x30] sm:$0xff]
    %v687 = vld [vmem:[#allocation8 + $0x38] sm:$0xff]
    %v688 = vld [vmem:[#allocation8 + $0x40] sm:$0xff]
    %v689 = vld [vmem:[#allocation8 + $0x48] sm:$0xff]
    %v690 = vld [vmem:[#allocation8 + $0x50] sm:$0xff]
    %v691 = vld [vmem:[#allocation8 + $0x58] sm:$0xff]
    %v692 = vld [vmem:[#allocation8 + $0x60] sm:$0xff]
    %v693 = vld [vmem:[#allocation8 + $0x68] sm:$0xff]
    %v694 = vld [vmem:[#allocation8 + $0x70] sm:$0xff]
    %v695 = vld [vmem:[#allocation8 + $0x78] sm:$0xff]
    %v696 = vld [vmem:[#allocation8 + $0x80] sm:$0xff]
    %v697 = vld [vmem:[#allocation8 + $0x88] sm:$0xff]
    %v698 = vld [vmem:[#allocation8 + $0x90] sm:$0xff]
    %v699 = vld [vmem:[#allocation8 + $0x98] sm:$0xff]
    %v700 = vld [vmem:[#allocation8 + $0xa0] sm:$0xff]
    %v701 = vld [vmem:[#allocation8 + $0xa8] sm:$0xff]
    %v702 = vld [vmem:[#allocation8 + $0xb0] sm:$0xff]
    %v703 = vld [vmem:[#allocation8 + $0xb8] sm:$0xff]
    %v704 = vld [vmem:[#allocation8 + $0xc0] sm:$0xff]
    %v705 = vld [vmem:[#allocation8 + $0xc8] sm:$0xff]
    %v706 = vld [vmem:[#allocation8 + $0xd0] sm:$0xff]
    %v707 = vld [vmem:[#allocation8 + $0xd8] sm:$0xff]
    %v708 = vld [vmem:[#allocation8 + $0xe0] sm:$0xff]
    %v709 = vld [vmem:[#allocation8 + $0xe8] sm:$0xff]
    %v710 = vld [vmem:[#allocation8 + $0xf0] sm:$0xff]
    %v711 = vld [vmem:[#allocation8 + $0xf8] sm:$0xff]
    %v744 = vunpack.c.l.b16 %v680
    %v745 = vunpack.c.h.b16 %v680
    %v746 = vunpack.c.l.b16 %v681
    %v747 = vunpack.c.h.b16 %v681
    %v748 = vunpack.c.l.b16 %v682
    %v749 = vunpack.c.h.b16 %v682
    %v750 = vunpack.c.l.b16 %v683
    %v751 = vunpack.c.h.b16 %v683
    %v752 = vunpack.c.l.b16 %v684
    %v753 = vunpack.c.h.b16 %v684
    %v754 = vunpack.c.l.b16 %v685
    %v755 = vunpack.c.h.b16 %v685
    %v756 = vunpack.c.l.b16 %v686
    %v757 = vunpack.c.h.b16 %v686
    %v758 = vunpack.c.l.b16 %v687
    %v759 = vunpack.c.h.b16 %v687
    %v760 = vunpack.c.l.b16 %v688
    %v761 = vunpack.c.h.b16 %v688
    %v762 = vunpack.c.l.b16 %v689
    %v763 = vunpack.c.h.b16 %v689
    %v764 = vunpack.c.l.b16 %v690
    %v765 = vunpack.c.h.b16 %v690
    %v766 = vunpack.c.l.b16 %v691
    %v767 = vunpack.c.h.b16 %v691
    %v768 = vunpack.c.l.b16 %v692
    %v769 = vunpack.c.h.b16 %v692
    %v770 = vunpack.c.l.b16 %v693
    %v771 = vunpack.c.h.b16 %v693
    %v772 = vunpack.c.l.b16 %v694
    %v773 = vunpack.c.h.b16 %v694
    %v774 = vunpack.c.l.b16 %v695
    %v775 = vunpack.c.h.b16 %v695
    %v776 = vunpack.c.l.b16 %v696
    %v777 = vunpack.c.h.b16 %v696
    %v778 = vunpack.c.l.b16 %v697
    %v779 = vunpack.c.h.b16 %v697
    %v780 = vunpack.c.l.b16 %v698
    %v781 = vunpack.c.h.b16 %v698
    %v782 = vunpack.c.l.b16 %v699
    %v783 = vunpack.c.h.b16 %v699
    %v784 = vunpack.c.l.b16 %v700
    %v785 = vunpack.c.h.b16 %v700
    %v786 = vunpack.c.l.b16 %v701
    %v787 = vunpack.c.h.b16 %v701
    %v788 = vunpack.c.l.b16 %v702
    %v789 = vunpack.c.h.b16 %v702
    %v790 = vunpack.c.l.b16 %v703
    %v791 = vunpack.c.h.b16 %v703
    %v792 = vunpack.c.l.b16 %v704
    %v793 = vunpack.c.h.b16 %v704
    %v794 = vunpack.c.l.b16 %v705
    %v795 = vunpack.c.h.b16 %v705
    %v796 = vunpack.c.l.b16 %v706
    %v797 = vunpack.c.h.b16 %v706
    %v798 = vunpack.c.l.b16 %v707
    %v799 = vunpack.c.h.b16 %v707
    %v800 = vunpack.c.l.b16 %v708
    %v801 = vunpack.c.h.b16 %v708
    %v802 = vunpack.c.l.b16 %v709
    %v803 = vunpack.c.h.b16 %v709
    %v804 = vunpack.c.l.b16 %v710
    %v805 = vunpack.c.h.b16 %v710
    %v806 = vunpack.c.l.b16 %v711
    %v807 = vunpack.c.h.b16 %v711
    %v808 = vpack.c.b16 %v748, %v744
    %v809 = vpack.c.b16 %v749, %v745
    %v810 = vpack.c.b16 %v750, %v746
    %v811 = vpack.c.b16 %v751, %v747
    %v812 = vpack.c.b16 %v756, %v752
    %v813 = vpack.c.b16 %v757, %v753
    %v814 = vpack.c.b16 %v758, %v754
    %v815 = vpack.c.b16 %v759, %v755
    %v816 = vpack.c.b16 %v764, %v760
    %v817 = vpack.c.b16 %v765, %v761
    %v818 = vpack.c.b16 %v766, %v762
    %v819 = vpack.c.b16 %v767, %v763
    %v820 = vpack.c.b16 %v772, %v768
    %v821 = vpack.c.b16 %v773, %v769
    %v822 = vpack.c.b16 %v774, %v770
    %v823 = vpack.c.b16 %v775, %v771
    %v824 = vpack.c.b16 %v780, %v776
    %v825 = vpack.c.b16 %v781, %v777
    %v826 = vpack.c.b16 %v782, %v778
    %v827 = vpack.c.b16 %v783, %v779
    %v828 = vpack.c.b16 %v788, %v784
    %v829 = vpack.c.b16 %v789, %v785
    %v830 = vpack.c.b16 %v790, %v786
    %v831 = vpack.c.b16 %v791, %v787
    %v832 = vpack.c.b16 %v796, %v792
    %v833 = vpack.c.b16 %v797, %v793
    %v834 = vpack.c.b16 %v798, %v794
    %v835 = vpack.c.b16 %v799, %v795
    %v836 = vpack.c.b16 %v804, %v800
    %v837 = vpack.c.b16 %v805, %v801
    %v838 = vpack.c.b16 %v806, %v802
    %v839 = vpack.c.b16 %v807, %v803
    %872 = vmatprep.subr.bf16.mxu0 %v809
    %873 = vmatpush1.bf16.msra.mxu0 %v808
    %874 = vmatprep.subr.bf16.mxu0 %v813
    %875 = vmatpush1.bf16.msra.mxu0 %v812
    %876 = vmatprep.subr.bf16.mxu0 %v817
    %877 = vmatpush1.bf16.msra.mxu0 %v816
    %878 = vmatprep.subr.bf16.mxu0 %v821
    %879 = vmatpush1.bf16.msra.mxu0 %v820
    %880 = vmatprep.subr.bf16.mxu0 %v825
    %881 = vmatpush1.bf16.msra.mxu0 %v824
    %882 = vmatprep.subr.bf16.mxu0 %v829
    %883 = vmatpush1.bf16.msra.mxu0 %v828
    %884 = vmatprep.subr.bf16.mxu0 %v833
    %885 = vmatpush1.bf16.msra.mxu0 %v832
    %886 = vmatprep.subr.bf16.mxu0 %v837
    %887 = vmatpush1.bf16.msra.mxu0 %v836
    %888 = vmatprep.subr.bf16.mxu0 0
    %889 = vmatpush1.bf16.msra.mxu0 0
    %890 = vmatprep.subr.bf16.mxu0 0
    %891 = vmatpush1.bf16.msra.mxu0 0
    %892 = vmatprep.subr.bf16.mxu0 0
    %893 = vmatpush1.bf16.msra.mxu0 0
    %894 = vmatprep.subr.bf16.mxu0 0
    %895 = vmatpush1.bf16.msra.mxu0 0
    %896 = vmatprep.subr.bf16.mxu0 0
    %897 = vmatpush1.bf16.msra.mxu0 0
    %898 = vmatprep.subr.bf16.mxu0 0
    %899 = vmatpush1.bf16.msra.mxu0 0
    %900 = vmatprep.subr.bf16.mxu0 0
    %901 = vmatpush1.bf16.msra.mxu0 0
    %902 = vmatprep.subr.bf16.mxu0 0
    %903 = vmatpush1.bf16.msra.mxu0 0
    %904 = vmatprep.mubr.bf16.mxu0 0
    %905 = vmatmul.mubr.bf16.gmra.mrb[0].mxu0 %v679
    %v906 = vpop.f32.mrb[0].mxu0
    %v907 = vadd.f32 0.0, %v906
    %v908 = vpop.f32.mrb[0].mxu0
    %v909 = vadd.f32 0.0, %v908
    %v910 = vpop.f32.mrb[0].mxu0
    %v911 = vpop.f32.mrb[0].mxu0
    %912 = vdwg.mxu0
    %913 = vmatprep.subr.bf16.mxu0 %v811
    %914 = vmatpush1.bf16.msra.mxu0 %v810
    %915 = vmatprep.subr.bf16.mxu0 %v815
    %916 = vmatpush1.bf16.msra.mxu0 %v814
    %917 = vmatprep.subr.bf16.mxu0 %v819
    %918 = vmatpush1.bf16.msra.mxu0 %v818
    %919 = vmatprep.subr.bf16.mxu0 %v823
    %920 = vmatpush1.bf16.msra.mxu0 %v822
    %921 = vmatprep.subr.bf16.mxu0 %v827
    %922 = vmatpush1.bf16.msra.mxu0 %v826
    %923 = vmatprep.subr.bf16.mxu0 %v831
    %924 = vmatpush1.bf16.msra.mxu0 %v830
    %925 = vmatprep.subr.bf16.mxu0 %v835
    %926 = vmatpush1.bf16.msra.mxu0 %v834
    %927 = vmatprep.subr.bf16.mxu0 %v839
    %928 = vmatpush1.bf16.msra.mxu0 %v838
    %929 = vmatprep.subr.bf16.mxu0 0
    %930 = vmatpush1.bf16.msra.mxu0 0
    %931 = vmatprep.subr.bf16.mxu0 0
    %932 = vmatpush1.bf16.msra.mxu0 0
    %933 = vmatprep.subr.bf16.mxu0 0
    %934 = vmatpush1.bf16.msra.mxu0 0
    %935 = vmatprep.subr.bf16.mxu0 0
    %936 = vmatpush1.bf16.msra.mxu0 0
    %937 = vmatprep.subr.bf16.mxu0 0
    %938 = vmatpush1.bf16.msra.mxu0 0
    %939 = vmatprep.subr.bf16.mxu0 0
    %940 = vmatpush1.bf16.msra.mxu0 0
    %941 = vmatprep.subr.bf16.mxu0 0
    %942 = vmatpush1.bf16.msra.mxu0 0
    %943 = vmatprep.subr.bf16.mxu0 0
    %944 = vmatpush1.bf16.msra.mxu0 0
    %945 = vmatprep.mubr.bf16.mxu0 0
    %946 = vmatmul.mubr.bf16.gmra.mrb[0].mxu0 %v679
    %v947 = vpop.f32.mrb[0].mxu0
    %v948 = vadd.f32 0.0, %v947
    %v949 = vpop.f32.mrb[0].mxu0
    %v950 = vadd.f32 0.0, %v949
    %v951 = vpop.f32.mrb[0].mxu0
    %v952 = vpop.f32.mrb[0].mxu0
    %953 = vdwg.mxu0
    %v954 = vadd.f32 %v674, %v907
    %v955 = vadd.f32 %v675, %v909
    %v956 = vadd.f32 %v676, %v948
    %v957 = vadd.f32 %v677, %v950
    %v958 = vxor.u32 %v954, 2147483648
    %v959 = vmul.f32 %v958, 1.442695
    %v960 = vpow.pop %v959
    %v961 = vadd.f32 %v960, 1.0
    %v962 = vrcp.pop %v961
    %v963 = vmul.f32 1.0, %v962
    %v964 = vxor.u32 %v955, 2147483648
    %v965 = vmul.f32 %v964, 1.442695
    %v966 = vpow.pop %v965
    %v967 = vadd.f32 %v966, 1.0
    %v968 = vrcp.pop %v967
    %v969 = vmul.f32 1.0, %v968
    %v970 = vtanh.pop %v956
    %v971 = vxor.u32 %v957, 2147483648
    %v972 = vmul.f32 %v971, 1.442695
    %v973 = vpow.pop %v972
    %v974 = vadd.f32 %v973, 1.0
    %v975 = vrcp.pop %v974
    %v976 = vmul.f32 1.0, %v975
    %v977 = vld [vmem:[#allocation3] sm:$0xff]
    %v978 = vmul.f32 %v969, %v977
    %v979 = vmul.f32 %v963, %v970
    %v980 = vadd.f32 %v978, %v979
    %v981 = vtanh.pop %v980
    %v982 = vmul.f32 %v976, %v981
    %983 = vst [vmem:[#allocation3] sm:$0xff] %v980
    %984 = vst [vmem:[#allocation2] sm:$0xff] %v982
    %s985 = scalar_lea.vmem [#allocation4], 16
    %986 = vst [vmem:[%s985] sm:$0xff] %v982
    %s987 = scalar_lea.vmem [#allocation5], 96
    %v988 = vld [vmem:[%s987] sm:$0xff]
    %v989 = vld [vmem:[%s987 + $0x8] sm:$0xff]
    %v990 = vld [vmem:[%s987 + $0x10] sm:$0xff]
    %v991 = vld [vmem:[%s987 + $0x18] sm:$0xff]
    %v992 = vld [vmem:[#allocation2] sm:$0xff]
    %v993 = vpack.c.bf16 %v992, %v992
    %v994 = vld [vmem:[#allocation8] sm:$0xff]
    %v995 = vld [vmem:[#allocation8 + $0x8] sm:$0xff]
    %v996 = vld [vmem:[#allocation8 + $0x10] sm:$0xff]
    %v997 = vld [vmem:[#allocation8 + $0x18] sm:$0xff]
    %v998 = vld [vmem:[#allocation8 + $0x20] sm:$0xff]
    %v999 = vld [vmem:[#allocation8 + $0x28] sm:$0xff]
    %v1000 = vld [vmem:[#allocation8 + $0x30] sm:$0xff]
    %v1001 = vld [vmem:[#allocation8 + $0x38] sm:$0xff]
    %v1002 = vld [vmem:[#allocation8 + $0x40] sm:$0xff]
    %v1003 = vld [vmem:[#allocation8 + $0x48] sm:$0xff]
    %v1004 = vld [vmem:[#allocation8 + $0x50] sm:$0xff]
    %v1005 = vld [vmem:[#allocation8 + $0x58] sm:$0xff]
    %v1006 = vld [vmem:[#allocation8 + $0x60] sm:$0xff]
    %v1007 = vld [vmem:[#allocation8 + $0x68] sm:$0xff]
    %v1008 = vld [vmem:[#allocation8 + $0x70] sm:$0xff]
    %v1009 = vld [vmem:[#allocation8 + $0x78] sm:$0xff]
    %v1010 = vld [vmem:[#allocation8 + $0x80] sm:$0xff]
    %v1011 = vld [vmem:[#allocation8 + $0x88] sm:$0xff]
    %v1012 = vld [vmem:[#allocation8 + $0x90] sm:$0xff]
    %v1013 = vld [vmem:[#allocation8 + $0x98] sm:$0xff]
    %v1014 = vld [vmem:[#allocation8 + $0xa0] sm:$0xff]
    %v1015 = vld [vmem:[#allocation8 + $0xa8] sm:$0xff]
    %v1016 = vld [vmem:[#allocation8 + $0xb0] sm:$0xff]
    %v1017 = vld [vmem:[#allocation8 + $0xb8] sm:$0xff]
    %v1018 = vld [vmem:[#allocation8 + $0xc0] sm:$0xff]
    %v1019 = vld [vmem:[#allocation8 + $0xc8] sm:$0xff]
    %v1020 = vld [vmem:[#allocation8 + $0xd0] sm:$0xff]
    %v1021 = vld [vmem:[#allocation8 + $0xd8] sm:$0xff]
    %v1022 = vld [vmem:[#allocation8 + $0xe0] sm:$0xff]
    %v1023 = vld [vmem:[#allocation8 + $0xe8] sm:$0xff]
    %v1024 = vld [vmem:[#allocation8 + $0xf0] sm:$0xff]
    %v1025 = vld [vmem:[#allocation8 + $0xf8] sm:$0xff]
    %v1058 = vunpack.c.l.b16 %v994
    %v1059 = vunpack.c.h.b16 %v994
    %v1060 = vunpack.c.l.b16 %v995
    %v1061 = vunpack.c.h.b16 %v995
    %v1062 = vunpack.c.l.b16 %v996
    %v1063 = vunpack.c.h.b16 %v996
    %v1064 = vunpack.c.l.b16 %v997
    %v1065 = vunpack.c.h.b16 %v997
    %v1066 = vunpack.c.l.b16 %v998
    %v1067 = vunpack.c.h.b16 %v998
    %v1068 = vunpack.c.l.b16 %v999
    %v1069 = vunpack.c.h.b16 %v999
    %v1070 = vunpack.c.l.b16 %v1000
    %v1071 = vunpack.c.h.b16 %v1000
    %v1072 = vunpack.c.l.b16 %v1001
    %v1073 = vunpack.c.h.b16 %v1001
    %v1074 = vunpack.c.l.b16 %v1002
    %v1075 = vunpack.c.h.b16 %v1002
    %v1076 = vunpack.c.l.b16 %v1003
    %v1077 = vunpack.c.h.b16 %v1003
    %v1078 = vunpack.c.l.b16 %v1004
    %v1079 = vunpack.c.h.b16 %v1004
    %v1080 = vunpack.c.l.b16 %v1005
    %v1081 = vunpack.c.h.b16 %v1005
    %v1082 = vunpack.c.l.b16 %v1006
    %v1083 = vunpack.c.h.b16 %v1006
    %v1084 = vunpack.c.l.b16 %v1007
    %v1085 = vunpack.c.h.b16 %v1007
    %v1086 = vunpack.c.l.b16 %v1008
    %v1087 = vunpack.c.h.b16 %v1008
    %v1088 = vunpack.c.l.b16 %v1009
    %v1089 = vunpack.c.h.b16 %v1009
    %v1090 = vunpack.c.l.b16 %v1010
    %v1091 = vunpack.c.h.b16 %v1010
    %v1092 = vunpack.c.l.b16 %v1011
    %v1093 = vunpack.c.h.b16 %v1011
    %v1094 = vunpack.c.l.b16 %v1012
    %v1095 = vunpack.c.h.b16 %v1012
    %v1096 = vunpack.c.l.b16 %v1013
    %v1097 = vunpack.c.h.b16 %v1013
    %v1098 = vunpack.c.l.b16 %v1014
    %v1099 = vunpack.c.h.b16 %v1014
    %v1100 = vunpack.c.l.b16 %v1015
    %v1101 = vunpack.c.h.b16 %v1015
    %v1102 = vunpack.c.l.b16 %v1016
    %v1103 = vunpack.c.h.b16 %v1016
    %v1104 = vunpack.c.l.b16 %v1017
    %v1105 = vunpack.c.h.b16 %v1017
    %v1106 = vunpack.c.l.b16 %v1018
    %v1107 = vunpack.c.h.b16 %v1018
    %v1108 = vunpack.c.l.b16 %v1019
    %v1109 = vunpack.c.h.b16 %v1019
    %v1110 = vunpack.c.l.b16 %v1020
    %v1111 = vunpack.c.h.b16 %v1020
    %v1112 = vunpack.c.l.b16 %v1021
    %v1113 = vunpack.c.h.b16 %v1021
    %v1114 = vunpack.c.l.b16 %v1022
    %v1115 = vunpack.c.h.b16 %v1022
    %v1116 = vunpack.c.l.b16 %v1023
    %v1117 = vunpack.c.h.b16 %v1023
    %v1118 = vunpack.c.l.b16 %v1024
    %v1119 = vunpack.c.h.b16 %v1024
    %v1120 = vunpack.c.l.b16 %v1025
    %v1121 = vunpack.c.h.b16 %v1025
    %v1122 = vpack.c.b16 %v1062, %v1058
    %v1123 = vpack.c.b16 %v1063, %v1059
    %v1124 = vpack.c.b16 %v1064, %v1060
    %v1125 = vpack.c.b16 %v1065, %v1061
    %v1126 = vpack.c.b16 %v1070, %v1066
    %v1127 = vpack.c.b16 %v1071, %v1067
    %v1128 = vpack.c.b16 %v1072, %v1068
    %v1129 = vpack.c.b16 %v1073, %v1069
    %v1130 = vpack.c.b16 %v1078, %v1074
    %v1131 = vpack.c.b16 %v1079, %v1075
    %v1132 = vpack.c.b16 %v1080, %v1076
    %v1133 = vpack.c.b16 %v1081, %v1077
    %v1134 = vpack.c.b16 %v1086, %v1082
    %v1135 = vpack.c.b16 %v1087, %v1083
    %v1136 = vpack.c.b16 %v1088, %v1084
    %v1137 = vpack.c.b16 %v1089, %v1085
    %v1138 = vpack.c.b16 %v1094, %v1090
    %v1139 = vpack.c.b16 %v1095, %v1091
    %v1140 = vpack.c.b16 %v1096, %v1092
    %v1141 = vpack.c.b16 %v1097, %v1093
    %v1142 = vpack.c.b16 %v1102, %v1098
    %v1143 = vpack.c.b16 %v1103, %v1099
    %v1144 = vpack.c.b16 %v1104, %v1100
    %v1145 = vpack.c.b16 %v1105, %v1101
    %v1146 = vpack.c.b16 %v1110, %v1106
    %v1147 = vpack.c.b16 %v1111, %v1107
    %v1148 = vpack.c.b16 %v1112, %v1108
    %v1149 = vpack.c.b16 %v1113, %v1109
    %v1150 = vpack.c.b16 %v1118, %v1114
    %v1151 = vpack.c.b16 %v1119, %v1115
    %v1152 = vpack.c.b16 %v1120, %v1116
    %v1153 = vpack.c.b16 %v1121, %v1117
    %1186 = vmatprep.subr.bf16.mxu0 %v1123
    %1187 = vmatpush1.bf16.msra.mxu0 %v1122
    %1188 = vmatprep.subr.bf16.mxu0 %v1127
    %1189 = vmatpush1.bf16.msra.mxu0 %v1126
    %1190 = vmatprep.subr.bf16.mxu0 %v1131
    %1191 = vmatpush1.bf16.msra.mxu0 %v1130
    %1192 = vmatprep.subr.bf16.mxu0 %v1135
    %1193 = vmatpush1.bf16.msra.mxu0 %v1134
    %1194 = vmatprep.subr.bf16.mxu0 %v1139
    %1195 = vmatpush1.bf16.msra.mxu0 %v1138
    %1196 = vmatprep.subr.bf16.mxu0 %v1143
    %1197 = vmatpush1.bf16.msra.mxu0 %v1142
    %1198 = vmatprep.subr.bf16.mxu0 %v1147
    %1199 = vmatpush1.bf16.msra.mxu0 %v1146
    %1200 = vmatprep.subr.bf16.mxu0 %v1151
    %1201 = vmatpush1.bf16.msra.mxu0 %v1150
    %1202 = vmatprep.subr.bf16.mxu0 0
    %1203 = vmatpush1.bf16.msra.mxu0 0
    %1204 = vmatprep.subr.bf16.mxu0 0
    %1205 = vmatpush1.bf16.msra.mxu0 0
    %1206 = vmatprep.subr.bf16.mxu0 0
    %1207 = vmatpush1.bf16.msra.mxu0 0
    %1208 = vmatprep.subr.bf16.mxu0 0
    %1209 = vmatpush1.bf16.msra.mxu0 0
    %1210 = vmatprep.subr.bf16.mxu0 0
    %1211 = vmatpush1.bf16.msra.mxu0 0
    %1212 = vmatprep.subr.bf16.mxu0 0
    %1213 = vmatpush1.bf16.msra.mxu0 0
    %1214 = vmatprep.subr.bf16.mxu0 0
    %1215 = vmatpush1.bf16.msra.mxu0 0
    %1216 = vmatprep.subr.bf16.mxu0 0
    %1217 = vmatpush1.bf16.msra.mxu0 0
    %1218 = vmatprep.mubr.bf16.mxu0 0
    %1219 = vmatmul.mubr.bf16.gmra.mrb[0].mxu0 %v993
    %v1220 = vpop.f32.mrb[0].mxu0
    %v1221 = vadd.f32 0.0, %v1220
    %v1222 = vpop.f32.mrb[0].mxu0
    %v1223 = vadd.f32 0.0, %v1222
    %v1224 = vpop.f32.mrb[0].mxu0
    %v1225 = vpop.f32.mrb[0].mxu0
    %1226 = vdwg.mxu0
    %1227 = vmatprep.subr.bf16.mxu0 %v1125
    %1228 = vmatpush1.bf16.msra.mxu0 %v1124
    %1229 = vmatprep.subr.bf16.mxu0 %v1129
    %1230 = vmatpush1.bf16.msra.mxu0 %v1128
    %1231 = vmatprep.subr.bf16.mxu0 %v1133
    %1232 = vmatpush1.bf16.msra.mxu0 %v1132
    %1233 = vmatprep.subr.bf16.mxu0 %v1137
    %1234 = vmatpush1.bf16.msra.mxu0 %v1136
    %1235 = vmatprep.subr.bf16.mxu0 %v1141
    %1236 = vmatpush1.bf16.msra.mxu0 %v1140
    %1237 = vmatprep.subr.bf16.mxu0 %v1145
    %1238 = vmatpush1.bf16.msra.mxu0 %v1144
    %1239 = vmatprep.subr.bf16.mxu0 %v1149
    %1240 = vmatpush1.bf16.msra.mxu0 %v1148
    %1241 = vmatprep.subr.bf16.mxu0 %v1153
    %1242 = vmatpush1.bf16.msra.mxu0 %v1152
    %1243 = vmatprep.subr.bf16.mxu0 0
    %1244 = vmatpush1.bf16.msra.mxu0 0
    %1245 = vmatprep.subr.bf16.mxu0 0
    %1246 = vmatpush1.bf16.msra.mxu0 0
    %1247 = vmatprep.subr.bf16.mxu0 0
    %1248 = vmatpush1.bf16.msra.mxu0 0
    %1249 = vmatprep.subr.bf16.mxu0 0
    %1250 = vmatpush1.bf16.msra.mxu0 0
    %1251 = vmatprep.subr.bf16.mxu0 0
    %1252 = vmatpush1.bf16.msra.mxu0 0
    %1253 = vmatprep.subr.bf16.mxu0 0
    %1254 = vmatpush1.bf16.msra.mxu0 0
    %1255 = vmatprep.subr.bf16.mxu0 0
    %1256 = vmatpush1.bf16.msra.mxu0 0
    %1257 = vmatprep.subr.bf16.mxu0 0
    %1258 = vmatpush1.bf16.msra.mxu0 0
    %1259 = vmatprep.mubr.bf16.mxu0 0
    %1260 = vmatmul.mubr.bf16.gmra.mrb[0].mxu0 %v993
    %v1261 = vpop.f32.mrb[0].mxu0
    %v1262 = vadd.f32 0.0, %v1261
    %v1263 = vpop.f32.mrb[0].mxu0
    %v1264 = vadd.f32 0.0, %v1263
    %v1265 = vpop.f32.mrb[0].mxu0
    %v1266 = vpop.f32.mrb[0].mxu0
    %1267 = vdwg.mxu0
    %v1268 = vadd.f32 %v988, %v1221
    %v1269 = vadd.f32 %v989, %v1223
    %v1270 = vadd.f32 %v990, %v1262
    %v1271 = vadd.f32 %v991, %v1264
    %v1272 = vxor.u32 %v1268, 2147483648
    %v1273 = vmul.f32 %v1272, 1.442695
    %v1274 = vpow.pop %v1273
    %v1275 = vadd.f32 %v1274, 1.0
    %v1276 = vrcp.pop %v1275
    %v1277 = vmul.f32 1.0, %v1276
    %v1278 = vxor.u32 %v1269, 2147483648
    %v1279 = vmul.f32 %v1278, 1.442695
    %v1280 = vpow.pop %v1279
    %v1281 = vadd.f32 %v1280, 1.0
    %v1282 = vrcp.pop %v1281
    %v1283 = vmul.f32 1.0, %v1282
    %v1284 = vtanh.pop %v1270
    %v1285 = vxor.u32 %v1271, 2147483648
    %v1286 = vmul.f32 %v1285, 1.442695
    %v1287 = vpow.pop %v1286
    %v1288 = vadd.f32 %v1287, 1.0
    %v1289 = vrcp.pop %v1288
    %v1290 = vmul.f32 1.0, %v1289
    %v1291 = vld [vmem:[#allocation3] sm:$0xff]
    %v1292 = vmul.f32 %v1283, %v1291
    %v1293 = vmul.f32 %v1277, %v1284
    %v1294 = vadd.f32 %v1292, %v1293
    %v1295 = vtanh.pop %v1294
    %v1296 = vmul.f32 %v1290, %v1295
    %1297 = vst [vmem:[#allocation3] sm:$0xff] %v1294
    %1298 = vst [vmem:[#allocation2] sm:$0xff] %v1296
    %s1299 = scalar_lea.vmem [#allocation4], 24
    %1300 = vst [vmem:[%s1299] sm:$0xff] %v1296
    %s1301 = scalar_lea.vmem [#allocation5], 128
    %v1302 = vld [vmem:[%s1301] sm:$0xff]
    %v1303 = vld [vmem:[%s1301 + $0x8] sm:$0xff]
    %v1304 = vld [vmem:[%s1301 + $0x10] sm:$0xff]
    %v1305 = vld [vmem:[%s1301 + $0x18] sm:$0xff]
    %v1306 = vld [vmem:[#allocation2] sm:$0xff]
    %v1307 = vpack.c.bf16 %v1306, %v1306
    %v1308 = vld [vmem:[#allocation8] sm:$0xff]
    %v1309 = vld [vmem:[#allocation8 + $0x8] sm:$0xff]
    %v1310 = vld [vmem:[#allocation8 + $0x10] sm:$0xff]
    %v1311 = vld [vmem:[#allocation8 + $0x18] sm:$0xff]
    %v1312 = vld [vmem:[#allocation8 + $0x20] sm:$0xff]
    %v1313 = vld [vmem:[#allocation8 + $0x28] sm:$0xff]
    %v1314 = vld [vmem:[#allocation8 + $0x30] sm:$0xff]
    %v1315 = vld [vmem:[#allocation8 + $0x38] sm:$0xff]
    %v1316 = vld [vmem:[#allocation8 + $0x40] sm:$0xff]
    %v1317 = vld [vmem:[#allocation8 + $0x48] sm:$0xff]
    %v1318 = vld [vmem:[#allocation8 + $0x50] sm:$0xff]
    %v1319 = vld [vmem:[#allocation8 + $0x58] sm:$0xff]
    %v1320 = vld [vmem:[#allocation8 + $0x60] sm:$0xff]
    %v1321 = vld [vmem:[#allocation8 + $0x68] sm:$0xff]
    %v1322 = vld [vmem:[#allocation8 + $0x70] sm:$0xff]
    %v1323 = vld [vmem:[#allocation8 + $0x78] sm:$0xff]
    %v1324 = vld [vmem:[#allocation8 + $0x80] sm:$0xff]
    %v1325 = vld [vmem:[#allocation8 + $0x88] sm:$0xff]
    %v1326 = vld [vmem:[#allocation8 + $0x90] sm:$0xff]
    %v1327 = vld [vmem:[#allocation8 + $0x98] sm:$0xff]
    %v1328 = vld [vmem:[#allocation8 + $0xa0] sm:$0xff]
    %v1329 = vld [vmem:[#allocation8 + $0xa8] sm:$0xff]
    %v1330 = vld [vmem:[#allocation8 + $0xb0] sm:$0xff]
    %v1331 = vld [vmem:[#allocation8 + $0xb8] sm:$0xff]
    %v1332 = vld [vmem:[#allocation8 + $0xc0] sm:$0xff]
    %v1333 = vld [vmem:[#allocation8 + $0xc8] sm:$0xff]
    %v1334 = vld [vmem:[#allocation8 + $0xd0] sm:$0xff]
    %v1335 = vld [vmem:[#allocation8 + $0xd8] sm:$0xff]
    %v1336 = vld [vmem:[#allocation8 + $0xe0] sm:$0xff]
    %v1337 = vld [vmem:[#allocation8 + $0xe8] sm:$0xff]
    %v1338 = vld [vmem:[#allocation8 + $0xf0] sm:$0xff]
    %v1339 = vld [vmem:[#allocation8 + $0xf8] sm:$0xff]
    %v1372 = vunpack.c.l.b16 %v1308
    %v1373 = vunpack.c.h.b16 %v1308
    %v1374 = vunpack.c.l.b16 %v1309
    %v1375 = vunpack.c.h.b16 %v1309
    %v1376 = vunpack.c.l.b16 %v1310
    %v1377 = vunpack.c.h.b16 %v1310
    %v1378 = vunpack.c.l.b16 %v1311
    %v1379 = vunpack.c.h.b16 %v1311
    %v1380 = vunpack.c.l.b16 %v1312
    %v1381 = vunpack.c.h.b16 %v1312
    %v1382 = vunpack.c.l.b16 %v1313
    %v1383 = vunpack.c.h.b16 %v1313
    %v1384 = vunpack.c.l.b16 %v1314
    %v1385 = vunpack.c.h.b16 %v1314
    %v1386 = vunpack.c.l.b16 %v1315
    %v1387 = vunpack.c.h.b16 %v1315
    %v1388 = vunpack.c.l.b16 %v1316
    %v1389 = vunpack.c.h.b16 %v1316
    %v1390 = vunpack.c.l.b16 %v1317
    %v1391 = vunpack.c.h.b16 %v1317
    %v1392 = vunpack.c.l.b16 %v1318
    %v1393 = vunpack.c.h.b16 %v1318
    %v1394 = vunpack.c.l.b16 %v1319
    %v1395 = vunpack.c.h.b16 %v1319
    %v1396 = vunpack.c.l.b16 %v1320
    %v1397 = vunpack.c.h.b16 %v1320
    %v1398 = vunpack.c.l.b16 %v1321
    %v1399 = vunpack.c.h.b16 %v1321
    %v1400 = vunpack.c.l.b16 %v1322
    %v1401 = vunpack.c.h.b16 %v1322
    %v1402 = vunpack.c.l.b16 %v1323
    %v1403 = vunpack.c.h.b16 %v1323
    %v1404 = vunpack.c.l.b16 %v1324
    %v1405 = vunpack.c.h.b16 %v1324
    %v1406 = vunpack.c.l.b16 %v1325
    %v1407 = vunpack.c.h.b16 %v1325
    %v1408 = vunpack.c.l.b16 %v1326
    %v1409 = vunpack.c.h.b16 %v1326
    %v1410 = vunpack.c.l.b16 %v1327
    %v1411 = vunpack.c.h.b16 %v1327
    %v1412 = vunpack.c.l.b16 %v1328
    %v1413 = vunpack.c.h.b16 %v1328
    %v1414 = vunpack.c.l.b16 %v1329
    %v1415 = vunpack.c.h.b16 %v1329
    %v1416 = vunpack.c.l.b16 %v1330
    %v1417 = vunpack.c.h.b16 %v1330
    %v1418 = vunpack.c.l.b16 %v1331
    %v1419 = vunpack.c.h.b16 %v1331
    %v1420 = vunpack.c.l.b16 %v1332
    %v1421 = vunpack.c.h.b16 %v1332
    %v1422 = vunpack.c.l.b16 %v1333
    %v1423 = vunpack.c.h.b16 %v1333
    %v1424 = vunpack.c.l.b16 %v1334
    %v1425 = vunpack.c.h.b16 %v1334
    %v1426 = vunpack.c.l.b16 %v1335
    %v1427 = vunpack.c.h.b16 %v1335
    %v1428 = vunpack.c.l.b16 %v1336
    %v1429 = vunpack.c.h.b16 %v1336
    %v1430 = vunpack.c.l.b16 %v1337
    %v1431 = vunpack.c.h.b16 %v1337
    %v1432 = vunpack.c.l.b16 %v1338
    %v1433 = vunpack.c.h.b16 %v1338
    %v1434 = vunpack.c.l.b16 %v1339
    %v1435 = vunpack.c.h.b16 %v1339
    %v1436 = vpack.c.b16 %v1376, %v1372
    %v1437 = vpack.c.b16 %v1377, %v1373
    %v1438 = vpack.c.b16 %v1378, %v1374
    %v1439 = vpack.c.b16 %v1379, %v1375
    %v1440 = vpack.c.b16 %v1384, %v1380
    %v1441 = vpack.c.b16 %v1385, %v1381
    %v1442 = vpack.c.b16 %v1386, %v1382
    %v1443 = vpack.c.b16 %v1387, %v1383
    %v1444 = vpack.c.b16 %v1392, %v1388
    %v1445 = vpack.c.b16 %v1393, %v1389
    %v1446 = vpack.c.b16 %v1394, %v1390
    %v1447 = vpack.c.b16 %v1395, %v1391
    %v1448 = vpack.c.b16 %v1400, %v1396
    %v1449 = vpack.c.b16 %v1401, %v1397
    %v1450 = vpack.c.b16 %v1402, %v1398
    %v1451 = vpack.c.b16 %v1403, %v1399
    %v1452 = vpack.c.b16 %v1408, %v1404
    %v1453 = vpack.c.b16 %v1409, %v1405
    %v1454 = vpack.c.b16 %v1410, %v1406
    %v1455 = vpack.c.b16 %v1411, %v1407
    %v1456 = vpack.c.b16 %v1416, %v1412
    %v1457 = vpack.c.b16 %v1417, %v1413
    %v1458 = vpack.c.b16 %v1418, %v1414
    %v1459 = vpack.c.b16 %v1419, %v1415
    %v1460 = vpack.c.b16 %v1424, %v1420
    %v1461 = vpack.c.b16 %v1425, %v1421
    %v1462 = vpack.c.b16 %v1426, %v1422
    %v1463 = vpack.c.b16 %v1427, %v1423
    %v1464 = vpack.c.b16 %v1432, %v1428
    %v1465 = vpack.c.b16 %v1433, %v1429
    %v1466 = vpack.c.b16 %v1434, %v1430
    %v1467 = vpack.c.b16 %v1435, %v1431
    %1500 = vmatprep.subr.bf16.mxu0 %v1437
    %1501 = vmatpush1.bf16.msra.mxu0 %v1436
    %1502 = vmatprep.subr.bf16.mxu0 %v1441
    %1503 = vmatpush1.bf16.msra.mxu0 %v1440
    %1504 = vmatprep.subr.bf16.mxu0 %v1445
    %1505 = vmatpush1.bf16.msra.mxu0 %v1444
    %1506 = vmatprep.subr.bf16.mxu0 %v1449
    %1507 = vmatpush1.bf16.msra.mxu0 %v1448
    %1508 = vmatprep.subr.bf16.mxu0 %v1453
    %1509 = vmatpush1.bf16.msra.mxu0 %v1452
    %1510 = vmatprep.subr.bf16.mxu0 %v1457
    %1511 = vmatpush1.bf16.msra.mxu0 %v1456
    %1512 = vmatprep.subr.bf16.mxu0 %v1461
    %1513 = vmatpush1.bf16.msra.mxu0 %v1460
    %1514 = vmatprep.subr.bf16.mxu0 %v1465
    %1515 = vmatpush1.bf16.msra.mxu0 %v1464
    %1516 = vmatprep.subr.bf16.mxu0 0
    %1517 = vmatpush1.bf16.msra.mxu0 0
    %1518 = vmatprep.subr.bf16.mxu0 0
    %1519 = vmatpush1.bf16.msra.mxu0 0
    %1520 = vmatprep.subr.bf16.mxu0 0
    %1521 = vmatpush1.bf16.msra.mxu0 0
    %1522 = vmatprep.subr.bf16.mxu0 0
    %1523 = vmatpush1.bf16.msra.mxu0 0
    %1524 = vmatprep.subr.bf16.mxu0 0
    %1525 = vmatpush1.bf16.msra.mxu0 0
    %1526 = vmatprep.subr.bf16.mxu0 0
    %1527 = vmatpush1.bf16.msra.mxu0 0
    %1528 = vmatprep.subr.bf16.mxu0 0
    %1529 = vmatpush1.bf16.msra.mxu0 0
    %1530 = vmatprep.subr.bf16.mxu0 0
    %1531 = vmatpush1.bf16.msra.mxu0 0
    %1532 = vmatprep.mubr.bf16.mxu0 0
    %1533 = vmatmul.mubr.bf16.gmra.mrb[0].mxu0 %v1307
    %v1534 = vpop.f32.mrb[0].mxu0
    %v1535 = vadd.f32 0.0, %v1534
    %v1536 = vpop.f32.mrb[0].mxu0
    %v1537 = vadd.f32 0.0, %v1536
    %v1538 = vpop.f32.mrb[0].mxu0
    %v1539 = vpop.f32.mrb[0].mxu0
    %1540 = vdwg.mxu0
    %1541 = vmatprep.subr.bf16.mxu0 %v1439
    %1542 = vmatpush1.bf16.msra.mxu0 %v1438
    %1543 = vmatprep.subr.bf16.mxu0 %v1443
    %1544 = vmatpush1.bf16.msra.mxu0 %v1442
    %1545 = vmatprep.subr.bf16.mxu0 %v1447
    %1546 = vmatpush1.bf16.msra.mxu0 %v1446
    %1547 = vmatprep.subr.bf16.mxu0 %v1451
    %1548 = vmatpush1.bf16.msra.mxu0 %v1450
    %1549 = vmatprep.subr.bf16.mxu0 %v1455
    %1550 = vmatpush1.bf16.msra.mxu0 %v1454
    %1551 = vmatprep.subr.bf16.mxu0 %v1459
    %1552 = vmatpush1.bf16.msra.mxu0 %v1458
    %1553 = vmatprep.subr.bf16.mxu0 %v1463
    %1554 = vmatpush1.bf16.msra.mxu0 %v1462
    %1555 = vmatprep.subr.bf16.mxu0 %v1467
    %1556 = vmatpush1.bf16.msra.mxu0 %v1466
    %1557 = vmatprep.subr.bf16.mxu0 0
    %1558 = vmatpush1.bf16.msra.mxu0 0
    %1559 = vmatprep.subr.bf16.mxu0 0
    %1560 = vmatpush1.bf16.msra.mxu0 0
    %1561 = vmatprep.subr.bf16.mxu0 0
    %1562 = vmatpush1.bf16.msra.mxu0 0
    %1563 = vmatprep.subr.bf16.mxu0 0
    %1564 = vmatpush1.bf16.msra.mxu0 0
    %1565 = vmatprep.subr.bf16.mxu0 0
    %1566 = vmatpush1.bf16.msra.mxu0 0
    %1567 = vmatprep.subr.bf16.mxu0 0
    %1568 = vmatpush1.bf16.msra.mxu0 0
    %1569 = vmatprep.subr.bf16.mxu0 0
    %1570 = vmatpush1.bf16.msra.mxu0 0
    %1571 = vmatprep.subr.bf16.mxu0 0
    %1572 = vmatpush1.bf16.msra.mxu0 0
    %1573 = vmatprep.mubr.bf16.mxu0 0
    %1574 = vmatmul.mubr.bf16.gmra.mrb[0].mxu0 %v1307
    %v1575 = vpop.f32.mrb[0].mxu0
    %v1576 = vadd.f32 0.0, %v1575
    %v1577 = vpop.f32.mrb[0].mxu0
    %v1578 = vadd.f32 0.0, %v1577
    %v1579 = vpop.f32.mrb[0].mxu0
    %v1580 = vpop.f32.mrb[0].mxu0
    %1581 = vdwg.mxu0
    %v1582 = vadd.f32 %v1302, %v1535
    %v1583 = vadd.f32 %v1303, %v1537
    %v1584 = vadd.f32 %v1304, %v1576
    %v1585 = vadd.f32 %v1305, %v1578
    %v1586 = vxor.u32 %v1582, 2147483648
    %v1587 = vmul.f32 %v1586, 1.442695
    %v1588 = vpow.pop %v1587
    %v1589 = vadd.f32 %v1588, 1.0
    %v1590 = vrcp.pop %v1589
    %v1591 = vmul.f32 1.0, %v1590
    %v1592 = vxor.u32 %v1583, 2147483648
    %v1593 = vmul.f32 %v1592, 1.442695
    %v1594 = vpow.pop %v1593
    %v1595 = vadd.f32 %v1594, 1.0
    %v1596 = vrcp.pop %v1595
    %v1597 = vmul.f32 1.0, %v1596
    %v1598 = vtanh.pop %v1584
    %v1599 = vxor.u32 %v1585, 2147483648
    %v1600 = vmul.f32 %v1599, 1.442695
    %v1601 = vpow.pop %v1600
    %v1602 = vadd.f32 %v1601, 1.0
    %v1603 = vrcp.pop %v1602
    %v1604 = vmul.f32 1.0, %v1603
    %v1605 = vld [vmem:[#allocation3] sm:$0xff]
    %v1606 = vmul.f32 %v1597, %v1605
    %v1607 = vmul.f32 %v1591, %v1598
    %v1608 = vadd.f32 %v1606, %v1607
    %v1609 = vtanh.pop %v1608
    %v1610 = vmul.f32 %v1604, %v1609
    %1611 = vst [vmem:[#allocation3] sm:$0xff] %v1608
    %1612 = vst [vmem:[#allocation2] sm:$0xff] %v1610
    %s1613 = scalar_lea.vmem [#allocation4], 32
    %1614 = vst [vmem:[%s1613] sm:$0xff] %v1610
    %s1615 = scalar_lea.vmem [#allocation5], 160
    %v1616 = vld [vmem:[%s1615] sm:$0xff]
    %v1617 = vld [vmem:[%s1615 + $0x8] sm:$0xff]
    %v1618 = vld [vmem:[%s1615 + $0x10] sm:$0xff]
    %v1619 = vld [vmem:[%s1615 + $0x18] sm:$0xff]
    %v1620 = vld [vmem:[#allocation2] sm:$0xff]
    %v1621 = vpack.c.bf16 %v1620, %v1620
    %v1622 = vld [vmem:[#allocation8] sm:$0xff]
    %v1623 = vld [vmem:[#allocation8 + $0x8] sm:$0xff]
    %v1624 = vld [vmem:[#allocation8 + $0x10] sm:$0xff]
    %v1625 = vld [vmem:[#allocation8 + $0x18] sm:$0xff]
    %v1626 = vld [vmem:[#allocation8 + $0x20] sm:$0xff]
    %v1627 = vld [vmem:[#allocation8 + $0x28] sm:$0xff]
    %v1628 = vld [vmem:[#allocation8 + $0x30] sm:$0xff]
    %v1629 = vld [vmem:[#allocation8 + $0x38] sm:$0xff]
    %v1630 = vld [vmem:[#allocation8 + $0x40] sm:$0xff]
    %v1631 = vld [vmem:[#allocation8 + $0x48] sm:$0xff]
    %v1632 = vld [vmem:[#allocation8 + $0x50] sm:$0xff]
    %v1633 = vld [vmem:[#allocation8 + $0x58] sm:$0xff]
    %v1634 = vld [vmem:[#allocation8 + $0x60] sm:$0xff]
    %v1635 = vld [vmem:[#allocation8 + $0x68] sm:$0xff]
    %v1636 = vld [vmem:[#allocation8 + $0x70] sm:$0xff]
    %v1637 = vld [vmem:[#allocation8 + $0x78] sm:$0xff]
    %v1638 = vld [vmem:[#allocation8 + $0x80] sm:$0xff]
    %v1639 = vld [vmem:[#allocation8 + $0x88] sm:$0xff]
    %v1640 = vld [vmem:[#allocation8 + $0x90] sm:$0xff]
    %v1641 = vld [vmem:[#allocation8 + $0x98] sm:$0xff]
    %v1642 = vld [vmem:[#allocation8 + $0xa0] sm:$0xff]
    %v1643 = vld [vmem:[#allocation8 + $0xa8] sm:$0xff]
    %v1644 = vld [vmem:[#allocation8 + $0xb0] sm:$0xff]
    %v1645 = vld [vmem:[#allocation8 + $0xb8] sm:$0xff]
    %v1646 = vld [vmem:[#allocation8 + $0xc0] sm:$0xff]
    %v1647 = vld [vmem:[#allocation8 + $0xc8] sm:$0xff]
    %v1648 = vld [vmem:[#allocation8 + $0xd0] sm:$0xff]
    %v1649 = vld [vmem:[#allocation8 + $0xd8] sm:$0xff]
    %v1650 = vld [vmem:[#allocation8 + $0xe0] sm:$0xff]
    %v1651 = vld [vmem:[#allocation8 + $0xe8] sm:$0xff]
    %v1652 = vld [vmem:[#allocation8 + $0xf0] sm:$0xff]
    %v1653 = vld [vmem:[#allocation8 + $0xf8] sm:$0xff]
    %v1686 = vunpack.c.l.b16 %v1622
    %v1687 = vunpack.c.h.b16 %v1622
    %v1688 = vunpack.c.l.b16 %v1623
    %v1689 = vunpack.c.h.b16 %v1623
    %v1690 = vunpack.c.l.b16 %v1624
    %v1691 = vunpack.c.h.b16 %v1624
    %v1692 = vunpack.c.l.b16 %v1625
    %v1693 = vunpack.c.h.b16 %v1625
    %v1694 = vunpack.c.l.b16 %v1626
    %v1695 = vunpack.c.h.b16 %v1626
    %v1696 = vunpack.c.l.b16 %v1627
    %v1697 = vunpack.c.h.b16 %v1627
    %v1698 = vunpack.c.l.b16 %v1628
    %v1699 = vunpack.c.h.b16 %v1628
    %v1700 = vunpack.c.l.b16 %v1629
    %v1701 = vunpack.c.h.b16 %v1629
    %v1702 = vunpack.c.l.b16 %v1630
    %v1703 = vunpack.c.h.b16 %v1630
    %v1704 = vunpack.c.l.b16 %v1631
    %v1705 = vunpack.c.h.b16 %v1631
    %v1706 = vunpack.c.l.b16 %v1632
    %v1707 = vunpack.c.h.b16 %v1632
    %v1708 = vunpack.c.l.b16 %v1633
    %v1709 = vunpack.c.h.b16 %v1633
    %v1710 = vunpack.c.l.b16 %v1634
    %v1711 = vunpack.c.h.b16 %v1634
    %v1712 = vunpack.c.l.b16 %v1635
    %v1713 = vunpack.c.h.b16 %v1635
    %v1714 = vunpack.c.l.b16 %v1636
    %v1715 = vunpack.c.h.b16 %v1636
    %v1716 = vunpack.c.l.b16 %v1637
    %v1717 = vunpack.c.h.b16 %v1637
    %v1718 = vunpack.c.l.b16 %v1638
    %v1719 = vunpack.c.h.b16 %v1638
    %v1720 = vunpack.c.l.b16 %v1639
    %v1721 = vunpack.c.h.b16 %v1639
    %v1722 = vunpack.c.l.b16 %v1640
    %v1723 = vunpack.c.h.b16 %v1640
    %v1724 = vunpack.c.l.b16 %v1641
    %v1725 = vunpack.c.h.b16 %v1641
    %v1726 = vunpack.c.l.b16 %v1642
    %v1727 = vunpack.c.h.b16 %v1642
    %v1728 = vunpack.c.l.b16 %v1643
    %v1729 = vunpack.c.h.b16 %v1643
    %v1730 = vunpack.c.l.b16 %v1644
    %v1731 = vunpack.c.h.b16 %v1644
    %v1732 = vunpack.c.l.b16 %v1645
    %v1733 = vunpack.c.h.b16 %v1645
    %v1734 = vunpack.c.l.b16 %v1646
    %v1735 = vunpack.c.h.b16 %v1646
    %v1736 = vunpack.c.l.b16 %v1647
    %v1737 = vunpack.c.h.b16 %v1647
    %v1738 = vunpack.c.l.b16 %v1648
    %v1739 = vunpack.c.h.b16 %v1648
    %v1740 = vunpack.c.l.b16 %v1649
    %v1741 = vunpack.c.h.b16 %v1649
    %v1742 = vunpack.c.l.b16 %v1650
    %v1743 = vunpack.c.h.b16 %v1650
    %v1744 = vunpack.c.l.b16 %v1651
    %v1745 = vunpack.c.h.b16 %v1651
    %v1746 = vunpack.c.l.b16 %v1652
    %v1747 = vunpack.c.h.b16 %v1652
    %v1748 = vunpack.c.l.b16 %v1653
    %v1749 = vunpack.c.h.b16 %v1653
    %v1750 = vpack.c.b16 %v1690, %v1686
    %v1751 = vpack.c.b16 %v1691, %v1687
    %v1752 = vpack.c.b16 %v1692, %v1688
    %v1753 = vpack.c.b16 %v1693, %v1689
    %v1754 = vpack.c.b16 %v1698, %v1694
    %v1755 = vpack.c.b16 %v1699, %v1695
    %v1756 = vpack.c.b16 %v1700, %v1696
    %v1757 = vpack.c.b16 %v1701, %v1697
    %v1758 = vpack.c.b16 %v1706, %v1702
    %v1759 = vpack.c.b16 %v1707, %v1703
    %v1760 = vpack.c.b16 %v1708, %v1704
    %v1761 = vpack.c.b16 %v1709, %v1705
    %v1762 = vpack.c.b16 %v1714, %v1710
    %v1763 = vpack.c.b16 %v1715, %v1711
    %v1764 = vpack.c.b16 %v1716, %v1712
    %v1765 = vpack.c.b16 %v1717, %v1713
    %v1766 = vpack.c.b16 %v1722, %v1718
    %v1767 = vpack.c.b16 %v1723, %v1719
    %v1768 = vpack.c.b16 %v1724, %v1720
    %v1769 = vpack.c.b16 %v1725, %v1721
    %v1770 = vpack.c.b16 %v1730, %v1726
    %v1771 = vpack.c.b16 %v1731, %v1727
    %v1772 = vpack.c.b16 %v1732, %v1728
    %v1773 = vpack.c.b16 %v1733, %v1729
    %v1774 = vpack.c.b16 %v1738, %v1734
    %v1775 = vpack.c.b16 %v1739, %v1735
    %v1776 = vpack.c.b16 %v1740, %v1736
    %v1777 = vpack.c.b16 %v1741, %v1737
    %v1778 = vpack.c.b16 %v1746, %v1742
    %v1779 = vpack.c.b16 %v1747, %v1743
    %v1780 = vpack.c.b16 %v1748, %v1744
    %v1781 = vpack.c.b16 %v1749, %v1745
    %1814 = vmatprep.subr.bf16.mxu0 %v1751
    %1815 = vmatpush1.bf16.msra.mxu0 %v1750
    %1816 = vmatprep.subr.bf16.mxu0 %v1755
    %1817 = vmatpush1.bf16.msra.mxu0 %v1754
    %1818 = vmatprep.subr.bf16.mxu0 %v1759
    %1819 = vmatpush1.bf16.msra.mxu0 %v1758
    %1820 = vmatprep.subr.bf16.mxu0 %v1763
    %1821 = vmatpush1.bf16.msra.mxu0 %v1762
    %1822 = vmatprep.subr.bf16.mxu0 %v1767
    %1823 = vmatpush1.bf16.msra.mxu0 %v1766
    %1824 = vmatprep.subr.bf16.mxu0 %v1771
    %1825 = vmatpush1.bf16.msra.mxu0 %v1770
    %1826 = vmatprep.subr.bf16.mxu0 %v1775
    %1827 = vmatpush1.bf16.msra.mxu0 %v1774
    %1828 = vmatprep.subr.bf16.mxu0 %v1779
    %1829 = vmatpush1.bf16.msra.mxu0 %v1778
    %1830 = vmatprep.subr.bf16.mxu0 0
    %1831 = vmatpush1.bf16.msra.mxu0 0
    %1832 = vmatprep.subr.bf16.mxu0 0
    %1833 = vmatpush1.bf16.msra.mxu0 0
    %1834 = vmatprep.subr.bf16.mxu0 0
    %1835 = vmatpush1.bf16.msra.mxu0 0
    %1836 = vmatprep.subr.bf16.mxu0 0
    %1837 = vmatpush1.bf16.msra.mxu0 0
    %1838 = vmatprep.subr.bf16.mxu0 0
    %1839 = vmatpush1.bf16.msra.mxu0 0
    %1840 = vmatprep.subr.bf16.mxu0 0
    %1841 = vmatpush1.bf16.msra.mxu0 0
    %1842 = vmatprep.subr.bf16.mxu0 0
    %1843 = vmatpush1.bf16.msra.mxu0 0
    %1844 = vmatprep.subr.bf16.mxu0 0
    %1845 = vmatpush1.bf16.msra.mxu0 0
    %1846 = vmatprep.mubr.bf16.mxu0 0
    %1847 = vmatmul.mubr.bf16.gmra.mrb[0].mxu0 %v1621
    %v1848 = vpop.f32.mrb[0].mxu0
    %v1849 = vadd.f32 0.0, %v1848
    %v1850 = vpop.f32.mrb[0].mxu0
    %v1851 = vadd.f32 0.0, %v1850
    %v1852 = vpop.f32.mrb[0].mxu0
    %v1853 = vpop.f32.mrb[0].mxu0
    %1854 = vdwg.mxu0
    %1855 = vmatprep.subr.bf16.mxu0 %v1753
    %1856 = vmatpush1.bf16.msra.mxu0 %v1752
    %1857 = vmatprep.subr.bf16.mxu0 %v1757
    %1858 = vmatpush1.bf16.msra.mxu0 %v1756
    %1859 = vmatprep.subr.bf16.mxu0 %v1761
    %1860 = vmatpush1.bf16.msra.mxu0 %v1760
    %1861 = vmatprep.subr.bf16.mxu0 %v1765
    %1862 = vmatpush1.bf16.msra.mxu0 %v1764
    %1863 = vmatprep.subr.bf16.mxu0 %v1769
    %1864 = vmatpush1.bf16.msra.mxu0 %v1768
    %1865 = vmatprep.subr.bf16.mxu0 %v1773
    %1866 = vmatpush1.bf16.msra.mxu0 %v1772
    %1867 = vmatprep.subr.bf16.mxu0 %v1777
    %1868 = vmatpush1.bf16.msra.mxu0 %v1776
    %1869 = vmatprep.subr.bf16.mxu0 %v1781
    %1870 = vmatpush1.bf16.msra.mxu0 %v1780
    %1871 = vmatprep.subr.bf16.mxu0 0
    %1872 = vmatpush1.bf16.msra.mxu0 0
    %1873 = vmatprep.subr.bf16.mxu0 0
    %1874 = vmatpush1.bf16.msra.mxu0 0
    %1875 = vmatprep.subr.bf16.mxu0 0
    %1876 = vmatpush1.bf16.msra.mxu0 0
    %1877 = vmatprep.subr.bf16.mxu0 0
    %1878 = vmatpush1.bf16.msra.mxu0 0
    %1879 = vmatprep.subr.bf16.mxu0 0
    %1880 = vmatpush1.bf16.msra.mxu0 0
    %1881 = vmatprep.subr.bf16.mxu0 0
    %1882 = vmatpush1.bf16.msra.mxu0 0
    %1883 = vmatprep.subr.bf16.mxu0 0
    %1884 = vmatpush1.bf16.msra.mxu0 0
    %1885 = vmatprep.subr.bf16.mxu0 0
    %1886 = vmatpush1.bf16.msra.mxu0 0
    %1887 = vmatprep.mubr.bf16.mxu0 0
    %1888 = vmatmul.mubr.bf16.gmra.mrb[0].mxu0 %v1621
    %v1889 = vpop.f32.mrb[0].mxu0
    %v1890 = vadd.f32 0.0, %v1889
    %v1891 = vpop.f32.mrb[0].mxu0
    %v1892 = vadd.f32 0.0, %v1891
    %v1893 = vpop.f32.mrb[0].mxu0
    %v1894 = vpop.f32.mrb[0].mxu0
    %1895 = vdwg.mxu0
    %v1896 = vadd.f32 %v1616, %v1849
    %v1897 = vadd.f32 %v1617, %v1851
    %v1898 = vadd.f32 %v1618, %v1890
    %v1899 = vadd.f32 %v1619, %v1892
    %v1900 = vxor.u32 %v1896, 2147483648
    %v1901 = vmul.f32 %v1900, 1.442695
    %v1902 = vpow.pop %v1901
    %v1903 = vadd.f32 %v1902, 1.0
    %v1904 = vrcp.pop %v1903
    %v1905 = vmul.f32 1.0, %v1904
    %v1906 = vxor.u32 %v1897, 2147483648
    %v1907 = vmul.f32 %v1906, 1.442695
    %v1908 = vpow.pop %v1907
    %v1909 = vadd.f32 %v1908, 1.0
    %v1910 = vrcp.pop %v1909
    %v1911 = vmul.f32 1.0, %v1910
    %v1912 = vtanh.pop %v1898
    %v1913 = vxor.u32 %v1899, 2147483648
    %v1914 = vmul.f32 %v1913, 1.442695
    %v1915 = vpow.pop %v1914
    %v1916 = vadd.f32 %v1915, 1.0
    %v1917 = vrcp.pop %v1916
    %v1918 = vmul.f32 1.0, %v1917
    %v1919 = vld [vmem:[#allocation3] sm:$0xff]
    %v1920 = vmul.f32 %v1911, %v1919
    %v1921 = vmul.f32 %v1905, %v1912
    %v1922 = vadd.f32 %v1920, %v1921
    %v1923 = vtanh.pop %v1922
    %v1924 = vmul.f32 %v1918, %v1923
    %1925 = vst [vmem:[#allocation3] sm:$0xff] %v1922
    %1926 = vst [vmem:[#allocation2] sm:$0xff] %v1924
    %s1927 = scalar_lea.vmem [#allocation4], 40
    %1928 = vst [vmem:[%s1927] sm:$0xff] %v1924
    %s1929 = scalar_lea.vmem [#allocation5], 192
    %v1930 = vld [vmem:[%s1929] sm:$0xff]
    %v1931 = vld [vmem:[%s1929 + $0x8] sm:$0xff]
    %v1932 = vld [vmem:[%s1929 + $0x10] sm:$0xff]
    %v1933 = vld [vmem:[%s1929 + $0x18] sm:$0xff]
    %v1934 = vld [vmem:[#allocation2] sm:$0xff]
    %v1935 = vpack.c.bf16 %v1934, %v1934
    %v1936 = vld [vmem:[#allocation8] sm:$0xff]
    %v1937 = vld [vmem:[#allocation8 + $0x8] sm:$0xff]
    %v1938 = vld [vmem:[#allocation8 + $0x10] sm:$0xff]
    %v1939 = vld [vmem:[#allocation8 + $0x18] sm:$0xff]
    %v1940 = vld [vmem:[#allocation8 + $0x20] sm:$0xff]
    %v1941 = vld [vmem:[#allocation8 + $0x28] sm:$0xff]
    %v1942 = vld [vmem:[#allocation8 + $0x30] sm:$0xff]
    %v1943 = vld [vmem:[#allocation8 + $0x38] sm:$0xff]
    %v1944 = vld [vmem:[#allocation8 + $0x40] sm:$0xff]
    %v1945 = vld [vmem:[#allocation8 + $0x48] sm:$0xff]
    %v1946 = vld [vmem:[#allocation8 + $0x50] sm:$0xff]
    %v1947 = vld [vmem:[#allocation8 + $0x58] sm:$0xff]
    %v1948 = vld [vmem:[#allocation8 + $0x60] sm:$0xff]
    %v1949 = vld [vmem:[#allocation8 + $0x68] sm:$0xff]
    %v1950 = vld [vmem:[#allocation8 + $0x70] sm:$0xff]
    %v1951 = vld [vmem:[#allocation8 + $0x78] sm:$0xff]
    %v1952 = vld [vmem:[#allocation8 + $0x80] sm:$0xff]
    %v1953 = vld [vmem:[#allocation8 + $0x88] sm:$0xff]
    %v1954 = vld [vmem:[#allocation8 + $0x90] sm:$0xff]
    %v1955 = vld [vmem:[#allocation8 + $0x98] sm:$0xff]
    %v1956 = vld [vmem:[#allocation8 + $0xa0] sm:$0xff]
    %v1957 = vld [vmem:[#allocation8 + $0xa8] sm:$0xff]
    %v1958 = vld [vmem:[#allocation8 + $0xb0] sm:$0xff]
    %v1959 = vld [vmem:[#allocation8 + $0xb8] sm:$0xff]
    %v1960 = vld [vmem:[#allocation8 + $0xc0] sm:$0xff]
    %v1961 = vld [vmem:[#allocation8 + $0xc8] sm:$0xff]
    %v1962 = vld [vmem:[#allocation8 + $0xd0] sm:$0xff]
    %v1963 = vld [vmem:[#allocation8 + $0xd8] sm:$0xff]
    %v1964 = vld [vmem:[#allocation8 + $0xe0] sm:$0xff]
    %v1965 = vld [vmem:[#allocation8 + $0xe8] sm:$0xff]
    %v1966 = vld [vmem:[#allocation8 + $0xf0] sm:$0xff]
    %v1967 = vld [vmem:[#allocation8 + $0xf8] sm:$0xff]
    %v2000 = vunpack.c.l.b16 %v1936
    %v2001 = vunpack.c.h.b16 %v1936
    %v2002 = vunpack.c.l.b16 %v1937
    %v2003 = vunpack.c.h.b16 %v1937
    %v2004 = vunpack.c.l.b16 %v1938
    %v2005 = vunpack.c.h.b16 %v1938
    %v2006 = vunpack.c.l.b16 %v1939
    %v2007 = vunpack.c.h.b16 %v1939
    %v2008 = vunpack.c.l.b16 %v1940
    %v2009 = vunpack.c.h.b16 %v1940
    %v2010 = vunpack.c.l.b16 %v1941
    %v2011 = vunpack.c.h.b16 %v1941
    %v2012 = vunpack.c.l.b16 %v1942
    %v2013 = vunpack.c.h.b16 %v1942
    %v2014 = vunpack.c.l.b16 %v1943
    %v2015 = vunpack.c.h.b16 %v1943
    %v2016 = vunpack.c.l.b16 %v1944
    %v2017 = vunpack.c.h.b16 %v1944
    %v2018 = vunpack.c.l.b16 %v1945
    %v2019 = vunpack.c.h.b16 %v1945
    %v2020 = vunpack.c.l.b16 %v1946
    %v2021 = vunpack.c.h.b16 %v1946
    %v2022 = vunpack.c.l.b16 %v1947
    %v2023 = vunpack.c.h.b16 %v1947
    %v2024 = vunpack.c.l.b16 %v1948
    %v2025 = vunpack.c.h.b16 %v1948
    %v2026 = vunpack.c.l.b16 %v1949
    %v2027 = vunpack.c.h.b16 %v1949
    %v2028 = vunpack.c.l.b16 %v1950
    %v2029 = vunpack.c.h.b16 %v1950
    %v2030 = vunpack.c.l.b16 %v1951
    %v2031 = vunpack.c.h.b16 %v1951
    %v2032 = vunpack.c.l.b16 %v1952
    %v2033 = vunpack.c.h.b16 %v1952
    %v2034 = vunpack.c.l.b16 %v1953
    %v2035 = vunpack.c.h.b16 %v1953
    %v2036 = vunpack.c.l.b16 %v1954
    %v2037 = vunpack.c.h.b16 %v1954
    %v2038 = vunpack.c.l.b16 %v1955
    %v2039 = vunpack.c.h.b16 %v1955
    %v2040 = vunpack.c.l.b16 %v1956
    %v2041 = vunpack.c.h.b16 %v1956
    %v2042 = vunpack.c.l.b16 %v1957
    %v2043 = vunpack.c.h.b16 %v1957
    %v2044 = vunpack.c.l.b16 %v1958
    %v2045 = vunpack.c.h.b16 %v1958
    %v2046 = vunpack.c.l.b16 %v1959
    %v2047 = vunpack.c.h.b16 %v1959
    %v2048 = vunpack.c.l.b16 %v1960
    %v2049 = vunpack.c.h.b16 %v1960
    %v2050 = vunpack.c.l.b16 %v1961
    %v2051 = vunpack.c.h.b16 %v1961
    %v2052 = vunpack.c.l.b16 %v1962
    %v2053 = vunpack.c.h.b16 %v1962
    %v2054 = vunpack.c.l.b16 %v1963
    %v2055 = vunpack.c.h.b16 %v1963
    %v2056 = vunpack.c.l.b16 %v1964
    %v2057 = vunpack.c.h.b16 %v1964
    %v2058 = vunpack.c.l.b16 %v1965
    %v2059 = vunpack.c.h.b16 %v1965
    %v2060 = vunpack.c.l.b16 %v1966
    %v2061 = vunpack.c.h.b16 %v1966
    %v2062 = vunpack.c.l.b16 %v1967
    %v2063 = vunpack.c.h.b16 %v1967
    %v2064 = vpack.c.b16 %v2004, %v2000
    %v2065 = vpack.c.b16 %v2005, %v2001
    %v2066 = vpack.c.b16 %v2006, %v2002
    %v2067 = vpack.c.b16 %v2007, %v2003
    %v2068 = vpack.c.b16 %v2012, %v2008
    %v2069 = vpack.c.b16 %v2013, %v2009
    %v2070 = vpack.c.b16 %v2014, %v2010
    %v2071 = vpack.c.b16 %v2015, %v2011
    %v2072 = vpack.c.b16 %v2020, %v2016
    %v2073 = vpack.c.b16 %v2021, %v2017
    %v2074 = vpack.c.b16 %v2022, %v2018
    %v2075 = vpack.c.b16 %v2023, %v2019
    %v2076 = vpack.c.b16 %v2028, %v2024
    %v2077 = vpack.c.b16 %v2029, %v2025
    %v2078 = vpack.c.b16 %v2030, %v2026
    %v2079 = vpack.c.b16 %v2031, %v2027
    %v2080 = vpack.c.b16 %v2036, %v2032
    %v2081 = vpack.c.b16 %v2037, %v2033
    %v2082 = vpack.c.b16 %v2038, %v2034
    %v2083 = vpack.c.b16 %v2039, %v2035
    %v2084 = vpack.c.b16 %v2044, %v2040
    %v2085 = vpack.c.b16 %v2045, %v2041
    %v2086 = vpack.c.b16 %v2046, %v2042
    %v2087 = vpack.c.b16 %v2047, %v2043
    %v2088 = vpack.c.b16 %v2052, %v2048
    %v2089 = vpack.c.b16 %v2053, %v2049
    %v2090 = vpack.c.b16 %v2054, %v2050
    %v2091 = vpack.c.b16 %v2055, %v2051
    %v2092 = vpack.c.b16 %v2060, %v2056
    %v2093 = vpack.c.b16 %v2061, %v2057
    %v2094 = vpack.c.b16 %v2062, %v2058
    %v2095 = vpack.c.b16 %v2063, %v2059
    %2128 = vmatprep.subr.bf16.mxu0 %v2065
    %2129 = vmatpush1.bf16.msra.mxu0 %v2064
    %2130 = vmatprep.subr.bf16.mxu0 %v2069
    %2131 = vmatpush1.bf16.msra.mxu0 %v2068
    %2132 = vmatprep.subr.bf16.mxu0 %v2073
    %2133 = vmatpush1.bf16.msra.mxu0 %v2072
    %2134 = vmatprep.subr.bf16.mxu0 %v2077
    %2135 = vmatpush1.bf16.msra.mxu0 %v2076
    %2136 = vmatprep.subr.bf16.mxu0 %v2081
    %2137 = vmatpush1.bf16.msra.mxu0 %v2080
    %2138 = vmatprep.subr.bf16.mxu0 %v2085
    %2139 = vmatpush1.bf16.msra.mxu0 %v2084
    %2140 = vmatprep.subr.bf16.mxu0 %v2089
    %2141 = vmatpush1.bf16.msra.mxu0 %v2088
    %2142 = vmatprep.subr.bf16.mxu0 %v2093
    %2143 = vmatpush1.bf16.msra.mxu0 %v2092
    %2144 = vmatprep.subr.bf16.mxu0 0
    %2145 = vmatpush1.bf16.msra.mxu0 0
    %2146 = vmatprep.subr.bf16.mxu0 0
    %2147 = vmatpush1.bf16.msra.mxu0 0
    %2148 = vmatprep.subr.bf16.mxu0 0
    %2149 = vmatpush1.bf16.msra.mxu0 0
    %2150 = vmatprep.subr.bf16.mxu0 0
    %2151 = vmatpush1.bf16.msra.mxu0 0
    %2152 = vmatprep.subr.bf16.mxu0 0
    %2153 = vmatpush1.bf16.msra.mxu0 0
    %2154 = vmatprep.subr.bf16.mxu0 0
    %2155 = vmatpush1.bf16.msra.mxu0 0
    %2156 = vmatprep.subr.bf16.mxu0 0
    %2157 = vmatpush1.bf16.msra.mxu0 0
    %2158 = vmatprep.subr.bf16.mxu0 0
    %2159 = vmatpush1.bf16.msra.mxu0 0
    %2160 = vmatprep.mubr.bf16.mxu0 0
    %2161 = vmatmul.mubr.bf16.gmra.mrb[0].mxu0 %v1935
    %v2162 = vpop.f32.mrb[0].mxu0
    %v2163 = vadd.f32 0.0, %v2162
    %v2164 = vpop.f32.mrb[0].mxu0
    %v2165 = vadd.f32 0.0, %v2164
    %v2166 = vpop.f32.mrb[0].mxu0
    %v2167 = vpop.f32.mrb[0].mxu0
    %2168 = vdwg.mxu0
    %2169 = vmatprep.subr.bf16.mxu0 %v2067
    %2170 = vmatpush1.bf16.msra.mxu0 %v2066
    %2171 = vmatprep.subr.bf16.mxu0 %v2071
    %2172 = vmatpush1.bf16.msra.mxu0 %v2070
    %2173 = vmatprep.subr.bf16.mxu0 %v2075
    %2174 = vmatpush1.bf16.msra.mxu0 %v2074
    %2175 = vmatprep.subr.bf16.mxu0 %v2079
    %2176 = vmatpush1.bf16.msra.mxu0 %v2078
    %2177 = vmatprep.subr.bf16.mxu0 %v2083
    %2178 = vmatpush1.bf16.msra.mxu0 %v2082
    %2179 = vmatprep.subr.bf16.mxu0 %v2087
    %2180 = vmatpush1.bf16.msra.mxu0 %v2086
    %2181 = vmatprep.subr.bf16.mxu0 %v2091
    %2182 = vmatpush1.bf16.msra.mxu0 %v2090
    %2183 = vmatprep.subr.bf16.mxu0 %v2095
    %2184 = vmatpush1.bf16.msra.mxu0 %v2094
    %2185 = vmatprep.subr.bf16.mxu0 0
    %2186 = vmatpush1.bf16.msra.mxu0 0
    %2187 = vmatprep.subr.bf16.mxu0 0
    %2188 = vmatpush1.bf16.msra.mxu0 0
    %2189 = vmatprep.subr.bf16.mxu0 0
    %2190 = vmatpush1.bf16.msra.mxu0 0
    %2191 = vmatprep.subr.bf16.mxu0 0
    %2192 = vmatpush1.bf16.msra.mxu0 0
    %2193 = vmatprep.subr.bf16.mxu0 0
    %2194 = vmatpush1.bf16.msra.mxu0 0
    %2195 = vmatprep.subr.bf16.mxu0 0
    %2196 = vmatpush1.bf16.msra.mxu0 0
    %2197 = vmatprep.subr.bf16.mxu0 0
    %2198 = vmatpush1.bf16.msra.mxu0 0
    %2199 = vmatprep.subr.bf16.mxu0 0
    %2200 = vmatpush1.bf16.msra.mxu0 0
    %2201 = vmatprep.mubr.bf16.mxu0 0
    %2202 = vmatmul.mubr.bf16.gmra.mrb[0].mxu0 %v1935
    %v2203 = vpop.f32.mrb[0].mxu0
    %v2204 = vadd.f32 0.0, %v2203
    %v2205 = vpop.f32.mrb[0].mxu0
    %v2206 = vadd.f32 0.0, %v2205
    %v2207 = vpop.f32.mrb[0].mxu0
    %v2208 = vpop.f32.mrb[0].mxu0
    %2209 = vdwg.mxu0
    %v2210 = vadd.f32 %v1930, %v2163
    %v2211 = vadd.f32 %v1931, %v2165
    %v2212 = vadd.f32 %v1932, %v2204
    %v2213 = vadd.f32 %v1933, %v2206
    %v2214 = vxor.u32 %v2210, 2147483648
    %v2215 = vmul.f32 %v2214, 1.442695
    %v2216 = vpow.pop %v2215
    %v2217 = vadd.f32 %v2216, 1.0
    %v2218 = vrcp.pop %v2217
    %v2219 = vmul.f32 1.0, %v2218
    %v2220 = vxor.u32 %v2211, 2147483648
    %v2221 = vmul.f32 %v2220, 1.442695
    %v2222 = vpow.pop %v2221
    %v2223 = vadd.f32 %v2222, 1.0
    %v2224 = vrcp.pop %v2223
    %v2225 = vmul.f32 1.0, %v2224
    %v2226 = vtanh.pop %v2212
    %v2227 = vxor.u32 %v2213, 2147483648
    %v2228 = vmul.f32 %v2227, 1.442695
    %v2229 = vpow.pop %v2228
    %v2230 = vadd.f32 %v2229, 1.0
    %v2231 = vrcp.pop %v2230
    %v2232 = vmul.f32 1.0, %v2231
    %v2233 = vld [vmem:[#allocation3] sm:$0xff]
    %v2234 = vmul.f32 %v2225, %v2233
    %v2235 = vmul.f32 %v2219, %v2226
    %v2236 = vadd.f32 %v2234, %v2235
    %v2237 = vtanh.pop %v2236
    %v2238 = vmul.f32 %v2232, %v2237
    %2239 = vst [vmem:[#allocation3] sm:$0xff] %v2236
    %2240 = vst [vmem:[#allocation2] sm:$0xff] %v2238
    %s2241 = scalar_lea.vmem [#allocation4], 48
    %2242 = vst [vmem:[%s2241] sm:$0xff] %v2238
    %s2243 = scalar_lea.vmem [#allocation5], 224
    %v2244 = vld [vmem:[%s2243] sm:$0xff]
    %v2245 = vld [vmem:[%s2243 + $0x8] sm:$0xff]
    %v2246 = vld [vmem:[%s2243 + $0x10] sm:$0xff]
    %v2247 = vld [vmem:[%s2243 + $0x18] sm:$0xff]
    %v2248 = vld [vmem:[#allocation2] sm:$0xff]
    %v2249 = vpack.c.bf16 %v2248, %v2248
    %v2250 = vld [vmem:[#allocation8] sm:$0xff]
    %v2251 = vld [vmem:[#allocation8 + $0x8] sm:$0xff]
    %v2252 = vld [vmem:[#allocation8 + $0x10] sm:$0xff]
    %v2253 = vld [vmem:[#allocation8 + $0x18] sm:$0xff]
    %v2254 = vld [vmem:[#allocation8 + $0x20] sm:$0xff]
    %v2255 = vld [vmem:[#allocation8 + $0x28] sm:$0xff]
    %v2256 = vld [vmem:[#allocation8 + $0x30] sm:$0xff]
    %v2257 = vld [vmem:[#allocation8 + $0x38] sm:$0xff]
    %v2258 = vld [vmem:[#allocation8 + $0x40] sm:$0xff]
    %v2259 = vld [vmem:[#allocation8 + $0x48] sm:$0xff]
    %v2260 = vld [vmem:[#allocation8 + $0x50] sm:$0xff]
    %v2261 = vld [vmem:[#allocation8 + $0x58] sm:$0xff]
    %v2262 = vld [vmem:[#allocation8 + $0x60] sm:$0xff]
    %v2263 = vld [vmem:[#allocation8 + $0x68] sm:$0xff]
    %v2264 = vld [vmem:[#allocation8 + $0x70] sm:$0xff]
    %v2265 = vld [vmem:[#allocation8 + $0x78] sm:$0xff]
    %v2266 = vld [vmem:[#allocation8 + $0x80] sm:$0xff]
    %v2267 = vld [vmem:[#allocation8 + $0x88] sm:$0xff]
    %v2268 = vld [vmem:[#allocation8 + $0x90] sm:$0xff]
    %v2269 = vld [vmem:[#allocation8 + $0x98] sm:$0xff]
    %v2270 = vld [vmem:[#allocation8 + $0xa0] sm:$0xff]
    %v2271 = vld [vmem:[#allocation8 + $0xa8] sm:$0xff]
    %v2272 = vld [vmem:[#allocation8 + $0xb0] sm:$0xff]
    %v2273 = vld [vmem:[#allocation8 + $0xb8] sm:$0xff]
    %v2274 = vld [vmem:[#allocation8 + $0xc0] sm:$0xff]
    %v2275 = vld [vmem:[#allocation8 + $0xc8] sm:$0xff]
    %v2276 = vld [vmem:[#allocation8 + $0xd0] sm:$0xff]
    %v2277 = vld [vmem:[#allocation8 + $0xd8] sm:$0xff]
    %v2278 = vld [vmem:[#allocation8 + $0xe0] sm:$0xff]
    %v2279 = vld [vmem:[#allocation8 + $0xe8] sm:$0xff]
    %v2280 = vld [vmem:[#allocation8 + $0xf0] sm:$0xff]
    %v2281 = vld [vmem:[#allocation8 + $0xf8] sm:$0xff]
    %v2314 = vunpack.c.l.b16 %v2250
    %v2315 = vunpack.c.h.b16 %v2250
    %v2316 = vunpack.c.l.b16 %v2251
    %v2317 = vunpack.c.h.b16 %v2251
    %v2318 = vunpack.c.l.b16 %v2252
    %v2319 = vunpack.c.h.b16 %v2252
    %v2320 = vunpack.c.l.b16 %v2253
    %v2321 = vunpack.c.h.b16 %v2253
    %v2322 = vunpack.c.l.b16 %v2254
    %v2323 = vunpack.c.h.b16 %v2254
    %v2324 = vunpack.c.l.b16 %v2255
    %v2325 = vunpack.c.h.b16 %v2255
    %v2326 = vunpack.c.l.b16 %v2256
    %v2327 = vunpack.c.h.b16 %v2256
    %v2328 = vunpack.c.l.b16 %v2257
    %v2329 = vunpack.c.h.b16 %v2257
    %v2330 = vunpack.c.l.b16 %v2258
    %v2331 = vunpack.c.h.b16 %v2258
    %v2332 = vunpack.c.l.b16 %v2259
    %v2333 = vunpack.c.h.b16 %v2259
    %v2334 = vunpack.c.l.b16 %v2260
    %v2335 = vunpack.c.h.b16 %v2260
    %v2336 = vunpack.c.l.b16 %v2261
    %v2337 = vunpack.c.h.b16 %v2261
    %v2338 = vunpack.c.l.b16 %v2262
    %v2339 = vunpack.c.h.b16 %v2262
    %v2340 = vunpack.c.l.b16 %v2263
    %v2341 = vunpack.c.h.b16 %v2263
    %v2342 = vunpack.c.l.b16 %v2264
    %v2343 = vunpack.c.h.b16 %v2264
    %v2344 = vunpack.c.l.b16 %v2265
    %v2345 = vunpack.c.h.b16 %v2265
    %v2346 = vunpack.c.l.b16 %v2266
    %v2347 = vunpack.c.h.b16 %v2266
    %v2348 = vunpack.c.l.b16 %v2267
    %v2349 = vunpack.c.h.b16 %v2267
    %v2350 = vunpack.c.l.b16 %v2268
    %v2351 = vunpack.c.h.b16 %v2268
    %v2352 = vunpack.c.l.b16 %v2269
    %v2353 = vunpack.c.h.b16 %v2269
    %v2354 = vunpack.c.l.b16 %v2270
    %v2355 = vunpack.c.h.b16 %v2270
    %v2356 = vunpack.c.l.b16 %v2271
    %v2357 = vunpack.c.h.b16 %v2271
    %v2358 = vunpack.c.l.b16 %v2272
    %v2359 = vunpack.c.h.b16 %v2272
    %v2360 = vunpack.c.l.b16 %v2273
    %v2361 = vunpack.c.h.b16 %v2273
    %v2362 = vunpack.c.l.b16 %v2274
    %v2363 = vunpack.c.h.b16 %v2274
    %v2364 = vunpack.c.l.b16 %v2275
    %v2365 = vunpack.c.h.b16 %v2275
    %v2366 = vunpack.c.l.b16 %v2276
    %v2367 = vunpack.c.h.b16 %v2276
    %v2368 = vunpack.c.l.b16 %v2277
    %v2369 = vunpack.c.h.b16 %v2277
    %v2370 = vunpack.c.l.b16 %v2278
    %v2371 = vunpack.c.h.b16 %v2278
    %v2372 = vunpack.c.l.b16 %v2279
    %v2373 = vunpack.c.h.b16 %v2279
    %v2374 = vunpack.c.l.b16 %v2280
    %v2375 = vunpack.c.h.b16 %v2280
    %v2376 = vunpack.c.l.b16 %v2281
    %v2377 = vunpack.c.h.b16 %v2281
    %v2378 = vpack.c.b16 %v2318, %v2314
    %v2379 = vpack.c.b16 %v2319, %v2315
    %v2380 = vpack.c.b16 %v2320, %v2316
    %v2381 = vpack.c.b16 %v2321, %v2317
    %v2382 = vpack.c.b16 %v2326, %v2322
    %v2383 = vpack.c.b16 %v2327, %v2323
    %v2384 = vpack.c.b16 %v2328, %v2324
    %v2385 = vpack.c.b16 %v2329, %v2325
    %v2386 = vpack.c.b16 %v2334, %v2330
    %v2387 = vpack.c.b16 %v2335, %v2331
    %v2388 = vpack.c.b16 %v2336, %v2332
    %v2389 = vpack.c.b16 %v2337, %v2333
    %v2390 = vpack.c.b16 %v2342, %v2338
    %v2391 = vpack.c.b16 %v2343, %v2339
    %v2392 = vpack.c.b16 %v2344, %v2340
    %v2393 = vpack.c.b16 %v2345, %v2341
    %v2394 = vpack.c.b16 %v2350, %v2346
    %v2395 = vpack.c.b16 %v2351, %v2347
    %v2396 = vpack.c.b16 %v2352, %v2348
    %v2397 = vpack.c.b16 %v2353, %v2349
    %v2398 = vpack.c.b16 %v2358, %v2354
    %v2399 = vpack.c.b16 %v2359, %v2355
    %v2400 = vpack.c.b16 %v2360, %v2356
    %v2401 = vpack.c.b16 %v2361, %v2357
    %v2402 = vpack.c.b16 %v2366, %v2362
    %v2403 = vpack.c.b16 %v2367, %v2363
    %v2404 = vpack.c.b16 %v2368, %v2364
    %v2405 = vpack.c.b16 %v2369, %v2365
    %v2406 = vpack.c.b16 %v2374, %v2370
    %v2407 = vpack.c.b16 %v2375, %v2371
    %v2408 = vpack.c.b16 %v2376, %v2372
    %v2409 = vpack.c.b16 %v2377, %v2373
    %2442 = vmatprep.subr.bf16.mxu0 %v2379
    %2443 = vmatpush1.bf16.msra.mxu0 %v2378
    %2444 = vmatprep.subr.bf16.mxu0 %v2383
    %2445 = vmatpush1.bf16.msra.mxu0 %v2382
    %2446 = vmatprep.subr.bf16.mxu0 %v2387
    %2447 = vmatpush1.bf16.msra.mxu0 %v2386
    %2448 = vmatprep.subr.bf16.mxu0 %v2391
    %2449 = vmatpush1.bf16.msra.mxu0 %v2390
    %2450 = vmatprep.subr.bf16.mxu0 %v2395
    %2451 = vmatpush1.bf16.msra.mxu0 %v2394
    %2452 = vmatprep.subr.bf16.mxu0 %v2399
    %2453 = vmatpush1.bf16.msra.mxu0 %v2398
    %2454 = vmatprep.subr.bf16.mxu0 %v2403
    %2455 = vmatpush1.bf16.msra.mxu0 %v2402
    %2456 = vmatprep.subr.bf16.mxu0 %v2407
    %2457 = vmatpush1.bf16.msra.mxu0 %v2406
    %2458 = vmatprep.subr.bf16.mxu0 0
    %2459 = vmatpush1.bf16.msra.mxu0 0
    %2460 = vmatprep.subr.bf16.mxu0 0
    %2461 = vmatpush1.bf16.msra.mxu0 0
    %2462 = vmatprep.subr.bf16.mxu0 0
    %2463 = vmatpush1.bf16.msra.mxu0 0
    %2464 = vmatprep.subr.bf16.mxu0 0
    %2465 = vmatpush1.bf16.msra.mxu0 0
    %2466 = vmatprep.subr.bf16.mxu0 0
    %2467 = vmatpush1.bf16.msra.mxu0 0
    %2468 = vmatprep.subr.bf16.mxu0 0
    %2469 = vmatpush1.bf16.msra.mxu0 0
    %2470 = vmatprep.subr.bf16.mxu0 0
    %2471 = vmatpush1.bf16.msra.mxu0 0
    %2472 = vmatprep.subr.bf16.mxu0 0
    %2473 = vmatpush1.bf16.msra.mxu0 0
    %2474 = vmatprep.mubr.bf16.mxu0 0
    %2475 = vmatmul.mubr.bf16.gmra.mrb[0].mxu0 %v2249
    %v2476 = vpop.f32.mrb[0].mxu0
    %v2477 = vadd.f32 0.0, %v2476
    %v2478 = vpop.f32.mrb[0].mxu0
    %v2479 = vadd.f32 0.0, %v2478
    %v2480 = vpop.f32.mrb[0].mxu0
    %v2481 = vpop.f32.mrb[0].mxu0
    %2482 = vdwg.mxu0
    %2483 = vmatprep.subr.bf16.mxu0 %v2381
    %2484 = vmatpush1.bf16.msra.mxu0 %v2380
    %2485 = vmatprep.subr.bf16.mxu0 %v2385
    %2486 = vmatpush1.bf16.msra.mxu0 %v2384
    %2487 = vmatprep.subr.bf16.mxu0 %v2389
    %2488 = vmatpush1.bf16.msra.mxu0 %v2388
    %2489 = vmatprep.subr.bf16.mxu0 %v2393
    %2490 = vmatpush1.bf16.msra.mxu0 %v2392
    %2491 = vmatprep.subr.bf16.mxu0 %v2397
    %2492 = vmatpush1.bf16.msra.mxu0 %v2396
    %2493 = vmatprep.subr.bf16.mxu0 %v2401
    %2494 = vmatpush1.bf16.msra.mxu0 %v2400
    %2495 = vmatprep.subr.bf16.mxu0 %v2405
    %2496 = vmatpush1.bf16.msra.mxu0 %v2404
    %2497 = vmatprep.subr.bf16.mxu0 %v2409
    %2498 = vmatpush1.bf16.msra.mxu0 %v2408
    %2499 = vmatprep.subr.bf16.mxu0 0
    %2500 = vmatpush1.bf16.msra.mxu0 0
    %2501 = vmatprep.subr.bf16.mxu0 0
    %2502 = vmatpush1.bf16.msra.mxu0 0
    %2503 = vmatprep.subr.bf16.mxu0 0
    %2504 = vmatpush1.bf16.msra.mxu0 0
    %2505 = vmatprep.subr.bf16.mxu0 0
    %2506 = vmatpush1.bf16.msra.mxu0 0
    %2507 = vmatprep.subr.bf16.mxu0 0
    %2508 = vmatpush1.bf16.msra.mxu0 0
    %2509 = vmatprep.subr.bf16.mxu0 0
    %2510 = vmatpush1.bf16.msra.mxu0 0
    %2511 = vmatprep.subr.bf16.mxu0 0
    %2512 = vmatpush1.bf16.msra.mxu0 0
    %2513 = vmatprep.subr.bf16.mxu0 0
    %2514 = vmatpush1.bf16.msra.mxu0 0
    %2515 = vmatprep.mubr.bf16.mxu0 0
    %2516 = vmatmul.mubr.bf16.gmra.mrb[0].mxu0 %v2249
    %v2517 = vpop.f32.mrb[0].mxu0
    %v2518 = vadd.f32 0.0, %v2517
    %v2519 = vpop.f32.mrb[0].mxu0
    %v2520 = vadd.f32 0.0, %v2519
    %v2521 = vpop.f32.mrb[0].mxu0
    %v2522 = vpop.f32.mrb[0].mxu0
    %2523 = vdwg.mxu0
    %v2524 = vadd.f32 %v2244, %v2477
    %v2525 = vadd.f32 %v2245, %v2479
    %v2526 = vadd.f32 %v2246, %v2518
    %v2527 = vadd.f32 %v2247, %v2520
    %v2528 = vxor.u32 %v2524, 2147483648
    %v2529 = vmul.f32 %v2528, 1.442695
    %v2530 = vpow.pop %v2529
    %v2531 = vadd.f32 %v2530, 1.0
    %v2532 = vrcp.pop %v2531
    %v2533 = vmul.f32 1.0, %v2532
    %v2534 = vxor.u32 %v2525, 2147483648
    %v2535 = vmul.f32 %v2534, 1.442695
    %v2536 = vpow.pop %v2535
    %v2537 = vadd.f32 %v2536, 1.0
    %v2538 = vrcp.pop %v2537
    %v2539 = vmul.f32 1.0, %v2538
    %v2540 = vtanh.pop %v2526
    %v2541 = vxor.u32 %v2527, 2147483648
    %v2542 = vmul.f32 %v2541, 1.442695
    %v2543 = vpow.pop %v2542
    %v2544 = vadd.f32 %v2543, 1.0
    %v2545 = vrcp.pop %v2544
    %v2546 = vmul.f32 1.0, %v2545
    %v2547 = vld [vmem:[#allocation3] sm:$0xff]
    %v2548 = vmul.f32 %v2539, %v2547
    %v2549 = vmul.f32 %v2533, %v2540
    %v2550 = vadd.f32 %v2548, %v2549
    %v2551 = vtanh.pop %v2550
    %v2552 = vmul.f32 %v2546, %v2551
    %2553 = vst [vmem:[#allocation3] sm:$0xff] %v2550
    %2554 = vst [vmem:[#allocation2] sm:$0xff] %v2552
    %s2555 = scalar_lea.vmem [#allocation4], 56
    %2556 = vst [vmem:[%s2555] sm:$0xff] %v2552
    %v2557 = vld [vmem:[#allocation4] sm:$0xff]
    %v2558 = vld [vmem:[#allocation4 + $0x8] sm:$0xff]
    %v2559 = vld [vmem:[#allocation4 + $0x10] sm:$0xff]
    %v2560 = vld [vmem:[#allocation4 + $0x18] sm:$0xff]
    %v2561 = vld [vmem:[#allocation4 + $0x20] sm:$0xff]
    %v2562 = vld [vmem:[#allocation4 + $0x28] sm:$0xff]
    %v2563 = vld [vmem:[#allocation4 + $0x30] sm:$0xff]
    %v2564 = vld [vmem:[#allocation4 + $0x38] sm:$0xff]
    %v2565 = vpack.c.bf16 %v2557, %v2557
    %v2566 = vpack.c.bf16 %v2558, %v2558
    %v2567 = vpack.c.bf16 %v2559, %v2559
    %v2568 = vpack.c.bf16 %v2560, %v2560
    %v2569 = vpack.c.bf16 %v2561, %v2561
    %v2570 = vpack.c.bf16 %v2562, %v2562
    %v2571 = vpack.c.bf16 %v2563, %v2563
    %v2572 = vpack.c.bf16 %v2564, %v2564
    %2573 = vst [vmem:[#allocation10] sm:$0xf] %v2565
    %2574 = vst [vmem:[#allocation10 + $0x4] sm:$0xf] %v2566
    %2575 = vst [vmem:[#allocation10 + $0x8] sm:$0xf] %v2567
    %2576 = vst [vmem:[#allocation10 + $0xc] sm:$0xf] %v2568
    %2577 = vst [vmem:[#allocation10 + $0x10] sm:$0xf] %v2569
    %2578 = vst [vmem:[#allocation10 + $0x14] sm:$0xf] %v2570
    %2579 = vst [vmem:[#allocation10 + $0x18] sm:$0xf] %v2571
    %2580 = vst [vmem:[#allocation10 + $0x1c] sm:$0xf] %v2572
    // Predicated region
    $region22: #{eval_lstm_model2_forward.5} parent=1 // pred_check
      _
    $region23: #{eval_lstm_model2_forward.5} parent=1 // pred_check_branch
      %2582 = sbr.rel (0) target = $region25
    $region24: #{eval_lstm_model2_forward.5} parent=1 // pred_region
      %s2584 = ssub.s32 512, 512
      %2585 = vsyncadd [#allocation7], %s2584
      %s2586 = sshll.u32 [#allocation10], 4
      %s2587 = int_to_ptr.vmem [resolvable:$true] %s2586
      %2592 = dma.vmem_to_hbm [thread:$0]  %s2587, 512, %s2, [#allocation7], 64, 64, 4
    $region25: #{eval_lstm_model2_forward.5} parent=1 // pred_fallthru
      _
    // Predicated region
    $region26: #{eval_lstm_model2_forward.5} parent=1 // pred_check
      _
    $region27: #{eval_lstm_model2_forward.5} parent=1 // pred_check_branch
      %2594 = sbr.rel (0) target = $region29
    $region28: #{eval_lstm_model2_forward.5} parent=1 // pred_region
      %2595 = dma.done [#allocation7], 512
    $region29: #{eval_lstm_model2_forward.5} parent=1 // pred_fallthru
      _
    %2596 = vsyncpa [#allocation6], 1
    %2597 = vsyncpa [#allocation9], 1
    %2598 = vsyncpa [#allocation7], 1

// kernel: eval_lstm_model2_forward.7
$region0: #{eval_lstm_model2_forward.7}
  #allocation0 [shape = 'u32[]', space=smem, size = 0x4, offset = 0x4, fixed_abs, tag = 'smem constant byte address 0x4 - core index']
  #allocation1 [shape = 'u32[144,128]{1,0:T(1,128)}', space=vmem, size = 0x12000, scoped, tag = 'internal scratch']
  #allocation2 [shape = 'f32[8,128]{1,0:T(8,128)}', space=vmem, size = 0x1000, scoped, tag = 'scratch operand']
  #allocation3 [shape = 'f32[8,128]{1,0:T(8,128)}', space=vmem, size = 0x1000, scoped, tag = 'scratch operand']
  #allocation4 [shape = 'f32[8,8,128]{2,1,0:T(8,128)}', space=vmem, size = 0x8000, scoped, tag = 'scratch operand']
  %s0 = inlined_call_operand.hbm [shape: f32[8,8,512], index: 0, kind: input, shape index: {}]
  %s1 = inlined_call_operand.hbm [shape: bf16[128,512], index: 1, kind: input, shape index: {}]
  %s2 = inlined_call_operand.hbm [shape: bf16[128,128], index: 2, kind: input, shape index: {}]
  %s3 = inlined_call_operand.hbm [shape: f32[1,128], index: 3, kind: input, shape index: {}]
  %s4 = inlined_call_operand.hbm [shape: f32[8,8,128], index: 4, kind: output, shape index: {}]
  %s5 = sld [smem:[#allocation0]]
  $region46: #{eval_lstm_model2_forward.7} parent=0
    _
  %s7 = ssub.s32 1, %s5
  %s8 = scalar_select 0, %s7, %s5
  $region1: #{eval_lstm_model2_forward.7} parent=0
    #allocation5 [shape = 'u8[131072]{0}', space=vmem, size = 0x20000, scoped, tag = 'input window, operand 0, single buffered']
    #allocation6 [shape = 's32[1]{0}', space=sflag, size = 0x4, scoped, tag = 'scoped memory for eval_lstm_model2_forward.7']
    #allocation7 [shape = 's32[1]{0}', space=sflag, size = 0x4, scoped, tag = 'scoped memory for eval_lstm_model2_forward.7']
    #allocation8 [shape = 'u8[131072]{0}', space=vmem, size = 0x20000, scoped, tag = 'input window, operand 1, single buffered']
    #allocation9 [shape = 's32[1]{0}', space=sflag, size = 0x4, scoped, tag = 'scoped memory for eval_lstm_model2_forward.7']
    #allocation10 [shape = 'u8[32768]{0}', space=vmem, size = 0x8000, scoped, tag = 'input window, operand 2, single buffered']
    #allocation11 [shape = 'u8[512]{0}', space=vmem, size = 0x400, scoped, tag = 'input window, operand 3, single buffered']
    #allocation12 [shape = 's32[1]{0}', space=sflag, size = 0x4, scoped, tag = 'scoped memory for eval_lstm_model2_forward.7']
    #allocation13 [shape = 'u8[32768]{0}', space=vmem, size = 0x8000, scoped, tag = 'output window, operand 0, single buffered']
    %9 = vsyncpa [#allocation6], 0
    %10 = vsyncpa [#allocation9], 0
    %11 = vsyncpa [#allocation12], 0
    %12 = vsyncpa [#allocation7], 0
    // Predicated region
    $region2: #{eval_lstm_model2_forward.7} parent=1 // pred_check
      _
    $region3: #{eval_lstm_model2_forward.7} parent=1 // pred_check_branch
      %14 = sbr.rel (0) target = $region5
    $region4: #{eval_lstm_model2_forward.7} parent=1 // pred_region
      %s16 = ssub.s32 4096, 4096
      %17 = vsyncadd [#allocation6], %s16
      %s18 = sshll.u32 [#allocation5], 4
      %s19 = int_to_ptr.vmem [resolvable:$true] %s18
      %24 = dma.hbm_to_vmem [thread:$0]  %s0, 4096, %s19, [#allocation6], 512, 512, 32
    $region5: #{eval_lstm_model2_forward.7} parent=1 // pred_fallthru
      _
    // Predicated region
    $region6: #{eval_lstm_model2_forward.7} parent=1 // pred_check
      _
    $region7: #{eval_lstm_model2_forward.7} parent=1 // pred_check_branch
      %26 = sbr.rel (0) target = $region9
    $region8: #{eval_lstm_model2_forward.7} parent=1 // pred_region
      %s28 = ssub.s32 4096, 4096
      %29 = vsyncadd [#allocation9], %s28
      %s30 = sshll.u32 [#allocation8], 4
      %s31 = int_to_ptr.vmem [resolvable:$true] %s30
      %36 = dma.hbm_to_vmem [thread:$0]  %s1, 4096, %s31, [#allocation9], 256, 256, 16
    $region9: #{eval_lstm_model2_forward.7} parent=1 // pred_fallthru
      _
    // Predicated region
    $region10: #{eval_lstm_model2_forward.7} parent=1 // pred_check
      _
    $region11: #{eval_lstm_model2_forward.7} parent=1 // pred_check_branch
      %38 = sbr.rel (0) target = $region13
    $region12: #{eval_lstm_model2_forward.7} parent=1 // pred_region
      %s40 = ssub.s32 1024, 1024
      %41 = vsyncadd [#allocation9], %s40
      %s42 = sshll.u32 [#allocation10], 4
      %s43 = int_to_ptr.vmem [resolvable:$true] %s42
      %48 = dma.hbm_to_vmem [thread:$0]  %s2, 1024, %s43, [#allocation9], 64, 64, 4
    $region13: #{eval_lstm_model2_forward.7} parent=1 // pred_fallthru
      _
    // Predicated region
    $region14: #{eval_lstm_model2_forward.7} parent=1 // pred_check
      _
    $region15: #{eval_lstm_model2_forward.7} parent=1 // pred_check_branch
      %50 = sbr.rel (0) target = $region17
    $region16: #{eval_lstm_model2_forward.7} parent=1 // pred_region
      %s52 = ssub.s32 16, 16
      %53 = vsyncadd [#allocation12], %s52
      %s55 = sshll.u32 [#allocation11], 4
      %s56 = int_to_ptr.vmem [resolvable:$true] %s55
      %58 = dma.hbm_to_vmem [thread:$0]  %s3, 16, %s56, [#allocation12]
    $region17: #{eval_lstm_model2_forward.7} parent=1 // pred_fallthru
      _
    // Predicated region
    $region18: #{eval_lstm_model2_forward.7} parent=1 // pred_check
      _
    $region19: #{eval_lstm_model2_forward.7} parent=1 // pred_check_branch
      %60 = sbr.rel (0) target = $region21
    $region20: #{eval_lstm_model2_forward.7} parent=1 // pred_region
      %61 = dma.done [#allocation6], 4096
    $region21: #{eval_lstm_model2_forward.7} parent=1 // pred_fallthru
      _
    // Predicated region
    $region22: #{eval_lstm_model2_forward.7} parent=1 // pred_check
      _
    $region23: #{eval_lstm_model2_forward.7} parent=1 // pred_check_branch
      %63 = sbr.rel (0) target = $region25
    $region24: #{eval_lstm_model2_forward.7} parent=1 // pred_region
      %64 = dma.done [#allocation9], 4096
    $region25: #{eval_lstm_model2_forward.7} parent=1 // pred_fallthru
      _
    // Predicated region
    $region26: #{eval_lstm_model2_forward.7} parent=1 // pred_check
      _
    $region27: #{eval_lstm_model2_forward.7} parent=1 // pred_check_branch
      %66 = sbr.rel (0) target = $region29
    $region28: #{eval_lstm_model2_forward.7} parent=1 // pred_region
      %67 = dma.done [#allocation9], 1024
    $region29: #{eval_lstm_model2_forward.7} parent=1 // pred_fallthru
      _
    // Predicated region
    $region30: #{eval_lstm_model2_forward.7} parent=1 // pred_check
      _
    $region31: #{eval_lstm_model2_forward.7} parent=1 // pred_check_branch
      %69 = sbr.rel (0) target = $region33
    $region32: #{eval_lstm_model2_forward.7} parent=1 // pred_region
      %70 = dma.done [#allocation12], 16
    $region33: #{eval_lstm_model2_forward.7} parent=1 // pred_fallthru
      _
    %p72 = scmp.eq.s32.totalorder 0, 0
    // Predicated region
    $region34: #{eval_lstm_model2_forward.7} parent=1 // pred_check
      %p73 = pneg %p72
    $region35: #{eval_lstm_model2_forward.7} parent=1 // pred_check_branch
      %75 = sbr.rel (%p73) target = $region37
    $region36: #{eval_lstm_model2_forward.7} parent=1 // pred_region
      %76 = vst [vmem:[#allocation2] sm:$0xff] 0.0
      %77 = vst [vmem:[#allocation3] sm:$0xff] 0.0
    $region37: #{eval_lstm_model2_forward.7} parent=1 // pred_fallthru
      _
    %v78 = vld [vmem:[#allocation5] sm:$0xff]
    %v79 = vld [vmem:[#allocation5 + $0x8] sm:$0xff]
    %v80 = vld [vmem:[#allocation5 + $0x10] sm:$0xff]
    %v81 = vld [vmem:[#allocation5 + $0x18] sm:$0xff]
    %v82 = vld [vmem:[#allocation2] sm:$0xff]
    %v83 = vpack.c.bf16 %v82, %v82
    %v84 = vld [vmem:[#allocation8] sm:$0xff]
    %v85 = vld [vmem:[#allocation8 + $0x8] sm:$0xff]
    %v86 = vld [vmem:[#allocation8 + $0x10] sm:$0xff]
    %v87 = vld [vmem:[#allocation8 + $0x18] sm:$0xff]
    %v88 = vld [vmem:[#allocation8 + $0x20] sm:$0xff]
    %v89 = vld [vmem:[#allocation8 + $0x28] sm:$0xff]
    %v90 = vld [vmem:[#allocation8 + $0x30] sm:$0xff]
    %v91 = vld [vmem:[#allocation8 + $0x38] sm:$0xff]
    %v92 = vld [vmem:[#allocation8 + $0x40] sm:$0xff]
    %v93 = vld [vmem:[#allocation8 + $0x48] sm:$0xff]
    %v94 = vld [vmem:[#allocation8 + $0x50] sm:$0xff]
    %v95 = vld [vmem:[#allocation8 + $0x58] sm:$0xff]
    %v96 = vld [vmem:[#allocation8 + $0x60] sm:$0xff]
    %v97 = vld [vmem:[#allocation8 + $0x68] sm:$0xff]
    %v98 = vld [vmem:[#allocation8 + $0x70] sm:$0xff]
    %v99 = vld [vmem:[#allocation8 + $0x78] sm:$0xff]
    %v100 = vld [vmem:[#allocation8 + $0x80] sm:$0xff]
    %v101 = vld [vmem:[#allocation8 + $0x88] sm:$0xff]
    %v102 = vld [vmem:[#allocation8 + $0x90] sm:$0xff]
    %v103 = vld [vmem:[#allocation8 + $0x98] sm:$0xff]
    %v104 = vld [vmem:[#allocation8 + $0xa0] sm:$0xff]
    %v105 = vld [vmem:[#allocation8 + $0xa8] sm:$0xff]
    %v106 = vld [vmem:[#allocation8 + $0xb0] sm:$0xff]
    %v107 = vld [vmem:[#allocation8 + $0xb8] sm:$0xff]
    %v108 = vld [vmem:[#allocation8 + $0xc0] sm:$0xff]
    %v109 = vld [vmem:[#allocation8 + $0xc8] sm:$0xff]
    %v110 = vld [vmem:[#allocation8 + $0xd0] sm:$0xff]
    %v111 = vld [vmem:[#allocation8 + $0xd8] sm:$0xff]
    %v112 = vld [vmem:[#allocation8 + $0xe0] sm:$0xff]
    %v113 = vld [vmem:[#allocation8 + $0xe8] sm:$0xff]
    %v114 = vld [vmem:[#allocation8 + $0xf0] sm:$0xff]
    %v115 = vld [vmem:[#allocation8 + $0xf8] sm:$0xff]
    %v148 = vunpack.c.l.b16 %v84
    %v149 = vunpack.c.h.b16 %v84
    %v150 = vunpack.c.l.b16 %v85
    %v151 = vunpack.c.h.b16 %v85
    %v152 = vunpack.c.l.b16 %v86
    %v153 = vunpack.c.h.b16 %v86
    %v154 = vunpack.c.l.b16 %v87
    %v155 = vunpack.c.h.b16 %v87
    %v156 = vunpack.c.l.b16 %v88
    %v157 = vunpack.c.h.b16 %v88
    %v158 = vunpack.c.l.b16 %v89
    %v159 = vunpack.c.h.b16 %v89
    %v160 = vunpack.c.l.b16 %v90
    %v161 = vunpack.c.h.b16 %v90
    %v162 = vunpack.c.l.b16 %v91
    %v163 = vunpack.c.h.b16 %v91
    %v164 = vunpack.c.l.b16 %v92
    %v165 = vunpack.c.h.b16 %v92
    %v166 = vunpack.c.l.b16 %v93
    %v167 = vunpack.c.h.b16 %v93
    %v168 = vunpack.c.l.b16 %v94
    %v169 = vunpack.c.h.b16 %v94
    %v170 = vunpack.c.l.b16 %v95
    %v171 = vunpack.c.h.b16 %v95
    %v172 = vunpack.c.l.b16 %v96
    %v173 = vunpack.c.h.b16 %v96
    %v174 = vunpack.c.l.b16 %v97
    %v175 = vunpack.c.h.b16 %v97
    %v176 = vunpack.c.l.b16 %v98
    %v177 = vunpack.c.h.b16 %v98
    %v178 = vunpack.c.l.b16 %v99
    %v179 = vunpack.c.h.b16 %v99
    %v180 = vunpack.c.l.b16 %v100
    %v181 = vunpack.c.h.b16 %v100
    %v182 = vunpack.c.l.b16 %v101
    %v183 = vunpack.c.h.b16 %v101
    %v184 = vunpack.c.l.b16 %v102
    %v185 = vunpack.c.h.b16 %v102
    %v186 = vunpack.c.l.b16 %v103
    %v187 = vunpack.c.h.b16 %v103
    %v188 = vunpack.c.l.b16 %v104
    %v189 = vunpack.c.h.b16 %v104
    %v190 = vunpack.c.l.b16 %v105
    %v191 = vunpack.c.h.b16 %v105
    %v192 = vunpack.c.l.b16 %v106
    %v193 = vunpack.c.h.b16 %v106
    %v194 = vunpack.c.l.b16 %v107
    %v195 = vunpack.c.h.b16 %v107
    %v196 = vunpack.c.l.b16 %v108
    %v197 = vunpack.c.h.b16 %v108
    %v198 = vunpack.c.l.b16 %v109
    %v199 = vunpack.c.h.b16 %v109
    %v200 = vunpack.c.l.b16 %v110
    %v201 = vunpack.c.h.b16 %v110
    %v202 = vunpack.c.l.b16 %v111
    %v203 = vunpack.c.h.b16 %v111
    %v204 = vunpack.c.l.b16 %v112
    %v205 = vunpack.c.h.b16 %v112
    %v206 = vunpack.c.l.b16 %v113
    %v207 = vunpack.c.h.b16 %v113
    %v208 = vunpack.c.l.b16 %v114
    %v209 = vunpack.c.h.b16 %v114
    %v210 = vunpack.c.l.b16 %v115
    %v211 = vunpack.c.h.b16 %v115
    %v212 = vpack.c.b16 %v152, %v148
    %v213 = vpack.c.b16 %v153, %v149
    %v214 = vpack.c.b16 %v154, %v150
    %v215 = vpack.c.b16 %v155, %v151
    %v216 = vpack.c.b16 %v160, %v156
    %v217 = vpack.c.b16 %v161, %v157
    %v218 = vpack.c.b16 %v162, %v158
    %v219 = vpack.c.b16 %v163, %v159
    %v220 = vpack.c.b16 %v168, %v164
    %v221 = vpack.c.b16 %v169, %v165
    %v222 = vpack.c.b16 %v170, %v166
    %v223 = vpack.c.b16 %v171, %v167
    %v224 = vpack.c.b16 %v176, %v172
    %v225 = vpack.c.b16 %v177, %v173
    %v226 = vpack.c.b16 %v178, %v174
    %v227 = vpack.c.b16 %v179, %v175
    %v228 = vpack.c.b16 %v184, %v180
    %v229 = vpack.c.b16 %v185, %v181
    %v230 = vpack.c.b16 %v186, %v182
    %v231 = vpack.c.b16 %v187, %v183
    %v232 = vpack.c.b16 %v192, %v188
    %v233 = vpack.c.b16 %v193, %v189
    %v234 = vpack.c.b16 %v194, %v190
    %v235 = vpack.c.b16 %v195, %v191
    %v236 = vpack.c.b16 %v200, %v196
    %v237 = vpack.c.b16 %v201, %v197
    %v238 = vpack.c.b16 %v202, %v198
    %v239 = vpack.c.b16 %v203, %v199
    %v240 = vpack.c.b16 %v208, %v204
    %v241 = vpack.c.b16 %v209, %v205
    %v242 = vpack.c.b16 %v210, %v206
    %v243 = vpack.c.b16 %v211, %v207
    %276 = vmatprep.subr.bf16.mxu0 %v213
    %277 = vmatpush1.bf16.msra.mxu0 %v212
    %278 = vmatprep.subr.bf16.mxu0 %v217
    %279 = vmatpush1.bf16.msra.mxu0 %v216
    %280 = vmatprep.subr.bf16.mxu0 %v221
    %281 = vmatpush1.bf16.msra.mxu0 %v220
    %282 = vmatprep.subr.bf16.mxu0 %v225
    %283 = vmatpush1.bf16.msra.mxu0 %v224
    %284 = vmatprep.subr.bf16.mxu0 %v229
    %285 = vmatpush1.bf16.msra.mxu0 %v228
    %286 = vmatprep.subr.bf16.mxu0 %v233
    %287 = vmatpush1.bf16.msra.mxu0 %v232
    %288 = vmatprep.subr.bf16.mxu0 %v237
    %289 = vmatpush1.bf16.msra.mxu0 %v236
    %290 = vmatprep.subr.bf16.mxu0 %v241
    %291 = vmatpush1.bf16.msra.mxu0 %v240
    %292 = vmatprep.subr.bf16.mxu0 0
    %293 = vmatpush1.bf16.msra.mxu0 0
    %294 = vmatprep.subr.bf16.mxu0 0
    %295 = vmatpush1.bf16.msra.mxu0 0
    %296 = vmatprep.subr.bf16.mxu0 0
    %297 = vmatpush1.bf16.msra.mxu0 0
    %298 = vmatprep.subr.bf16.mxu0 0
    %299 = vmatpush1.bf16.msra.mxu0 0
    %300 = vmatprep.subr.bf16.mxu0 0
    %301 = vmatpush1.bf16.msra.mxu0 0
    %302 = vmatprep.subr.bf16.mxu0 0
    %303 = vmatpush1.bf16.msra.mxu0 0
    %304 = vmatprep.subr.bf16.mxu0 0
    %305 = vmatpush1.bf16.msra.mxu0 0
    %306 = vmatprep.subr.bf16.mxu0 0
    %307 = vmatpush1.bf16.msra.mxu0 0
    %308 = vmatprep.mubr.bf16.mxu0 0
    %309 = vmatmul.mubr.bf16.gmra.mrb[0].mxu0 %v83
    %v310 = vpop.f32.mrb[0].mxu0
    %v311 = vadd.f32 0.0, %v310
    %v312 = vpop.f32.mrb[0].mxu0
    %v313 = vadd.f32 0.0, %v312
    %v314 = vpop.f32.mrb[0].mxu0
    %v315 = vpop.f32.mrb[0].mxu0
    %316 = vdwg.mxu0
    %317 = vmatprep.subr.bf16.mxu0 %v215
    %318 = vmatpush1.bf16.msra.mxu0 %v214
    %319 = vmatprep.subr.bf16.mxu0 %v219
    %320 = vmatpush1.bf16.msra.mxu0 %v218
    %321 = vmatprep.subr.bf16.mxu0 %v223
    %322 = vmatpush1.bf16.msra.mxu0 %v222
    %323 = vmatprep.subr.bf16.mxu0 %v227
    %324 = vmatpush1.bf16.msra.mxu0 %v226
    %325 = vmatprep.subr.bf16.mxu0 %v231
    %326 = vmatpush1.bf16.msra.mxu0 %v230
    %327 = vmatprep.subr.bf16.mxu0 %v235
    %328 = vmatpush1.bf16.msra.mxu0 %v234
    %329 = vmatprep.subr.bf16.mxu0 %v239
    %330 = vmatpush1.bf16.msra.mxu0 %v238
    %331 = vmatprep.subr.bf16.mxu0 %v243
    %332 = vmatpush1.bf16.msra.mxu0 %v242
    %333 = vmatprep.subr.bf16.mxu0 0
    %334 = vmatpush1.bf16.msra.mxu0 0
    %335 = vmatprep.subr.bf16.mxu0 0
    %336 = vmatpush1.bf16.msra.mxu0 0
    %337 = vmatprep.subr.bf16.mxu0 0
    %338 = vmatpush1.bf16.msra.mxu0 0
    %339 = vmatprep.subr.bf16.mxu0 0
    %340 = vmatpush1.bf16.msra.mxu0 0
    %341 = vmatprep.subr.bf16.mxu0 0
    %342 = vmatpush1.bf16.msra.mxu0 0
    %343 = vmatprep.subr.bf16.mxu0 0
    %344 = vmatpush1.bf16.msra.mxu0 0
    %345 = vmatprep.subr.bf16.mxu0 0
    %346 = vmatpush1.bf16.msra.mxu0 0
    %347 = vmatprep.subr.bf16.mxu0 0
    %348 = vmatpush1.bf16.msra.mxu0 0
    %349 = vmatprep.mubr.bf16.mxu0 0
    %350 = vmatmul.mubr.bf16.gmra.mrb[0].mxu0 %v83
    %v351 = vpop.f32.mrb[0].mxu0
    %v352 = vadd.f32 0.0, %v351
    %v353 = vpop.f32.mrb[0].mxu0
    %v354 = vadd.f32 0.0, %v353
    %v355 = vpop.f32.mrb[0].mxu0
    %v356 = vpop.f32.mrb[0].mxu0
    %357 = vdwg.mxu0
    %v358 = vadd.f32 %v78, %v311
    %v359 = vadd.f32 %v79, %v313
    %v360 = vadd.f32 %v80, %v352
    %v361 = vadd.f32 %v81, %v354
    %v362 = vxor.u32 %v358, 2147483648
    %v363 = vmul.f32 %v362, 1.442695
    %v364 = vpow.pop %v363
    %v365 = vadd.f32 %v364, 1.0
    %v366 = vrcp.pop %v365
    %v367 = vmul.f32 1.0, %v366
    %v368 = vxor.u32 %v359, 2147483648
    %v369 = vmul.f32 %v368, 1.442695
    %v370 = vpow.pop %v369
    %v371 = vadd.f32 %v370, 1.0
    %v372 = vrcp.pop %v371
    %v373 = vmul.f32 1.0, %v372
    %v374 = vtanh.pop %v360
    %v375 = vxor.u32 %v361, 2147483648
    %v376 = vmul.f32 %v375, 1.442695
    %v377 = vpow.pop %v376
    %v378 = vadd.f32 %v377, 1.0
    %v379 = vrcp.pop %v378
    %v380 = vmul.f32 1.0, %v379
    %v381 = vld [vmem:[#allocation3] sm:$0xff]
    %v382 = vmul.f32 %v373, %v381
    %v383 = vmul.f32 %v367, %v374
    %v384 = vadd.f32 %v382, %v383
    %v385 = vtanh.pop %v384
    %v386 = vmul.f32 %v380, %v385
    %387 = vst [vmem:[#allocation3] sm:$0xff] %v384
    %388 = vst [vmem:[#allocation2] sm:$0xff] %v386
    %389 = vst [vmem:[#allocation4] sm:$0xff] %v386
    %s390 = scalar_lea.vmem [#allocation5], 32
    %v391 = vld [vmem:[%s390] sm:$0xff]
    %v392 = vld [vmem:[%s390 + $0x8] sm:$0xff]
    %v393 = vld [vmem:[%s390 + $0x10] sm:$0xff]
    %v394 = vld [vmem:[%s390 + $0x18] sm:$0xff]
    %v395 = vld [vmem:[#allocation2] sm:$0xff]
    %v396 = vpack.c.bf16 %v395, %v395
    %v397 = vld [vmem:[#allocation8] sm:$0xff]
    %v398 = vld [vmem:[#allocation8 + $0x8] sm:$0xff]
    %v399 = vld [vmem:[#allocation8 + $0x10] sm:$0xff]
    %v400 = vld [vmem:[#allocation8 + $0x18] sm:$0xff]
    %v401 = vld [vmem:[#allocation8 + $0x20] sm:$0xff]
    %v402 = vld [vmem:[#allocation8 + $0x28] sm:$0xff]
    %v403 = vld [vmem:[#allocation8 + $0x30] sm:$0xff]
    %v404 = vld [vmem:[#allocation8 + $0x38] sm:$0xff]
    %v405 = vld [vmem:[#allocation8 + $0x40] sm:$0xff]
    %v406 = vld [vmem:[#allocation8 + $0x48] sm:$0xff]
    %v407 = vld [vmem:[#allocation8 + $0x50] sm:$0xff]
    %v408 = vld [vmem:[#allocation8 + $0x58] sm:$0xff]
    %v409 = vld [vmem:[#allocation8 + $0x60] sm:$0xff]
    %v410 = vld [vmem:[#allocation8 + $0x68] sm:$0xff]
    %v411 = vld [vmem:[#allocation8 + $0x70] sm:$0xff]
    %v412 = vld [vmem:[#allocation8 + $0x78] sm:$0xff]
    %v413 = vld [vmem:[#allocation8 + $0x80] sm:$0xff]
    %v414 = vld [vmem:[#allocation8 + $0x88] sm:$0xff]
    %v415 = vld [vmem:[#allocation8 + $0x90] sm:$0xff]
    %v416 = vld [vmem:[#allocation8 + $0x98] sm:$0xff]
    %v417 = vld [vmem:[#allocation8 + $0xa0] sm:$0xff]
    %v418 = vld [vmem:[#allocation8 + $0xa8] sm:$0xff]
    %v419 = vld [vmem:[#allocation8 + $0xb0] sm:$0xff]
    %v420 = vld [vmem:[#allocation8 + $0xb8] sm:$0xff]
    %v421 = vld [vmem:[#allocation8 + $0xc0] sm:$0xff]
    %v422 = vld [vmem:[#allocation8 + $0xc8] sm:$0xff]
    %v423 = vld [vmem:[#allocation8 + $0xd0] sm:$0xff]
    %v424 = vld [vmem:[#allocation8 + $0xd8] sm:$0xff]
    %v425 = vld [vmem:[#allocation8 + $0xe0] sm:$0xff]
    %v426 = vld [vmem:[#allocation8 + $0xe8] sm:$0xff]
    %v427 = vld [vmem:[#allocation8 + $0xf0] sm:$0xff]
    %v428 = vld [vmem:[#allocation8 + $0xf8] sm:$0xff]
    %v461 = vunpack.c.l.b16 %v397
    %v462 = vunpack.c.h.b16 %v397
    %v463 = vunpack.c.l.b16 %v398
    %v464 = vunpack.c.h.b16 %v398
    %v465 = vunpack.c.l.b16 %v399
    %v466 = vunpack.c.h.b16 %v399
    %v467 = vunpack.c.l.b16 %v400
    %v468 = vunpack.c.h.b16 %v400
    %v469 = vunpack.c.l.b16 %v401
    %v470 = vunpack.c.h.b16 %v401
    %v471 = vunpack.c.l.b16 %v402
    %v472 = vunpack.c.h.b16 %v402
    %v473 = vunpack.c.l.b16 %v403
    %v474 = vunpack.c.h.b16 %v403
    %v475 = vunpack.c.l.b16 %v404
    %v476 = vunpack.c.h.b16 %v404
    %v477 = vunpack.c.l.b16 %v405
    %v478 = vunpack.c.h.b16 %v405
    %v479 = vunpack.c.l.b16 %v406
    %v480 = vunpack.c.h.b16 %v406
    %v481 = vunpack.c.l.b16 %v407
    %v482 = vunpack.c.h.b16 %v407
    %v483 = vunpack.c.l.b16 %v408
    %v484 = vunpack.c.h.b16 %v408
    %v485 = vunpack.c.l.b16 %v409
    %v486 = vunpack.c.h.b16 %v409
    %v487 = vunpack.c.l.b16 %v410
    %v488 = vunpack.c.h.b16 %v410
    %v489 = vunpack.c.l.b16 %v411
    %v490 = vunpack.c.h.b16 %v411
    %v491 = vunpack.c.l.b16 %v412
    %v492 = vunpack.c.h.b16 %v412
    %v493 = vunpack.c.l.b16 %v413
    %v494 = vunpack.c.h.b16 %v413
    %v495 = vunpack.c.l.b16 %v414
    %v496 = vunpack.c.h.b16 %v414
    %v497 = vunpack.c.l.b16 %v415
    %v498 = vunpack.c.h.b16 %v415
    %v499 = vunpack.c.l.b16 %v416
    %v500 = vunpack.c.h.b16 %v416
    %v501 = vunpack.c.l.b16 %v417
    %v502 = vunpack.c.h.b16 %v417
    %v503 = vunpack.c.l.b16 %v418
    %v504 = vunpack.c.h.b16 %v418
    %v505 = vunpack.c.l.b16 %v419
    %v506 = vunpack.c.h.b16 %v419
    %v507 = vunpack.c.l.b16 %v420
    %v508 = vunpack.c.h.b16 %v420
    %v509 = vunpack.c.l.b16 %v421
    %v510 = vunpack.c.h.b16 %v421
    %v511 = vunpack.c.l.b16 %v422
    %v512 = vunpack.c.h.b16 %v422
    %v513 = vunpack.c.l.b16 %v423
    %v514 = vunpack.c.h.b16 %v423
    %v515 = vunpack.c.l.b16 %v424
    %v516 = vunpack.c.h.b16 %v424
    %v517 = vunpack.c.l.b16 %v425
    %v518 = vunpack.c.h.b16 %v425
    %v519 = vunpack.c.l.b16 %v426
    %v520 = vunpack.c.h.b16 %v426
    %v521 = vunpack.c.l.b16 %v427
    %v522 = vunpack.c.h.b16 %v427
    %v523 = vunpack.c.l.b16 %v428
    %v524 = vunpack.c.h.b16 %v428
    %v525 = vpack.c.b16 %v465, %v461
    %v526 = vpack.c.b16 %v466, %v462
    %v527 = vpack.c.b16 %v467, %v463
    %v528 = vpack.c.b16 %v468, %v464
    %v529 = vpack.c.b16 %v473, %v469
    %v530 = vpack.c.b16 %v474, %v470
    %v531 = vpack.c.b16 %v475, %v471
    %v532 = vpack.c.b16 %v476, %v472
    %v533 = vpack.c.b16 %v481, %v477
    %v534 = vpack.c.b16 %v482, %v478
    %v535 = vpack.c.b16 %v483, %v479
    %v536 = vpack.c.b16 %v484, %v480
    %v537 = vpack.c.b16 %v489, %v485
    %v538 = vpack.c.b16 %v490, %v486
    %v539 = vpack.c.b16 %v491, %v487
    %v540 = vpack.c.b16 %v492, %v488
    %v541 = vpack.c.b16 %v497, %v493
    %v542 = vpack.c.b16 %v498, %v494
    %v543 = vpack.c.b16 %v499, %v495
    %v544 = vpack.c.b16 %v500, %v496
    %v545 = vpack.c.b16 %v505, %v501
    %v546 = vpack.c.b16 %v506, %v502
    %v547 = vpack.c.b16 %v507, %v503
    %v548 = vpack.c.b16 %v508, %v504
    %v549 = vpack.c.b16 %v513, %v509
    %v550 = vpack.c.b16 %v514, %v510
    %v551 = vpack.c.b16 %v515, %v511
    %v552 = vpack.c.b16 %v516, %v512
    %v553 = vpack.c.b16 %v521, %v517
    %v554 = vpack.c.b16 %v522, %v518
    %v555 = vpack.c.b16 %v523, %v519
    %v556 = vpack.c.b16 %v524, %v520
    %589 = vmatprep.subr.bf16.mxu0 %v526
    %590 = vmatpush1.bf16.msra.mxu0 %v525
    %591 = vmatprep.subr.bf16.mxu0 %v530
    %592 = vmatpush1.bf16.msra.mxu0 %v529
    %593 = vmatprep.subr.bf16.mxu0 %v534
    %594 = vmatpush1.bf16.msra.mxu0 %v533
    %595 = vmatprep.subr.bf16.mxu0 %v538
    %596 = vmatpush1.bf16.msra.mxu0 %v537
    %597 = vmatprep.subr.bf16.mxu0 %v542
    %598 = vmatpush1.bf16.msra.mxu0 %v541
    %599 = vmatprep.subr.bf16.mxu0 %v546
    %600 = vmatpush1.bf16.msra.mxu0 %v545
    %601 = vmatprep.subr.bf16.mxu0 %v550
    %602 = vmatpush1.bf16.msra.mxu0 %v549
    %603 = vmatprep.subr.bf16.mxu0 %v554
    %604 = vmatpush1.bf16.msra.mxu0 %v553
    %605 = vmatprep.subr.bf16.mxu0 0
    %606 = vmatpush1.bf16.msra.mxu0 0
    %607 = vmatprep.subr.bf16.mxu0 0
    %608 = vmatpush1.bf16.msra.mxu0 0
    %609 = vmatprep.subr.bf16.mxu0 0
    %610 = vmatpush1.bf16.msra.mxu0 0
    %611 = vmatprep.subr.bf16.mxu0 0
    %612 = vmatpush1.bf16.msra.mxu0 0
    %613 = vmatprep.subr.bf16.mxu0 0
    %614 = vmatpush1.bf16.msra.mxu0 0
    %615 = vmatprep.subr.bf16.mxu0 0
    %616 = vmatpush1.bf16.msra.mxu0 0
    %617 = vmatprep.subr.bf16.mxu0 0
    %618 = vmatpush1.bf16.msra.mxu0 0
    %619 = vmatprep.subr.bf16.mxu0 0
    %620 = vmatpush1.bf16.msra.mxu0 0
    %621 = vmatprep.mubr.bf16.mxu0 0
    %622 = vmatmul.mubr.bf16.gmra.mrb[0].mxu0 %v396
    %v623 = vpop.f32.mrb[0].mxu0
    %v624 = vadd.f32 0.0, %v623
    %v625 = vpop.f32.mrb[0].mxu0
    %v626 = vadd.f32 0.0, %v625
    %v627 = vpop.f32.mrb[0].mxu0
    %v628 = vpop.f32.mrb[0].mxu0
    %629 = vdwg.mxu0
    %630 = vmatprep.subr.bf16.mxu0 %v528
    %631 = vmatpush1.bf16.msra.mxu0 %v527
    %632 = vmatprep.subr.bf16.mxu0 %v532
    %633 = vmatpush1.bf16.msra.mxu0 %v531
    %634 = vmatprep.subr.bf16.mxu0 %v536
    %635 = vmatpush1.bf16.msra.mxu0 %v535
    %636 = vmatprep.subr.bf16.mxu0 %v540
    %637 = vmatpush1.bf16.msra.mxu0 %v539
    %638 = vmatprep.subr.bf16.mxu0 %v544
    %639 = vmatpush1.bf16.msra.mxu0 %v543
    %640 = vmatprep.subr.bf16.mxu0 %v548
    %641 = vmatpush1.bf16.msra.mxu0 %v547
    %642 = vmatprep.subr.bf16.mxu0 %v552
    %643 = vmatpush1.bf16.msra.mxu0 %v551
    %644 = vmatprep.subr.bf16.mxu0 %v556
    %645 = vmatpush1.bf16.msra.mxu0 %v555
    %646 = vmatprep.subr.bf16.mxu0 0
    %647 = vmatpush1.bf16.msra.mxu0 0
    %648 = vmatprep.subr.bf16.mxu0 0
    %649 = vmatpush1.bf16.msra.mxu0 0
    %650 = vmatprep.subr.bf16.mxu0 0
    %651 = vmatpush1.bf16.msra.mxu0 0
    %652 = vmatprep.subr.bf16.mxu0 0
    %653 = vmatpush1.bf16.msra.mxu0 0
    %654 = vmatprep.subr.bf16.mxu0 0
    %655 = vmatpush1.bf16.msra.mxu0 0
    %656 = vmatprep.subr.bf16.mxu0 0
    %657 = vmatpush1.bf16.msra.mxu0 0
    %658 = vmatprep.subr.bf16.mxu0 0
    %659 = vmatpush1.bf16.msra.mxu0 0
    %660 = vmatprep.subr.bf16.mxu0 0
    %661 = vmatpush1.bf16.msra.mxu0 0
    %662 = vmatprep.mubr.bf16.mxu0 0
    %663 = vmatmul.mubr.bf16.gmra.mrb[0].mxu0 %v396
    %v664 = vpop.f32.mrb[0].mxu0
    %v665 = vadd.f32 0.0, %v664
    %v666 = vpop.f32.mrb[0].mxu0
    %v667 = vadd.f32 0.0, %v666
    %v668 = vpop.f32.mrb[0].mxu0
    %v669 = vpop.f32.mrb[0].mxu0
    %670 = vdwg.mxu0
    %v671 = vadd.f32 %v391, %v624
    %v672 = vadd.f32 %v392, %v626
    %v673 = vadd.f32 %v393, %v665
    %v674 = vadd.f32 %v394, %v667
    %v675 = vxor.u32 %v671, 2147483648
    %v676 = vmul.f32 %v675, 1.442695
    %v677 = vpow.pop %v676
    %v678 = vadd.f32 %v677, 1.0
    %v679 = vrcp.pop %v678
    %v680 = vmul.f32 1.0, %v679
    %v681 = vxor.u32 %v672, 2147483648
    %v682 = vmul.f32 %v681, 1.442695
    %v683 = vpow.pop %v682
    %v684 = vadd.f32 %v683, 1.0
    %v685 = vrcp.pop %v684
    %v686 = vmul.f32 1.0, %v685
    %v687 = vtanh.pop %v673
    %v688 = vxor.u32 %v674, 2147483648
    %v689 = vmul.f32 %v688, 1.442695
    %v690 = vpow.pop %v689
    %v691 = vadd.f32 %v690, 1.0
    %v692 = vrcp.pop %v691
    %v693 = vmul.f32 1.0, %v692
    %v694 = vld [vmem:[#allocation3] sm:$0xff]
    %v695 = vmul.f32 %v686, %v694
    %v696 = vmul.f32 %v680, %v687
    %v697 = vadd.f32 %v695, %v696
    %v698 = vtanh.pop %v697
    %v699 = vmul.f32 %v693, %v698
    %700 = vst [vmem:[#allocation3] sm:$0xff] %v697
    %701 = vst [vmem:[#allocation2] sm:$0xff] %v699
    %s702 = scalar_lea.vmem [#allocation4], 8
    %703 = vst [vmem:[%s702] sm:$0xff] %v699
    %s704 = scalar_lea.vmem [#allocation5], 64
    %v705 = vld [vmem:[%s704] sm:$0xff]
    %v706 = vld [vmem:[%s704 + $0x8] sm:$0xff]
    %v707 = vld [vmem:[%s704 + $0x10] sm:$0xff]
    %v708 = vld [vmem:[%s704 + $0x18] sm:$0xff]
    %v709 = vld [vmem:[#allocation2] sm:$0xff]
    %v710 = vpack.c.bf16 %v709, %v709
    %v711 = vld [vmem:[#allocation8] sm:$0xff]
    %v712 = vld [vmem:[#allocation8 + $0x8] sm:$0xff]
    %v713 = vld [vmem:[#allocation8 + $0x10] sm:$0xff]
    %v714 = vld [vmem:[#allocation8 + $0x18] sm:$0xff]
    %v715 = vld [vmem:[#allocation8 + $0x20] sm:$0xff]
    %v716 = vld [vmem:[#allocation8 + $0x28] sm:$0xff]
    %v717 = vld [vmem:[#allocation8 + $0x30] sm:$0xff]
    %v718 = vld [vmem:[#allocation8 + $0x38] sm:$0xff]
    %v719 = vld [vmem:[#allocation8 + $0x40] sm:$0xff]
    %v720 = vld [vmem:[#allocation8 + $0x48] sm:$0xff]
    %v721 = vld [vmem:[#allocation8 + $0x50] sm:$0xff]
    %v722 = vld [vmem:[#allocation8 + $0x58] sm:$0xff]
    %v723 = vld [vmem:[#allocation8 + $0x60] sm:$0xff]
    %v724 = vld [vmem:[#allocation8 + $0x68] sm:$0xff]
    %v725 = vld [vmem:[#allocation8 + $0x70] sm:$0xff]
    %v726 = vld [vmem:[#allocation8 + $0x78] sm:$0xff]
    %v727 = vld [vmem:[#allocation8 + $0x80] sm:$0xff]
    %v728 = vld [vmem:[#allocation8 + $0x88] sm:$0xff]
    %v729 = vld [vmem:[#allocation8 + $0x90] sm:$0xff]
    %v730 = vld [vmem:[#allocation8 + $0x98] sm:$0xff]
    %v731 = vld [vmem:[#allocation8 + $0xa0] sm:$0xff]
    %v732 = vld [vmem:[#allocation8 + $0xa8] sm:$0xff]
    %v733 = vld [vmem:[#allocation8 + $0xb0] sm:$0xff]
    %v734 = vld [vmem:[#allocation8 + $0xb8] sm:$0xff]
    %v735 = vld [vmem:[#allocation8 + $0xc0] sm:$0xff]
    %v736 = vld [vmem:[#allocation8 + $0xc8] sm:$0xff]
    %v737 = vld [vmem:[#allocation8 + $0xd0] sm:$0xff]
    %v738 = vld [vmem:[#allocation8 + $0xd8] sm:$0xff]
    %v739 = vld [vmem:[#allocation8 + $0xe0] sm:$0xff]
    %v740 = vld [vmem:[#allocation8 + $0xe8] sm:$0xff]
    %v741 = vld [vmem:[#allocation8 + $0xf0] sm:$0xff]
    %v742 = vld [vmem:[#allocation8 + $0xf8] sm:$0xff]
    %v775 = vunpack.c.l.b16 %v711
    %v776 = vunpack.c.h.b16 %v711
    %v777 = vunpack.c.l.b16 %v712
    %v778 = vunpack.c.h.b16 %v712
    %v779 = vunpack.c.l.b16 %v713
    %v780 = vunpack.c.h.b16 %v713
    %v781 = vunpack.c.l.b16 %v714
    %v782 = vunpack.c.h.b16 %v714
    %v783 = vunpack.c.l.b16 %v715
    %v784 = vunpack.c.h.b16 %v715
    %v785 = vunpack.c.l.b16 %v716
    %v786 = vunpack.c.h.b16 %v716
    %v787 = vunpack.c.l.b16 %v717
    %v788 = vunpack.c.h.b16 %v717
    %v789 = vunpack.c.l.b16 %v718
    %v790 = vunpack.c.h.b16 %v718
    %v791 = vunpack.c.l.b16 %v719
    %v792 = vunpack.c.h.b16 %v719
    %v793 = vunpack.c.l.b16 %v720
    %v794 = vunpack.c.h.b16 %v720
    %v795 = vunpack.c.l.b16 %v721
    %v796 = vunpack.c.h.b16 %v721
    %v797 = vunpack.c.l.b16 %v722
    %v798 = vunpack.c.h.b16 %v722
    %v799 = vunpack.c.l.b16 %v723
    %v800 = vunpack.c.h.b16 %v723
    %v801 = vunpack.c.l.b16 %v724
    %v802 = vunpack.c.h.b16 %v724
    %v803 = vunpack.c.l.b16 %v725
    %v804 = vunpack.c.h.b16 %v725
    %v805 = vunpack.c.l.b16 %v726
    %v806 = vunpack.c.h.b16 %v726
    %v807 = vunpack.c.l.b16 %v727
    %v808 = vunpack.c.h.b16 %v727
    %v809 = vunpack.c.l.b16 %v728
    %v810 = vunpack.c.h.b16 %v728
    %v811 = vunpack.c.l.b16 %v729
    %v812 = vunpack.c.h.b16 %v729
    %v813 = vunpack.c.l.b16 %v730
    %v814 = vunpack.c.h.b16 %v730
    %v815 = vunpack.c.l.b16 %v731
    %v816 = vunpack.c.h.b16 %v731
    %v817 = vunpack.c.l.b16 %v732
    %v818 = vunpack.c.h.b16 %v732
    %v819 = vunpack.c.l.b16 %v733
    %v820 = vunpack.c.h.b16 %v733
    %v821 = vunpack.c.l.b16 %v734
    %v822 = vunpack.c.h.b16 %v734
    %v823 = vunpack.c.l.b16 %v735
    %v824 = vunpack.c.h.b16 %v735
    %v825 = vunpack.c.l.b16 %v736
    %v826 = vunpack.c.h.b16 %v736
    %v827 = vunpack.c.l.b16 %v737
    %v828 = vunpack.c.h.b16 %v737
    %v829 = vunpack.c.l.b16 %v738
    %v830 = vunpack.c.h.b16 %v738
    %v831 = vunpack.c.l.b16 %v739
    %v832 = vunpack.c.h.b16 %v739
    %v833 = vunpack.c.l.b16 %v740
    %v834 = vunpack.c.h.b16 %v740
    %v835 = vunpack.c.l.b16 %v741
    %v836 = vunpack.c.h.b16 %v741
    %v837 = vunpack.c.l.b16 %v742
    %v838 = vunpack.c.h.b16 %v742
    %v839 = vpack.c.b16 %v779, %v775
    %v840 = vpack.c.b16 %v780, %v776
    %v841 = vpack.c.b16 %v781, %v777
    %v842 = vpack.c.b16 %v782, %v778
    %v843 = vpack.c.b16 %v787, %v783
    %v844 = vpack.c.b16 %v788, %v784
    %v845 = vpack.c.b16 %v789, %v785
    %v846 = vpack.c.b16 %v790, %v786
    %v847 = vpack.c.b16 %v795, %v791
    %v848 = vpack.c.b16 %v796, %v792
    %v849 = vpack.c.b16 %v797, %v793
    %v850 = vpack.c.b16 %v798, %v794
    %v851 = vpack.c.b16 %v803, %v799
    %v852 = vpack.c.b16 %v804, %v800
    %v853 = vpack.c.b16 %v805, %v801
    %v854 = vpack.c.b16 %v806, %v802
    %v855 = vpack.c.b16 %v811, %v807
    %v856 = vpack.c.b16 %v812, %v808
    %v857 = vpack.c.b16 %v813, %v809
    %v858 = vpack.c.b16 %v814, %v810
    %v859 = vpack.c.b16 %v819, %v815
    %v860 = vpack.c.b16 %v820, %v816
    %v861 = vpack.c.b16 %v821, %v817
    %v862 = vpack.c.b16 %v822, %v818
    %v863 = vpack.c.b16 %v827, %v823
    %v864 = vpack.c.b16 %v828, %v824
    %v865 = vpack.c.b16 %v829, %v825
    %v866 = vpack.c.b16 %v830, %v826
    %v867 = vpack.c.b16 %v835, %v831
    %v868 = vpack.c.b16 %v836, %v832
    %v869 = vpack.c.b16 %v837, %v833
    %v870 = vpack.c.b16 %v838, %v834
    %903 = vmatprep.subr.bf16.mxu0 %v840
    %904 = vmatpush1.bf16.msra.mxu0 %v839
    %905 = vmatprep.subr.bf16.mxu0 %v844
    %906 = vmatpush1.bf16.msra.mxu0 %v843
    %907 = vmatprep.subr.bf16.mxu0 %v848
    %908 = vmatpush1.bf16.msra.mxu0 %v847
    %909 = vmatprep.subr.bf16.mxu0 %v852
    %910 = vmatpush1.bf16.msra.mxu0 %v851
    %911 = vmatprep.subr.bf16.mxu0 %v856
    %912 = vmatpush1.bf16.msra.mxu0 %v855
    %913 = vmatprep.subr.bf16.mxu0 %v860
    %914 = vmatpush1.bf16.msra.mxu0 %v859
    %915 = vmatprep.subr.bf16.mxu0 %v864
    %916 = vmatpush1.bf16.msra.mxu0 %v863
    %917 = vmatprep.subr.bf16.mxu0 %v868
    %918 = vmatpush1.bf16.msra.mxu0 %v867
    %919 = vmatprep.subr.bf16.mxu0 0
    %920 = vmatpush1.bf16.msra.mxu0 0
    %921 = vmatprep.subr.bf16.mxu0 0
    %922 = vmatpush1.bf16.msra.mxu0 0
    %923 = vmatprep.subr.bf16.mxu0 0
    %924 = vmatpush1.bf16.msra.mxu0 0
    %925 = vmatprep.subr.bf16.mxu0 0
    %926 = vmatpush1.bf16.msra.mxu0 0
    %927 = vmatprep.subr.bf16.mxu0 0
    %928 = vmatpush1.bf16.msra.mxu0 0
    %929 = vmatprep.subr.bf16.mxu0 0
    %930 = vmatpush1.bf16.msra.mxu0 0
    %931 = vmatprep.subr.bf16.mxu0 0
    %932 = vmatpush1.bf16.msra.mxu0 0
    %933 = vmatprep.subr.bf16.mxu0 0
    %934 = vmatpush1.bf16.msra.mxu0 0
    %935 = vmatprep.mubr.bf16.mxu0 0
    %936 = vmatmul.mubr.bf16.gmra.mrb[0].mxu0 %v710
    %v937 = vpop.f32.mrb[0].mxu0
    %v938 = vadd.f32 0.0, %v937
    %v939 = vpop.f32.mrb[0].mxu0
    %v940 = vadd.f32 0.0, %v939
    %v941 = vpop.f32.mrb[0].mxu0
    %v942 = vpop.f32.mrb[0].mxu0
    %943 = vdwg.mxu0
    %944 = vmatprep.subr.bf16.mxu0 %v842
    %945 = vmatpush1.bf16.msra.mxu0 %v841
    %946 = vmatprep.subr.bf16.mxu0 %v846
    %947 = vmatpush1.bf16.msra.mxu0 %v845
    %948 = vmatprep.subr.bf16.mxu0 %v850
    %949 = vmatpush1.bf16.msra.mxu0 %v849
    %950 = vmatprep.subr.bf16.mxu0 %v854
    %951 = vmatpush1.bf16.msra.mxu0 %v853
    %952 = vmatprep.subr.bf16.mxu0 %v858
    %953 = vmatpush1.bf16.msra.mxu0 %v857
    %954 = vmatprep.subr.bf16.mxu0 %v862
    %955 = vmatpush1.bf16.msra.mxu0 %v861
    %956 = vmatprep.subr.bf16.mxu0 %v866
    %957 = vmatpush1.bf16.msra.mxu0 %v865
    %958 = vmatprep.subr.bf16.mxu0 %v870
    %959 = vmatpush1.bf16.msra.mxu0 %v869
    %960 = vmatprep.subr.bf16.mxu0 0
    %961 = vmatpush1.bf16.msra.mxu0 0
    %962 = vmatprep.subr.bf16.mxu0 0
    %963 = vmatpush1.bf16.msra.mxu0 0
    %964 = vmatprep.subr.bf16.mxu0 0
    %965 = vmatpush1.bf16.msra.mxu0 0
    %966 = vmatprep.subr.bf16.mxu0 0
    %967 = vmatpush1.bf16.msra.mxu0 0
    %968 = vmatprep.subr.bf16.mxu0 0
    %969 = vmatpush1.bf16.msra.mxu0 0
    %970 = vmatprep.subr.bf16.mxu0 0
    %971 = vmatpush1.bf16.msra.mxu0 0
    %972 = vmatprep.subr.bf16.mxu0 0
    %973 = vmatpush1.bf16.msra.mxu0 0
    %974 = vmatprep.subr.bf16.mxu0 0
    %975 = vmatpush1.bf16.msra.mxu0 0
    %976 = vmatprep.mubr.bf16.mxu0 0
    %977 = vmatmul.mubr.bf16.gmra.mrb[0].mxu0 %v710
    %v978 = vpop.f32.mrb[0].mxu0
    %v979 = vadd.f32 0.0, %v978
    %v980 = vpop.f32.mrb[0].mxu0
    %v981 = vadd.f32 0.0, %v980
    %v982 = vpop.f32.mrb[0].mxu0
    %v983 = vpop.f32.mrb[0].mxu0
    %984 = vdwg.mxu0
    %v985 = vadd.f32 %v705, %v938
    %v986 = vadd.f32 %v706, %v940
    %v987 = vadd.f32 %v707, %v979
    %v988 = vadd.f32 %v708, %v981
    %v989 = vxor.u32 %v985, 2147483648
    %v990 = vmul.f32 %v989, 1.442695
    %v991 = vpow.pop %v990
    %v992 = vadd.f32 %v991, 1.0
    %v993 = vrcp.pop %v992
    %v994 = vmul.f32 1.0, %v993
    %v995 = vxor.u32 %v986, 2147483648
    %v996 = vmul.f32 %v995, 1.442695
    %v997 = vpow.pop %v996
    %v998 = vadd.f32 %v997, 1.0
    %v999 = vrcp.pop %v998
    %v1000 = vmul.f32 1.0, %v999
    %v1001 = vtanh.pop %v987
    %v1002 = vxor.u32 %v988, 2147483648
    %v1003 = vmul.f32 %v1002, 1.442695
    %v1004 = vpow.pop %v1003
    %v1005 = vadd.f32 %v1004, 1.0
    %v1006 = vrcp.pop %v1005
    %v1007 = vmul.f32 1.0, %v1006
    %v1008 = vld [vmem:[#allocation3] sm:$0xff]
    %v1009 = vmul.f32 %v1000, %v1008
    %v1010 = vmul.f32 %v994, %v1001
    %v1011 = vadd.f32 %v1009, %v1010
    %v1012 = vtanh.pop %v1011
    %v1013 = vmul.f32 %v1007, %v1012
    %1014 = vst [vmem:[#allocation3] sm:$0xff] %v1011
    %1015 = vst [vmem:[#allocation2] sm:$0xff] %v1013
    %s1016 = scalar_lea.vmem [#allocation4], 16
    %1017 = vst [vmem:[%s1016] sm:$0xff] %v1013
    %s1018 = scalar_lea.vmem [#allocation5], 96
    %v1019 = vld [vmem:[%s1018] sm:$0xff]
    %v1020 = vld [vmem:[%s1018 + $0x8] sm:$0xff]
    %v1021 = vld [vmem:[%s1018 + $0x10] sm:$0xff]
    %v1022 = vld [vmem:[%s1018 + $0x18] sm:$0xff]
    %v1023 = vld [vmem:[#allocation2] sm:$0xff]
    %v1024 = vpack.c.bf16 %v1023, %v1023
    %v1025 = vld [vmem:[#allocation8] sm:$0xff]
    %v1026 = vld [vmem:[#allocation8 + $0x8] sm:$0xff]
    %v1027 = vld [vmem:[#allocation8 + $0x10] sm:$0xff]
    %v1028 = vld [vmem:[#allocation8 + $0x18] sm:$0xff]
    %v1029 = vld [vmem:[#allocation8 + $0x20] sm:$0xff]
    %v1030 = vld [vmem:[#allocation8 + $0x28] sm:$0xff]
    %v1031 = vld [vmem:[#allocation8 + $0x30] sm:$0xff]
    %v1032 = vld [vmem:[#allocation8 + $0x38] sm:$0xff]
    %v1033 = vld [vmem:[#allocation8 + $0x40] sm:$0xff]
    %v1034 = vld [vmem:[#allocation8 + $0x48] sm:$0xff]
    %v1035 = vld [vmem:[#allocation8 + $0x50] sm:$0xff]
    %v1036 = vld [vmem:[#allocation8 + $0x58] sm:$0xff]
    %v1037 = vld [vmem:[#allocation8 + $0x60] sm:$0xff]
    %v1038 = vld [vmem:[#allocation8 + $0x68] sm:$0xff]
    %v1039 = vld [vmem:[#allocation8 + $0x70] sm:$0xff]
    %v1040 = vld [vmem:[#allocation8 + $0x78] sm:$0xff]
    %v1041 = vld [vmem:[#allocation8 + $0x80] sm:$0xff]
    %v1042 = vld [vmem:[#allocation8 + $0x88] sm:$0xff]
    %v1043 = vld [vmem:[#allocation8 + $0x90] sm:$0xff]
    %v1044 = vld [vmem:[#allocation8 + $0x98] sm:$0xff]
    %v1045 = vld [vmem:[#allocation8 + $0xa0] sm:$0xff]
    %v1046 = vld [vmem:[#allocation8 + $0xa8] sm:$0xff]
    %v1047 = vld [vmem:[#allocation8 + $0xb0] sm:$0xff]
    %v1048 = vld [vmem:[#allocation8 + $0xb8] sm:$0xff]
    %v1049 = vld [vmem:[#allocation8 + $0xc0] sm:$0xff]
    %v1050 = vld [vmem:[#allocation8 + $0xc8] sm:$0xff]
    %v1051 = vld [vmem:[#allocation8 + $0xd0] sm:$0xff]
    %v1052 = vld [vmem:[#allocation8 + $0xd8] sm:$0xff]
    %v1053 = vld [vmem:[#allocation8 + $0xe0] sm:$0xff]
    %v1054 = vld [vmem:[#allocation8 + $0xe8] sm:$0xff]
    %v1055 = vld [vmem:[#allocation8 + $0xf0] sm:$0xff]
    %v1056 = vld [vmem:[#allocation8 + $0xf8] sm:$0xff]
    %v1089 = vunpack.c.l.b16 %v1025
    %v1090 = vunpack.c.h.b16 %v1025
    %v1091 = vunpack.c.l.b16 %v1026
    %v1092 = vunpack.c.h.b16 %v1026
    %v1093 = vunpack.c.l.b16 %v1027
    %v1094 = vunpack.c.h.b16 %v1027
    %v1095 = vunpack.c.l.b16 %v1028
    %v1096 = vunpack.c.h.b16 %v1028
    %v1097 = vunpack.c.l.b16 %v1029
    %v1098 = vunpack.c.h.b16 %v1029
    %v1099 = vunpack.c.l.b16 %v1030
    %v1100 = vunpack.c.h.b16 %v1030
    %v1101 = vunpack.c.l.b16 %v1031
    %v1102 = vunpack.c.h.b16 %v1031
    %v1103 = vunpack.c.l.b16 %v1032
    %v1104 = vunpack.c.h.b16 %v1032
    %v1105 = vunpack.c.l.b16 %v1033
    %v1106 = vunpack.c.h.b16 %v1033
    %v1107 = vunpack.c.l.b16 %v1034
    %v1108 = vunpack.c.h.b16 %v1034
    %v1109 = vunpack.c.l.b16 %v1035
    %v1110 = vunpack.c.h.b16 %v1035
    %v1111 = vunpack.c.l.b16 %v1036
    %v1112 = vunpack.c.h.b16 %v1036
    %v1113 = vunpack.c.l.b16 %v1037
    %v1114 = vunpack.c.h.b16 %v1037
    %v1115 = vunpack.c.l.b16 %v1038
    %v1116 = vunpack.c.h.b16 %v1038
    %v1117 = vunpack.c.l.b16 %v1039
    %v1118 = vunpack.c.h.b16 %v1039
    %v1119 = vunpack.c.l.b16 %v1040
    %v1120 = vunpack.c.h.b16 %v1040
    %v1121 = vunpack.c.l.b16 %v1041
    %v1122 = vunpack.c.h.b16 %v1041
    %v1123 = vunpack.c.l.b16 %v1042
    %v1124 = vunpack.c.h.b16 %v1042
    %v1125 = vunpack.c.l.b16 %v1043
    %v1126 = vunpack.c.h.b16 %v1043
    %v1127 = vunpack.c.l.b16 %v1044
    %v1128 = vunpack.c.h.b16 %v1044
    %v1129 = vunpack.c.l.b16 %v1045
    %v1130 = vunpack.c.h.b16 %v1045
    %v1131 = vunpack.c.l.b16 %v1046
    %v1132 = vunpack.c.h.b16 %v1046
    %v1133 = vunpack.c.l.b16 %v1047
    %v1134 = vunpack.c.h.b16 %v1047
    %v1135 = vunpack.c.l.b16 %v1048
    %v1136 = vunpack.c.h.b16 %v1048
    %v1137 = vunpack.c.l.b16 %v1049
    %v1138 = vunpack.c.h.b16 %v1049
    %v1139 = vunpack.c.l.b16 %v1050
    %v1140 = vunpack.c.h.b16 %v1050
    %v1141 = vunpack.c.l.b16 %v1051
    %v1142 = vunpack.c.h.b16 %v1051
    %v1143 = vunpack.c.l.b16 %v1052
    %v1144 = vunpack.c.h.b16 %v1052
    %v1145 = vunpack.c.l.b16 %v1053
    %v1146 = vunpack.c.h.b16 %v1053
    %v1147 = vunpack.c.l.b16 %v1054
    %v1148 = vunpack.c.h.b16 %v1054
    %v1149 = vunpack.c.l.b16 %v1055
    %v1150 = vunpack.c.h.b16 %v1055
    %v1151 = vunpack.c.l.b16 %v1056
    %v1152 = vunpack.c.h.b16 %v1056
    %v1153 = vpack.c.b16 %v1093, %v1089
    %v1154 = vpack.c.b16 %v1094, %v1090
    %v1155 = vpack.c.b16 %v1095, %v1091
    %v1156 = vpack.c.b16 %v1096, %v1092
    %v1157 = vpack.c.b16 %v1101, %v1097
    %v1158 = vpack.c.b16 %v1102, %v1098
    %v1159 = vpack.c.b16 %v1103, %v1099
    %v1160 = vpack.c.b16 %v1104, %v1100
    %v1161 = vpack.c.b16 %v1109, %v1105
    %v1162 = vpack.c.b16 %v1110, %v1106
    %v1163 = vpack.c.b16 %v1111, %v1107
    %v1164 = vpack.c.b16 %v1112, %v1108
    %v1165 = vpack.c.b16 %v1117, %v1113
    %v1166 = vpack.c.b16 %v1118, %v1114
    %v1167 = vpack.c.b16 %v1119, %v1115
    %v1168 = vpack.c.b16 %v1120, %v1116
    %v1169 = vpack.c.b16 %v1125, %v1121
    %v1170 = vpack.c.b16 %v1126, %v1122
    %v1171 = vpack.c.b16 %v1127, %v1123
    %v1172 = vpack.c.b16 %v1128, %v1124
    %v1173 = vpack.c.b16 %v1133, %v1129
    %v1174 = vpack.c.b16 %v1134, %v1130
    %v1175 = vpack.c.b16 %v1135, %v1131
    %v1176 = vpack.c.b16 %v1136, %v1132
    %v1177 = vpack.c.b16 %v1141, %v1137
    %v1178 = vpack.c.b16 %v1142, %v1138
    %v1179 = vpack.c.b16 %v1143, %v1139
    %v1180 = vpack.c.b16 %v1144, %v1140
    %v1181 = vpack.c.b16 %v1149, %v1145
    %v1182 = vpack.c.b16 %v1150, %v1146
    %v1183 = vpack.c.b16 %v1151, %v1147
    %v1184 = vpack.c.b16 %v1152, %v1148
    %1217 = vmatprep.subr.bf16.mxu0 %v1154
    %1218 = vmatpush1.bf16.msra.mxu0 %v1153
    %1219 = vmatprep.subr.bf16.mxu0 %v1158
    %1220 = vmatpush1.bf16.msra.mxu0 %v1157
    %1221 = vmatprep.subr.bf16.mxu0 %v1162
    %1222 = vmatpush1.bf16.msra.mxu0 %v1161
    %1223 = vmatprep.subr.bf16.mxu0 %v1166
    %1224 = vmatpush1.bf16.msra.mxu0 %v1165
    %1225 = vmatprep.subr.bf16.mxu0 %v1170
    %1226 = vmatpush1.bf16.msra.mxu0 %v1169
    %1227 = vmatprep.subr.bf16.mxu0 %v1174
    %1228 = vmatpush1.bf16.msra.mxu0 %v1173
    %1229 = vmatprep.subr.bf16.mxu0 %v1178
    %1230 = vmatpush1.bf16.msra.mxu0 %v1177
    %1231 = vmatprep.subr.bf16.mxu0 %v1182
    %1232 = vmatpush1.bf16.msra.mxu0 %v1181
    %1233 = vmatprep.subr.bf16.mxu0 0
    %1234 = vmatpush1.bf16.msra.mxu0 0
    %1235 = vmatprep.subr.bf16.mxu0 0
    %1236 = vmatpush1.bf16.msra.mxu0 0
    %1237 = vmatprep.subr.bf16.mxu0 0
    %1238 = vmatpush1.bf16.msra.mxu0 0
    %1239 = vmatprep.subr.bf16.mxu0 0
    %1240 = vmatpush1.bf16.msra.mxu0 0
    %1241 = vmatprep.subr.bf16.mxu0 0
    %1242 = vmatpush1.bf16.msra.mxu0 0
    %1243 = vmatprep.subr.bf16.mxu0 0
    %1244 = vmatpush1.bf16.msra.mxu0 0
    %1245 = vmatprep.subr.bf16.mxu0 0
    %1246 = vmatpush1.bf16.msra.mxu0 0
    %1247 = vmatprep.subr.bf16.mxu0 0
    %1248 = vmatpush1.bf16.msra.mxu0 0
    %1249 = vmatprep.mubr.bf16.mxu0 0
    %1250 = vmatmul.mubr.bf16.gmra.mrb[0].mxu0 %v1024
    %v1251 = vpop.f32.mrb[0].mxu0
    %v1252 = vadd.f32 0.0, %v1251
    %v1253 = vpop.f32.mrb[0].mxu0
    %v1254 = vadd.f32 0.0, %v1253
    %v1255 = vpop.f32.mrb[0].mxu0
    %v1256 = vpop.f32.mrb[0].mxu0
    %1257 = vdwg.mxu0
    %1258 = vmatprep.subr.bf16.mxu0 %v1156
    %1259 = vmatpush1.bf16.msra.mxu0 %v1155
    %1260 = vmatprep.subr.bf16.mxu0 %v1160
    %1261 = vmatpush1.bf16.msra.mxu0 %v1159
    %1262 = vmatprep.subr.bf16.mxu0 %v1164
    %1263 = vmatpush1.bf16.msra.mxu0 %v1163
    %1264 = vmatprep.subr.bf16.mxu0 %v1168
    %1265 = vmatpush1.bf16.msra.mxu0 %v1167
    %1266 = vmatprep.subr.bf16.mxu0 %v1172
    %1267 = vmatpush1.bf16.msra.mxu0 %v1171
    %1268 = vmatprep.subr.bf16.mxu0 %v1176
    %1269 = vmatpush1.bf16.msra.mxu0 %v1175
    %1270 = vmatprep.subr.bf16.mxu0 %v1180
    %1271 = vmatpush1.bf16.msra.mxu0 %v1179
    %1272 = vmatprep.subr.bf16.mxu0 %v1184
    %1273 = vmatpush1.bf16.msra.mxu0 %v1183
    %1274 = vmatprep.subr.bf16.mxu0 0
    %1275 = vmatpush1.bf16.msra.mxu0 0
    %1276 = vmatprep.subr.bf16.mxu0 0
    %1277 = vmatpush1.bf16.msra.mxu0 0
    %1278 = vmatprep.subr.bf16.mxu0 0
    %1279 = vmatpush1.bf16.msra.mxu0 0
    %1280 = vmatprep.subr.bf16.mxu0 0
    %1281 = vmatpush1.bf16.msra.mxu0 0
    %1282 = vmatprep.subr.bf16.mxu0 0
    %1283 = vmatpush1.bf16.msra.mxu0 0
    %1284 = vmatprep.subr.bf16.mxu0 0
    %1285 = vmatpush1.bf16.msra.mxu0 0
    %1286 = vmatprep.subr.bf16.mxu0 0
    %1287 = vmatpush1.bf16.msra.mxu0 0
    %1288 = vmatprep.subr.bf16.mxu0 0
    %1289 = vmatpush1.bf16.msra.mxu0 0
    %1290 = vmatprep.mubr.bf16.mxu0 0
    %1291 = vmatmul.mubr.bf16.gmra.mrb[0].mxu0 %v1024
    %v1292 = vpop.f32.mrb[0].mxu0
    %v1293 = vadd.f32 0.0, %v1292
    %v1294 = vpop.f32.mrb[0].mxu0
    %v1295 = vadd.f32 0.0, %v1294
    %v1296 = vpop.f32.mrb[0].mxu0
    %v1297 = vpop.f32.mrb[0].mxu0
    %1298 = vdwg.mxu0
    %v1299 = vadd.f32 %v1019, %v1252
    %v1300 = vadd.f32 %v1020, %v1254
    %v1301 = vadd.f32 %v1021, %v1293
    %v1302 = vadd.f32 %v1022, %v1295
    %v1303 = vxor.u32 %v1299, 2147483648
    %v1304 = vmul.f32 %v1303, 1.442695
    %v1305 = vpow.pop %v1304
    %v1306 = vadd.f32 %v1305, 1.0
    %v1307 = vrcp.pop %v1306
    %v1308 = vmul.f32 1.0, %v1307
    %v1309 = vxor.u32 %v1300, 2147483648
    %v1310 = vmul.f32 %v1309, 1.442695
    %v1311 = vpow.pop %v1310
    %v1312 = vadd.f32 %v1311, 1.0
    %v1313 = vrcp.pop %v1312
    %v1314 = vmul.f32 1.0, %v1313
    %v1315 = vtanh.pop %v1301
    %v1316 = vxor.u32 %v1302, 2147483648
    %v1317 = vmul.f32 %v1316, 1.442695
    %v1318 = vpow.pop %v1317
    %v1319 = vadd.f32 %v1318, 1.0
    %v1320 = vrcp.pop %v1319
    %v1321 = vmul.f32 1.0, %v1320
    %v1322 = vld [vmem:[#allocation3] sm:$0xff]
    %v1323 = vmul.f32 %v1314, %v1322
    %v1324 = vmul.f32 %v1308, %v1315
    %v1325 = vadd.f32 %v1323, %v1324
    %v1326 = vtanh.pop %v1325
    %v1327 = vmul.f32 %v1321, %v1326
    %1328 = vst [vmem:[#allocation3] sm:$0xff] %v1325
    %1329 = vst [vmem:[#allocation2] sm:$0xff] %v1327
    %s1330 = scalar_lea.vmem [#allocation4], 24
    %1331 = vst [vmem:[%s1330] sm:$0xff] %v1327
    %s1332 = scalar_lea.vmem [#allocation5], 128
    %v1333 = vld [vmem:[%s1332] sm:$0xff]
    %v1334 = vld [vmem:[%s1332 + $0x8] sm:$0xff]
    %v1335 = vld [vmem:[%s1332 + $0x10] sm:$0xff]
    %v1336 = vld [vmem:[%s1332 + $0x18] sm:$0xff]
    %v1337 = vld [vmem:[#allocation2] sm:$0xff]
    %v1338 = vpack.c.bf16 %v1337, %v1337
    %v1339 = vld [vmem:[#allocation8] sm:$0xff]
    %v1340 = vld [vmem:[#allocation8 + $0x8] sm:$0xff]
    %v1341 = vld [vmem:[#allocation8 + $0x10] sm:$0xff]
    %v1342 = vld [vmem:[#allocation8 + $0x18] sm:$0xff]
    %v1343 = vld [vmem:[#allocation8 + $0x20] sm:$0xff]
    %v1344 = vld [vmem:[#allocation8 + $0x28] sm:$0xff]
    %v1345 = vld [vmem:[#allocation8 + $0x30] sm:$0xff]
    %v1346 = vld [vmem:[#allocation8 + $0x38] sm:$0xff]
    %v1347 = vld [vmem:[#allocation8 + $0x40] sm:$0xff]
    %v1348 = vld [vmem:[#allocation8 + $0x48] sm:$0xff]
    %v1349 = vld [vmem:[#allocation8 + $0x50] sm:$0xff]
    %v1350 = vld [vmem:[#allocation8 + $0x58] sm:$0xff]
    %v1351 = vld [vmem:[#allocation8 + $0x60] sm:$0xff]
    %v1352 = vld [vmem:[#allocation8 + $0x68] sm:$0xff]
    %v1353 = vld [vmem:[#allocation8 + $0x70] sm:$0xff]
    %v1354 = vld [vmem:[#allocation8 + $0x78] sm:$0xff]
    %v1355 = vld [vmem:[#allocation8 + $0x80] sm:$0xff]
    %v1356 = vld [vmem:[#allocation8 + $0x88] sm:$0xff]
    %v1357 = vld [vmem:[#allocation8 + $0x90] sm:$0xff]
    %v1358 = vld [vmem:[#allocation8 + $0x98] sm:$0xff]
    %v1359 = vld [vmem:[#allocation8 + $0xa0] sm:$0xff]
    %v1360 = vld [vmem:[#allocation8 + $0xa8] sm:$0xff]
    %v1361 = vld [vmem:[#allocation8 + $0xb0] sm:$0xff]
    %v1362 = vld [vmem:[#allocation8 + $0xb8] sm:$0xff]
    %v1363 = vld [vmem:[#allocation8 + $0xc0] sm:$0xff]
    %v1364 = vld [vmem:[#allocation8 + $0xc8] sm:$0xff]
    %v1365 = vld [vmem:[#allocation8 + $0xd0] sm:$0xff]
    %v1366 = vld [vmem:[#allocation8 + $0xd8] sm:$0xff]
    %v1367 = vld [vmem:[#allocation8 + $0xe0] sm:$0xff]
    %v1368 = vld [vmem:[#allocation8 + $0xe8] sm:$0xff]
    %v1369 = vld [vmem:[#allocation8 + $0xf0] sm:$0xff]
    %v1370 = vld [vmem:[#allocation8 + $0xf8] sm:$0xff]
    %v1403 = vunpack.c.l.b16 %v1339
    %v1404 = vunpack.c.h.b16 %v1339
    %v1405 = vunpack.c.l.b16 %v1340
    %v1406 = vunpack.c.h.b16 %v1340
    %v1407 = vunpack.c.l.b16 %v1341
    %v1408 = vunpack.c.h.b16 %v1341
    %v1409 = vunpack.c.l.b16 %v1342
    %v1410 = vunpack.c.h.b16 %v1342
    %v1411 = vunpack.c.l.b16 %v1343
    %v1412 = vunpack.c.h.b16 %v1343
    %v1413 = vunpack.c.l.b16 %v1344
    %v1414 = vunpack.c.h.b16 %v1344
    %v1415 = vunpack.c.l.b16 %v1345
    %v1416 = vunpack.c.h.b16 %v1345
    %v1417 = vunpack.c.l.b16 %v1346
    %v1418 = vunpack.c.h.b16 %v1346
    %v1419 = vunpack.c.l.b16 %v1347
    %v1420 = vunpack.c.h.b16 %v1347
    %v1421 = vunpack.c.l.b16 %v1348
    %v1422 = vunpack.c.h.b16 %v1348
    %v1423 = vunpack.c.l.b16 %v1349
    %v1424 = vunpack.c.h.b16 %v1349
    %v1425 = vunpack.c.l.b16 %v1350
    %v1426 = vunpack.c.h.b16 %v1350
    %v1427 = vunpack.c.l.b16 %v1351
    %v1428 = vunpack.c.h.b16 %v1351
    %v1429 = vunpack.c.l.b16 %v1352
    %v1430 = vunpack.c.h.b16 %v1352
    %v1431 = vunpack.c.l.b16 %v1353
    %v1432 = vunpack.c.h.b16 %v1353
    %v1433 = vunpack.c.l.b16 %v1354
    %v1434 = vunpack.c.h.b16 %v1354
    %v1435 = vunpack.c.l.b16 %v1355
    %v1436 = vunpack.c.h.b16 %v1355
    %v1437 = vunpack.c.l.b16 %v1356
    %v1438 = vunpack.c.h.b16 %v1356
    %v1439 = vunpack.c.l.b16 %v1357
    %v1440 = vunpack.c.h.b16 %v1357
    %v1441 = vunpack.c.l.b16 %v1358
    %v1442 = vunpack.c.h.b16 %v1358
    %v1443 = vunpack.c.l.b16 %v1359
    %v1444 = vunpack.c.h.b16 %v1359
    %v1445 = vunpack.c.l.b16 %v1360
    %v1446 = vunpack.c.h.b16 %v1360
    %v1447 = vunpack.c.l.b16 %v1361
    %v1448 = vunpack.c.h.b16 %v1361
    %v1449 = vunpack.c.l.b16 %v1362
    %v1450 = vunpack.c.h.b16 %v1362
    %v1451 = vunpack.c.l.b16 %v1363
    %v1452 = vunpack.c.h.b16 %v1363
    %v1453 = vunpack.c.l.b16 %v1364
    %v1454 = vunpack.c.h.b16 %v1364
    %v1455 = vunpack.c.l.b16 %v1365
    %v1456 = vunpack.c.h.b16 %v1365
    %v1457 = vunpack.c.l.b16 %v1366
    %v1458 = vunpack.c.h.b16 %v1366
    %v1459 = vunpack.c.l.b16 %v1367
    %v1460 = vunpack.c.h.b16 %v1367
    %v1461 = vunpack.c.l.b16 %v1368
    %v1462 = vunpack.c.h.b16 %v1368
    %v1463 = vunpack.c.l.b16 %v1369
    %v1464 = vunpack.c.h.b16 %v1369
    %v1465 = vunpack.c.l.b16 %v1370
    %v1466 = vunpack.c.h.b16 %v1370
    %v1467 = vpack.c.b16 %v1407, %v1403
    %v1468 = vpack.c.b16 %v1408, %v1404
    %v1469 = vpack.c.b16 %v1409, %v1405
    %v1470 = vpack.c.b16 %v1410, %v1406
    %v1471 = vpack.c.b16 %v1415, %v1411
    %v1472 = vpack.c.b16 %v1416, %v1412
    %v1473 = vpack.c.b16 %v1417, %v1413
    %v1474 = vpack.c.b16 %v1418, %v1414
    %v1475 = vpack.c.b16 %v1423, %v1419
    %v1476 = vpack.c.b16 %v1424, %v1420
    %v1477 = vpack.c.b16 %v1425, %v1421
    %v1478 = vpack.c.b16 %v1426, %v1422
    %v1479 = vpack.c.b16 %v1431, %v1427
    %v1480 = vpack.c.b16 %v1432, %v1428
    %v1481 = vpack.c.b16 %v1433, %v1429
    %v1482 = vpack.c.b16 %v1434, %v1430
    %v1483 = vpack.c.b16 %v1439, %v1435
    %v1484 = vpack.c.b16 %v1440, %v1436
    %v1485 = vpack.c.b16 %v1441, %v1437
    %v1486 = vpack.c.b16 %v1442, %v1438
    %v1487 = vpack.c.b16 %v1447, %v1443
    %v1488 = vpack.c.b16 %v1448, %v1444
    %v1489 = vpack.c.b16 %v1449, %v1445
    %v1490 = vpack.c.b16 %v1450, %v1446
    %v1491 = vpack.c.b16 %v1455, %v1451
    %v1492 = vpack.c.b16 %v1456, %v1452
    %v1493 = vpack.c.b16 %v1457, %v1453
    %v1494 = vpack.c.b16 %v1458, %v1454
    %v1495 = vpack.c.b16 %v1463, %v1459
    %v1496 = vpack.c.b16 %v1464, %v1460
    %v1497 = vpack.c.b16 %v1465, %v1461
    %v1498 = vpack.c.b16 %v1466, %v1462
    %1531 = vmatprep.subr.bf16.mxu0 %v1468
    %1532 = vmatpush1.bf16.msra.mxu0 %v1467
    %1533 = vmatprep.subr.bf16.mxu0 %v1472
    %1534 = vmatpush1.bf16.msra.mxu0 %v1471
    %1535 = vmatprep.subr.bf16.mxu0 %v1476
    %1536 = vmatpush1.bf16.msra.mxu0 %v1475
    %1537 = vmatprep.subr.bf16.mxu0 %v1480
    %1538 = vmatpush1.bf16.msra.mxu0 %v1479
    %1539 = vmatprep.subr.bf16.mxu0 %v1484
    %1540 = vmatpush1.bf16.msra.mxu0 %v1483
    %1541 = vmatprep.subr.bf16.mxu0 %v1488
    %1542 = vmatpush1.bf16.msra.mxu0 %v1487
    %1543 = vmatprep.subr.bf16.mxu0 %v1492
    %1544 = vmatpush1.bf16.msra.mxu0 %v1491
    %1545 = vmatprep.subr.bf16.mxu0 %v1496
    %1546 = vmatpush1.bf16.msra.mxu0 %v1495
    %1547 = vmatprep.subr.bf16.mxu0 0
    %1548 = vmatpush1.bf16.msra.mxu0 0
    %1549 = vmatprep.subr.bf16.mxu0 0
    %1550 = vmatpush1.bf16.msra.mxu0 0
    %1551 = vmatprep.subr.bf16.mxu0 0
    %1552 = vmatpush1.bf16.msra.mxu0 0
    %1553 = vmatprep.subr.bf16.mxu0 0
    %1554 = vmatpush1.bf16.msra.mxu0 0
    %1555 = vmatprep.subr.bf16.mxu0 0
    %1556 = vmatpush1.bf16.msra.mxu0 0
    %1557 = vmatprep.subr.bf16.mxu0 0
    %1558 = vmatpush1.bf16.msra.mxu0 0
    %1559 = vmatprep.subr.bf16.mxu0 0
    %1560 = vmatpush1.bf16.msra.mxu0 0
    %1561 = vmatprep.subr.bf16.mxu0 0
    %1562 = vmatpush1.bf16.msra.mxu0 0
    %1563 = vmatprep.mubr.bf16.mxu0 0
    %1564 = vmatmul.mubr.bf16.gmra.mrb[0].mxu0 %v1338
    %v1565 = vpop.f32.mrb[0].mxu0
    %v1566 = vadd.f32 0.0, %v1565
    %v1567 = vpop.f32.mrb[0].mxu0
    %v1568 = vadd.f32 0.0, %v1567
    %v1569 = vpop.f32.mrb[0].mxu0
    %v1570 = vpop.f32.mrb[0].mxu0
    %1571 = vdwg.mxu0
    %1572 = vmatprep.subr.bf16.mxu0 %v1470
    %1573 = vmatpush1.bf16.msra.mxu0 %v1469
    %1574 = vmatprep.subr.bf16.mxu0 %v1474
    %1575 = vmatpush1.bf16.msra.mxu0 %v1473
    %1576 = vmatprep.subr.bf16.mxu0 %v1478
    %1577 = vmatpush1.bf16.msra.mxu0 %v1477
    %1578 = vmatprep.subr.bf16.mxu0 %v1482
    %1579 = vmatpush1.bf16.msra.mxu0 %v1481
    %1580 = vmatprep.subr.bf16.mxu0 %v1486
    %1581 = vmatpush1.bf16.msra.mxu0 %v1485
    %1582 = vmatprep.subr.bf16.mxu0 %v1490
    %1583 = vmatpush1.bf16.msra.mxu0 %v1489
    %1584 = vmatprep.subr.bf16.mxu0 %v1494
    %1585 = vmatpush1.bf16.msra.mxu0 %v1493
    %1586 = vmatprep.subr.bf16.mxu0 %v1498
    %1587 = vmatpush1.bf16.msra.mxu0 %v1497
    %1588 = vmatprep.subr.bf16.mxu0 0
    %1589 = vmatpush1.bf16.msra.mxu0 0
    %1590 = vmatprep.subr.bf16.mxu0 0
    %1591 = vmatpush1.bf16.msra.mxu0 0
    %1592 = vmatprep.subr.bf16.mxu0 0
    %1593 = vmatpush1.bf16.msra.mxu0 0
    %1594 = vmatprep.subr.bf16.mxu0 0
    %1595 = vmatpush1.bf16.msra.mxu0 0
    %1596 = vmatprep.subr.bf16.mxu0 0
    %1597 = vmatpush1.bf16.msra.mxu0 0
    %1598 = vmatprep.subr.bf16.mxu0 0
    %1599 = vmatpush1.bf16.msra.mxu0 0
    %1600 = vmatprep.subr.bf16.mxu0 0
    %1601 = vmatpush1.bf16.msra.mxu0 0
    %1602 = vmatprep.subr.bf16.mxu0 0
    %1603 = vmatpush1.bf16.msra.mxu0 0
    %1604 = vmatprep.mubr.bf16.mxu0 0
    %1605 = vmatmul.mubr.bf16.gmra.mrb[0].mxu0 %v1338
    %v1606 = vpop.f32.mrb[0].mxu0
    %v1607 = vadd.f32 0.0, %v1606
    %v1608 = vpop.f32.mrb[0].mxu0
    %v1609 = vadd.f32 0.0, %v1608
    %v1610 = vpop.f32.mrb[0].mxu0
    %v1611 = vpop.f32.mrb[0].mxu0
    %1612 = vdwg.mxu0
    %v1613 = vadd.f32 %v1333, %v1566
    %v1614 = vadd.f32 %v1334, %v1568
    %v1615 = vadd.f32 %v1335, %v1607
    %v1616 = vadd.f32 %v1336, %v1609
    %v1617 = vxor.u32 %v1613, 2147483648
    %v1618 = vmul.f32 %v1617, 1.442695
    %v1619 = vpow.pop %v1618
    %v1620 = vadd.f32 %v1619, 1.0
    %v1621 = vrcp.pop %v1620
    %v1622 = vmul.f32 1.0, %v1621
    %v1623 = vxor.u32 %v1614, 2147483648
    %v1624 = vmul.f32 %v1623, 1.442695
    %v1625 = vpow.pop %v1624
    %v1626 = vadd.f32 %v1625, 1.0
    %v1627 = vrcp.pop %v1626
    %v1628 = vmul.f32 1.0, %v1627
    %v1629 = vtanh.pop %v1615
    %v1630 = vxor.u32 %v1616, 2147483648
    %v1631 = vmul.f32 %v1630, 1.442695
    %v1632 = vpow.pop %v1631
    %v1633 = vadd.f32 %v1632, 1.0
    %v1634 = vrcp.pop %v1633
    %v1635 = vmul.f32 1.0, %v1634
    %v1636 = vld [vmem:[#allocation3] sm:$0xff]
    %v1637 = vmul.f32 %v1628, %v1636
    %v1638 = vmul.f32 %v1622, %v1629
    %v1639 = vadd.f32 %v1637, %v1638
    %v1640 = vtanh.pop %v1639
    %v1641 = vmul.f32 %v1635, %v1640
    %1642 = vst [vmem:[#allocation3] sm:$0xff] %v1639
    %1643 = vst [vmem:[#allocation2] sm:$0xff] %v1641
    %s1644 = scalar_lea.vmem [#allocation4], 32
    %1645 = vst [vmem:[%s1644] sm:$0xff] %v1641
    %s1646 = scalar_lea.vmem [#allocation5], 160
    %v1647 = vld [vmem:[%s1646] sm:$0xff]
    %v1648 = vld [vmem:[%s1646 + $0x8] sm:$0xff]
    %v1649 = vld [vmem:[%s1646 + $0x10] sm:$0xff]
    %v1650 = vld [vmem:[%s1646 + $0x18] sm:$0xff]
    %v1651 = vld [vmem:[#allocation2] sm:$0xff]
    %v1652 = vpack.c.bf16 %v1651, %v1651
    %v1653 = vld [vmem:[#allocation8] sm:$0xff]
    %v1654 = vld [vmem:[#allocation8 + $0x8] sm:$0xff]
    %v1655 = vld [vmem:[#allocation8 + $0x10] sm:$0xff]
    %v1656 = vld [vmem:[#allocation8 + $0x18] sm:$0xff]
    %v1657 = vld [vmem:[#allocation8 + $0x20] sm:$0xff]
    %v1658 = vld [vmem:[#allocation8 + $0x28] sm:$0xff]
    %v1659 = vld [vmem:[#allocation8 + $0x30] sm:$0xff]
    %v1660 = vld [vmem:[#allocation8 + $0x38] sm:$0xff]
    %v1661 = vld [vmem:[#allocation8 + $0x40] sm:$0xff]
    %v1662 = vld [vmem:[#allocation8 + $0x48] sm:$0xff]
    %v1663 = vld [vmem:[#allocation8 + $0x50] sm:$0xff]
    %v1664 = vld [vmem:[#allocation8 + $0x58] sm:$0xff]
    %v1665 = vld [vmem:[#allocation8 + $0x60] sm:$0xff]
    %v1666 = vld [vmem:[#allocation8 + $0x68] sm:$0xff]
    %v1667 = vld [vmem:[#allocation8 + $0x70] sm:$0xff]
    %v1668 = vld [vmem:[#allocation8 + $0x78] sm:$0xff]
    %v1669 = vld [vmem:[#allocation8 + $0x80] sm:$0xff]
    %v1670 = vld [vmem:[#allocation8 + $0x88] sm:$0xff]
    %v1671 = vld [vmem:[#allocation8 + $0x90] sm:$0xff]
    %v1672 = vld [vmem:[#allocation8 + $0x98] sm:$0xff]
    %v1673 = vld [vmem:[#allocation8 + $0xa0] sm:$0xff]
    %v1674 = vld [vmem:[#allocation8 + $0xa8] sm:$0xff]
    %v1675 = vld [vmem:[#allocation8 + $0xb0] sm:$0xff]
    %v1676 = vld [vmem:[#allocation8 + $0xb8] sm:$0xff]
    %v1677 = vld [vmem:[#allocation8 + $0xc0] sm:$0xff]
    %v1678 = vld [vmem:[#allocation8 + $0xc8] sm:$0xff]
    %v1679 = vld [vmem:[#allocation8 + $0xd0] sm:$0xff]
    %v1680 = vld [vmem:[#allocation8 + $0xd8] sm:$0xff]
    %v1681 = vld [vmem:[#allocation8 + $0xe0] sm:$0xff]
    %v1682 = vld [vmem:[#allocation8 + $0xe8] sm:$0xff]
    %v1683 = vld [vmem:[#allocation8 + $0xf0] sm:$0xff]
    %v1684 = vld [vmem:[#allocation8 + $0xf8] sm:$0xff]
    %v1717 = vunpack.c.l.b16 %v1653
    %v1718 = vunpack.c.h.b16 %v1653
    %v1719 = vunpack.c.l.b16 %v1654
    %v1720 = vunpack.c.h.b16 %v1654
    %v1721 = vunpack.c.l.b16 %v1655
    %v1722 = vunpack.c.h.b16 %v1655
    %v1723 = vunpack.c.l.b16 %v1656
    %v1724 = vunpack.c.h.b16 %v1656
    %v1725 = vunpack.c.l.b16 %v1657
    %v1726 = vunpack.c.h.b16 %v1657
    %v1727 = vunpack.c.l.b16 %v1658
    %v1728 = vunpack.c.h.b16 %v1658
    %v1729 = vunpack.c.l.b16 %v1659
    %v1730 = vunpack.c.h.b16 %v1659
    %v1731 = vunpack.c.l.b16 %v1660
    %v1732 = vunpack.c.h.b16 %v1660
    %v1733 = vunpack.c.l.b16 %v1661
    %v1734 = vunpack.c.h.b16 %v1661
    %v1735 = vunpack.c.l.b16 %v1662
    %v1736 = vunpack.c.h.b16 %v1662
    %v1737 = vunpack.c.l.b16 %v1663
    %v1738 = vunpack.c.h.b16 %v1663
    %v1739 = vunpack.c.l.b16 %v1664
    %v1740 = vunpack.c.h.b16 %v1664
    %v1741 = vunpack.c.l.b16 %v1665
    %v1742 = vunpack.c.h.b16 %v1665
    %v1743 = vunpack.c.l.b16 %v1666
    %v1744 = vunpack.c.h.b16 %v1666
    %v1745 = vunpack.c.l.b16 %v1667
    %v1746 = vunpack.c.h.b16 %v1667
    %v1747 = vunpack.c.l.b16 %v1668
    %v1748 = vunpack.c.h.b16 %v1668
    %v1749 = vunpack.c.l.b16 %v1669
    %v1750 = vunpack.c.h.b16 %v1669
    %v1751 = vunpack.c.l.b16 %v1670
    %v1752 = vunpack.c.h.b16 %v1670
    %v1753 = vunpack.c.l.b16 %v1671
    %v1754 = vunpack.c.h.b16 %v1671
    %v1755 = vunpack.c.l.b16 %v1672
    %v1756 = vunpack.c.h.b16 %v1672
    %v1757 = vunpack.c.l.b16 %v1673
    %v1758 = vunpack.c.h.b16 %v1673
    %v1759 = vunpack.c.l.b16 %v1674
    %v1760 = vunpack.c.h.b16 %v1674
    %v1761 = vunpack.c.l.b16 %v1675
    %v1762 = vunpack.c.h.b16 %v1675
    %v1763 = vunpack.c.l.b16 %v1676
    %v1764 = vunpack.c.h.b16 %v1676
    %v1765 = vunpack.c.l.b16 %v1677
    %v1766 = vunpack.c.h.b16 %v1677
    %v1767 = vunpack.c.l.b16 %v1678
    %v1768 = vunpack.c.h.b16 %v1678
    %v1769 = vunpack.c.l.b16 %v1679
    %v1770 = vunpack.c.h.b16 %v1679
    %v1771 = vunpack.c.l.b16 %v1680
    %v1772 = vunpack.c.h.b16 %v1680
    %v1773 = vunpack.c.l.b16 %v1681
    %v1774 = vunpack.c.h.b16 %v1681
    %v1775 = vunpack.c.l.b16 %v1682
    %v1776 = vunpack.c.h.b16 %v1682
    %v1777 = vunpack.c.l.b16 %v1683
    %v1778 = vunpack.c.h.b16 %v1683
    %v1779 = vunpack.c.l.b16 %v1684
    %v1780 = vunpack.c.h.b16 %v1684
    %v1781 = vpack.c.b16 %v1721, %v1717
    %v1782 = vpack.c.b16 %v1722, %v1718
    %v1783 = vpack.c.b16 %v1723, %v1719
    %v1784 = vpack.c.b16 %v1724, %v1720
    %v1785 = vpack.c.b16 %v1729, %v1725
    %v1786 = vpack.c.b16 %v1730, %v1726
    %v1787 = vpack.c.b16 %v1731, %v1727
    %v1788 = vpack.c.b16 %v1732, %v1728
    %v1789 = vpack.c.b16 %v1737, %v1733
    %v1790 = vpack.c.b16 %v1738, %v1734
    %v1791 = vpack.c.b16 %v1739, %v1735
    %v1792 = vpack.c.b16 %v1740, %v1736
    %v1793 = vpack.c.b16 %v1745, %v1741
    %v1794 = vpack.c.b16 %v1746, %v1742
    %v1795 = vpack.c.b16 %v1747, %v1743
    %v1796 = vpack.c.b16 %v1748, %v1744
    %v1797 = vpack.c.b16 %v1753, %v1749
    %v1798 = vpack.c.b16 %v1754, %v1750
    %v1799 = vpack.c.b16 %v1755, %v1751
    %v1800 = vpack.c.b16 %v1756, %v1752
    %v1801 = vpack.c.b16 %v1761, %v1757
    %v1802 = vpack.c.b16 %v1762, %v1758
    %v1803 = vpack.c.b16 %v1763, %v1759
    %v1804 = vpack.c.b16 %v1764, %v1760
    %v1805 = vpack.c.b16 %v1769, %v1765
    %v1806 = vpack.c.b16 %v1770, %v1766
    %v1807 = vpack.c.b16 %v1771, %v1767
    %v1808 = vpack.c.b16 %v1772, %v1768
    %v1809 = vpack.c.b16 %v1777, %v1773
    %v1810 = vpack.c.b16 %v1778, %v1774
    %v1811 = vpack.c.b16 %v1779, %v1775
    %v1812 = vpack.c.b16 %v1780, %v1776
    %1845 = vmatprep.subr.bf16.mxu0 %v1782
    %1846 = vmatpush1.bf16.msra.mxu0 %v1781
    %1847 = vmatprep.subr.bf16.mxu0 %v1786
    %1848 = vmatpush1.bf16.msra.mxu0 %v1785
    %1849 = vmatprep.subr.bf16.mxu0 %v1790
    %1850 = vmatpush1.bf16.msra.mxu0 %v1789
    %1851 = vmatprep.subr.bf16.mxu0 %v1794
    %1852 = vmatpush1.bf16.msra.mxu0 %v1793
    %1853 = vmatprep.subr.bf16.mxu0 %v1798
    %1854 = vmatpush1.bf16.msra.mxu0 %v1797
    %1855 = vmatprep.subr.bf16.mxu0 %v1802
    %1856 = vmatpush1.bf16.msra.mxu0 %v1801
    %1857 = vmatprep.subr.bf16.mxu0 %v1806
    %1858 = vmatpush1.bf16.msra.mxu0 %v1805
    %1859 = vmatprep.subr.bf16.mxu0 %v1810
    %1860 = vmatpush1.bf16.msra.mxu0 %v1809
    %1861 = vmatprep.subr.bf16.mxu0 0
    %1862 = vmatpush1.bf16.msra.mxu0 0
    %1863 = vmatprep.subr.bf16.mxu0 0
    %1864 = vmatpush1.bf16.msra.mxu0 0
    %1865 = vmatprep.subr.bf16.mxu0 0
    %1866 = vmatpush1.bf16.msra.mxu0 0
    %1867 = vmatprep.subr.bf16.mxu0 0
    %1868 = vmatpush1.bf16.msra.mxu0 0
    %1869 = vmatprep.subr.bf16.mxu0 0
    %1870 = vmatpush1.bf16.msra.mxu0 0
    %1871 = vmatprep.subr.bf16.mxu0 0
    %1872 = vmatpush1.bf16.msra.mxu0 0
    %1873 = vmatprep.subr.bf16.mxu0 0
    %1874 = vmatpush1.bf16.msra.mxu0 0
    %1875 = vmatprep.subr.bf16.mxu0 0
    %1876 = vmatpush1.bf16.msra.mxu0 0
    %1877 = vmatprep.mubr.bf16.mxu0 0
    %1878 = vmatmul.mubr.bf16.gmra.mrb[0].mxu0 %v1652
    %v1879 = vpop.f32.mrb[0].mxu0
    %v1880 = vadd.f32 0.0, %v1879
    %v1881 = vpop.f32.mrb[0].mxu0
    %v1882 = vadd.f32 0.0, %v1881
    %v1883 = vpop.f32.mrb[0].mxu0
    %v1884 = vpop.f32.mrb[0].mxu0
    %1885 = vdwg.mxu0
    %1886 = vmatprep.subr.bf16.mxu0 %v1784
    %1887 = vmatpush1.bf16.msra.mxu0 %v1783
    %1888 = vmatprep.subr.bf16.mxu0 %v1788
    %1889 = vmatpush1.bf16.msra.mxu0 %v1787
    %1890 = vmatprep.subr.bf16.mxu0 %v1792
    %1891 = vmatpush1.bf16.msra.mxu0 %v1791
    %1892 = vmatprep.subr.bf16.mxu0 %v1796
    %1893 = vmatpush1.bf16.msra.mxu0 %v1795
    %1894 = vmatprep.subr.bf16.mxu0 %v1800
    %1895 = vmatpush1.bf16.msra.mxu0 %v1799
    %1896 = vmatprep.subr.bf16.mxu0 %v1804
    %1897 = vmatpush1.bf16.msra.mxu0 %v1803
    %1898 = vmatprep.subr.bf16.mxu0 %v1808
    %1899 = vmatpush1.bf16.msra.mxu0 %v1807
    %1900 = vmatprep.subr.bf16.mxu0 %v1812
    %1901 = vmatpush1.bf16.msra.mxu0 %v1811
    %1902 = vmatprep.subr.bf16.mxu0 0
    %1903 = vmatpush1.bf16.msra.mxu0 0
    %1904 = vmatprep.subr.bf16.mxu0 0
    %1905 = vmatpush1.bf16.msra.mxu0 0
    %1906 = vmatprep.subr.bf16.mxu0 0
    %1907 = vmatpush1.bf16.msra.mxu0 0
    %1908 = vmatprep.subr.bf16.mxu0 0
    %1909 = vmatpush1.bf16.msra.mxu0 0
    %1910 = vmatprep.subr.bf16.mxu0 0
    %1911 = vmatpush1.bf16.msra.mxu0 0
    %1912 = vmatprep.subr.bf16.mxu0 0
    %1913 = vmatpush1.bf16.msra.mxu0 0
    %1914 = vmatprep.subr.bf16.mxu0 0
    %1915 = vmatpush1.bf16.msra.mxu0 0
    %1916 = vmatprep.subr.bf16.mxu0 0
    %1917 = vmatpush1.bf16.msra.mxu0 0
    %1918 = vmatprep.mubr.bf16.mxu0 0
    %1919 = vmatmul.mubr.bf16.gmra.mrb[0].mxu0 %v1652
    %v1920 = vpop.f32.mrb[0].mxu0
    %v1921 = vadd.f32 0.0, %v1920
    %v1922 = vpop.f32.mrb[0].mxu0
    %v1923 = vadd.f32 0.0, %v1922
    %v1924 = vpop.f32.mrb[0].mxu0
    %v1925 = vpop.f32.mrb[0].mxu0
    %1926 = vdwg.mxu0
    %v1927 = vadd.f32 %v1647, %v1880
    %v1928 = vadd.f32 %v1648, %v1882
    %v1929 = vadd.f32 %v1649, %v1921
    %v1930 = vadd.f32 %v1650, %v1923
    %v1931 = vxor.u32 %v1927, 2147483648
    %v1932 = vmul.f32 %v1931, 1.442695
    %v1933 = vpow.pop %v1932
    %v1934 = vadd.f32 %v1933, 1.0
    %v1935 = vrcp.pop %v1934
    %v1936 = vmul.f32 1.0, %v1935
    %v1937 = vxor.u32 %v1928, 2147483648
    %v1938 = vmul.f32 %v1937, 1.442695
    %v1939 = vpow.pop %v1938
    %v1940 = vadd.f32 %v1939, 1.0
    %v1941 = vrcp.pop %v1940
    %v1942 = vmul.f32 1.0, %v1941
    %v1943 = vtanh.pop %v1929
    %v1944 = vxor.u32 %v1930, 2147483648
    %v1945 = vmul.f32 %v1944, 1.442695
    %v1946 = vpow.pop %v1945
    %v1947 = vadd.f32 %v1946, 1.0
    %v1948 = vrcp.pop %v1947
    %v1949 = vmul.f32 1.0, %v1948
    %v1950 = vld [vmem:[#allocation3] sm:$0xff]
    %v1951 = vmul.f32 %v1942, %v1950
    %v1952 = vmul.f32 %v1936, %v1943
    %v1953 = vadd.f32 %v1951, %v1952
    %v1954 = vtanh.pop %v1953
    %v1955 = vmul.f32 %v1949, %v1954
    %1956 = vst [vmem:[#allocation3] sm:$0xff] %v1953
    %1957 = vst [vmem:[#allocation2] sm:$0xff] %v1955
    %s1958 = scalar_lea.vmem [#allocation4], 40
    %1959 = vst [vmem:[%s1958] sm:$0xff] %v1955
    %s1960 = scalar_lea.vmem [#allocation5], 192
    %v1961 = vld [vmem:[%s1960] sm:$0xff]
    %v1962 = vld [vmem:[%s1960 + $0x8] sm:$0xff]
    %v1963 = vld [vmem:[%s1960 + $0x10] sm:$0xff]
    %v1964 = vld [vmem:[%s1960 + $0x18] sm:$0xff]
    %v1965 = vld [vmem:[#allocation2] sm:$0xff]
    %v1966 = vpack.c.bf16 %v1965, %v1965
    %v1967 = vld [vmem:[#allocation8] sm:$0xff]
    %v1968 = vld [vmem:[#allocation8 + $0x8] sm:$0xff]
    %v1969 = vld [vmem:[#allocation8 + $0x10] sm:$0xff]
    %v1970 = vld [vmem:[#allocation8 + $0x18] sm:$0xff]
    %v1971 = vld [vmem:[#allocation8 + $0x20] sm:$0xff]
    %v1972 = vld [vmem:[#allocation8 + $0x28] sm:$0xff]
    %v1973 = vld [vmem:[#allocation8 + $0x30] sm:$0xff]
    %v1974 = vld [vmem:[#allocation8 + $0x38] sm:$0xff]
    %v1975 = vld [vmem:[#allocation8 + $0x40] sm:$0xff]
    %v1976 = vld [vmem:[#allocation8 + $0x48] sm:$0xff]
    %v1977 = vld [vmem:[#allocation8 + $0x50] sm:$0xff]
    %v1978 = vld [vmem:[#allocation8 + $0x58] sm:$0xff]
    %v1979 = vld [vmem:[#allocation8 + $0x60] sm:$0xff]
    %v1980 = vld [vmem:[#allocation8 + $0x68] sm:$0xff]
    %v1981 = vld [vmem:[#allocation8 + $0x70] sm:$0xff]
    %v1982 = vld [vmem:[#allocation8 + $0x78] sm:$0xff]
    %v1983 = vld [vmem:[#allocation8 + $0x80] sm:$0xff]
    %v1984 = vld [vmem:[#allocation8 + $0x88] sm:$0xff]
    %v1985 = vld [vmem:[#allocation8 + $0x90] sm:$0xff]
    %v1986 = vld [vmem:[#allocation8 + $0x98] sm:$0xff]
    %v1987 = vld [vmem:[#allocation8 + $0xa0] sm:$0xff]
    %v1988 = vld [vmem:[#allocation8 + $0xa8] sm:$0xff]
    %v1989 = vld [vmem:[#allocation8 + $0xb0] sm:$0xff]
    %v1990 = vld [vmem:[#allocation8 + $0xb8] sm:$0xff]
    %v1991 = vld [vmem:[#allocation8 + $0xc0] sm:$0xff]
    %v1992 = vld [vmem:[#allocation8 + $0xc8] sm:$0xff]
    %v1993 = vld [vmem:[#allocation8 + $0xd0] sm:$0xff]
    %v1994 = vld [vmem:[#allocation8 + $0xd8] sm:$0xff]
    %v1995 = vld [vmem:[#allocation8 + $0xe0] sm:$0xff]
    %v1996 = vld [vmem:[#allocation8 + $0xe8] sm:$0xff]
    %v1997 = vld [vmem:[#allocation8 + $0xf0] sm:$0xff]
    %v1998 = vld [vmem:[#allocation8 + $0xf8] sm:$0xff]
    %v2031 = vunpack.c.l.b16 %v1967
    %v2032 = vunpack.c.h.b16 %v1967
    %v2033 = vunpack.c.l.b16 %v1968
    %v2034 = vunpack.c.h.b16 %v1968
    %v2035 = vunpack.c.l.b16 %v1969
    %v2036 = vunpack.c.h.b16 %v1969
    %v2037 = vunpack.c.l.b16 %v1970
    %v2038 = vunpack.c.h.b16 %v1970
    %v2039 = vunpack.c.l.b16 %v1971
    %v2040 = vunpack.c.h.b16 %v1971
    %v2041 = vunpack.c.l.b16 %v1972
    %v2042 = vunpack.c.h.b16 %v1972
    %v2043 = vunpack.c.l.b16 %v1973
    %v2044 = vunpack.c.h.b16 %v1973
    %v2045 = vunpack.c.l.b16 %v1974
    %v2046 = vunpack.c.h.b16 %v1974
    %v2047 = vunpack.c.l.b16 %v1975
    %v2048 = vunpack.c.h.b16 %v1975
    %v2049 = vunpack.c.l.b16 %v1976
    %v2050 = vunpack.c.h.b16 %v1976
    %v2051 = vunpack.c.l.b16 %v1977
    %v2052 = vunpack.c.h.b16 %v1977
    %v2053 = vunpack.c.l.b16 %v1978
    %v2054 = vunpack.c.h.b16 %v1978
    %v2055 = vunpack.c.l.b16 %v1979
    %v2056 = vunpack.c.h.b16 %v1979
    %v2057 = vunpack.c.l.b16 %v1980
    %v2058 = vunpack.c.h.b16 %v1980
    %v2059 = vunpack.c.l.b16 %v1981
    %v2060 = vunpack.c.h.b16 %v1981
    %v2061 = vunpack.c.l.b16 %v1982
    %v2062 = vunpack.c.h.b16 %v1982
    %v2063 = vunpack.c.l.b16 %v1983
    %v2064 = vunpack.c.h.b16 %v1983
    %v2065 = vunpack.c.l.b16 %v1984
    %v2066 = vunpack.c.h.b16 %v1984
    %v2067 = vunpack.c.l.b16 %v1985
    %v2068 = vunpack.c.h.b16 %v1985
    %v2069 = vunpack.c.l.b16 %v1986
    %v2070 = vunpack.c.h.b16 %v1986
    %v2071 = vunpack.c.l.b16 %v1987
    %v2072 = vunpack.c.h.b16 %v1987
    %v2073 = vunpack.c.l.b16 %v1988
    %v2074 = vunpack.c.h.b16 %v1988
    %v2075 = vunpack.c.l.b16 %v1989
    %v2076 = vunpack.c.h.b16 %v1989
    %v2077 = vunpack.c.l.b16 %v1990
    %v2078 = vunpack.c.h.b16 %v1990
    %v2079 = vunpack.c.l.b16 %v1991
    %v2080 = vunpack.c.h.b16 %v1991
    %v2081 = vunpack.c.l.b16 %v1992
    %v2082 = vunpack.c.h.b16 %v1992
    %v2083 = vunpack.c.l.b16 %v1993
    %v2084 = vunpack.c.h.b16 %v1993
    %v2085 = vunpack.c.l.b16 %v1994
    %v2086 = vunpack.c.h.b16 %v1994
    %v2087 = vunpack.c.l.b16 %v1995
    %v2088 = vunpack.c.h.b16 %v1995
    %v2089 = vunpack.c.l.b16 %v1996
    %v2090 = vunpack.c.h.b16 %v1996
    %v2091 = vunpack.c.l.b16 %v1997
    %v2092 = vunpack.c.h.b16 %v1997
    %v2093 = vunpack.c.l.b16 %v1998
    %v2094 = vunpack.c.h.b16 %v1998
    %v2095 = vpack.c.b16 %v2035, %v2031
    %v2096 = vpack.c.b16 %v2036, %v2032
    %v2097 = vpack.c.b16 %v2037, %v2033
    %v2098 = vpack.c.b16 %v2038, %v2034
    %v2099 = vpack.c.b16 %v2043, %v2039
    %v2100 = vpack.c.b16 %v2044, %v2040
    %v2101 = vpack.c.b16 %v2045, %v2041
    %v2102 = vpack.c.b16 %v2046, %v2042
    %v2103 = vpack.c.b16 %v2051, %v2047
    %v2104 = vpack.c.b16 %v2052, %v2048
    %v2105 = vpack.c.b16 %v2053, %v2049
    %v2106 = vpack.c.b16 %v2054, %v2050
    %v2107 = vpack.c.b16 %v2059, %v2055
    %v2108 = vpack.c.b16 %v2060, %v2056
    %v2109 = vpack.c.b16 %v2061, %v2057
    %v2110 = vpack.c.b16 %v2062, %v2058
    %v2111 = vpack.c.b16 %v2067, %v2063
    %v2112 = vpack.c.b16 %v2068, %v2064
    %v2113 = vpack.c.b16 %v2069, %v2065
    %v2114 = vpack.c.b16 %v2070, %v2066
    %v2115 = vpack.c.b16 %v2075, %v2071
    %v2116 = vpack.c.b16 %v2076, %v2072
    %v2117 = vpack.c.b16 %v2077, %v2073
    %v2118 = vpack.c.b16 %v2078, %v2074
    %v2119 = vpack.c.b16 %v2083, %v2079
    %v2120 = vpack.c.b16 %v2084, %v2080
    %v2121 = vpack.c.b16 %v2085, %v2081
    %v2122 = vpack.c.b16 %v2086, %v2082
    %v2123 = vpack.c.b16 %v2091, %v2087
    %v2124 = vpack.c.b16 %v2092, %v2088
    %v2125 = vpack.c.b16 %v2093, %v2089
    %v2126 = vpack.c.b16 %v2094, %v2090
    %2159 = vmatprep.subr.bf16.mxu0 %v2096
    %2160 = vmatpush1.bf16.msra.mxu0 %v2095
    %2161 = vmatprep.subr.bf16.mxu0 %v2100
    %2162 = vmatpush1.bf16.msra.mxu0 %v2099
    %2163 = vmatprep.subr.bf16.mxu0 %v2104
    %2164 = vmatpush1.bf16.msra.mxu0 %v2103
    %2165 = vmatprep.subr.bf16.mxu0 %v2108
    %2166 = vmatpush1.bf16.msra.mxu0 %v2107
    %2167 = vmatprep.subr.bf16.mxu0 %v2112
    %2168 = vmatpush1.bf16.msra.mxu0 %v2111
    %2169 = vmatprep.subr.bf16.mxu0 %v2116
    %2170 = vmatpush1.bf16.msra.mxu0 %v2115
    %2171 = vmatprep.subr.bf16.mxu0 %v2120
    %2172 = vmatpush1.bf16.msra.mxu0 %v2119
    %2173 = vmatprep.subr.bf16.mxu0 %v2124
    %2174 = vmatpush1.bf16.msra.mxu0 %v2123
    %2175 = vmatprep.subr.bf16.mxu0 0
    %2176 = vmatpush1.bf16.msra.mxu0 0
    %2177 = vmatprep.subr.bf16.mxu0 0
    %2178 = vmatpush1.bf16.msra.mxu0 0
    %2179 = vmatprep.subr.bf16.mxu0 0
    %2180 = vmatpush1.bf16.msra.mxu0 0
    %2181 = vmatprep.subr.bf16.mxu0 0
    %2182 = vmatpush1.bf16.msra.mxu0 0
    %2183 = vmatprep.subr.bf16.mxu0 0
    %2184 = vmatpush1.bf16.msra.mxu0 0
    %2185 = vmatprep.subr.bf16.mxu0 0
    %2186 = vmatpush1.bf16.msra.mxu0 0
    %2187 = vmatprep.subr.bf16.mxu0 0
    %2188 = vmatpush1.bf16.msra.mxu0 0
    %2189 = vmatprep.subr.bf16.mxu0 0
    %2190 = vmatpush1.bf16.msra.mxu0 0
    %2191 = vmatprep.mubr.bf16.mxu0 0
    %2192 = vmatmul.mubr.bf16.gmra.mrb[0].mxu0 %v1966
    %v2193 = vpop.f32.mrb[0].mxu0
    %v2194 = vadd.f32 0.0, %v2193
    %v2195 = vpop.f32.mrb[0].mxu0
    %v2196 = vadd.f32 0.0, %v2195
    %v2197 = vpop.f32.mrb[0].mxu0
    %v2198 = vpop.f32.mrb[0].mxu0
    %2199 = vdwg.mxu0
    %2200 = vmatprep.subr.bf16.mxu0 %v2098
    %2201 = vmatpush1.bf16.msra.mxu0 %v2097
    %2202 = vmatprep.subr.bf16.mxu0 %v2102
    %2203 = vmatpush1.bf16.msra.mxu0 %v2101
    %2204 = vmatprep.subr.bf16.mxu0 %v2106
    %2205 = vmatpush1.bf16.msra.mxu0 %v2105
    %2206 = vmatprep.subr.bf16.mxu0 %v2110
    %2207 = vmatpush1.bf16.msra.mxu0 %v2109
    %2208 = vmatprep.subr.bf16.mxu0 %v2114
    %2209 = vmatpush1.bf16.msra.mxu0 %v2113
    %2210 = vmatprep.subr.bf16.mxu0 %v2118
    %2211 = vmatpush1.bf16.msra.mxu0 %v2117
    %2212 = vmatprep.subr.bf16.mxu0 %v2122
    %2213 = vmatpush1.bf16.msra.mxu0 %v2121
    %2214 = vmatprep.subr.bf16.mxu0 %v2126
    %2215 = vmatpush1.bf16.msra.mxu0 %v2125
    %2216 = vmatprep.subr.bf16.mxu0 0
    %2217 = vmatpush1.bf16.msra.mxu0 0
    %2218 = vmatprep.subr.bf16.mxu0 0
    %2219 = vmatpush1.bf16.msra.mxu0 0
    %2220 = vmatprep.subr.bf16.mxu0 0
    %2221 = vmatpush1.bf16.msra.mxu0 0
    %2222 = vmatprep.subr.bf16.mxu0 0
    %2223 = vmatpush1.bf16.msra.mxu0 0
    %2224 = vmatprep.subr.bf16.mxu0 0
    %2225 = vmatpush1.bf16.msra.mxu0 0
    %2226 = vmatprep.subr.bf16.mxu0 0
    %2227 = vmatpush1.bf16.msra.mxu0 0
    %2228 = vmatprep.subr.bf16.mxu0 0
    %2229 = vmatpush1.bf16.msra.mxu0 0
    %2230 = vmatprep.subr.bf16.mxu0 0
    %2231 = vmatpush1.bf16.msra.mxu0 0
    %2232 = vmatprep.mubr.bf16.mxu0 0
    %2233 = vmatmul.mubr.bf16.gmra.mrb[0].mxu0 %v1966
    %v2234 = vpop.f32.mrb[0].mxu0
    %v2235 = vadd.f32 0.0, %v2234
    %v2236 = vpop.f32.mrb[0].mxu0
    %v2237 = vadd.f32 0.0, %v2236
    %v2238 = vpop.f32.mrb[0].mxu0
    %v2239 = vpop.f32.mrb[0].mxu0
    %2240 = vdwg.mxu0
    %v2241 = vadd.f32 %v1961, %v2194
    %v2242 = vadd.f32 %v1962, %v2196
    %v2243 = vadd.f32 %v1963, %v2235
    %v2244 = vadd.f32 %v1964, %v2237
    %v2245 = vxor.u32 %v2241, 2147483648
    %v2246 = vmul.f32 %v2245, 1.442695
    %v2247 = vpow.pop %v2246
    %v2248 = vadd.f32 %v2247, 1.0
    %v2249 = vrcp.pop %v2248
    %v2250 = vmul.f32 1.0, %v2249
    %v2251 = vxor.u32 %v2242, 2147483648
    %v2252 = vmul.f32 %v2251, 1.442695
    %v2253 = vpow.pop %v2252
    %v2254 = vadd.f32 %v2253, 1.0
    %v2255 = vrcp.pop %v2254
    %v2256 = vmul.f32 1.0, %v2255
    %v2257 = vtanh.pop %v2243
    %v2258 = vxor.u32 %v2244, 2147483648
    %v2259 = vmul.f32 %v2258, 1.442695
    %v2260 = vpow.pop %v2259
    %v2261 = vadd.f32 %v2260, 1.0
    %v2262 = vrcp.pop %v2261
    %v2263 = vmul.f32 1.0, %v2262
    %v2264 = vld [vmem:[#allocation3] sm:$0xff]
    %v2265 = vmul.f32 %v2256, %v2264
    %v2266 = vmul.f32 %v2250, %v2257
    %v2267 = vadd.f32 %v2265, %v2266
    %v2268 = vtanh.pop %v2267
    %v2269 = vmul.f32 %v2263, %v2268
    %2270 = vst [vmem:[#allocation3] sm:$0xff] %v2267
    %2271 = vst [vmem:[#allocation2] sm:$0xff] %v2269
    %s2272 = scalar_lea.vmem [#allocation4], 48
    %2273 = vst [vmem:[%s2272] sm:$0xff] %v2269
    %s2274 = scalar_lea.vmem [#allocation5], 224
    %v2275 = vld [vmem:[%s2274] sm:$0xff]
    %v2276 = vld [vmem:[%s2274 + $0x8] sm:$0xff]
    %v2277 = vld [vmem:[%s2274 + $0x10] sm:$0xff]
    %v2278 = vld [vmem:[%s2274 + $0x18] sm:$0xff]
    %v2279 = vld [vmem:[#allocation2] sm:$0xff]
    %v2280 = vpack.c.bf16 %v2279, %v2279
    %v2281 = vld [vmem:[#allocation8] sm:$0xff]
    %v2282 = vld [vmem:[#allocation8 + $0x8] sm:$0xff]
    %v2283 = vld [vmem:[#allocation8 + $0x10] sm:$0xff]
    %v2284 = vld [vmem:[#allocation8 + $0x18] sm:$0xff]
    %v2285 = vld [vmem:[#allocation8 + $0x20] sm:$0xff]
    %v2286 = vld [vmem:[#allocation8 + $0x28] sm:$0xff]
    %v2287 = vld [vmem:[#allocation8 + $0x30] sm:$0xff]
    %v2288 = vld [vmem:[#allocation8 + $0x38] sm:$0xff]
    %v2289 = vld [vmem:[#allocation8 + $0x40] sm:$0xff]
    %v2290 = vld [vmem:[#allocation8 + $0x48] sm:$0xff]
    %v2291 = vld [vmem:[#allocation8 + $0x50] sm:$0xff]
    %v2292 = vld [vmem:[#allocation8 + $0x58] sm:$0xff]
    %v2293 = vld [vmem:[#allocation8 + $0x60] sm:$0xff]
    %v2294 = vld [vmem:[#allocation8 + $0x68] sm:$0xff]
    %v2295 = vld [vmem:[#allocation8 + $0x70] sm:$0xff]
    %v2296 = vld [vmem:[#allocation8 + $0x78] sm:$0xff]
    %v2297 = vld [vmem:[#allocation8 + $0x80] sm:$0xff]
    %v2298 = vld [vmem:[#allocation8 + $0x88] sm:$0xff]
    %v2299 = vld [vmem:[#allocation8 + $0x90] sm:$0xff]
    %v2300 = vld [vmem:[#allocation8 + $0x98] sm:$0xff]
    %v2301 = vld [vmem:[#allocation8 + $0xa0] sm:$0xff]
    %v2302 = vld [vmem:[#allocation8 + $0xa8] sm:$0xff]
    %v2303 = vld [vmem:[#allocation8 + $0xb0] sm:$0xff]
    %v2304 = vld [vmem:[#allocation8 + $0xb8] sm:$0xff]
    %v2305 = vld [vmem:[#allocation8 + $0xc0] sm:$0xff]
    %v2306 = vld [vmem:[#allocation8 + $0xc8] sm:$0xff]
    %v2307 = vld [vmem:[#allocation8 + $0xd0] sm:$0xff]
    %v2308 = vld [vmem:[#allocation8 + $0xd8] sm:$0xff]
    %v2309 = vld [vmem:[#allocation8 + $0xe0] sm:$0xff]
    %v2310 = vld [vmem:[#allocation8 + $0xe8] sm:$0xff]
    %v2311 = vld [vmem:[#allocation8 + $0xf0] sm:$0xff]
    %v2312 = vld [vmem:[#allocation8 + $0xf8] sm:$0xff]
    %v2345 = vunpack.c.l.b16 %v2281
    %v2346 = vunpack.c.h.b16 %v2281
    %v2347 = vunpack.c.l.b16 %v2282
    %v2348 = vunpack.c.h.b16 %v2282
    %v2349 = vunpack.c.l.b16 %v2283
    %v2350 = vunpack.c.h.b16 %v2283
    %v2351 = vunpack.c.l.b16 %v2284
    %v2352 = vunpack.c.h.b16 %v2284
    %v2353 = vunpack.c.l.b16 %v2285
    %v2354 = vunpack.c.h.b16 %v2285
    %v2355 = vunpack.c.l.b16 %v2286
    %v2356 = vunpack.c.h.b16 %v2286
    %v2357 = vunpack.c.l.b16 %v2287
    %v2358 = vunpack.c.h.b16 %v2287
    %v2359 = vunpack.c.l.b16 %v2288
    %v2360 = vunpack.c.h.b16 %v2288
    %v2361 = vunpack.c.l.b16 %v2289
    %v2362 = vunpack.c.h.b16 %v2289
    %v2363 = vunpack.c.l.b16 %v2290
    %v2364 = vunpack.c.h.b16 %v2290
    %v2365 = vunpack.c.l.b16 %v2291
    %v2366 = vunpack.c.h.b16 %v2291
    %v2367 = vunpack.c.l.b16 %v2292
    %v2368 = vunpack.c.h.b16 %v2292
    %v2369 = vunpack.c.l.b16 %v2293
    %v2370 = vunpack.c.h.b16 %v2293
    %v2371 = vunpack.c.l.b16 %v2294
    %v2372 = vunpack.c.h.b16 %v2294
    %v2373 = vunpack.c.l.b16 %v2295
    %v2374 = vunpack.c.h.b16 %v2295
    %v2375 = vunpack.c.l.b16 %v2296
    %v2376 = vunpack.c.h.b16 %v2296
    %v2377 = vunpack.c.l.b16 %v2297
    %v2378 = vunpack.c.h.b16 %v2297
    %v2379 = vunpack.c.l.b16 %v2298
    %v2380 = vunpack.c.h.b16 %v2298
    %v2381 = vunpack.c.l.b16 %v2299
    %v2382 = vunpack.c.h.b16 %v2299
    %v2383 = vunpack.c.l.b16 %v2300
    %v2384 = vunpack.c.h.b16 %v2300
    %v2385 = vunpack.c.l.b16 %v2301
    %v2386 = vunpack.c.h.b16 %v2301
    %v2387 = vunpack.c.l.b16 %v2302
    %v2388 = vunpack.c.h.b16 %v2302
    %v2389 = vunpack.c.l.b16 %v2303
    %v2390 = vunpack.c.h.b16 %v2303
    %v2391 = vunpack.c.l.b16 %v2304
    %v2392 = vunpack.c.h.b16 %v2304
    %v2393 = vunpack.c.l.b16 %v2305
    %v2394 = vunpack.c.h.b16 %v2305
    %v2395 = vunpack.c.l.b16 %v2306
    %v2396 = vunpack.c.h.b16 %v2306
    %v2397 = vunpack.c.l.b16 %v2307
    %v2398 = vunpack.c.h.b16 %v2307
    %v2399 = vunpack.c.l.b16 %v2308
    %v2400 = vunpack.c.h.b16 %v2308
    %v2401 = vunpack.c.l.b16 %v2309
    %v2402 = vunpack.c.h.b16 %v2309
    %v2403 = vunpack.c.l.b16 %v2310
    %v2404 = vunpack.c.h.b16 %v2310
    %v2405 = vunpack.c.l.b16 %v2311
    %v2406 = vunpack.c.h.b16 %v2311
    %v2407 = vunpack.c.l.b16 %v2312
    %v2408 = vunpack.c.h.b16 %v2312
    %v2409 = vpack.c.b16 %v2349, %v2345
    %v2410 = vpack.c.b16 %v2350, %v2346
    %v2411 = vpack.c.b16 %v2351, %v2347
    %v2412 = vpack.c.b16 %v2352, %v2348
    %v2413 = vpack.c.b16 %v2357, %v2353
    %v2414 = vpack.c.b16 %v2358, %v2354
    %v2415 = vpack.c.b16 %v2359, %v2355
    %v2416 = vpack.c.b16 %v2360, %v2356
    %v2417 = vpack.c.b16 %v2365, %v2361
    %v2418 = vpack.c.b16 %v2366, %v2362
    %v2419 = vpack.c.b16 %v2367, %v2363
    %v2420 = vpack.c.b16 %v2368, %v2364
    %v2421 = vpack.c.b16 %v2373, %v2369
    %v2422 = vpack.c.b16 %v2374, %v2370
    %v2423 = vpack.c.b16 %v2375, %v2371
    %v2424 = vpack.c.b16 %v2376, %v2372
    %v2425 = vpack.c.b16 %v2381, %v2377
    %v2426 = vpack.c.b16 %v2382, %v2378
    %v2427 = vpack.c.b16 %v2383, %v2379
    %v2428 = vpack.c.b16 %v2384, %v2380
    %v2429 = vpack.c.b16 %v2389, %v2385
    %v2430 = vpack.c.b16 %v2390, %v2386
    %v2431 = vpack.c.b16 %v2391, %v2387
    %v2432 = vpack.c.b16 %v2392, %v2388
    %v2433 = vpack.c.b16 %v2397, %v2393
    %v2434 = vpack.c.b16 %v2398, %v2394
    %v2435 = vpack.c.b16 %v2399, %v2395
    %v2436 = vpack.c.b16 %v2400, %v2396
    %v2437 = vpack.c.b16 %v2405, %v2401
    %v2438 = vpack.c.b16 %v2406, %v2402
    %v2439 = vpack.c.b16 %v2407, %v2403
    %v2440 = vpack.c.b16 %v2408, %v2404
    %2473 = vmatprep.subr.bf16.mxu0 %v2410
    %2474 = vmatpush1.bf16.msra.mxu0 %v2409
    %2475 = vmatprep.subr.bf16.mxu0 %v2414
    %2476 = vmatpush1.bf16.msra.mxu0 %v2413
    %2477 = vmatprep.subr.bf16.mxu0 %v2418
    %2478 = vmatpush1.bf16.msra.mxu0 %v2417
    %2479 = vmatprep.subr.bf16.mxu0 %v2422
    %2480 = vmatpush1.bf16.msra.mxu0 %v2421
    %2481 = vmatprep.subr.bf16.mxu0 %v2426
    %2482 = vmatpush1.bf16.msra.mxu0 %v2425
    %2483 = vmatprep.subr.bf16.mxu0 %v2430
    %2484 = vmatpush1.bf16.msra.mxu0 %v2429
    %2485 = vmatprep.subr.bf16.mxu0 %v2434
    %2486 = vmatpush1.bf16.msra.mxu0 %v2433
    %2487 = vmatprep.subr.bf16.mxu0 %v2438
    %2488 = vmatpush1.bf16.msra.mxu0 %v2437
    %2489 = vmatprep.subr.bf16.mxu0 0
    %2490 = vmatpush1.bf16.msra.mxu0 0
    %2491 = vmatprep.subr.bf16.mxu0 0
    %2492 = vmatpush1.bf16.msra.mxu0 0
    %2493 = vmatprep.subr.bf16.mxu0 0
    %2494 = vmatpush1.bf16.msra.mxu0 0
    %2495 = vmatprep.subr.bf16.mxu0 0
    %2496 = vmatpush1.bf16.msra.mxu0 0
    %2497 = vmatprep.subr.bf16.mxu0 0
    %2498 = vmatpush1.bf16.msra.mxu0 0
    %2499 = vmatprep.subr.bf16.mxu0 0
    %2500 = vmatpush1.bf16.msra.mxu0 0
    %2501 = vmatprep.subr.bf16.mxu0 0
    %2502 = vmatpush1.bf16.msra.mxu0 0
    %2503 = vmatprep.subr.bf16.mxu0 0
    %2504 = vmatpush1.bf16.msra.mxu0 0
    %2505 = vmatprep.mubr.bf16.mxu0 0
    %2506 = vmatmul.mubr.bf16.gmra.mrb[0].mxu0 %v2280
    %v2507 = vpop.f32.mrb[0].mxu0
    %v2508 = vadd.f32 0.0, %v2507
    %v2509 = vpop.f32.mrb[0].mxu0
    %v2510 = vadd.f32 0.0, %v2509
    %v2511 = vpop.f32.mrb[0].mxu0
    %v2512 = vpop.f32.mrb[0].mxu0
    %2513 = vdwg.mxu0
    %2514 = vmatprep.subr.bf16.mxu0 %v2412
    %2515 = vmatpush1.bf16.msra.mxu0 %v2411
    %2516 = vmatprep.subr.bf16.mxu0 %v2416
    %2517 = vmatpush1.bf16.msra.mxu0 %v2415
    %2518 = vmatprep.subr.bf16.mxu0 %v2420
    %2519 = vmatpush1.bf16.msra.mxu0 %v2419
    %2520 = vmatprep.subr.bf16.mxu0 %v2424
    %2521 = vmatpush1.bf16.msra.mxu0 %v2423
    %2522 = vmatprep.subr.bf16.mxu0 %v2428
    %2523 = vmatpush1.bf16.msra.mxu0 %v2427
    %2524 = vmatprep.subr.bf16.mxu0 %v2432
    %2525 = vmatpush1.bf16.msra.mxu0 %v2431
    %2526 = vmatprep.subr.bf16.mxu0 %v2436
    %2527 = vmatpush1.bf16.msra.mxu0 %v2435
    %2528 = vmatprep.subr.bf16.mxu0 %v2440
    %2529 = vmatpush1.bf16.msra.mxu0 %v2439
    %2530 = vmatprep.subr.bf16.mxu0 0
    %2531 = vmatpush1.bf16.msra.mxu0 0
    %2532 = vmatprep.subr.bf16.mxu0 0
    %2533 = vmatpush1.bf16.msra.mxu0 0
    %2534 = vmatprep.subr.bf16.mxu0 0
    %2535 = vmatpush1.bf16.msra.mxu0 0
    %2536 = vmatprep.subr.bf16.mxu0 0
    %2537 = vmatpush1.bf16.msra.mxu0 0
    %2538 = vmatprep.subr.bf16.mxu0 0
    %2539 = vmatpush1.bf16.msra.mxu0 0
    %2540 = vmatprep.subr.bf16.mxu0 0
    %2541 = vmatpush1.bf16.msra.mxu0 0
    %2542 = vmatprep.subr.bf16.mxu0 0
    %2543 = vmatpush1.bf16.msra.mxu0 0
    %2544 = vmatprep.subr.bf16.mxu0 0
    %2545 = vmatpush1.bf16.msra.mxu0 0
    %2546 = vmatprep.mubr.bf16.mxu0 0
    %2547 = vmatmul.mubr.bf16.gmra.mrb[0].mxu0 %v2280
    %v2548 = vpop.f32.mrb[0].mxu0
    %v2549 = vadd.f32 0.0, %v2548
    %v2550 = vpop.f32.mrb[0].mxu0
    %v2551 = vadd.f32 0.0, %v2550
    %v2552 = vpop.f32.mrb[0].mxu0
    %v2553 = vpop.f32.mrb[0].mxu0
    %2554 = vdwg.mxu0
    %v2555 = vadd.f32 %v2275, %v2508
    %v2556 = vadd.f32 %v2276, %v2510
    %v2557 = vadd.f32 %v2277, %v2549
    %v2558 = vadd.f32 %v2278, %v2551
    %v2559 = vxor.u32 %v2555, 2147483648
    %v2560 = vmul.f32 %v2559, 1.442695
    %v2561 = vpow.pop %v2560
    %v2562 = vadd.f32 %v2561, 1.0
    %v2563 = vrcp.pop %v2562
    %v2564 = vmul.f32 1.0, %v2563
    %v2565 = vxor.u32 %v2556, 2147483648
    %v2566 = vmul.f32 %v2565, 1.442695
    %v2567 = vpow.pop %v2566
    %v2568 = vadd.f32 %v2567, 1.0
    %v2569 = vrcp.pop %v2568
    %v2570 = vmul.f32 1.0, %v2569
    %v2571 = vtanh.pop %v2557
    %v2572 = vxor.u32 %v2558, 2147483648
    %v2573 = vmul.f32 %v2572, 1.442695
    %v2574 = vpow.pop %v2573
    %v2575 = vadd.f32 %v2574, 1.0
    %v2576 = vrcp.pop %v2575
    %v2577 = vmul.f32 1.0, %v2576
    %v2578 = vld [vmem:[#allocation3] sm:$0xff]
    %v2579 = vmul.f32 %v2570, %v2578
    %v2580 = vmul.f32 %v2564, %v2571
    %v2581 = vadd.f32 %v2579, %v2580
    %v2582 = vtanh.pop %v2581
    %v2583 = vmul.f32 %v2577, %v2582
    %2584 = vst [vmem:[#allocation3] sm:$0xff] %v2581
    %2585 = vst [vmem:[#allocation2] sm:$0xff] %v2583
    %s2586 = scalar_lea.vmem [#allocation4], 56
    %2587 = vst [vmem:[%s2586] sm:$0xff] %v2583
    %v2588 = vld [vmem:[#allocation4] sm:$0xff]
    %v2589 = vld [vmem:[#allocation4 + $0x8] sm:$0xff]
    %v2590 = vld [vmem:[#allocation4 + $0x10] sm:$0xff]
    %v2591 = vld [vmem:[#allocation4 + $0x18] sm:$0xff]
    %v2592 = vld [vmem:[#allocation4 + $0x20] sm:$0xff]
    %v2593 = vld [vmem:[#allocation4 + $0x28] sm:$0xff]
    %v2594 = vld [vmem:[#allocation4 + $0x30] sm:$0xff]
    %v2595 = vld [vmem:[#allocation4 + $0x38] sm:$0xff]
    %v2596 = vpack.c.bf16 %v2589, %v2588
    %v2597 = vpack.c.bf16 %v2591, %v2590
    %v2598 = vpack.c.bf16 %v2593, %v2592
    %v2599 = vpack.c.bf16 %v2595, %v2594
    %v2600 = vld [vmem:[#allocation10] sm:$0xf]
    %v2601 = vld [vmem:[#allocation10 + $0x4] sm:$0xf]
    %v2602 = vld [vmem:[#allocation10 + $0x8] sm:$0xf]
    %v2603 = vld [vmem:[#allocation10 + $0xc] sm:$0xf]
    %v2604 = vld [vmem:[#allocation10 + $0x10] sm:$0xf]
    %v2605 = vld [vmem:[#allocation10 + $0x14] sm:$0xf]
    %v2606 = vld [vmem:[#allocation10 + $0x18] sm:$0xf]
    %v2607 = vld [vmem:[#allocation10 + $0x1c] sm:$0xf]
    %v2608 = vld [vmem:[#allocation10 + $0x20] sm:$0xf]
    %v2609 = vld [vmem:[#allocation10 + $0x24] sm:$0xf]
    %v2610 = vld [vmem:[#allocation10 + $0x28] sm:$0xf]
    %v2611 = vld [vmem:[#allocation10 + $0x2c] sm:$0xf]
    %v2612 = vld [vmem:[#allocation10 + $0x30] sm:$0xf]
    %v2613 = vld [vmem:[#allocation10 + $0x34] sm:$0xf]
    %v2614 = vld [vmem:[#allocation10 + $0x38] sm:$0xf]
    %v2615 = vld [vmem:[#allocation10 + $0x3c] sm:$0xf]
    %v2616 = vld [vmem:[#allocation11] sm:$0x1]
    %v2618 = vlaneseq
    %v2619 = vshrl.u32 %v2618, 7
    %v2620 = vsub.s32 0, %v2619
    %v2621 = vrot.slane %v2616, %v2620
    %v2639 = vunpack.c.l.b16 %v2600
    %v2640 = vunpack.c.l.b16 %v2601
    %v2641 = vunpack.c.l.b16 %v2602
    %v2642 = vunpack.c.l.b16 %v2603
    %v2643 = vunpack.c.l.b16 %v2604
    %v2644 = vunpack.c.l.b16 %v2605
    %v2645 = vunpack.c.l.b16 %v2606
    %v2646 = vunpack.c.l.b16 %v2607
    %v2647 = vunpack.c.l.b16 %v2608
    %v2648 = vunpack.c.l.b16 %v2609
    %v2649 = vunpack.c.l.b16 %v2610
    %v2650 = vunpack.c.l.b16 %v2611
    %v2651 = vunpack.c.l.b16 %v2612
    %v2652 = vunpack.c.l.b16 %v2613
    %v2653 = vunpack.c.l.b16 %v2614
    %v2654 = vunpack.c.l.b16 %v2615
    %v2655 = vpack.c.b16 %v2640, %v2639
    %v2656 = vpack.c.b16 %v2642, %v2641
    %v2657 = vpack.c.b16 %v2644, %v2643
    %v2658 = vpack.c.b16 %v2646, %v2645
    %v2659 = vpack.c.b16 %v2648, %v2647
    %v2660 = vpack.c.b16 %v2650, %v2649
    %v2661 = vpack.c.b16 %v2652, %v2651
    %v2662 = vpack.c.b16 %v2654, %v2653
    %2671 = vmatprep.subr.bf16.mxu0 0
    %2672 = vmatpush1.bf16.msra.mxu0 %v2655
    %2673 = vmatprep.subr.bf16.mxu0 0
    %2674 = vmatpush1.bf16.msra.mxu0 %v2656
    %2675 = vmatprep.subr.bf16.mxu0 0
    %2676 = vmatpush1.bf16.msra.mxu0 %v2657
    %2677 = vmatprep.subr.bf16.mxu0 0
    %2678 = vmatpush1.bf16.msra.mxu0 %v2658
    %2679 = vmatprep.subr.bf16.mxu0 0
    %2680 = vmatpush1.bf16.msra.mxu0 %v2659
    %2681 = vmatprep.subr.bf16.mxu0 0
    %2682 = vmatpush1.bf16.msra.mxu0 %v2660
    %2683 = vmatprep.subr.bf16.mxu0 0
    %2684 = vmatpush1.bf16.msra.mxu0 %v2661
    %2685 = vmatprep.subr.bf16.mxu0 0
    %2686 = vmatpush1.bf16.msra.mxu0 %v2662
    %2687 = vmatprep.subr.bf16.mxu0 0
    %2688 = vmatpush1.bf16.msra.mxu0 0
    %2689 = vmatprep.subr.bf16.mxu0 0
    %2690 = vmatpush1.bf16.msra.mxu0 0
    %2691 = vmatprep.subr.bf16.mxu0 0
    %2692 = vmatpush1.bf16.msra.mxu0 0
    %2693 = vmatprep.subr.bf16.mxu0 0
    %2694 = vmatpush1.bf16.msra.mxu0 0
    %2695 = vmatprep.subr.bf16.mxu0 0
    %2696 = vmatpush1.bf16.msra.mxu0 0
    %2697 = vmatprep.subr.bf16.mxu0 0
    %2698 = vmatpush1.bf16.msra.mxu0 0
    %2699 = vmatprep.subr.bf16.mxu0 0
    %2700 = vmatpush1.bf16.msra.mxu0 0
    %2701 = vmatprep.subr.bf16.mxu0 0
    %2702 = vmatpush1.bf16.msra.mxu0 0
    %2703 = vmatprep.mubr.bf16.mxu0 0
    %2704 = vmatmul.mubr.bf16.gmra.mrb[0].mxu0 %v2596
    %v2705 = vpop.f32.mrb[0].mxu0
    %v2706 = vadd.f32 %v2621, %v2705
    %v2707 = vpop.f32.mrb[0].mxu0
    %v2708 = vpop.f32.mrb[0].mxu0
    %v2709 = vadd.f32 %v2621, %v2708
    %v2710 = vpop.f32.mrb[0].mxu0
    %2711 = vmatprep.mubr.bf16.mxu0 0
    %2712 = vmatmul.mubr.bf16.gmra.mrb[0].mxu0 %v2597
    %v2713 = vpop.f32.mrb[0].mxu0
    %v2714 = vadd.f32 %v2621, %v2713
    %v2715 = vpop.f32.mrb[0].mxu0
    %v2716 = vpop.f32.mrb[0].mxu0
    %v2717 = vadd.f32 %v2621, %v2716
    %v2718 = vpop.f32.mrb[0].mxu0
    %2719 = vmatprep.mubr.bf16.mxu0 0
    %2720 = vmatmul.mubr.bf16.gmra.mrb[0].mxu0 %v2598
    %v2721 = vpop.f32.mrb[0].mxu0
    %v2722 = vadd.f32 %v2621, %v2721
    %v2723 = vpop.f32.mrb[0].mxu0
    %v2724 = vpop.f32.mrb[0].mxu0
    %v2725 = vadd.f32 %v2621, %v2724
    %v2726 = vpop.f32.mrb[0].mxu0
    %2727 = vmatprep.mubr.bf16.mxu0 0
    %2728 = vmatmul.mubr.bf16.gmra.mrb[0].mxu0 %v2599
    %v2729 = vpop.f32.mrb[0].mxu0
    %v2730 = vadd.f32 %v2621, %v2729
    %v2731 = vpop.f32.mrb[0].mxu0
    %v2732 = vpop.f32.mrb[0].mxu0
    %v2733 = vadd.f32 %v2621, %v2732
    %v2734 = vpop.f32.mrb[0].mxu0
    %2735 = vdwg.mxu0
    %2736 = vst [vmem:[#allocation13] sm:$0xff] %v2706
    %2737 = vst [vmem:[#allocation13 + $0x8] sm:$0xff] %v2709
    %2738 = vst [vmem:[#allocation13 + $0x10] sm:$0xff] %v2714
    %2739 = vst [vmem:[#allocation13 + $0x18] sm:$0xff] %v2717
    %2740 = vst [vmem:[#allocation13 + $0x20] sm:$0xff] %v2722
    %2741 = vst [vmem:[#allocation13 + $0x28] sm:$0xff] %v2725
    %2742 = vst [vmem:[#allocation13 + $0x30] sm:$0xff] %v2730
    %2743 = vst [vmem:[#allocation13 + $0x38] sm:$0xff] %v2733
    // Predicated region
    $region38: #{eval_lstm_model2_forward.7} parent=1 // pred_check
      _
    $region39: #{eval_lstm_model2_forward.7} parent=1 // pred_check_branch
      %2745 = sbr.rel (0) target = $region41
    $region40: #{eval_lstm_model2_forward.7} parent=1 // pred_region
      %s2747 = ssub.s32 1024, 1024
      %2748 = vsyncadd [#allocation7], %s2747
      %s2749 = sshll.u32 [#allocation13], 4
      %s2750 = int_to_ptr.vmem [resolvable:$true] %s2749
      %2755 = dma.vmem_to_hbm [thread:$0]  %s2750, 1024, %s4, [#allocation7], 128, 128, 8
    $region41: #{eval_lstm_model2_forward.7} parent=1 // pred_fallthru
      _
    // Predicated region
    $region42: #{eval_lstm_model2_forward.7} parent=1 // pred_check
      _
    $region43: #{eval_lstm_model2_forward.7} parent=1 // pred_check_branch
      %2757 = sbr.rel (0) target = $region45
    $region44: #{eval_lstm_model2_forward.7} parent=1 // pred_region
      %2758 = dma.done [#allocation7], 1024
    $region45: #{eval_lstm_model2_forward.7} parent=1 // pred_fallthru
      _
    %2759 = vsyncpa [#allocation6], 1
    %2760 = vsyncpa [#allocation9], 1
    %2761 = vsyncpa [#allocation12], 1
    %2762 = vsyncpa [#allocation7], 1

</llo_original>
